<compile_context>
chip_gen: v7x
topology: tpu7x:2x2x1
jax: 0.10.0
libtpu: 0.0.40
codegen_flags: <defaults>
</compile_context>

<pallas_src>
import functools

import jax
import jax.numpy as jnp
from jax import lax
from jax.experimental import pallas as pl
from jax.experimental.pallas import tpu as pltpu

BN_EPS = 1e-5
MLP_BLOCK_K = 4096          # sized for v7x's 64 MiB VMEM; 8192 is fine on v5e/v6e
DH, DO = 500, 5             # module fc sizes
DH_PAD, DO_PAD = 512, 128   # lane-dense padded fc sizes
VMEM_LIMIT = 48 * 1024 * 1024


def _round_up(x, m):
    return ((x + m - 1) // m) * m


def _mlp_tiling(feat, block_k=MLP_BLOCK_K):
    """Return (block_k, padded_feat) with block_k | padded_feat and 128 | block_k."""
    if feat <= block_k:
        bk = _round_up(feat, 128)
        return bk, bk
    return block_k, _round_up(feat, block_k)


# ----------------------------------------------------------------------------
# Conv + bias + ReLU + BatchNorm (train-mode batch stats) — one branch / step
# ----------------------------------------------------------------------------
def conv_bn_relu_kernel(x_ref, w_ref, b_ref, g_ref, beta_ref, mask_ref,
                        o_ref, col_ref, *, cin, wp, n_img, h_dim, w_dim):
    """x_ref:   (1, Cin, Ltot)   reflection-padded images, spatial flattened,
                                 packed along lanes with per-image stride Lp
       w_ref:   (Cout, Kpad)     conv weight, tap-major (kh,kw,c) packed
       b/g/beta_ref: (Cout, 1)   conv bias / BN gamma / BN beta
       mask_ref:(1, N*Lp)        1.0 at valid output lanes (q < H*Wp, w' < W)
       o_ref:   (1, Cout, N*Lp)  lane-dense output (garbage lanes masked/sliced)
       col_ref: (Kpad, N*Lp)     im2col scratch (VMEM)"""
    nlp = o_ref.shape[-1]
    kpad = col_ref.shape[0]
    k_real = 9 * cin

    # --- im2col: 9 lane-shifted tap copies, ALL images at once (stride Lp) ---
    for kh in range(3):
        for kw in range(3):
            k = kh * 3 + kw
            off = kh * wp + kw
            col_ref[k * cin:(k + 1) * cin, :] = x_ref[0, :, off:off + nlp]
    if k_real < kpad:   # zero the K-padding rows (uninit VMEM could hold NaNs)
        col_ref[k_real:, :] = jnp.zeros((kpad - k_real, nlp), jnp.float32)

    # --- conv as ONE matmul over all images, + bias, ReLU (module order) -----
    y = jnp.dot(w_ref[...], col_ref[...],
                preferred_element_type=jnp.float32) + b_ref[...]
    y = jnp.maximum(y, 0.0)                         # ReLU before BatchNorm

    # --- BatchNorm2d (training mode): masked batch stats, biased variance ----
    mask = mask_ref[...]
    inv_cnt = 1.0 / float(n_img * h_dim * w_dim)
    mean = jnp.sum(y * mask, axis=1, keepdims=True) * inv_cnt
    d = (y - mean) * mask
    var = jnp.sum(d * d, axis=1, keepdims=True) * inv_cnt
    scale = g_ref[...] * lax.rsqrt(var + BN_EPS)
    o_ref[0] = (y - mean) * scale + beta_ref[...]


def conv_bn_relu(xf, w2d, b, g, beta, mask, *, n_img, h_dim, w_dim, lp):
    """xf: (2, Cin, Ltot) — both siamese branches stacked on axis 0.
    Returns (2, Cout, N*Lp) float32."""
    _, cin, ltot = xf.shape
    cout, kpad = w2d.shape
    nlp = n_img * lp
    kernel = functools.partial(conv_bn_relu_kernel, cin=cin, wp=w_dim + 2,
                               n_img=n_img, h_dim=h_dim, w_dim=w_dim)
    return pl.pallas_call(
        kernel,
        out_shape=jax.ShapeDtypeStruct((2, cout, nlp), jnp.float32),
        grid=(2,),                                       # siamese-branch axis
        in_specs=[
            pl.BlockSpec((1, cin, ltot), lambda i: (i, 0, 0)),
            pl.BlockSpec((cout, kpad), lambda i: (0, 0)),  # weights stay resident
            pl.BlockSpec((cout, 1), lambda i: (0, 0)),
            pl.BlockSpec((cout, 1), lambda i: (0, 0)),
            pl.BlockSpec((cout, 1), lambda i: (0, 0)),
            pl.BlockSpec((1, nlp), lambda i: (0, 0)),
        ],
        out_specs=pl.BlockSpec((1, cout, nlp), lambda i: (i, 0, 0)),
        scratch_shapes=[pltpu.VMEM((kpad, nlp), jnp.float32)],
        compiler_params=pltpu.CompilerParams(
            dimension_semantics=("parallel",),
            vmem_limit_bytes=VMEM_LIMIT),
    )(xf, w2d, b, g, beta, mask)


# ----------------------------------------------------------------------------
# MLP (fc1 -> ReLU -> fc2 -> ReLU -> fc3), both branches, K-tiled over fc1
# ----------------------------------------------------------------------------
def mlp_kernel(x_ref, w1_ref, b1_ref, w2_ref, b2_ref, w3_ref, b3_ref,
               o_ref, acc_ref):
    k = pl.program_id(0)

    @pl.when(k == 0)
    def _():
        acc_ref[...] = jnp.zeros_like(acc_ref)

    # fc1 partial product: weights streamed from HBM in bf16 (halves the
    # memory-bound fc1 byte stream), widened in-kernel, accumulated in f32.
    acc_ref[...] += jnp.dot(x_ref[...], w1_ref[...].astype(jnp.float32),
                            preferred_element_type=jnp.float32)

    @pl.when(k == pl.num_programs(0) - 1)
    def _():
        h1 = jnp.maximum(acc_ref[...] + b1_ref[...], 0.0)
        h2 = jnp.maximum(
            jnp.dot(h1, w2_ref[...].astype(jnp.float32),
                    preferred_element_type=jnp.float32) + b2_ref[...], 0.0)
        o_ref[...] = (jnp.dot(h2, w3_ref[...],
                              preferred_element_type=jnp.float32) + b3_ref[...])


def mlp(x, w1, b1, w2, b2, w3, b3, *, block_k):
    B, f_pad = x.shape
    dh = w1.shape[1]
    do = w3.shape[1]
    assert f_pad % block_k == 0 and block_k % 128 == 0
    nk = f_pad // block_k
    return pl.pallas_call(
        mlp_kernel,
        out_shape=jax.ShapeDtypeStruct((B, do), jnp.float32),
        grid=(nk,),                                      # fc1 contraction axis
        in_specs=[
            pl.BlockSpec((B, block_k), lambda k: (0, k)),
            pl.BlockSpec((block_k, dh), lambda k: (k, 0)),
            pl.BlockSpec((1, dh), lambda k: (0, 0)),
            pl.BlockSpec((dh, dh), lambda k: (0, 0)),
            pl.BlockSpec((1, dh), lambda k: (0, 0)),
            pl.BlockSpec((dh, do), lambda k: (0, 0)),
            pl.BlockSpec((1, do), lambda k: (0, 0)),
        ],
        out_specs=pl.BlockSpec((B, do), lambda k: (0, 0)),
        scratch_shapes=[pltpu.VMEM((B, dh), jnp.float32)],
        compiler_params=pltpu.CompilerParams(
            dimension_semantics=("arbitrary",),
            vmem_limit_bytes=VMEM_LIMIT),
    )(x, w1, b1, w2, b2, w3, b3)


# ----------------------------------------------------------------------------
# SiameseNetwork forward (both branches at once)
# ----------------------------------------------------------------------------
def _prep_conv_input(h, lp, ltot):
    """(2, N, C, H, W) -> reflection-pad H/W by 1, flatten spatial, pack all
    images along lanes with per-image stride lp, pad tail to ltot lanes."""
    two, n, c, hh, ww = h.shape
    hp = jnp.pad(h, ((0, 0), (0, 0), (0, 0), (1, 1), (1, 1)), mode="reflect")
    lx = (hh + 2) * (ww + 2)
    hf = hp.reshape(two, n, c, lx)
    hf = jnp.pad(hf, ((0, 0), (0, 0), (0, 0), (0, lp - lx)))
    hf = jnp.transpose(hf, (0, 2, 1, 3)).reshape(two, c, n * lp)
    return jnp.pad(hf, ((0, 0), (0, 0), (0, ltot - n * lp)))


def siamese_forward(input1, input2, params):
    N, _, H, W = input1.shape
    Wp = W + 2
    Lq = H * Wp                       # per-image flat output length (w' < Wp)
    Lx = (H + 2) * (W + 2)            # per-image flat padded-input length
    Lp = _round_up(Lx, 128)           # lane-aligned per-image stride
    Ltot = (N + 1) * Lp               # extra segment = tap-slice slack
    x = jnp.stack([input1, input2], axis=0)          # (2, N, 1, H, W)

    # valid-output mask over the packed lane axis (shared by all conv layers)
    j = jnp.arange(N * Lp, dtype=jnp.int32)
    q = j % Lp
    mask = ((q < Lq) & ((q % Wp) < W)).astype(jnp.float32).reshape(1, N * Lp)

    h = x
    tmps = []
    for name in ("c1", "c2", "c3"):
        hf = _prep_conv_input(h, Lp, Ltot)
        y = conv_bn_relu(hf, params[name + "_w2d"], params[name + "_b"],
                         params[name + "_g"], params[name + "_beta"],
                         mask, n_img=N, h_dim=H, w_dim=W, lp=Lp)
        cout = params[name + "_w2d"].shape[0]
        # (2, Cout, N*Lp) -> (2, N, Cout, H, W)  (drop padded / garbage lanes)
        y = jnp.transpose(y.reshape(2, cout, N, Lp), (0, 2, 1, 3))[..., :Lq]
        y = y.reshape(2, N, cout, H, Wp)[..., :W]
        tmps.append(y)
        h = y

    # C-major flatten (== torch .view); rows 0..N-1 branch1, N..2N-1 branch2.
    flat = h.reshape(2 * N, -1)
    F = flat.shape[-1]
    bk, f_pad = _mlp_tiling(F)
    assert f_pad == params["fc1_w"].shape[0]
    flat_p = jnp.pad(flat, ((0, 0), (0, f_pad - F)))
    logits = mlp(flat_p, params["fc1_w"], params["fc1_b"],
                 params["fc2_w"], params["fc2_b"],
                 params["fc3_w"], params["fc3_b"], block_k=bk)[:, :DO]
    o1, o2 = logits[:N], logits[N:]
    return (o1, o2, tmps[0][0], tmps[1][0], tmps[2][0],
            tmps[0][1], tmps[1][1], tmps[2][1])


# ----------------------------------------------------------------------------
# Deterministic synthetic parameters (module shapes, scaled to H x W input)
# ----------------------------------------------------------------------------
def pack_conv(w_oihw):
    """(Cout, Cin, 3, 3) -> (Cout, Kpad) tap-major (kh,kw,c), Kpad = ceil8(9*Cin)."""
    co, ci = w_oihw.shape[0], w_oihw.shape[1]
    k_real = 9 * ci
    kpad = _round_up(k_real, 8)
    w2 = jnp.transpose(w_oihw, (0, 2, 3, 1)).reshape(co, k_real)
    return jnp.pad(w2, ((0, 0), (0, kpad - k_real)))


def init_params(key, H, W):
    ks = iter(jax.random.split(key, 18))

    def nrm(shape, scale):
        return scale * jax.random.normal(next(ks), shape, jnp.float32)

    p = {}
    for name, cin, cout in (("c1", 1, 4), ("c2", 4, 8), ("c3", 8, 8)):
        w = nrm((cout, cin, 3, 3), 0.3)
        p[name + "_w"] = w                       # OIHW, for the reference path
        p[name + "_w2d"] = pack_conv(w)          # packed, for the kernel
        p[name + "_b"] = nrm((cout, 1), 0.1)
        p[name + "_g"] = 1.0 + nrm((cout, 1), 0.1)
        p[name + "_beta"] = nrm((cout, 1), 0.1)

    feat = 8 * H * W
    _, feat_pad = _mlp_tiling(feat)

    # fc1/fc2 weights live in bf16 (HBM stream halved); fc3 is tiny -> f32.
    w1 = nrm((DH, feat), 0.02).astype(jnp.bfloat16)   # torch layout (out, in)
    w2 = nrm((DH, DH), 0.02).astype(jnp.bfloat16)
    w3 = nrm((DO, DH), 0.02)
    b1, b2, b3 = nrm((1, DH), 0.05), nrm((1, DH), 0.05), nrm((1, DO), 0.05)

    # reference copies (same bf16-rounded values, f32 math)
    p["fc1_wT"], p["fc2_wT"], p["fc3_wT"] = (w1.astype(jnp.float32),
                                             w2.astype(jnp.float32), w3)
    p["fc1_bT"], p["fc2_bT"], p["fc3_bT"] = b1, b2, b3

    # kernel copies: (in, out) layout, zero-padded to lane-dense tiles
    p["fc1_w"] = jnp.pad(jnp.transpose(w1), ((0, feat_pad - feat), (0, DH_PAD - DH)))
    p["fc1_b"] = jnp.pad(b1, ((0, 0), (0, DH_PAD - DH)))
    p["fc2_w"] = jnp.pad(jnp.transpose(w2), ((0, DH_PAD - DH), (0, DH_PAD - DH)))
    p["fc2_b"] = jnp.pad(b2, ((0, 0), (0, DH_PAD - DH)))
    p["fc3_w"] = jnp.pad(jnp.transpose(w3), ((0, DH_PAD - DH), (0, DO_PAD - DO)))
    p["fc3_b"] = jnp.pad(b3, ((0, 0), (0, DO_PAD - DO)))
    return p


# ----------------------------------------------------------------------------
# Pure-JAX reference (correctness check)
# ----------------------------------------------------------------------------
def ref_forward_once(x, p):
    h = x
    tmps = []
    for name in ("c1", "c2", "c3"):
        hp = jnp.pad(h, ((0, 0), (0, 0), (1, 1), (1, 1)), mode="reflect")
        y = lax.conv_general_dilated(
            hp, p[name + "_w"], (1, 1), "VALID",
            dimension_numbers=("NCHW", "OIHW", "NCHW"))
        y = y + p[name + "_b"].reshape(1, -1, 1, 1)
        y = jnp.maximum(y, 0.0)                      # ReLU then BatchNorm
        mean = jnp.mean(y, axis=(0, 2, 3), keepdims=True)
        var = jnp.mean((y - mean) ** 2, axis=(0, 2, 3), keepdims=True)
        y = ((y - mean) * lax.rsqrt(var + BN_EPS)
             * p[name + "_g"].reshape(1, -1, 1, 1)
             + p[name + "_beta"].reshape(1, -1, 1, 1))
        tmps.append(y)
        h = y
    flat = h.reshape(h.shape[0], -1)
    h1 = jnp.maximum(flat @ p["fc1_wT"].T + p["fc1_bT"], 0.0)
    h2 = jnp.maximum(h1 @ p["fc2_wT"].T + p["fc2_bT"], 0.0)
    return h2 @ p["fc3_wT"].T + p["fc3_bT"], tmps


# ----------------------------------------------------------------------------
if __name__ == "__main__":
    N, H, W = 2, 16, 16        # small test shapes (real module assumed 100x100)
    key = jax.random.PRNGKey(0)
    k_par, k_x1, k_x2 = jax.random.split(key, 3)

    params = init_params(k_par, H, W)
    input1 = jax.random.normal(k_x1, (N, 1, H, W), jnp.float32)
    input2 = jax.random.normal(k_x2, (N, 1, H, W), jnp.float32)

    fwd = jax.jit(functools.partial(siamese_forward, params=params))
    outs = jax.block_until_ready(fwd(input1, input2))
    o1, o2, s1, s2, s3, q1, q2, q3 = outs

    # Shape sanity (matches the PyTorch module semantics).
    assert o1.shape == (N, 5) and o2.shape == (N, 5)
    assert s1.shape == (N, 4, H, W) and q1.shape == (N, 4, H, W)
    assert s2.shape == (N, 8, H, W) and s3.shape == (N, 8, H, W)
    assert q2.shape == (N, 8, H, W) and q3.shape == (N, 8, H, W)

    # Numerical check against a pure-JAX reference (same bf16-rounded fc weights).
    r1, rt1 = ref_forward_once(input1, params)
    r2, rt2 = ref_forward_once(input2, params)
    tol = dict(rtol=1e-3, atol=1e-3)
    assert jnp.allclose(o1, r1, **tol)
    assert jnp.allclose(o2, r2, **tol)
    assert jnp.allclose(s1, rt1[0], **tol)
    assert jnp.allclose(s2, rt1[1], **tol)
    assert jnp.allclose(s3, rt1[2], **tol)
    assert jnp.allclose(q1, rt2[0], **tol)
    assert jnp.allclose(q2, rt2[1], **tol)
    assert jnp.allclose(q3, rt2[2], **tol)

    print("KERNEL_OK")
</pallas_src>

<mosaic_0001>
module attributes {stable_mosaic.version = 11 : i64} {
  func.func @conv_bn_relu_kernel(%arg0: i32, %arg1: memref<1x1x1152xf32, #tpu.memory_space<vmem>>, %arg2: memref<4x16xf32, #tpu.memory_space<vmem>>, %arg3: memref<4x1xf32, #tpu.memory_space<vmem>>, %arg4: memref<4x1xf32, #tpu.memory_space<vmem>>, %arg5: memref<4x1xf32, #tpu.memory_space<vmem>>, %arg6: memref<1x768xf32, #tpu.memory_space<vmem>>, %arg7: memref<1x4x768xf32, #tpu.memory_space<vmem>>, %arg8: memref<16x768xf32, #tpu.memory_space<vmem>>) attributes {dimension_semantics = [#tpu.dimension_semantics<parallel>], iteration_bounds = array<i64: 2>, scalar_prefetch = 0 : i64, scratch_operands = 1 : i64, tpu.core_type = #tpu.core_type<tc>, window_params = [{transform_indices = @transform_0, window_bounds = array<i64: 1, 1, 1152>}, {pipeline_mode = #tpu.pipeline_mode<synchronous>, transform_indices = @transform_1, window_bounds = array<i64: 4, 16>}, {pipeline_mode = #tpu.pipeline_mode<synchronous>, transform_indices = @transform_2, window_bounds = array<i64: 4, 1>}, {pipeline_mode = #tpu.pipeline_mode<synchronous>, transform_indices = @transform_3, window_bounds = array<i64: 4, 1>}, {pipeline_mode = #tpu.pipeline_mode<synchronous>, transform_indices = @transform_4, window_bounds = array<i64: 4, 1>}, {pipeline_mode = #tpu.pipeline_mode<synchronous>, transform_indices = @transform_5, window_bounds = array<i64: 1, 768>}, {transform_indices = @transform_6, window_bounds = array<i64: 1, 4, 768>}]} {
    %c0 = arith.constant 0 : index
    %c0_0 = arith.constant 0 : index
    %c0_1 = arith.constant 0 : index
    %0 = vector.load %arg1[%c0, %c0_0, %c0_1] : memref<1x1x1152xf32, #tpu.memory_space<vmem>>, vector<1x1x768xf32>
    %1 = vector.shape_cast %0 : vector<1x1x768xf32> to vector<1x768xf32>
    %c0_2 = arith.constant 0 : index
    %c0_3 = arith.constant 0 : index
    %2 = vector.load %arg8[%c0_2, %c0_3] : memref<16x768xf32, #tpu.memory_space<vmem>>, vector<1x768xf32>
    tpu.vector_store %arg8[%c0_2, %c0_3], %1 {strides = array<i32>} : memref<16x768xf32, #tpu.memory_space<vmem>>, vector<1x768xf32>,
    %c0_4 = arith.constant 0 : index
    %c0_5 = arith.constant 0 : index
    %c1 = arith.constant 1 : index
    %3 = vector.load %arg1[%c0_4, %c0_5, %c1] : memref<1x1x1152xf32, #tpu.memory_space<vmem>>, vector<1x1x768xf32>
    %4 = vector.shape_cast %3 : vector<1x1x768xf32> to vector<1x768xf32>
    %c1_6 = arith.constant 1 : index
    %c0_7 = arith.constant 0 : index
    %5 = vector.load %arg8[%c1_6, %c0_7] : memref<16x768xf32, #tpu.memory_space<vmem>>, vector<1x768xf32>
    tpu.vector_store %arg8[%c1_6, %c0_7], %4 {strides = array<i32>} : memref<16x768xf32, #tpu.memory_space<vmem>>, vector<1x768xf32>,
    %c0_8 = arith.constant 0 : index
    %c0_9 = arith.constant 0 : index
    %c2 = arith.constant 2 : index
    %6 = vector.load %arg1[%c0_8, %c0_9, %c2] : memref<1x1x1152xf32, #tpu.memory_space<vmem>>, vector<1x1x768xf32>
    %7 = vector.shape_cast %6 : vector<1x1x768xf32> to vector<1x768xf32>
    %c2_10 = arith.constant 2 : index
    %c0_11 = arith.constant 0 : index
    %8 = vector.load %arg8[%c2_10, %c0_11] : memref<16x768xf32, #tpu.memory_space<vmem>>, vector<1x768xf32>
    tpu.vector_store %arg8[%c2_10, %c0_11], %7 {strides = array<i32>} : memref<16x768xf32, #tpu.memory_space<vmem>>, vector<1x768xf32>,
    %c0_12 = arith.constant 0 : index
    %c0_13 = arith.constant 0 : index
    %c18 = arith.constant 18 : index
    %9 = vector.load %arg1[%c0_12, %c0_13, %c18] : memref<1x1x1152xf32, #tpu.memory_space<vmem>>, vector<1x1x768xf32>
    %10 = vector.shape_cast %9 : vector<1x1x768xf32> to vector<1x768xf32>
    %c3 = arith.constant 3 : index
    %c0_14 = arith.constant 0 : index
    %11 = vector.load %arg8[%c3, %c0_14] : memref<16x768xf32, #tpu.memory_space<vmem>>, vector<1x768xf32>
    tpu.vector_store %arg8[%c3, %c0_14], %10 {strides = array<i32>} : memref<16x768xf32, #tpu.memory_space<vmem>>, vector<1x768xf32>,
    %c0_15 = arith.constant 0 : index
    %c0_16 = arith.constant 0 : index
    %c19 = arith.constant 19 : index
    %12 = vector.load %arg1[%c0_15, %c0_16, %c19] : memref<1x1x1152xf32, #tpu.memory_space<vmem>>, vector<1x1x768xf32>
    %13 = vector.shape_cast %12 : vector<1x1x768xf32> to vector<1x768xf32>
    %c4 = arith.constant 4 : index
    %c0_17 = arith.constant 0 : index
    %14 = vector.load %arg8[%c4, %c0_17] : memref<16x768xf32, #tpu.memory_space<vmem>>, vector<1x768xf32>
    tpu.vector_store %arg8[%c4, %c0_17], %13 {strides = array<i32>} : memref<16x768xf32, #tpu.memory_space<vmem>>, vector<1x768xf32>,
    %c0_18 = arith.constant 0 : index
    %c0_19 = arith.constant 0 : index
    %c20 = arith.constant 20 : index
    %15 = vector.load %arg1[%c0_18, %c0_19, %c20] : memref<1x1x1152xf32, #tpu.memory_space<vmem>>, vector<1x1x768xf32>
    %16 = vector.shape_cast %15 : vector<1x1x768xf32> to vector<1x768xf32>
    %c5 = arith.constant 5 : index
    %c0_20 = arith.constant 0 : index
    %17 = vector.load %arg8[%c5, %c0_20] : memref<16x768xf32, #tpu.memory_space<vmem>>, vector<1x768xf32>
    tpu.vector_store %arg8[%c5, %c0_20], %16 {strides = array<i32>} : memref<16x768xf32, #tpu.memory_space<vmem>>, vector<1x768xf32>,
    %c0_21 = arith.constant 0 : index
    %c0_22 = arith.constant 0 : index
    %c36 = arith.constant 36 : index
    %18 = vector.load %arg1[%c0_21, %c0_22, %c36] : memref<1x1x1152xf32, #tpu.memory_space<vmem>>, vector<1x1x768xf32>
    %19 = vector.shape_cast %18 : vector<1x1x768xf32> to vector<1x768xf32>
    %c6 = arith.constant 6 : index
    %c0_23 = arith.constant 0 : index
    %20 = vector.load %arg8[%c6, %c0_23] : memref<16x768xf32, #tpu.memory_space<vmem>>, vector<1x768xf32>
    tpu.vector_store %arg8[%c6, %c0_23], %19 {strides = array<i32>} : memref<16x768xf32, #tpu.memory_space<vmem>>, vector<1x768xf32>,
    %c0_24 = arith.constant 0 : index
    %c0_25 = arith.constant 0 : index
    %c37 = arith.constant 37 : index
    %21 = vector.load %arg1[%c0_24, %c0_25, %c37] : memref<1x1x1152xf32, #tpu.memory_space<vmem>>, vector<1x1x768xf32>
    %22 = vector.shape_cast %21 : vector<1x1x768xf32> to vector<1x768xf32>
    %c7 = arith.constant 7 : index
    %c0_26 = arith.constant 0 : index
    %23 = vector.load %arg8[%c7, %c0_26] : memref<16x768xf32, #tpu.memory_space<vmem>>, vector<1x768xf32>
    tpu.vector_store %arg8[%c7, %c0_26], %22 {strides = array<i32>} : memref<16x768xf32, #tpu.memory_space<vmem>>, vector<1x768xf32>,
    %c0_27 = arith.constant 0 : index
    %c0_28 = arith.constant 0 : index
    %c38 = arith.constant 38 : index
    %24 = vector.load %arg1[%c0_27, %c0_28, %c38] : memref<1x1x1152xf32, #tpu.memory_space<vmem>>, vector<1x1x768xf32>
    %25 = vector.shape_cast %24 : vector<1x1x768xf32> to vector<1x768xf32>
    %c8 = arith.constant 8 : index
    %c0_29 = arith.constant 0 : index
    %26 = vector.load %arg8[%c8, %c0_29] : memref<16x768xf32, #tpu.memory_space<vmem>>, vector<1x768xf32>
    tpu.vector_store %arg8[%c8, %c0_29], %25 {strides = array<i32>} : memref<16x768xf32, #tpu.memory_space<vmem>>, vector<1x768xf32>,
    %cst = arith.constant 0.000000e+00 : f32
    %27 = vector.broadcast %cst : f32 to vector<7x768xf32>
    %c9 = arith.constant 9 : index
    %c0_30 = arith.constant 0 : index
    %28 = vector.load %arg8[%c9, %c0_30] : memref<16x768xf32, #tpu.memory_space<vmem>>, vector<7x768xf32>
    tpu.vector_store %arg8[%c9, %c0_30], %27 {strides = array<i32>} : memref<16x768xf32, #tpu.memory_space<vmem>>, vector<7x768xf32>,
    %c0_31 = arith.constant 0 : index
    %c0_32 = arith.constant 0 : index
    %29 = vector.load %arg2[%c0_31, %c0_32] : memref<4x16xf32, #tpu.memory_space<vmem>>, vector<4x16xf32>
    %c0_33 = arith.constant 0 : index
    %c0_34 = arith.constant 0 : index
    %30 = vector.load %arg8[%c0_33, %c0_34] : memref<16x768xf32, #tpu.memory_space<vmem>>, vector<16x768xf32>
    %cst_35 = arith.constant dense<0.000000e+00> : vector<4x768xf32>
    %31 = tpu.matmul %29, %30, %cst_35 {dimension_numbers = #tpu.dot_dimension_numbers<[1], [0], [0], [1], [0, 0, 1, 1], [], []>} : vector<4x16xf32>, vector<16x768xf32>, vector<4x768xf32> -> vector<4x768xf32>
    %c0_36 = arith.constant 0 : index
    %c0_37 = arith.constant 0 : index
    %32 = vector.load %arg3[%c0_36, %c0_37] : memref<4x1xf32, #tpu.memory_space<vmem>>, vector<4x1xf32>
    %33 = vector.broadcast %32 : vector<4x1xf32> to vector<4x768xf32>
    %34 = arith.addf %31, %33 : vector<4x768xf32>
    %cst_38 = arith.constant 0.000000e+00 : f32
    %35 = vector.broadcast %cst_38 : f32 to vector<4x768xf32>
    %36 = arith.maximumf %34, %35 : vector<4x768xf32>
    %c0_39 = arith.constant 0 : index
    %c0_40 = arith.constant 0 : index
    %37 = vector.load %arg6[%c0_39, %c0_40] : memref<1x768xf32, #tpu.memory_space<vmem>>, vector<1x768xf32>
    %38 = vector.broadcast %37 : vector<1x768xf32> to vector<4x768xf32>
    %39 = arith.mulf %36, %38 : vector<4x768xf32>
    %cst_41 = arith.constant dense<0.000000e+00> : vector<4xf32>
    %40 = vector.multi_reduction <add>, %39, %cst_41 [1] : vector<4x768xf32> to vector<4xf32>
    %41 = vector.shape_cast %40 : vector<4xf32> to vector<4x1xf32>
    %cst_42 = arith.constant 0.001953125 : f32
    %42 = vector.broadcast %cst_42 : f32 to vector<4x1xf32>
    %43 = arith.mulf %41, %42 : vector<4x1xf32>
    %44 = vector.broadcast %43 : vector<4x1xf32> to vector<4x768xf32>
    %45 = arith.subf %36, %44 : vector<4x768xf32>
    %46 = vector.broadcast %37 : vector<1x768xf32> to vector<4x768xf32>
    %47 = arith.mulf %45, %46 : vector<4x768xf32>
    %48 = arith.mulf %47, %47 : vector<4x768xf32>
    %cst_43 = arith.constant dense<0.000000e+00> : vector<4xf32>
    %49 = vector.multi_reduction <add>, %48, %cst_43 [1] : vector<4x768xf32> to vector<4xf32>
    %50 = vector.shape_cast %49 : vector<4xf32> to vector<4x1xf32>
    %cst_44 = arith.constant 0.001953125 : f32
    %51 = vector.broadcast %cst_44 : f32 to vector<4x1xf32>
    %52 = arith.mulf %50, %51 : vector<4x1xf32>
    %c0_45 = arith.constant 0 : index
    %c0_46 = arith.constant 0 : index
    %53 = vector.load %arg4[%c0_45, %c0_46] : memref<4x1xf32, #tpu.memory_space<vmem>>, vector<4x1xf32>
    %cst_47 = arith.constant 9.99999974E-6 : f32
    %54 = vector.broadcast %cst_47 : f32 to vector<4x1xf32>
    %55 = arith.addf %52, %54 : vector<4x1xf32>
    %56 = math.rsqrt %55 : vector<4x1xf32>
    %57 = arith.mulf %53, %56 : vector<4x1xf32>
    %58 = vector.broadcast %43 : vector<4x1xf32> to vector<4x768xf32>
    %59 = arith.subf %36, %58 : vector<4x768xf32>
    %60 = vector.broadcast %57 : vector<4x1xf32> to vector<4x768xf32>
    %61 = arith.mulf %59, %60 : vector<4x768xf32>
    %c0_48 = arith.constant 0 : index
    %c0_49 = arith.constant 0 : index
    %62 = vector.load %arg5[%c0_48, %c0_49] : memref<4x1xf32, #tpu.memory_space<vmem>>, vector<4x1xf32>
    %63 = vector.broadcast %62 : vector<4x1xf32> to vector<4x768xf32>
    %64 = arith.addf %61, %63 : vector<4x768xf32>
    %c0_50 = arith.constant 0 : index
    %c0_51 = arith.constant 0 : index
    %c0_52 = arith.constant 0 : index
    %65 = vector.load %arg7[%c0_50, %c0_51, %c0_52] : memref<1x4x768xf32, #tpu.memory_space<vmem>>, vector<1x4x768xf32>
    %66 = vector.shape_cast %65 : vector<1x4x768xf32> to vector<4x768xf32>
    %67 = vector.shape_cast %64 : vector<4x768xf32> to vector<1x4x768xf32>
    tpu.vector_store %arg7[%c0_50, %c0_51, %c0_52], %67 {strides = array<i32>} : memref<1x4x768xf32, #tpu.memory_space<vmem>>, vector<1x4x768xf32>,
    return
  }
  func.func @transform_0(%arg0: i32) -> (i32, i32, i32) {
    %c0_i32 = arith.constant 0 : i32
    %c0_i32_0 = arith.constant 0 : i32
    %c0_i32_1 = arith.constant 0 : i32
    return %arg0, %c0_i32, %c0_i32_0 : i32, i32, i32
  }
  func.func @transform_1(%arg0: i32) -> (i32, i32) {
    %c0_i32 = arith.constant 0 : i32
    %c0_i32_0 = arith.constant 0 : i32
    %c0_i32_1 = arith.constant 0 : i32
    return %c0_i32, %c0_i32_0 : i32, i32
  }
  func.func @transform_2(%arg0: i32) -> (i32, i32) {
    %c0_i32 = arith.constant 0 : i32
    %c0_i32_0 = arith.constant 0 : i32
    %c0_i32_1 = arith.constant 0 : i32
    return %c0_i32, %c0_i32_0 : i32, i32
  }
  func.func @transform_3(%arg0: i32) -> (i32, i32) {
    %c0_i32 = arith.constant 0 : i32
    %c0_i32_0 = arith.constant 0 : i32
    %c0_i32_1 = arith.constant 0 : i32
    return %c0_i32, %c0_i32_0 : i32, i32
  }
  func.func @transform_4(%arg0: i32) -> (i32, i32) {
    %c0_i32 = arith.constant 0 : i32
    %c0_i32_0 = arith.constant 0 : i32
    %c0_i32_1 = arith.constant 0 : i32
    return %c0_i32, %c0_i32_0 : i32, i32
  }
  func.func @transform_5(%arg0: i32) -> (i32, i32) {
    %c0_i32 = arith.constant 0 : i32
    %c0_i32_0 = arith.constant 0 : i32
    %c0_i32_1 = arith.constant 0 : i32
    return %c0_i32, %c0_i32_0 : i32, i32
  }
  func.func @transform_6(%arg0: i32) -> (i32, i32, i32) {
    %c0_i32 = arith.constant 0 : i32
    %c0_i32_0 = arith.constant 0 : i32
    %c0_i32_1 = arith.constant 0 : i32
    return %arg0, %c0_i32, %c0_i32_0 : i32, i32, i32
  }
}

module attributes {stable_mosaic.version = 11 : i64} {
  func.func @conv_bn_relu_kernel(%arg0: i32, %arg1: memref<1x4x1152xf32, #tpu.memory_space<vmem>>, %arg2: memref<8x40xf32, #tpu.memory_space<vmem>>, %arg3: memref<8x1xf32, #tpu.memory_space<vmem>>, %arg4: memref<8x1xf32, #tpu.memory_space<vmem>>, %arg5: memref<8x1xf32, #tpu.memory_space<vmem>>, %arg6: memref<1x768xf32, #tpu.memory_space<vmem>>, %arg7: memref<1x8x768xf32, #tpu.memory_space<vmem>>, %arg8: memref<40x768xf32, #tpu.memory_space<vmem>>) attributes {dimension_semantics = [#tpu.dimension_semantics<parallel>], iteration_bounds = array<i64: 2>, scalar_prefetch = 0 : i64, scratch_operands = 1 : i64, tpu.core_type = #tpu.core_type<tc>, window_params = [{transform_indices = @transform_0, window_bounds = array<i64: 1, 4, 1152>}, {pipeline_mode = #tpu.pipeline_mode<synchronous>, transform_indices = @transform_1, window_bounds = array<i64: 8, 40>}, {pipeline_mode = #tpu.pipeline_mode<synchronous>, transform_indices = @transform_2, window_bounds = array<i64: 8, 1>}, {pipeline_mode = #tpu.pipeline_mode<synchronous>, transform_indices = @transform_3, window_bounds = array<i64: 8, 1>}, {pipeline_mode = #tpu.pipeline_mode<synchronous>, transform_indices = @transform_4, window_bounds = array<i64: 8, 1>}, {pipeline_mode = #tpu.pipeline_mode<synchronous>, transform_indices = @transform_5, window_bounds = array<i64: 1, 768>}, {transform_indices = @transform_6, window_bounds = array<i64: 1, 8, 768>}]} {
    %c0 = arith.constant 0 : index
    %c0_0 = arith.constant 0 : index
    %c0_1 = arith.constant 0 : index
    %0 = vector.load %arg1[%c0, %c0_0, %c0_1] : memref<1x4x1152xf32, #tpu.memory_space<vmem>>, vector<1x4x768xf32>
    %1 = vector.shape_cast %0 : vector<1x4x768xf32> to vector<4x768xf32>
    %c0_2 = arith.constant 0 : index
    %c0_3 = arith.constant 0 : index
    %2 = vector.load %arg8[%c0_2, %c0_3] : memref<40x768xf32, #tpu.memory_space<vmem>>, vector<4x768xf32>
    tpu.vector_store %arg8[%c0_2, %c0_3], %1 {strides = array<i32>} : memref<40x768xf32, #tpu.memory_space<vmem>>, vector<4x768xf32>,
    %c0_4 = arith.constant 0 : index
    %c0_5 = arith.constant 0 : index
    %c1 = arith.constant 1 : index
    %3 = vector.load %arg1[%c0_4, %c0_5, %c1] : memref<1x4x1152xf32, #tpu.memory_space<vmem>>, vector<1x4x768xf32>
    %4 = vector.shape_cast %3 : vector<1x4x768xf32> to vector<4x768xf32>
    %c4 = arith.constant 4 : index
    %c0_6 = arith.constant 0 : index
    %5 = vector.load %arg8[%c4, %c0_6] : memref<40x768xf32, #tpu.memory_space<vmem>>, vector<4x768xf32>
    tpu.vector_store %arg8[%c4, %c0_6], %4 {strides = array<i32>} : memref<40x768xf32, #tpu.memory_space<vmem>>, vector<4x768xf32>,
    %c0_7 = arith.constant 0 : index
    %c0_8 = arith.constant 0 : index
    %c2 = arith.constant 2 : index
    %6 = vector.load %arg1[%c0_7, %c0_8, %c2] : memref<1x4x1152xf32, #tpu.memory_space<vmem>>, vector<1x4x768xf32>
    %7 = vector.shape_cast %6 : vector<1x4x768xf32> to vector<4x768xf32>
    %c8 = arith.constant 8 : index
    %c0_9 = arith.constant 0 : index
    %8 = vector.load %arg8[%c8, %c0_9] : memref<40x768xf32, #tpu.memory_space<vmem>>, vector<4x768xf32>
    tpu.vector_store %arg8[%c8, %c0_9], %7 {strides = array<i32>} : memref<40x768xf32, #tpu.memory_space<vmem>>, vector<4x768xf32>,
    %c0_10 = arith.constant 0 : index
    %c0_11 = arith.constant 0 : index
    %c18 = arith.constant 18 : index
    %9 = vector.load %arg1[%c0_10, %c0_11, %c18] : memref<1x4x1152xf32, #tpu.memory_space<vmem>>, vector<1x4x768xf32>
    %10 = vector.shape_cast %9 : vector<1x4x768xf32> to vector<4x768xf32>
    %c12 = arith.constant 12 : index
    %c0_12 = arith.constant 0 : index
    %11 = vector.load %arg8[%c12, %c0_12] : memref<40x768xf32, #tpu.memory_space<vmem>>, vector<4x768xf32>
    tpu.vector_store %arg8[%c12, %c0_12], %10 {strides = array<i32>} : memref<40x768xf32, #tpu.memory_space<vmem>>, vector<4x768xf32>,
    %c0_13 = arith.constant 0 : index
    %c0_14 = arith.constant 0 : index
    %c19 = arith.constant 19 : index
    %12 = vector.load %arg1[%c0_13, %c0_14, %c19] : memref<1x4x1152xf32, #tpu.memory_space<vmem>>, vector<1x4x768xf32>
    %13 = vector.shape_cast %12 : vector<1x4x768xf32> to vector<4x768xf32>
    %c16 = arith.constant 16 : index
    %c0_15 = arith.constant 0 : index
    %14 = vector.load %arg8[%c16, %c0_15] : memref<40x768xf32, #tpu.memory_space<vmem>>, vector<4x768xf32>
    tpu.vector_store %arg8[%c16, %c0_15], %13 {strides = array<i32>} : memref<40x768xf32, #tpu.memory_space<vmem>>, vector<4x768xf32>,
    %c0_16 = arith.constant 0 : index
    %c0_17 = arith.constant 0 : index
    %c20 = arith.constant 20 : index
    %15 = vector.load %arg1[%c0_16, %c0_17, %c20] : memref<1x4x1152xf32, #tpu.memory_space<vmem>>, vector<1x4x768xf32>
    %16 = vector.shape_cast %15 : vector<1x4x768xf32> to vector<4x768xf32>
    %c20_18 = arith.constant 20 : index
    %c0_19 = arith.constant 0 : index
    %17 = vector.load %arg8[%c20_18, %c0_19] : memref<40x768xf32, #tpu.memory_space<vmem>>, vector<4x768xf32>
    tpu.vector_store %arg8[%c20_18, %c0_19], %16 {strides = array<i32>} : memref<40x768xf32, #tpu.memory_space<vmem>>, vector<4x768xf32>,
    %c0_20 = arith.constant 0 : index
    %c0_21 = arith.constant 0 : index
    %c36 = arith.constant 36 : index
    %18 = vector.load %arg1[%c0_20, %c0_21, %c36] : memref<1x4x1152xf32, #tpu.memory_space<vmem>>, vector<1x4x768xf32>
    %19 = vector.shape_cast %18 : vector<1x4x768xf32> to vector<4x768xf32>
    %c24 = arith.constant 24 : index
    %c0_22 = arith.constant 0 : index
    %20 = vector.load %arg8[%c24, %c0_22] : memref<40x768xf32, #tpu.memory_space<vmem>>, vector<4x768xf32>
    tpu.vector_store %arg8[%c24, %c0_22], %19 {strides = array<i32>} : memref<40x768xf32, #tpu.memory_space<vmem>>, vector<4x768xf32>,
    %c0_23 = arith.constant 0 : index
    %c0_24 = arith.constant 0 : index
    %c37 = arith.constant 37 : index
    %21 = vector.load %arg1[%c0_23, %c0_24, %c37] : memref<1x4x1152xf32, #tpu.memory_space<vmem>>, vector<1x4x768xf32>
    %22 = vector.shape_cast %21 : vector<1x4x768xf32> to vector<4x768xf32>
    %c28 = arith.constant 28 : index
    %c0_25 = arith.constant 0 : index
    %23 = vector.load %arg8[%c28, %c0_25] : memref<40x768xf32, #tpu.memory_space<vmem>>, vector<4x768xf32>
    tpu.vector_store %arg8[%c28, %c0_25], %22 {strides = array<i32>} : memref<40x768xf32, #tpu.memory_space<vmem>>, vector<4x768xf32>,
    %c0_26 = arith.constant 0 : index
    %c0_27 = arith.constant 0 : index
    %c38 = arith.constant 38 : index
    %24 = vector.load %arg1[%c0_26, %c0_27, %c38] : memref<1x4x1152xf32, #tpu.memory_space<vmem>>, vector<1x4x768xf32>
    %25 = vector.shape_cast %24 : vector<1x4x768xf32> to vector<4x768xf32>
    %c32 = arith.constant 32 : index
    %c0_28 = arith.constant 0 : index
    %26 = vector.load %arg8[%c32, %c0_28] : memref<40x768xf32, #tpu.memory_space<vmem>>, vector<4x768xf32>
    tpu.vector_store %arg8[%c32, %c0_28], %25 {strides = array<i32>} : memref<40x768xf32, #tpu.memory_space<vmem>>, vector<4x768xf32>,
    %cst = arith.constant 0.000000e+00 : f32
    %27 = vector.broadcast %cst : f32 to vector<4x768xf32>
    %c36_29 = arith.constant 36 : index
    %c0_30 = arith.constant 0 : index
    %28 = vector.load %arg8[%c36_29, %c0_30] : memref<40x768xf32, #tpu.memory_space<vmem>>, vector<4x768xf32>
    tpu.vector_store %arg8[%c36_29, %c0_30], %27 {strides = array<i32>} : memref<40x768xf32, #tpu.memory_space<vmem>>, vector<4x768xf32>,
    %c0_31 = arith.constant 0 : index
    %c0_32 = arith.constant 0 : index
    %29 = vector.load %arg2[%c0_31, %c0_32] : memref<8x40xf32, #tpu.memory_space<vmem>>, vector<8x40xf32>
    %c0_33 = arith.constant 0 : index
    %c0_34 = arith.constant 0 : index
    %30 = vector.load %arg8[%c0_33, %c0_34] : memref<40x768xf32, #tpu.memory_space<vmem>>, vector<40x768xf32>
    %cst_35 = arith.constant dense<0.000000e+00> : vector<8x768xf32>
    %31 = tpu.matmul %29, %30, %cst_35 {dimension_numbers = #tpu.dot_dimension_numbers<[1], [0], [0], [1], [0, 0, 1, 1], [], []>} : vector<8x40xf32>, vector<40x768xf32>, vector<8x768xf32> -> vector<8x768xf32>
    %c0_36 = arith.constant 0 : index
    %c0_37 = arith.constant 0 : index
    %32 = vector.load %arg3[%c0_36, %c0_37] : memref<8x1xf32, #tpu.memory_space<vmem>>, vector<8x1xf32>
    %33 = vector.broadcast %32 : vector<8x1xf32> to vector<8x768xf32>
    %34 = arith.addf %31, %33 : vector<8x768xf32>
    %cst_38 = arith.constant 0.000000e+00 : f32
    %35 = vector.broadcast %cst_38 : f32 to vector<8x768xf32>
    %36 = arith.maximumf %34, %35 : vector<8x768xf32>
    %c0_39 = arith.constant 0 : index
    %c0_40 = arith.constant 0 : index
    %37 = vector.load %arg6[%c0_39, %c0_40] : memref<1x768xf32, #tpu.memory_space<vmem>>, vector<1x768xf32>
    %38 = vector.broadcast %37 : vector<1x768xf32> to vector<8x768xf32>
    %39 = arith.mulf %36, %38 : vector<8x768xf32>
    %cst_41 = arith.constant dense<0.000000e+00> : vector<8xf32>
    %40 = vector.multi_reduction <add>, %39, %cst_41 [1] : vector<8x768xf32> to vector<8xf32>
    %41 = vector.shape_cast %40 : vector<8xf32> to vector<8x1xf32>
    %cst_42 = arith.constant 0.001953125 : f32
    %42 = vector.broadcast %cst_42 : f32 to vector<8x1xf32>
    %43 = arith.mulf %41, %42 : vector<8x1xf32>
    %44 = vector.broadcast %43 : vector<8x1xf32> to vector<8x768xf32>
    %45 = arith.subf %36, %44 : vector<8x768xf32>
    %46 = vector.broadcast %37 : vector<1x768xf32> to vector<8x768xf32>
    %47 = arith.mulf %45, %46 : vector<8x768xf32>
    %48 = arith.mulf %47, %47 : vector<8x768xf32>
    %cst_43 = arith.constant dense<0.000000e+00> : vector<8xf32>
    %49 = vector.multi_reduction <add>, %48, %cst_43 [1] : vector<8x768xf32> to vector<8xf32>
    %50 = vector.shape_cast %49 : vector<8xf32> to vector<8x1xf32>
    %cst_44 = arith.constant 0.001953125 : f32
    %51 = vector.broadcast %cst_44 : f32 to vector<8x1xf32>
    %52 = arith.mulf %50, %51 : vector<8x1xf32>
    %c0_45 = arith.constant 0 : index
    %c0_46 = arith.constant 0 : index
    %53 = vector.load %arg4[%c0_45, %c0_46] : memref<8x1xf32, #tpu.memory_space<vmem>>, vector<8x1xf32>
    %cst_47 = arith.constant 9.99999974E-6 : f32
    %54 = vector.broadcast %cst_47 : f32 to vector<8x1xf32>
    %55 = arith.addf %52, %54 : vector<8x1xf32>
    %56 = math.rsqrt %55 : vector<8x1xf32>
    %57 = arith.mulf %53, %56 : vector<8x1xf32>
    %58 = vector.broadcast %43 : vector<8x1xf32> to vector<8x768xf32>
    %59 = arith.subf %36, %58 : vector<8x768xf32>
    %60 = vector.broadcast %57 : vector<8x1xf32> to vector<8x768xf32>
    %61 = arith.mulf %59, %60 : vector<8x768xf32>
    %c0_48 = arith.constant 0 : index
    %c0_49 = arith.constant 0 : index
    %62 = vector.load %arg5[%c0_48, %c0_49] : memref<8x1xf32, #tpu.memory_space<vmem>>, vector<8x1xf32>
    %63 = vector.broadcast %62 : vector<8x1xf32> to vector<8x768xf32>
    %64 = arith.addf %61, %63 : vector<8x768xf32>
    %c0_50 = arith.constant 0 : index
    %c0_51 = arith.constant 0 : index
    %c0_52 = arith.constant 0 : index
    %65 = vector.load %arg7[%c0_50, %c0_51, %c0_52] : memref<1x8x768xf32, #tpu.memory_space<vmem>>, vector<1x8x768xf32>
    %66 = vector.shape_cast %65 : vector<1x8x768xf32> to vector<8x768xf32>
    %67 = vector.shape_cast %64 : vector<8x768xf32> to vector<1x8x768xf32>
    tpu.vector_store %arg7[%c0_50, %c0_51, %c0_52], %67 {strides = array<i32>} : memref<1x8x768xf32, #tpu.memory_space<vmem>>, vector<1x8x768xf32>,
    return
  }
  func.func @transform_0(%arg0: i32) -> (i32, i32, i32) {
    %c0_i32 = arith.constant 0 : i32
    %c0_i32_0 = arith.constant 0 : i32
    %c0_i32_1 = arith.constant 0 : i32
    return %arg0, %c0_i32, %c0_i32_0 : i32, i32, i32
  }
  func.func @transform_1(%arg0: i32) -> (i32, i32) {
    %c0_i32 = arith.constant 0 : i32
    %c0_i32_0 = arith.constant 0 : i32
    %c0_i32_1 = arith.constant 0 : i32
    return %c0_i32, %c0_i32_0 : i32, i32
  }
  func.func @transform_2(%arg0: i32) -> (i32, i32) {
    %c0_i32 = arith.constant 0 : i32
    %c0_i32_0 = arith.constant 0 : i32
    %c0_i32_1 = arith.constant 0 : i32
    return %c0_i32, %c0_i32_0 : i32, i32
  }
  func.func @transform_3(%arg0: i32) -> (i32, i32) {
    %c0_i32 = arith.constant 0 : i32
    %c0_i32_0 = arith.constant 0 : i32
    %c0_i32_1 = arith.constant 0 : i32
    return %c0_i32, %c0_i32_0 : i32, i32
  }
  func.func @transform_4(%arg0: i32) -> (i32, i32) {
    %c0_i32 = arith.constant 0 : i32
    %c0_i32_0 = arith.constant 0 : i32
    %c0_i32_1 = arith.constant 0 : i32
    return %c0_i32, %c0_i32_0 : i32, i32
  }
  func.func @transform_5(%arg0: i32) -> (i32, i32) {
    %c0_i32 = arith.constant 0 : i32
    %c0_i32_0 = arith.constant 0 : i32
    %c0_i32_1 = arith.constant 0 : i32
    return %c0_i32, %c0_i32_0 : i32, i32
  }
  func.func @transform_6(%arg0: i32) -> (i32, i32, i32) {
    %c0_i32 = arith.constant 0 : i32
    %c0_i32_0 = arith.constant 0 : i32
    %c0_i32_1 = arith.constant 0 : i32
    return %arg0, %c0_i32, %c0_i32_0 : i32, i32, i32
  }
}

module attributes {stable_mosaic.version = 11 : i64} {
  func.func @conv_bn_relu_kernel(%arg0: i32, %arg1: memref<1x8x1152xf32, #tpu.memory_space<vmem>>, %arg2: memref<8x72xf32, #tpu.memory_space<vmem>>, %arg3: memref<8x1xf32, #tpu.memory_space<vmem>>, %arg4: memref<8x1xf32, #tpu.memory_space<vmem>>, %arg5: memref<8x1xf32, #tpu.memory_space<vmem>>, %arg6: memref<1x768xf32, #tpu.memory_space<vmem>>, %arg7: memref<1x8x768xf32, #tpu.memory_space<vmem>>, %arg8: memref<72x768xf32, #tpu.memory_space<vmem>>) attributes {dimension_semantics = [#tpu.dimension_semantics<parallel>], iteration_bounds = array<i64: 2>, scalar_prefetch = 0 : i64, scratch_operands = 1 : i64, tpu.core_type = #tpu.core_type<tc>, window_params = [{transform_indices = @transform_0, window_bounds = array<i64: 1, 8, 1152>}, {pipeline_mode = #tpu.pipeline_mode<synchronous>, transform_indices = @transform_1, window_bounds = array<i64: 8, 72>}, {pipeline_mode = #tpu.pipeline_mode<synchronous>, transform_indices = @transform_2, window_bounds = array<i64: 8, 1>}, {pipeline_mode = #tpu.pipeline_mode<synchronous>, transform_indices = @transform_3, window_bounds = array<i64: 8, 1>}, {pipeline_mode = #tpu.pipeline_mode<synchronous>, transform_indices = @transform_4, window_bounds = array<i64: 8, 1>}, {pipeline_mode = #tpu.pipeline_mode<synchronous>, transform_indices = @transform_5, window_bounds = array<i64: 1, 768>}, {transform_indices = @transform_6, window_bounds = array<i64: 1, 8, 768>}]} {
    %c0 = arith.constant 0 : index
    %c0_0 = arith.constant 0 : index
    %c0_1 = arith.constant 0 : index
    %0 = vector.load %arg1[%c0, %c0_0, %c0_1] : memref<1x8x1152xf32, #tpu.memory_space<vmem>>, vector<1x8x768xf32>
    %1 = vector.shape_cast %0 : vector<1x8x768xf32> to vector<8x768xf32>
    %c0_2 = arith.constant 0 : index
    %c0_3 = arith.constant 0 : index
    %2 = vector.load %arg8[%c0_2, %c0_3] : memref<72x768xf32, #tpu.memory_space<vmem>>, vector<8x768xf32>
    tpu.vector_store %arg8[%c0_2, %c0_3], %1 {strides = array<i32>} : memref<72x768xf32, #tpu.memory_space<vmem>>, vector<8x768xf32>,
    %c0_4 = arith.constant 0 : index
    %c0_5 = arith.constant 0 : index
    %c1 = arith.constant 1 : index
    %3 = vector.load %arg1[%c0_4, %c0_5, %c1] : memref<1x8x1152xf32, #tpu.memory_space<vmem>>, vector<1x8x768xf32>
    %4 = vector.shape_cast %3 : vector<1x8x768xf32> to vector<8x768xf32>
    %c8 = arith.constant 8 : index
    %c0_6 = arith.constant 0 : index
    %5 = vector.load %arg8[%c8, %c0_6] : memref<72x768xf32, #tpu.memory_space<vmem>>, vector<8x768xf32>
    tpu.vector_store %arg8[%c8, %c0_6], %4 {strides = array<i32>} : memref<72x768xf32, #tpu.memory_space<vmem>>, vector<8x768xf32>,
    %c0_7 = arith.constant 0 : index
    %c0_8 = arith.constant 0 : index
    %c2 = arith.constant 2 : index
    %6 = vector.load %arg1[%c0_7, %c0_8, %c2] : memref<1x8x1152xf32, #tpu.memory_space<vmem>>, vector<1x8x768xf32>
    %7 = vector.shape_cast %6 : vector<1x8x768xf32> to vector<8x768xf32>
    %c16 = arith.constant 16 : index
    %c0_9 = arith.constant 0 : index
    %8 = vector.load %arg8[%c16, %c0_9] : memref<72x768xf32, #tpu.memory_space<vmem>>, vector<8x768xf32>
    tpu.vector_store %arg8[%c16, %c0_9], %7 {strides = array<i32>} : memref<72x768xf32, #tpu.memory_space<vmem>>, vector<8x768xf32>,
    %c0_10 = arith.constant 0 : index
    %c0_11 = arith.constant 0 : index
    %c18 = arith.constant 18 : index
    %9 = vector.load %arg1[%c0_10, %c0_11, %c18] : memref<1x8x1152xf32, #tpu.memory_space<vmem>>, vector<1x8x768xf32>
    %10 = vector.shape_cast %9 : vector<1x8x768xf32> to vector<8x768xf32>
    %c24 = arith.constant 24 : index
    %c0_12 = arith.constant 0 : index
    %11 = vector.load %arg8[%c24, %c0_12] : memref<72x768xf32, #tpu.memory_space<vmem>>, vector<8x768xf32>
    tpu.vector_store %arg8[%c24, %c0_12], %10 {strides = array<i32>} : memref<72x768xf32, #tpu.memory_space<vmem>>, vector<8x768xf32>,
    %c0_13 = arith.constant 0 : index
    %c0_14 = arith.constant 0 : index
    %c19 = arith.constant 19 : index
    %12 = vector.load %arg1[%c0_13, %c0_14, %c19] : memref<1x8x1152xf32, #tpu.memory_space<vmem>>, vector<1x8x768xf32>
    %13 = vector.shape_cast %12 : vector<1x8x768xf32> to vector<8x768xf32>
    %c32 = arith.constant 32 : index
    %c0_15 = arith.constant 0 : index
    %14 = vector.load %arg8[%c32, %c0_15] : memref<72x768xf32, #tpu.memory_space<vmem>>, vector<8x768xf32>
    tpu.vector_store %arg8[%c32, %c0_15], %13 {strides = array<i32>} : memref<72x768xf32, #tpu.memory_space<vmem>>, vector<8x768xf32>,
    %c0_16 = arith.constant 0 : index
    %c0_17 = arith.constant 0 : index
    %c20 = arith.constant 20 : index
    %15 = vector.load %arg1[%c0_16, %c0_17, %c20] : memref<1x8x1152xf32, #tpu.memory_space<vmem>>, vector<1x8x768xf32>
    %16 = vector.shape_cast %15 : vector<1x8x768xf32> to vector<8x768xf32>
    %c40 = arith.constant 40 : index
    %c0_18 = arith.constant 0 : index
    %17 = vector.load %arg8[%c40, %c0_18] : memref<72x768xf32, #tpu.memory_space<vmem>>, vector<8x768xf32>
    tpu.vector_store %arg8[%c40, %c0_18], %16 {strides = array<i32>} : memref<72x768xf32, #tpu.memory_space<vmem>>, vector<8x768xf32>,
    %c0_19 = arith.constant 0 : index
    %c0_20 = arith.constant 0 : index
    %c36 = arith.constant 36 : index
    %18 = vector.load %arg1[%c0_19, %c0_20, %c36] : memref<1x8x1152xf32, #tpu.memory_space<vmem>>, vector<1x8x768xf32>
    %19 = vector.shape_cast %18 : vector<1x8x768xf32> to vector<8x768xf32>
    %c48 = arith.constant 48 : index
    %c0_21 = arith.constant 0 : index
    %20 = vector.load %arg8[%c48, %c0_21] : memref<72x768xf32, #tpu.memory_space<vmem>>, vector<8x768xf32>
    tpu.vector_store %arg8[%c48, %c0_21], %19 {strides = array<i32>} : memref<72x768xf32, #tpu.memory_space<vmem>>, vector<8x768xf32>,
    %c0_22 = arith.constant 0 : index
    %c0_23 = arith.constant 0 : index
    %c37 = arith.constant 37 : index
    %21 = vector.load %arg1[%c0_22, %c0_23, %c37] : memref<1x8x1152xf32, #tpu.memory_space<vmem>>, vector<1x8x768xf32>
    %22 = vector.shape_cast %21 : vector<1x8x768xf32> to vector<8x768xf32>
    %c56 = arith.constant 56 : index
    %c0_24 = arith.constant 0 : index
    %23 = vector.load %arg8[%c56, %c0_24] : memref<72x768xf32, #tpu.memory_space<vmem>>, vector<8x768xf32>
    tpu.vector_store %arg8[%c56, %c0_24], %22 {strides = array<i32>} : memref<72x768xf32, #tpu.memory_space<vmem>>, vector<8x768xf32>,
    %c0_25 = arith.constant 0 : index
    %c0_26 = arith.constant 0 : index
    %c38 = arith.constant 38 : index
    %24 = vector.load %arg1[%c0_25, %c0_26, %c38] : memref<1x8x1152xf32, #tpu.memory_space<vmem>>, vector<1x8x768xf32>
    %25 = vector.shape_cast %24 : vector<1x8x768xf32> to vector<8x768xf32>
    %c64 = arith.constant 64 : index
    %c0_27 = arith.constant 0 : index
    %26 = vector.load %arg8[%c64, %c0_27] : memref<72x768xf32, #tpu.memory_space<vmem>>, vector<8x768xf32>
    tpu.vector_store %arg8[%c64, %c0_27], %25 {strides = array<i32>} : memref<72x768xf32, #tpu.memory_space<vmem>>, vector<8x768xf32>,
    %c0_28 = arith.constant 0 : index
    %c0_29 = arith.constant 0 : index
    %27 = vector.load %arg2[%c0_28, %c0_29] : memref<8x72xf32, #tpu.memory_space<vmem>>, vector<8x72xf32>
    %c0_30 = arith.constant 0 : index
    %c0_31 = arith.constant 0 : index
    %28 = vector.load %arg8[%c0_30, %c0_31] : memref<72x768xf32, #tpu.memory_space<vmem>>, vector<72x768xf32>
    %cst = arith.constant dense<0.000000e+00> : vector<8x768xf32>
    %29 = tpu.matmul %27, %28, %cst {dimension_numbers = #tpu.dot_dimension_numbers<[1], [0], [0], [1], [0, 0, 1, 1], [], []>} : vector<8x72xf32>, vector<72x768xf32>, vector<8x768xf32> -> vector<8x768xf32>
    %c0_32 = arith.constant 0 : index
    %c0_33 = arith.constant 0 : index
    %30 = vector.load %arg3[%c0_32, %c0_33] : memref<8x1xf32, #tpu.memory_space<vmem>>, vector<8x1xf32>
    %31 = vector.broadcast %30 : vector<8x1xf32> to vector<8x768xf32>
    %32 = arith.addf %29, %31 : vector<8x768xf32>
    %cst_34 = arith.constant 0.000000e+00 : f32
    %33 = vector.broadcast %cst_34 : f32 to vector<8x768xf32>
    %34 = arith.maximumf %32, %33 : vector<8x768xf32>
    %c0_35 = arith.constant 0 : index
    %c0_36 = arith.constant 0 : index
    %35 = vector.load %arg6[%c0_35, %c0_36] : memref<1x768xf32, #tpu.memory_space<vmem>>, vector<1x768xf32>
    %36 = vector.broadcast %35 : vector<1x768xf32> to vector<8x768xf32>
    %37 = arith.mulf %34, %36 : vector<8x768xf32>
    %cst_37 = arith.constant dense<0.000000e+00> : vector<8xf32>
    %38 = vector.multi_reduction <add>, %37, %cst_37 [1] : vector<8x768xf32> to vector<8xf32>
    %39 = vector.shape_cast %38 : vector<8xf32> to vector<8x1xf32>
    %cst_38 = arith.constant 0.001953125 : f32
    %40 = vector.broadcast %cst_38 : f32 to vector<8x1xf32>
    %41 = arith.mulf %39, %40 : vector<8x1xf32>
    %42 = vector.broadcast %41 : vector<8x1xf32> to vector<8x768xf32>
    %43 = arith.subf %34, %42 : vector<8x768xf32>
    %44 = vector.broadcast %35 : vector<1x768xf32> to vector<8x768xf32>
    %45 = arith.mulf %43, %44 : vector<8x768xf32>
    %46 = arith.mulf %45, %45 : vector<8x768xf32>
    %cst_39 = arith.constant dense<0.000000e+00> : vector<8xf32>
    %47 = vector.multi_reduction <add>, %46, %cst_39 [1] : vector<8x768xf32> to vector<8xf32>
    %48 = vector.shape_cast %47 : vector<8xf32> to vector<8x1xf32>
    %cst_40 = arith.constant 0.001953125 : f32
    %49 = vector.broadcast %cst_40 : f32 to vector<8x1xf32>
    %50 = arith.mulf %48, %49 : vector<8x1xf32>
    %c0_41 = arith.constant 0 : index
    %c0_42 = arith.constant 0 : index
    %51 = vector.load %arg4[%c0_41, %c0_42] : memref<8x1xf32, #tpu.memory_space<vmem>>, vector<8x1xf32>
    %cst_43 = arith.constant 9.99999974E-6 : f32
    %52 = vector.broadcast %cst_43 : f32 to vector<8x1xf32>
    %53 = arith.addf %50, %52 : vector<8x1xf32>
    %54 = math.rsqrt %53 : vector<8x1xf32>
    %55 = arith.mulf %51, %54 : vector<8x1xf32>
    %56 = vector.broadcast %41 : vector<8x1xf32> to vector<8x768xf32>
    %57 = arith.subf %34, %56 : vector<8x768xf32>
    %58 = vector.broadcast %55 : vector<8x1xf32> to vector<8x768xf32>
    %59 = arith.mulf %57, %58 : vector<8x768xf32>
    %c0_44 = arith.constant 0 : index
    %c0_45 = arith.constant 0 : index
    %60 = vector.load %arg5[%c0_44, %c0_45] : memref<8x1xf32, #tpu.memory_space<vmem>>, vector<8x1xf32>
    %61 = vector.broadcast %60 : vector<8x1xf32> to vector<8x768xf32>
    %62 = arith.addf %59, %61 : vector<8x768xf32>
    %c0_46 = arith.constant 0 : index
    %c0_47 = arith.constant 0 : index
    %c0_48 = arith.constant 0 : index
    %63 = vector.load %arg7[%c0_46, %c0_47, %c0_48] : memref<1x8x768xf32, #tpu.memory_space<vmem>>, vector<1x8x768xf32>
    %64 = vector.shape_cast %63 : vector<1x8x768xf32> to vector<8x768xf32>
    %65 = vector.shape_cast %62 : vector<8x768xf32> to vector<1x8x768xf32>
    tpu.vector_store %arg7[%c0_46, %c0_47, %c0_48], %65 {strides = array<i32>} : memref<1x8x768xf32, #tpu.memory_space<vmem>>, vector<1x8x768xf32>,
    return
  }
  func.func @transform_0(%arg0: i32) -> (i32, i32, i32) {
    %c0_i32 = arith.constant 0 : i32
    %c0_i32_0 = arith.constant 0 : i32
    %c0_i32_1 = arith.constant 0 : i32
    return %arg0, %c0_i32, %c0_i32_0 : i32, i32, i32
  }
  func.func @transform_1(%arg0: i32) -> (i32, i32) {
    %c0_i32 = arith.constant 0 : i32
    %c0_i32_0 = arith.constant 0 : i32
    %c0_i32_1 = arith.constant 0 : i32
    return %c0_i32, %c0_i32_0 : i32, i32
  }
  func.func @transform_2(%arg0: i32) -> (i32, i32) {
    %c0_i32 = arith.constant 0 : i32
    %c0_i32_0 = arith.constant 0 : i32
    %c0_i32_1 = arith.constant 0 : i32
    return %c0_i32, %c0_i32_0 : i32, i32
  }
  func.func @transform_3(%arg0: i32) -> (i32, i32) {
    %c0_i32 = arith.constant 0 : i32
    %c0_i32_0 = arith.constant 0 : i32
    %c0_i32_1 = arith.constant 0 : i32
    return %c0_i32, %c0_i32_0 : i32, i32
  }
  func.func @transform_4(%arg0: i32) -> (i32, i32) {
    %c0_i32 = arith.constant 0 : i32
    %c0_i32_0 = arith.constant 0 : i32
    %c0_i32_1 = arith.constant 0 : i32
    return %c0_i32, %c0_i32_0 : i32, i32
  }
  func.func @transform_5(%arg0: i32) -> (i32, i32) {
    %c0_i32 = arith.constant 0 : i32
    %c0_i32_0 = arith.constant 0 : i32
    %c0_i32_1 = arith.constant 0 : i32
    return %c0_i32, %c0_i32_0 : i32, i32
  }
  func.func @transform_6(%arg0: i32) -> (i32, i32, i32) {
    %c0_i32 = arith.constant 0 : i32
    %c0_i32_0 = arith.constant 0 : i32
    %c0_i32_1 = arith.constant 0 : i32
    return %arg0, %c0_i32, %c0_i32_0 : i32, i32, i32
  }
}

module attributes {stable_mosaic.version = 11 : i64} {
  func.func @mlp_kernel(%arg0: i32, %arg1: memref<4x2048xf32, #tpu.memory_space<vmem>>, %arg2: memref<2048x512xbf16, #tpu.memory_space<vmem>>, %arg3: memref<1x512xf32, #tpu.memory_space<vmem>>, %arg4: memref<512x512xbf16, #tpu.memory_space<vmem>>, %arg5: memref<1x512xf32, #tpu.memory_space<vmem>>, %arg6: memref<512x128xf32, #tpu.memory_space<vmem>>, %arg7: memref<1x128xf32, #tpu.memory_space<vmem>>, %arg8: memref<4x128xf32, #tpu.memory_space<vmem>>, %arg9: memref<4x512xf32, #tpu.memory_space<vmem>>) attributes {dimension_semantics = [#tpu.dimension_semantics<arbitrary>], iteration_bounds = array<i64: 1>, scalar_prefetch = 0 : i64, scratch_operands = 1 : i64, tpu.core_type = #tpu.core_type<tc>, window_params = [{transform_indices = @transform_0, window_bounds = array<i64: 4, 2048>}, {transform_indices = @transform_1, window_bounds = array<i64: 2048, 512>}, {pipeline_mode = #tpu.pipeline_mode<synchronous>, transform_indices = @transform_2, window_bounds = array<i64: 1, 512>}, {pipeline_mode = #tpu.pipeline_mode<synchronous>, transform_indices = @transform_3, window_bounds = array<i64: 512, 512>}, {pipeline_mode = #tpu.pipeline_mode<synchronous>, transform_indices = @transform_4, window_bounds = array<i64: 1, 512>}, {pipeline_mode = #tpu.pipeline_mode<synchronous>, transform_indices = @transform_5, window_bounds = array<i64: 512, 128>}, {pipeline_mode = #tpu.pipeline_mode<synchronous>, transform_indices = @transform_6, window_bounds = array<i64: 1, 128>}, {pipeline_mode = #tpu.pipeline_mode<synchronous>, transform_indices = @transform_7, window_bounds = array<i64: 4, 128>}]} {
    %c0_i32 = arith.constant 0 : i32
    %0 = arith.cmpi eq, %arg0, %c0_i32 : i32
    %1 = arith.extui %0 : i1 to i32
    %c0_i32_0 = arith.constant 0 : i32
    %2 = arith.cmpi ne, %1, %c0_i32_0 : i32
    scf.if %2 {
      %cst_10 = arith.constant 0.000000e+00 : f32
      %13 = vector.broadcast %cst_10 : f32 to vector<4x512xf32>
      %c0_11 = arith.constant 0 : index
      %c0_12 = arith.constant 0 : index
      %14 = vector.load %arg9[%c0_11, %c0_12] : memref<4x512xf32, #tpu.memory_space<vmem>>, vector<4x512xf32>
      tpu.vector_store %arg9[%c0_11, %c0_12], %13 {strides = array<i32>} : memref<4x512xf32, #tpu.memory_space<vmem>>, vector<4x512xf32>,
    } else {
    }
    %c0 = arith.constant 0 : index
    %c0_1 = arith.constant 0 : index
    %3 = vector.load %arg9[%c0, %c0_1] : memref<4x512xf32, #tpu.memory_space<vmem>>, vector<4x512xf32>
    %c0_2 = arith.constant 0 : index
    %c0_3 = arith.constant 0 : index
    %4 = vector.load %arg1[%c0_2, %c0_3] : memref<4x2048xf32, #tpu.memory_space<vmem>>, vector<4x2048xf32>
    %c0_4 = arith.constant 0 : index
    %c0_5 = arith.constant 0 : index
    %5 = vector.load %arg2[%c0_4, %c0_5] : memref<2048x512xbf16, #tpu.memory_space<vmem>>, vector<2048x512xbf16>
    %6 = arith.extf %5 : vector<2048x512xbf16> to vector<2048x512xf32>
    %cst = arith.constant dense<0.000000e+00> : vector<4x512xf32>
    %7 = tpu.matmul %4, %6, %cst {dimension_numbers = #tpu.dot_dimension_numbers<[1], [0], [0], [1], [0, 0, 1, 1], [], []>} : vector<4x2048xf32>, vector<2048x512xf32>, vector<4x512xf32> -> vector<4x512xf32>
    %8 = arith.addf %3, %7 : vector<4x512xf32>
    %c0_6 = arith.constant 0 : index
    %c0_7 = arith.constant 0 : index
    %9 = vector.load %arg9[%c0_6, %c0_7] : memref<4x512xf32, #tpu.memory_space<vmem>>, vector<4x512xf32>
    tpu.vector_store %arg9[%c0_6, %c0_7], %8 {strides = array<i32>} : memref<4x512xf32, #tpu.memory_space<vmem>>, vector<4x512xf32>,
    %c0_i32_8 = arith.constant 0 : i32
    %10 = arith.cmpi eq, %arg0, %c0_i32_8 : i32
    %11 = arith.extui %10 : i1 to i32
    %c0_i32_9 = arith.constant 0 : i32
    %12 = arith.cmpi ne, %11, %c0_i32_9 : i32
    scf.if %12 {
      %c0_10 = arith.constant 0 : index
      %c0_11 = arith.constant 0 : index
      %13 = vector.load %arg9[%c0_10, %c0_11] : memref<4x512xf32, #tpu.memory_space<vmem>>, vector<4x512xf32>
      %c0_12 = arith.constant 0 : index
      %c0_13 = arith.constant 0 : index
      %14 = vector.load %arg3[%c0_12, %c0_13] : memref<1x512xf32, #tpu.memory_space<vmem>>, vector<1x512xf32>
      %15 = vector.broadcast %14 : vector<1x512xf32> to vector<4x512xf32>
      %16 = arith.addf %13, %15 : vector<4x512xf32>
      %cst_14 = arith.constant 0.000000e+00 : f32
      %17 = vector.broadcast %cst_14 : f32 to vector<4x512xf32>
      %18 = arith.maximumf %16, %17 : vector<4x512xf32>
      %c0_15 = arith.constant 0 : index
      %c0_16 = arith.constant 0 : index
      %19 = vector.load %arg4[%c0_15, %c0_16] : memref<512x512xbf16, #tpu.memory_space<vmem>>, vector<512x512xbf16>
      %20 = arith.extf %19 : vector<512x512xbf16> to vector<512x512xf32>
      %cst_17 = arith.constant dense<0.000000e+00> : vector<4x512xf32>
      %21 = tpu.matmul %18, %20, %cst_17 {dimension_numbers = #tpu.dot_dimension_numbers<[1], [0], [0], [1], [0, 0, 1, 1], [], []>} : vector<4x512xf32>, vector<512x512xf32>, vector<4x512xf32> -> vector<4x512xf32>
      %c0_18 = arith.constant 0 : index
      %c0_19 = arith.constant 0 : index
      %22 = vector.load %arg5[%c0_18, %c0_19] : memref<1x512xf32, #tpu.memory_space<vmem>>, vector<1x512xf32>
      %23 = vector.broadcast %22 : vector<1x512xf32> to vector<4x512xf32>
      %24 = arith.addf %21, %23 : vector<4x512xf32>
      %cst_20 = arith.constant 0.000000e+00 : f32
      %25 = vector.broadcast %cst_20 : f32 to vector<4x512xf32>
      %26 = arith.maximumf %24, %25 : vector<4x512xf32>
      %c0_21 = arith.constant 0 : index
      %c0_22 = arith.constant 0 : index
      %27 = vector.load %arg6[%c0_21, %c0_22] : memref<512x128xf32, #tpu.memory_space<vmem>>, vector<512x128xf32>
      %cst_23 = arith.constant dense<0.000000e+00> : vector<4x128xf32>
      %28 = tpu.matmul %26, %27, %cst_23 {dimension_numbers = #tpu.dot_dimension_numbers<[1], [0], [0], [1], [0, 0, 1, 1], [], []>} : vector<4x512xf32>, vector<512x128xf32>, vector<4x128xf32> -> vector<4x128xf32>
      %c0_24 = arith.constant 0 : index
      %c0_25 = arith.constant 0 : index
      %29 = vector.load %arg7[%c0_24, %c0_25] : memref<1x128xf32, #tpu.memory_space<vmem>>, vector<1x128xf32>
      %30 = vector.broadcast %29 : vector<1x128xf32> to vector<4x128xf32>
      %31 = arith.addf %28, %30 : vector<4x128xf32>
      %c0_26 = arith.constant 0 : index
      %c0_27 = arith.constant 0 : index
      %32 = vector.load %arg8[%c0_26, %c0_27] : memref<4x128xf32, #tpu.memory_space<vmem>>, vector<4x128xf32>
      tpu.vector_store %arg8[%c0_26, %c0_27], %31 {strides = array<i32>} : memref<4x128xf32, #tpu.memory_space<vmem>>, vector<4x128xf32>,
    } else {
    }
    return
  }
  func.func @transform_0(%arg0: i32) -> (i32, i32) {
    %c0_i32 = arith.constant 0 : i32
    %c0_i32_0 = arith.constant 0 : i32
    return %c0_i32, %arg0 : i32, i32
  }
  func.func @transform_1(%arg0: i32) -> (i32, i32) {
    %c0_i32 = arith.constant 0 : i32
    %c0_i32_0 = arith.constant 0 : i32
    return %arg0, %c0_i32 : i32, i32
  }
  func.func @transform_2(%arg0: i32) -> (i32, i32) {
    %c0_i32 = arith.constant 0 : i32
    %c0_i32_0 = arith.constant 0 : i32
    %c0_i32_1 = arith.constant 0 : i32
    return %c0_i32, %c0_i32_0 : i32, i32
  }
  func.func @transform_3(%arg0: i32) -> (i32, i32) {
    %c0_i32 = arith.constant 0 : i32
    %c0_i32_0 = arith.constant 0 : i32
    %c0_i32_1 = arith.constant 0 : i32
    return %c0_i32, %c0_i32_0 : i32, i32
  }
  func.func @transform_4(%arg0: i32) -> (i32, i32) {
    %c0_i32 = arith.constant 0 : i32
    %c0_i32_0 = arith.constant 0 : i32
    %c0_i32_1 = arith.constant 0 : i32
    return %c0_i32, %c0_i32_0 : i32, i32
  }
  func.func @transform_5(%arg0: i32) -> (i32, i32) {
    %c0_i32 = arith.constant 0 : i32
    %c0_i32_0 = arith.constant 0 : i32
    %c0_i32_1 = arith.constant 0 : i32
    return %c0_i32, %c0_i32_0 : i32, i32
  }
  func.func @transform_6(%arg0: i32) -> (i32, i32) {
    %c0_i32 = arith.constant 0 : i32
    %c0_i32_0 = arith.constant 0 : i32
    %c0_i32_1 = arith.constant 0 : i32
    return %c0_i32, %c0_i32_0 : i32, i32
  }
  func.func @transform_7(%arg0: i32) -> (i32, i32) {
    %c0_i32 = arith.constant 0 : i32
    %c0_i32_0 = arith.constant 0 : i32
    %c0_i32_1 = arith.constant 0 : i32
    return %c0_i32, %c0_i32_0 : i32, i32
  }
}

</mosaic_0001>

<llo_original>
// kernel: siamese_forward.4
$region0: #{siamese_forward.4}
  #allocation0 [shape = 'u32[]', space=smem, size = 0x4, offset = 0x4, fixed_abs, tag = 'smem constant byte address 0x4 - core index']
  #allocation1 [shape = 'u32[144,128]{1,0:T(1,128)}', space=vmem, size = 0x12000, scoped, tag = 'internal scratch']
  #allocation2 [shape = 'f32[16,768]{1,0:T(8,128)}', space=vmem, size = 0xc000, scoped, tag = 'scratch operand']
  %s0 = inlined_call_operand.vmem [shape: f32[2,1,1152], index: 0, kind: input, shape index: {}]
  %s1 = inlined_call_operand.hbm [shape: f32[4,16], index: 1, kind: input, shape index: {}]
  %s2 = inlined_call_operand.hbm [shape: f32[4,1], index: 2, kind: input, shape index: {}]
  %s3 = inlined_call_operand.hbm [shape: f32[4,1], index: 3, kind: input, shape index: {}]
  %s4 = inlined_call_operand.hbm [shape: f32[4,1], index: 4, kind: input, shape index: {}]
  %s5 = inlined_call_operand.vmem [shape: f32[1,768], index: 5, kind: input, shape index: {}]
  %s6 = inlined_call_operand.vmem [shape: f32[2,4,768], index: 6, kind: output, shape index: {}]
  %s7 = sld [smem:[#allocation0]]
  $region73: #{siamese_forward.4} parent=0
    _
  %s9 = ssub.s32 1, %s7
  %s10 = scalar_select 0, %s9, %s7
  $region1: #{siamese_forward.4} parent=0
    #allocation3 [shape = 'u8[2048]{0}', space=vmem, size = 0x800, scoped, tag = 'input window, operand 1, single buffered']
    #allocation4 [shape = 's32[2]{0}', space=sflag, size = 0x8, scoped, tag = 'scoped memory for siamese_forward.4']
    #allocation5 [shape = 'u8[2048]{0}', space=vmem, size = 0x800, scoped, tag = 'input window, operand 2, single buffered']
    #allocation6 [shape = 's32[1]{0}', space=sflag, size = 0x4, scoped, tag = 'scoped memory for siamese_forward.4']
    #allocation7 [shape = 'u8[2048]{0}', space=vmem, size = 0x800, scoped, tag = 'input window, operand 3, single buffered']
    #allocation8 [shape = 'u8[2048]{0}', space=vmem, size = 0x800, scoped, tag = 'input window, operand 4, single buffered']
    #allocation9 [shape = 's32[1]{0}', space=sflag, size = 0x4, scoped, tag = 'scoped memory for siamese_forward.4']
    %11 = vsyncpa [#allocation4], 0
    %12 = vsyncpa [#allocation6], 0
    %13 = vsyncpa [#allocation9], 0
    loop: start=0, step=1, limit=4
    $region2: #{siamese_forward.4} parent=1 // loop_pre_header
      _
    $region3: #{siamese_forward.4} parent=1 // loop_header
      %s15 = sphi 0, %s19
      %p16 = scmp.ge.s32.totalorder %s15, 4
      %s25 = sphi 0, %s27
      %s28 = sphi 0, %s25
      %s29 = sphi 0, %s28
      %s45 = sphi 0, %s29
      %s49 = sphi 0, %s49
      %s51 = sphi 0, %s49
      %s52 = sphi 0, %s51
      %s66 = sphi 0, %s52
      %s70 = sphi 0, %s70
      %s72 = sphi 0, %s70
      %s73 = sphi 0, %s72
      %s87 = sphi 0, %s73
      %s91 = sphi 0, %s91
      %s93 = sphi 0, %s91
      %s94 = sphi 0, %s93
      %s108 = sphi 0, %s94
      %s112 = sphi 0, %s112
      %s114 = sphi 0, %s112
      %s115 = sphi 0, %s114
      %s129 = sphi 0, %s115
      %s133 = sphi 0, %s133
      %s135 = sphi 0, %s133
      %s136 = sphi 0, %s135
      %s150 = sphi 0, %s136
      %s156 = sphi 0, %s158
      %s159 = sphi 0, %s156
      %s160 = sphi 0, %s159
      %s176 = sphi 0, %s160
    $region4: #{siamese_forward.4} parent=1 // loop_header_branch
      %18 = sbr.rel (%p16) target = $region8
    $region5: #{siamese_forward.4} parent=1 // loop_body
      %s20 = ssub.s32 %s15, 1
      %s21 = ssub.s32 %s15, 2
      %s22 = sadd.s32 %s15, 1
      %s23 = ssub.s32 %s15, %s22
      %p24 = scmp.eq.s32.totalorder %s23, 0
      %s26 = sadd.s32 %s25, 1
      %s27 = scalar_select %p24, %s25, %s26
      %p30 = pneg %p24
      %p31 = scmp.eq.s32.totalorder %s15, 1
      %p32 = por %p30, %p31
      %p33 = scmp.ne.s32.totalorder %s25, %s28
      %p34 = scmp.eq.s32.totalorder %s15, 0
      %p35 = por %p33, %p34
      %p36 = scmp.ne.s32.totalorder %s25, %s28
      %p37 = scmp.eq.s32.totalorder %s20, 1
      %p38 = por %p36, %p37
      %p39 = scmp.ne.s32.totalorder %s28, %s29
      %p40 = scmp.eq.s32.totalorder %s20, 0
      %p41 = por %p39, %p40
      %p42 = scmp.ne.s32.totalorder %s28, %s29
      %p43 = scmp.eq.s32.totalorder %s21, 1
      %p44 = por %p42, %p43
      %p46 = scmp.ne.s32.totalorder %s29, %s45
      %p47 = scmp.eq.s32.totalorder %s21, 0
      %p48 = por %p46, %p47
      %s50 = sadd.s32 %s49, 1
      %p53 = scmp.eq.s32.totalorder %s15, 1
      %p54 = scmp.ne.s32.totalorder %s49, %s51
      %p55 = scmp.eq.s32.totalorder %s15, 0
      %p56 = por %p54, %p55
      %p57 = scmp.ne.s32.totalorder %s49, %s51
      %p58 = scmp.eq.s32.totalorder %s20, 1
      %p59 = por %p57, %p58
      %p60 = scmp.ne.s32.totalorder %s51, %s52
      %p61 = scmp.eq.s32.totalorder %s20, 0
      %p62 = por %p60, %p61
      %p63 = scmp.ne.s32.totalorder %s51, %s52
      %p64 = scmp.eq.s32.totalorder %s21, 1
      %p65 = por %p63, %p64
      %p67 = scmp.ne.s32.totalorder %s52, %s66
      %p68 = scmp.eq.s32.totalorder %s21, 0
      %p69 = por %p67, %p68
      %s71 = sadd.s32 %s70, 1
      %p74 = scmp.eq.s32.totalorder %s15, 1
      %p75 = scmp.ne.s32.totalorder %s70, %s72
      %p76 = scmp.eq.s32.totalorder %s15, 0
      %p77 = por %p75, %p76
      %p78 = scmp.ne.s32.totalorder %s70, %s72
      %p79 = scmp.eq.s32.totalorder %s20, 1
      %p80 = por %p78, %p79
      %p81 = scmp.ne.s32.totalorder %s72, %s73
      %p82 = scmp.eq.s32.totalorder %s20, 0
      %p83 = por %p81, %p82
      %p84 = scmp.ne.s32.totalorder %s72, %s73
      %p85 = scmp.eq.s32.totalorder %s21, 1
      %p86 = por %p84, %p85
      %p88 = scmp.ne.s32.totalorder %s73, %s87
      %p89 = scmp.eq.s32.totalorder %s21, 0
      %p90 = por %p88, %p89
      %s92 = sadd.s32 %s91, 1
      %p95 = scmp.eq.s32.totalorder %s15, 1
      %p96 = scmp.ne.s32.totalorder %s91, %s93
      %p97 = scmp.eq.s32.totalorder %s15, 0
      %p98 = por %p96, %p97
      %p99 = scmp.ne.s32.totalorder %s91, %s93
      %p100 = scmp.eq.s32.totalorder %s20, 1
      %p101 = por %p99, %p100
      %p102 = scmp.ne.s32.totalorder %s93, %s94
      %p103 = scmp.eq.s32.totalorder %s20, 0
      %p104 = por %p102, %p103
      %p105 = scmp.ne.s32.totalorder %s93, %s94
      %p106 = scmp.eq.s32.totalorder %s21, 1
      %p107 = por %p105, %p106
      %p109 = scmp.ne.s32.totalorder %s94, %s108
      %p110 = scmp.eq.s32.totalorder %s21, 0
      %p111 = por %p109, %p110
      %s113 = sadd.s32 %s112, 1
      %p116 = scmp.eq.s32.totalorder %s15, 1
      %p117 = scmp.ne.s32.totalorder %s112, %s114
      %p118 = scmp.eq.s32.totalorder %s15, 0
      %p119 = por %p117, %p118
      %p120 = scmp.ne.s32.totalorder %s112, %s114
      %p121 = scmp.eq.s32.totalorder %s20, 1
      %p122 = por %p120, %p121
      %p123 = scmp.ne.s32.totalorder %s114, %s115
      %p124 = scmp.eq.s32.totalorder %s20, 0
      %p125 = por %p123, %p124
      %p126 = scmp.ne.s32.totalorder %s114, %s115
      %p127 = scmp.eq.s32.totalorder %s21, 1
      %p128 = por %p126, %p127
      %p130 = scmp.ne.s32.totalorder %s115, %s129
      %p131 = scmp.eq.s32.totalorder %s21, 0
      %p132 = por %p130, %p131
      %s134 = sadd.s32 %s133, 1
      %p137 = scmp.eq.s32.totalorder %s15, 1
      %p138 = scmp.ne.s32.totalorder %s133, %s135
      %p139 = scmp.eq.s32.totalorder %s15, 0
      %p140 = por %p138, %p139
      %p141 = scmp.ne.s32.totalorder %s133, %s135
      %p142 = scmp.eq.s32.totalorder %s20, 1
      %p143 = por %p141, %p142
      %p144 = scmp.ne.s32.totalorder %s135, %s136
      %p145 = scmp.eq.s32.totalorder %s20, 0
      %p146 = por %p144, %p145
      %p147 = scmp.ne.s32.totalorder %s135, %s136
      %p148 = scmp.eq.s32.totalorder %s21, 1
      %p149 = por %p147, %p148
      %p151 = scmp.ne.s32.totalorder %s136, %s150
      %p152 = scmp.eq.s32.totalorder %s21, 0
      %p153 = por %p151, %p152
      %s154 = ssub.s32 %s15, %s22
      %p155 = scmp.eq.s32.totalorder %s154, 0
      %s157 = sadd.s32 %s156, 1
      %s158 = scalar_select %p155, %s156, %s157
      %p161 = pneg %p155
      %p162 = scmp.eq.s32.totalorder %s15, 1
      %p163 = por %p161, %p162
      %p164 = scmp.ne.s32.totalorder %s156, %s159
      %p165 = scmp.eq.s32.totalorder %s15, 0
      %p166 = por %p164, %p165
      %p167 = scmp.ne.s32.totalorder %s156, %s159
      %p168 = scmp.eq.s32.totalorder %s20, 1
      %p169 = por %p167, %p168
      %p170 = scmp.ne.s32.totalorder %s159, %s160
      %p171 = scmp.eq.s32.totalorder %s20, 0
      %p172 = por %p170, %p171
      %p173 = scmp.ne.s32.totalorder %s159, %s160
      %p174 = scmp.eq.s32.totalorder %s21, 1
      %p175 = por %p173, %p174
      %p177 = scmp.ne.s32.totalorder %s160, %s176
      %p178 = scmp.eq.s32.totalorder %s21, 0
      %p179 = por %p177, %p178
      %p180 = scmp.le.s32.totalorder 1, %s15
      %p181 = scmp.lt.s32.totalorder %s15, 3
      %p182 = pnand %p180, %p181
      %p183 = pneg %p182
      // Predicated region
      $region9: #{siamese_forward.4} parent=5 // pred_check
        _
      $region10: #{siamese_forward.4} parent=5 // pred_check_branch
        %185 = sbr.rel (%p182) target = $region12
      $region11: #{siamese_forward.4} parent=5 // pred_region
        %s186 = ssub.s32 %s15, 1
        // Predicated region
        $region13: #{siamese_forward.4} parent=11 // pred_check
          %p187 = pneg %p62
        $region14: #{siamese_forward.4} parent=11 // pred_check_branch
          %189 = sbr.rel (%p187) target = $region16
        $region15: #{siamese_forward.4} parent=11 // pred_region
          %s191 = ssub.s32 64, 64
          %192 = vsyncadd [#allocation4], %s191
          %s194 = sshll.u32 [#allocation3], 4
          %s195 = int_to_ptr.vmem [resolvable:$true] %s194
          %197 = dma.hbm_to_vmem [thread:$0]  %s1, 64, %s195, [#allocation4]
        $region16: #{siamese_forward.4} parent=11 // pred_fallthru
          _
        // Predicated region
        $region17: #{siamese_forward.4} parent=11 // pred_check
          %p198 = pneg %p83
        $region18: #{siamese_forward.4} parent=11 // pred_check_branch
          %200 = sbr.rel (%p198) target = $region20
        $region19: #{siamese_forward.4} parent=11 // pred_region
          %s202 = ssub.s32 64, 64
          %203 = vsyncadd [#allocation6], %s202
          %s205 = sshll.u32 [#allocation5], 4
          %s206 = int_to_ptr.vmem [resolvable:$true] %s205
          %208 = dma.hbm_to_vmem [thread:$0]  %s2, 64, %s206, [#allocation6]
        $region20: #{siamese_forward.4} parent=11 // pred_fallthru
          _
        // Predicated region
        $region21: #{siamese_forward.4} parent=11 // pred_check
          %p209 = pneg %p104
        $region22: #{siamese_forward.4} parent=11 // pred_check_branch
          %211 = sbr.rel (%p209) target = $region24
        $region23: #{siamese_forward.4} parent=11 // pred_region
          %s213 = ssub.s32 64, 64
          %214 = vsyncadd [#allocation6], %s213
          %s216 = sshll.u32 [#allocation7], 4
          %s217 = int_to_ptr.vmem [resolvable:$true] %s216
          %219 = dma.hbm_to_vmem [thread:$0]  %s3, 64, %s217, [#allocation6]
        $region24: #{siamese_forward.4} parent=11 // pred_fallthru
          _
        // Predicated region
        $region25: #{siamese_forward.4} parent=11 // pred_check
          %p220 = pneg %p125
        $region26: #{siamese_forward.4} parent=11 // pred_check_branch
          %222 = sbr.rel (%p220) target = $region28
        $region27: #{siamese_forward.4} parent=11 // pred_region
          %s224 = ssub.s32 64, 64
          %225 = vsyncadd [#allocation9], %s224
          %s227 = sshll.u32 [#allocation8], 4
          %s228 = int_to_ptr.vmem [resolvable:$true] %s227
          %230 = dma.hbm_to_vmem [thread:$0]  %s4, 64, %s228, [#allocation9]
        $region28: #{siamese_forward.4} parent=11 // pred_fallthru
          _
        // Predicated region
        $region29: #{siamese_forward.4} parent=11 // pred_check
          %p231 = pneg %p146
        $region30: #{siamese_forward.4} parent=11 // pred_check_branch
          %233 = sbr.rel (%p231) target = $region32
        $region31: #{siamese_forward.4} parent=11 // pred_region
          _
        $region32: #{siamese_forward.4} parent=11 // pred_fallthru
          _
      $region12: #{siamese_forward.4} parent=5 // pred_fallthru
        _
      %p234 = scmp.lt.s32.totalorder %s15, 2
      // Predicated region
      $region33: #{siamese_forward.4} parent=5 // pred_check
        %p235 = pneg %p234
      $region34: #{siamese_forward.4} parent=5 // pred_check_branch
        %237 = sbr.rel (%p235) target = $region36
      $region35: #{siamese_forward.4} parent=5 // pred_region
        // Predicated region
        $region37: #{siamese_forward.4} parent=35 // pred_check
          %p238 = pneg %p35
        $region38: #{siamese_forward.4} parent=35 // pred_check_branch
          %240 = sbr.rel (%p238) target = $region40
        $region39: #{siamese_forward.4} parent=35 // pred_region
          %p241 = scmp.lt.s32.totalorder %s15, 1
          %s242 = scalar_select %p241, %s15, 1
          %s243 = smul.addr %s242, 9
          %s244 = scalar_lea.vmem %s0, %s243
        $region40: #{siamese_forward.4} parent=35 // pred_fallthru
          _
      $region36: #{siamese_forward.4} parent=5 // pred_fallthru
        _
      %p245 = scmp.le.s32.totalorder 1, %s15
      %p246 = scmp.lt.s32.totalorder %s15, 3
      %p247 = pnand %p245, %p246
      %p248 = pneg %p247
      // Predicated region
      $region41: #{siamese_forward.4} parent=5 // pred_check
        _
      $region42: #{siamese_forward.4} parent=5 // pred_check_branch
        %250 = sbr.rel (%p247) target = $region44
      $region43: #{siamese_forward.4} parent=5 // pred_region
        %s251 = ssub.s32 %s15, 1
        // Predicated region
        $region45: #{siamese_forward.4} parent=43 // pred_check
          %p252 = pneg %p62
        $region46: #{siamese_forward.4} parent=43 // pred_check_branch
          %254 = sbr.rel (%p252) target = $region48
        $region47: #{siamese_forward.4} parent=43 // pred_region
          %255 = dma.done [#allocation4], 64
        $region48: #{siamese_forward.4} parent=43 // pred_fallthru
          _
        // Predicated region
        $region49: #{siamese_forward.4} parent=43 // pred_check
          %p256 = pneg %p83
        $region50: #{siamese_forward.4} parent=43 // pred_check_branch
          %258 = sbr.rel (%p256) target = $region52
        $region51: #{siamese_forward.4} parent=43 // pred_region
          %259 = dma.done [#allocation6], 64
        $region52: #{siamese_forward.4} parent=43 // pred_fallthru
          _
        // Predicated region
        $region53: #{siamese_forward.4} parent=43 // pred_check
          %p260 = pneg %p104
        $region54: #{siamese_forward.4} parent=43 // pred_check_branch
          %262 = sbr.rel (%p260) target = $region56
        $region55: #{siamese_forward.4} parent=43 // pred_region
          %263 = dma.done [#allocation6], 64
        $region56: #{siamese_forward.4} parent=43 // pred_fallthru
          _
        // Predicated region
        $region57: #{siamese_forward.4} parent=43 // pred_check
          %p264 = pneg %p125
        $region58: #{siamese_forward.4} parent=43 // pred_check_branch
          %266 = sbr.rel (%p264) target = $region60
        $region59: #{siamese_forward.4} parent=43 // pred_region
          %267 = dma.done [#allocation9], 64
        $region60: #{siamese_forward.4} parent=43 // pred_fallthru
          _
        %p268 = scmp.lt.s32.totalorder %s20, 1
        %s269 = scalar_select %p268, %s20, 1
        %s270 = smul.addr %s269, 9
        %s271 = scalar_lea.vmem %s0, %s270
        %p272 = pneg %p41
        %p273 = pneg %p38
        %p274 = pneg %p62
        %p275 = pneg %p59
        %p276 = pneg %p83
        %p277 = pneg %p80
        %p278 = pneg %p104
        %p279 = pneg %p101
        %p280 = pneg %p125
        %p281 = pneg %p122
        %p282 = pneg %p146
        %p283 = pneg %p143
        %p284 = pneg %p172
        %p285 = pneg %p169
        %p286 = scmp.lt.s32.totalorder %s20, 1
        %s287 = scalar_select %p286, %s20, 1
        %s288 = smul.addr %s287, 6
        %s289 = smul.addr %s288, 4
        %s290 = scalar_lea.vmem %s6, %s289
        %p291 = scmp.lt.s32.totalorder %s20, 1
        %s292 = scalar_select %p291, %s20, 1
        %s293 = smul.addr %s292, 9
        %s294 = scalar_lea.vmem %s0, %s293
        %p295 = scmp.lt.s32.totalorder %s20, 1
        %s296 = scalar_select %p295, %s20, 1
        %s297 = smul.addr %s296, 6
        %s298 = smul.addr %s297, 4
        %s299 = scalar_lea.vmem %s6, %s298
        %v300 = vld [vmem:[%s294] sm:$0x3f]
        %v301 = vlaneseq
        %vm302 = vcmp.ge.s32.totalorder %v301, 0
        %vm303 = vcmp.lt.s32.totalorder %v301, 768
        %vm304 = vmand %vm302, %vm303
        %305 = vst.msk [vmem:[#allocation2] ss:$8 sm:$0xf] %vm304, %v300
        %306 = vst.msk [vmem:[#allocation2] ss:$8 sm:$0x30] %vm304, %v300
        %v307 = vld [vmem:[%s294] sm:$0x7f]
        %309 = vrot.lane.b32.xlu0 %v307, 127
        %v310 = vpop.permute.xlu0 %309
        %v311 = vrot.slane %v310, 1
        %vm312 = vcmask 1039360
        %v313 = vsel %vm312, %v310, %v311
        %s315 = scalar_lea.vmem [#allocation2], 1
        %316 = vst.msk [vmem:[%s315] ss:$8 sm:$0xf] %vm304, %v313
        %317 = vst.msk [vmem:[%s315] ss:$8 sm:$0x30] %vm304, %v313
        %v318 = vld [vmem:[%s294] sm:$0x7f]
        %320 = vrot.lane.b32.xlu0 %v318, 126
        %v321 = vpop.permute.xlu0 %320
        %v322 = vrot.slane %v321, 1
        %vm323 = vcmask 1031168
        %v324 = vsel %vm323, %v321, %v322
        %s326 = scalar_lea.vmem [#allocation2], 2
        %327 = vst.msk [vmem:[%s326] ss:$8 sm:$0xf] %vm304, %v324
        %328 = vst.msk [vmem:[%s326] ss:$8 sm:$0x30] %vm304, %v324
        %v329 = vld [vmem:[%s294] sm:$0x7f]
        %331 = vrot.lane.b32.xlu0 %v329, 110
        %v332 = vpop.permute.xlu0 %331
        %v333 = vrot.slane %v332, 1
        %vm334 = vcmask 900096
        %v335 = vsel %vm334, %v332, %v333
        %s337 = scalar_lea.vmem [#allocation2], 3
        %338 = vst.msk [vmem:[%s337] ss:$8 sm:$0xf] %vm304, %v335
        %339 = vst.msk [vmem:[%s337] ss:$8 sm:$0x30] %vm304, %v335
        %v340 = vld [vmem:[%s294] sm:$0x7f]
        %342 = vrot.lane.b32.xlu0 %v340, 109
        %v343 = vpop.permute.xlu0 %342
        %v344 = vrot.slane %v343, 1
        %vm345 = vcmask 891904
        %v346 = vsel %vm345, %v343, %v344
        %s348 = scalar_lea.vmem [#allocation2], 4
        %349 = vst.msk [vmem:[%s348] ss:$8 sm:$0xf] %vm304, %v346
        %350 = vst.msk [vmem:[%s348] ss:$8 sm:$0x30] %vm304, %v346
        %v351 = vld [vmem:[%s294] sm:$0x7f]
        %353 = vrot.lane.b32.xlu0 %v351, 108
        %v354 = vpop.permute.xlu0 %353
        %v355 = vrot.slane %v354, 1
        %vm356 = vcmask 883712
        %v357 = vsel %vm356, %v354, %v355
        %s359 = scalar_lea.vmem [#allocation2], 5
        %360 = vst.msk [vmem:[%s359] ss:$8 sm:$0xf] %vm304, %v357
        %361 = vst.msk [vmem:[%s359] ss:$8 sm:$0x30] %vm304, %v357
        %v362 = vld [vmem:[%s294] sm:$0x7f]
        %364 = vrot.lane.b32.xlu0 %v362, 92
        %v365 = vpop.permute.xlu0 %364
        %v366 = vrot.slane %v365, 1
        %vm367 = vcmask 752640
        %v368 = vsel %vm367, %v365, %v366
        %s370 = scalar_lea.vmem [#allocation2], 6
        %371 = vst.msk [vmem:[%s370] ss:$8 sm:$0xf] %vm304, %v368
        %372 = vst.msk [vmem:[%s370] ss:$8 sm:$0x30] %vm304, %v368
        %v373 = vld [vmem:[%s294] sm:$0x7f]
        %375 = vrot.lane.b32.xlu0 %v373, 91
        %v376 = vpop.permute.xlu0 %375
        %v377 = vrot.slane %v376, 1
        %vm378 = vcmask 744448
        %v379 = vsel %vm378, %v376, %v377
        %s381 = scalar_lea.vmem [#allocation2], 7
        %382 = vst.msk [vmem:[%s381] ss:$8 sm:$0xf] %vm304, %v379
        %383 = vst.msk [vmem:[%s381] ss:$8 sm:$0x30] %vm304, %v379
        %v384 = vld [vmem:[%s294] sm:$0x7f]
        %386 = vrot.lane.b32.xlu0 %v384, 90
        %v387 = vpop.permute.xlu0 %386
        %v388 = vrot.slane %v387, 1
        %vm389 = vcmask 736256
        %v390 = vsel %vm389, %v387, %v388
        %s392 = scalar_lea.vmem [#allocation2], 48
        %393 = vst.msk [vmem:[%s392] ss:$8 sm:$0xf] %vm304, %v390
        %394 = vst.msk [vmem:[%s392] ss:$8 sm:$0x30] %vm304, %v390
        %395 = vst [vmem:[#allocation2 + $0x30] sm:$0xfe] 0.0
        %396 = vst [vmem:[#allocation2 + $0x38] sm:$0xfe] 0.0
        %397 = vst [vmem:[#allocation2 + $0x40] sm:$0xfe] 0.0
        %398 = vst [vmem:[#allocation2 + $0x48] sm:$0xfe] 0.0
        %399 = vst [vmem:[#allocation2 + $0x50] sm:$0xfe] 0.0
        %400 = vst [vmem:[#allocation2 + $0x58] sm:$0xfe] 0.0
        %v401 = vld [vmem:[#allocation3] sm:$0xf]
        %v402 = vld [vmem:[#allocation2] sm:$0xff]
        %v403 = vld [vmem:[#allocation2 + $0x8] sm:$0xff]
        %v404 = vld [vmem:[#allocation2 + $0x10] sm:$0xff]
        %v405 = vld [vmem:[#allocation2 + $0x18] sm:$0xff]
        %v406 = vld [vmem:[#allocation2 + $0x20] sm:$0xff]
        %v407 = vld [vmem:[#allocation2 + $0x28] sm:$0xff]
        %v408 = vld [vmem:[#allocation2 + $0x30] sm:$0xff]
        %v409 = vld [vmem:[#allocation2 + $0x38] sm:$0xff]
        %v410 = vld [vmem:[#allocation2 + $0x40] sm:$0xff]
        %v411 = vld [vmem:[#allocation2 + $0x48] sm:$0xff]
        %v412 = vld [vmem:[#allocation2 + $0x50] sm:$0xff]
        %v413 = vld [vmem:[#allocation2 + $0x58] sm:$0xff]
        %v414 = vld [vmem:[#allocation5] sm:$0xf]
        %416 = vset.pattern.permute.xlu0 0
        %417 = vperm.xlu0 %416, %v414
        %v418 = vpop.permute.xlu0 %417
        %vm420 = vcmask 130048
        %v422 = vsel %vm420, %v401, 0
        %424 = vmatprep.subr.mxu0 %v403
        %425 = vmatpush1.msra.mxu0 %v402
        %426 = vmatprep.subr.mxu0 %v409
        %427 = vmatpush1.msra.mxu0 %v408
        %428 = vmatprep.subr.mxu0 0.0
        %429 = vmatpush1.msra.mxu0 0.0
        %430 = vmatprep.subr.mxu0 0.0
        %431 = vmatpush1.msra.mxu0 0.0
        %432 = vmatprep.subr.mxu0 0.0
        %433 = vmatpush1.msra.mxu0 0.0
        %434 = vmatprep.subr.mxu0 0.0
        %435 = vmatpush1.msra.mxu0 0.0
        %436 = vmatprep.subr.mxu0 0.0
        %437 = vmatpush1.msra.mxu0 0.0
        %438 = vmatprep.subr.mxu0 0.0
        %439 = vmatpush1.msra.mxu0 0.0
        %440 = vmatprep.subr.mxu0 0.0
        %441 = vmatpush1.msra.mxu0 0.0
        %442 = vmatprep.subr.mxu0 0.0
        %443 = vmatpush1.msra.mxu0 0.0
        %444 = vmatprep.subr.mxu0 0.0
        %445 = vmatpush1.msra.mxu0 0.0
        %446 = vmatprep.subr.mxu0 0.0
        %447 = vmatpush1.msra.mxu0 0.0
        %448 = vmatprep.subr.mxu0 0.0
        %449 = vmatpush1.msra.mxu0 0.0
        %450 = vmatprep.subr.mxu0 0.0
        %451 = vmatpush1.msra.mxu0 0.0
        %452 = vmatprep.subr.mxu0 0.0
        %453 = vmatpush1.msra.mxu0 0.0
        %454 = vmatprep.subr.mxu0 0.0
        %455 = vmatpush1.msra.mxu0 0.0
        %456 = vmatprep.subr.mxu0 0.0
        %457 = vmatpush1.msra.mxu0 0.0
        %458 = vmatprep.subr.mxu0 0.0
        %459 = vmatpush1.msra.mxu0 0.0
        %460 = vmatprep.subr.mxu0 0.0
        %461 = vmatpush1.msra.mxu0 0.0
        %462 = vmatprep.subr.mxu0 0.0
        %463 = vmatpush1.msra.mxu0 0.0
        %464 = vmatprep.subr.mxu0 0.0
        %465 = vmatpush1.msra.mxu0 0.0
        %466 = vmatprep.subr.mxu0 0.0
        %467 = vmatpush1.msra.mxu0 0.0
        %468 = vmatprep.subr.mxu0 0.0
        %469 = vmatpush1.msra.mxu0 0.0
        %470 = vmatprep.subr.mxu0 0.0
        %471 = vmatpush1.msra.mxu0 0.0
        %472 = vmatprep.subr.mxu0 0.0
        %473 = vmatpush1.msra.mxu0 0.0
        %474 = vmatprep.subr.mxu0 0.0
        %475 = vmatpush1.msra.mxu0 0.0
        %476 = vmatprep.subr.mxu0 0.0
        %477 = vmatpush1.msra.mxu0 0.0
        %478 = vmatprep.subr.mxu0 0.0
        %479 = vmatpush1.msra.mxu0 0.0
        %480 = vmatprep.subr.mxu0 0.0
        %481 = vmatpush1.msra.mxu0 0.0
        %482 = vmatprep.subr.mxu0 0.0
        %483 = vmatpush1.msra.mxu0 0.0
        %484 = vmatprep.subr.mxu0 0.0
        %485 = vmatpush1.msra.mxu0 0.0
        %486 = vmatprep.subr.mxu0 0.0
        %487 = vmatpush1.msra.mxu0 0.0
        %488 = vmatprep.mubr.f32.mxu0 0.0
        %489 = vmatmul.mubr.f32.gmra.mrb[0].mxu0 %v422
        %v490 = vpop.f32.mrb[0].mxu0
        %v491 = vadd.f32 %v418, %v490
        %v492 = vpop.f32.mrb[0].mxu0
        %v493 = vadd.f32 %v418, %v492
        %494 = vdwg.mxu0
        %495 = vmatprep.subr.mxu0 %v405
        %496 = vmatpush1.msra.mxu0 %v404
        %497 = vmatprep.subr.mxu0 %v411
        %498 = vmatpush1.msra.mxu0 %v410
        %499 = vmatprep.subr.mxu0 0.0
        %500 = vmatpush1.msra.mxu0 0.0
        %501 = vmatprep.subr.mxu0 0.0
        %502 = vmatpush1.msra.mxu0 0.0
        %503 = vmatprep.subr.mxu0 0.0
        %504 = vmatpush1.msra.mxu0 0.0
        %505 = vmatprep.subr.mxu0 0.0
        %506 = vmatpush1.msra.mxu0 0.0
        %507 = vmatprep.subr.mxu0 0.0
        %508 = vmatpush1.msra.mxu0 0.0
        %509 = vmatprep.subr.mxu0 0.0
        %510 = vmatpush1.msra.mxu0 0.0
        %511 = vmatprep.subr.mxu0 0.0
        %512 = vmatpush1.msra.mxu0 0.0
        %513 = vmatprep.subr.mxu0 0.0
        %514 = vmatpush1.msra.mxu0 0.0
        %515 = vmatprep.subr.mxu0 0.0
        %516 = vmatpush1.msra.mxu0 0.0
        %517 = vmatprep.subr.mxu0 0.0
        %518 = vmatpush1.msra.mxu0 0.0
        %519 = vmatprep.subr.mxu0 0.0
        %520 = vmatpush1.msra.mxu0 0.0
        %521 = vmatprep.subr.mxu0 0.0
        %522 = vmatpush1.msra.mxu0 0.0
        %523 = vmatprep.subr.mxu0 0.0
        %524 = vmatpush1.msra.mxu0 0.0
        %525 = vmatprep.subr.mxu0 0.0
        %526 = vmatpush1.msra.mxu0 0.0
        %527 = vmatprep.subr.mxu0 0.0
        %528 = vmatpush1.msra.mxu0 0.0
        %529 = vmatprep.subr.mxu0 0.0
        %530 = vmatpush1.msra.mxu0 0.0
        %531 = vmatprep.subr.mxu0 0.0
        %532 = vmatpush1.msra.mxu0 0.0
        %533 = vmatprep.subr.mxu0 0.0
        %534 = vmatpush1.msra.mxu0 0.0
        %535 = vmatprep.subr.mxu0 0.0
        %536 = vmatpush1.msra.mxu0 0.0
        %537 = vmatprep.subr.mxu0 0.0
        %538 = vmatpush1.msra.mxu0 0.0
        %539 = vmatprep.subr.mxu0 0.0
        %540 = vmatpush1.msra.mxu0 0.0
        %541 = vmatprep.subr.mxu0 0.0
        %542 = vmatpush1.msra.mxu0 0.0
        %543 = vmatprep.subr.mxu0 0.0
        %544 = vmatpush1.msra.mxu0 0.0
        %545 = vmatprep.subr.mxu0 0.0
        %546 = vmatpush1.msra.mxu0 0.0
        %547 = vmatprep.subr.mxu0 0.0
        %548 = vmatpush1.msra.mxu0 0.0
        %549 = vmatprep.subr.mxu0 0.0
        %550 = vmatpush1.msra.mxu0 0.0
        %551 = vmatprep.subr.mxu0 0.0
        %552 = vmatpush1.msra.mxu0 0.0
        %553 = vmatprep.subr.mxu0 0.0
        %554 = vmatpush1.msra.mxu0 0.0
        %555 = vmatprep.subr.mxu0 0.0
        %556 = vmatpush1.msra.mxu0 0.0
        %557 = vmatprep.subr.mxu0 0.0
        %558 = vmatpush1.msra.mxu0 0.0
        %559 = vmatprep.mubr.f32.mxu0 0.0
        %560 = vmatmul.mubr.f32.gmra.mrb[0].mxu0 %v422
        %v561 = vpop.f32.mrb[0].mxu0
        %v562 = vadd.f32 %v418, %v561
        %v563 = vpop.f32.mrb[0].mxu0
        %v564 = vadd.f32 %v418, %v563
        %565 = vdwg.mxu0
        %566 = vmatprep.subr.mxu0 %v407
        %567 = vmatpush1.msra.mxu0 %v406
        %568 = vmatprep.subr.mxu0 %v413
        %569 = vmatpush1.msra.mxu0 %v412
        %570 = vmatprep.subr.mxu0 0.0
        %571 = vmatpush1.msra.mxu0 0.0
        %572 = vmatprep.subr.mxu0 0.0
        %573 = vmatpush1.msra.mxu0 0.0
        %574 = vmatprep.subr.mxu0 0.0
        %575 = vmatpush1.msra.mxu0 0.0
        %576 = vmatprep.subr.mxu0 0.0
        %577 = vmatpush1.msra.mxu0 0.0
        %578 = vmatprep.subr.mxu0 0.0
        %579 = vmatpush1.msra.mxu0 0.0
        %580 = vmatprep.subr.mxu0 0.0
        %581 = vmatpush1.msra.mxu0 0.0
        %582 = vmatprep.subr.mxu0 0.0
        %583 = vmatpush1.msra.mxu0 0.0
        %584 = vmatprep.subr.mxu0 0.0
        %585 = vmatpush1.msra.mxu0 0.0
        %586 = vmatprep.subr.mxu0 0.0
        %587 = vmatpush1.msra.mxu0 0.0
        %588 = vmatprep.subr.mxu0 0.0
        %589 = vmatpush1.msra.mxu0 0.0
        %590 = vmatprep.subr.mxu0 0.0
        %591 = vmatpush1.msra.mxu0 0.0
        %592 = vmatprep.subr.mxu0 0.0
        %593 = vmatpush1.msra.mxu0 0.0
        %594 = vmatprep.subr.mxu0 0.0
        %595 = vmatpush1.msra.mxu0 0.0
        %596 = vmatprep.subr.mxu0 0.0
        %597 = vmatpush1.msra.mxu0 0.0
        %598 = vmatprep.subr.mxu0 0.0
        %599 = vmatpush1.msra.mxu0 0.0
        %600 = vmatprep.subr.mxu0 0.0
        %601 = vmatpush1.msra.mxu0 0.0
        %602 = vmatprep.subr.mxu0 0.0
        %603 = vmatpush1.msra.mxu0 0.0
        %604 = vmatprep.subr.mxu0 0.0
        %605 = vmatpush1.msra.mxu0 0.0
        %606 = vmatprep.subr.mxu0 0.0
        %607 = vmatpush1.msra.mxu0 0.0
        %608 = vmatprep.subr.mxu0 0.0
        %609 = vmatpush1.msra.mxu0 0.0
        %610 = vmatprep.subr.mxu0 0.0
        %611 = vmatpush1.msra.mxu0 0.0
        %612 = vmatprep.subr.mxu0 0.0
        %613 = vmatpush1.msra.mxu0 0.0
        %614 = vmatprep.subr.mxu0 0.0
        %615 = vmatpush1.msra.mxu0 0.0
        %616 = vmatprep.subr.mxu0 0.0
        %617 = vmatpush1.msra.mxu0 0.0
        %618 = vmatprep.subr.mxu0 0.0
        %619 = vmatpush1.msra.mxu0 0.0
        %620 = vmatprep.subr.mxu0 0.0
        %621 = vmatpush1.msra.mxu0 0.0
        %622 = vmatprep.subr.mxu0 0.0
        %623 = vmatpush1.msra.mxu0 0.0
        %624 = vmatprep.subr.mxu0 0.0
        %625 = vmatpush1.msra.mxu0 0.0
        %626 = vmatprep.subr.mxu0 0.0
        %627 = vmatpush1.msra.mxu0 0.0
        %628 = vmatprep.subr.mxu0 0.0
        %629 = vmatpush1.msra.mxu0 0.0
        %630 = vmatprep.mubr.f32.mxu0 0.0
        %631 = vmatmul.mubr.f32.gmra.mrb[0].mxu0 %v422
        %v632 = vpop.f32.mrb[0].mxu0
        %v633 = vadd.f32 %v418, %v632
        %v634 = vpop.f32.mrb[0].mxu0
        %v635 = vadd.f32 %v418, %v634
        %636 = vdwg.mxu0
        %v637 = vmax.f32 %v491, 0.0
        %v638 = vmax.f32 %v493, 0.0
        %v639 = vmax.f32 %v562, 0.0
        %v640 = vmax.f32 %v564, 0.0
        %v641 = vmax.f32 %v633, 0.0
        %v642 = vmax.f32 %v635, 0.0
        %v643 = vld [vmem:[%s5] sm:$0x3f]
        %v645 = vlaneseq
        %v646 = vshrl.u32 %v645, 7
        %v647 = vsub.s32 0, %v646
        %v648 = vrot.slane %v643, %v647
        %v649 = vlaneseq
        %v650 = vshrl.u32 %v649, 7
        %v651 = vsub.s32 1, %v650
        %v652 = vrot.slane %v643, %v651
        %v653 = vlaneseq
        %v654 = vshrl.u32 %v653, 7
        %v655 = vsub.s32 2, %v654
        %v656 = vrot.slane %v643, %v655
        %v657 = vlaneseq
        %v658 = vshrl.u32 %v657, 7
        %v659 = vsub.s32 3, %v658
        %v660 = vrot.slane %v643, %v659
        %v661 = vlaneseq
        %v662 = vshrl.u32 %v661, 7
        %v663 = vsub.s32 4, %v662
        %v664 = vrot.slane %v643, %v663
        %v665 = vlaneseq
        %v666 = vshrl.u32 %v665, 7
        %v667 = vsub.s32 5, %v666
        %v668 = vrot.slane %v643, %v667
        %v675 = vmul.f32 %v637, %v648
        %v676 = vmul.f32 %v638, %v652
        %v677 = vmul.f32 %v639, %v656
        %v678 = vmul.f32 %v640, %v660
        %v679 = vmul.f32 %v641, %v664
        %v680 = vmul.f32 %v642, %v668
        %vm681 = vcmask 1043456
        %v682 = vsel %vm681, %v675, 0.0
        %v683 = vsel %vm681, %v676, 0.0
        %v684 = vadd.f32 %v682, %v683
        %v685 = vsel %vm681, %v677, 0.0
        %v686 = vadd.f32 %v684, %v685
        %v687 = vsel %vm681, %v678, 0.0
        %v688 = vadd.f32 %v686, %v687
        %v689 = vsel %vm681, %v679, 0.0
        %v690 = vadd.f32 %v688, %v689
        %v691 = vsel %vm681, %v680, 0.0
        %v692 = vadd.f32 %v690, %v691
        %693 = vadd.xlane.f32.xlu0 %v692
        %v694 = vpop.xlane.xlu0 %693
        %v695 = vmul.f32 %v694, 0.001953125
        %v696 = vsub.f32 %v637, %v695
        %v697 = vsub.f32 %v638, %v695
        %v698 = vsub.f32 %v639, %v695
        %v699 = vsub.f32 %v640, %v695
        %v700 = vsub.f32 %v641, %v695
        %v701 = vsub.f32 %v642, %v695
        %v702 = vmul.f32 %v696, %v648
        %v703 = vmul.f32 %v697, %v652
        %v704 = vmul.f32 %v698, %v656
        %v705 = vmul.f32 %v699, %v660
        %v706 = vmul.f32 %v700, %v664
        %v707 = vmul.f32 %v701, %v668
        %v708 = vmul.f32 %v702, %v702
        %v709 = vmul.f32 %v703, %v703
        %v710 = vmul.f32 %v704, %v704
        %v711 = vmul.f32 %v705, %v705
        %v712 = vmul.f32 %v706, %v706
        %v713 = vmul.f32 %v707, %v707
        %v714 = vsel %vm681, %v708, 0.0
        %v715 = vsel %vm681, %v709, 0.0
        %v716 = vadd.f32 %v714, %v715
        %v717 = vsel %vm681, %v710, 0.0
        %v718 = vadd.f32 %v716, %v717
        %v719 = vsel %vm681, %v711, 0.0
        %v720 = vadd.f32 %v718, %v719
        %v721 = vsel %vm681, %v712, 0.0
        %v722 = vadd.f32 %v720, %v721
        %v723 = vsel %vm681, %v713, 0.0
        %v724 = vadd.f32 %v722, %v723
        %725 = vadd.xlane.f32.xlu0 %v724
        %v726 = vpop.xlane.xlu0 %725
        %v727 = vmul.f32 %v726, 0.001953125
        %v728 = vld [vmem:[#allocation7] sm:$0xf]
        %v729 = vadd.f32 %v727, 1e-05
        %v730 = vrsqrt.pop %v729
        %v731 = vmul.f32 %v728, %v730
        %733 = vset.pattern.permute.xlu0 0
        %734 = vperm.xlu0 %733, %v731
        %v735 = vpop.permute.xlu0 %734
        %v737 = vmul.f32 %v696, %v735
        %v738 = vmul.f32 %v697, %v735
        %v739 = vmul.f32 %v698, %v735
        %v740 = vmul.f32 %v699, %v735
        %v741 = vmul.f32 %v700, %v735
        %v742 = vmul.f32 %v701, %v735
        %v743 = vld [vmem:[#allocation8] sm:$0xf]
        %745 = vset.pattern.permute.xlu0 0
        %746 = vperm.xlu0 %745, %v743
        %v747 = vpop.permute.xlu0 %746
        %v749 = vadd.f32 %v737, %v747
        %v750 = vadd.f32 %v738, %v747
        %v751 = vadd.f32 %v739, %v747
        %v752 = vadd.f32 %v740, %v747
        %v753 = vadd.f32 %v741, %v747
        %v754 = vadd.f32 %v742, %v747
        %v761 = vcombine.low %v749, %v750
        %v762 = vcombine.low %v751, %v752
        %v763 = vcombine.low %v753, %v754
        %767 = vst [vmem:[%s299] sm:$0xff] %v761
        %768 = vst [vmem:[%s299 + $0x8] sm:$0xff] %v762
        %769 = vst [vmem:[%s299 + $0x10] sm:$0xff] %v763
        %p770 = scmp.lt.s32.totalorder %s20, 1
        %s771 = scalar_select %p770, %s20, 1
        %s772 = smul.addr %s771, 6
        %s773 = smul.addr %s772, 4
        %s774 = scalar_lea.vmem %s6, %s773
        // Predicated region
        $region61: #{siamese_forward.4} parent=43 // pred_check
          %p775 = pneg %p169
        $region62: #{siamese_forward.4} parent=43 // pred_check_branch
          %777 = sbr.rel (%p775) target = $region64
        $region63: #{siamese_forward.4} parent=43 // pred_region
          _
        $region64: #{siamese_forward.4} parent=43 // pred_fallthru
          _
      $region44: #{siamese_forward.4} parent=5 // pred_fallthru
        _
      %p778 = scmp.le.s32.totalorder 2, %s15
      // Predicated region
      $region65: #{siamese_forward.4} parent=5 // pred_check
        %p779 = pneg %p778
      $region66: #{siamese_forward.4} parent=5 // pred_check_branch
        %781 = sbr.rel (%p779) target = $region68
      $region67: #{siamese_forward.4} parent=5 // pred_region
        %s782 = ssub.s32 %s15, 2
        // Predicated region
        $region69: #{siamese_forward.4} parent=67 // pred_check
          %p783 = pneg %p175
        $region70: #{siamese_forward.4} parent=67 // pred_check_branch
          %785 = sbr.rel (%p783) target = $region72
        $region71: #{siamese_forward.4} parent=67 // pred_region
          %p786 = scmp.lt.s32.totalorder %s21, 1
          %s787 = scalar_select %p786, %s21, 1
          %s788 = smul.addr %s787, 6
          %s789 = smul.addr %s788, 4
          %s790 = scalar_lea.vmem %s6, %s789
        $region72: #{siamese_forward.4} parent=67 // pred_fallthru
          _
      $region68: #{siamese_forward.4} parent=5 // pred_fallthru
        _
    $region6: #{siamese_forward.4} parent=1 // loop_footer
      %s19 = sadd.s32 1, %s15
    $region7: #{siamese_forward.4} parent=1 // loop_footer_branch
      %14 = sbr.rel target = $region3
    $region8: #{siamese_forward.4} parent=1 // loop_exit
      _
    %791 = vsyncpa [#allocation4], 1
    %s792 = scalar_lea.sflag [#allocation4], 1
    %793 = vsyncpa %s792, 1
    %794 = vsyncpa [#allocation6], 1
    %795 = vsyncpa [#allocation9], 1

// kernel: siamese_forward.5
$region0: #{siamese_forward.5}
  #allocation0 [shape = 'u32[]', space=smem, size = 0x4, offset = 0x4, fixed_abs, tag = 'smem constant byte address 0x4 - core index']
  #allocation1 [shape = 'u32[144,128]{1,0:T(1,128)}', space=vmem, size = 0x12000, scoped, tag = 'internal scratch']
  #allocation2 [shape = 'f32[40,768]{1,0:T(8,128)}', space=vmem, size = 0x1e000, scoped, tag = 'scratch operand']
  %s0 = inlined_call_operand.vmem [shape: f32[2,4,1152], index: 0, kind: input, shape index: {}]
  %s1 = inlined_call_operand.vmem [shape: f32[8,40], index: 1, kind: input, shape index: {}]
  %s2 = inlined_call_operand.vmem [shape: f32[8,1], index: 2, kind: input, shape index: {}]
  %s3 = inlined_call_operand.vmem [shape: f32[8,1], index: 3, kind: input, shape index: {}]
  %s4 = inlined_call_operand.vmem [shape: f32[8,1], index: 4, kind: input, shape index: {}]
  %s5 = inlined_call_operand.vmem [shape: f32[1,768], index: 5, kind: input, shape index: {}]
  %s6 = inlined_call_operand.vmem [shape: f32[2,8,768], index: 6, kind: output, shape index: {}]
  %s7 = sld [smem:[#allocation0]]
  $region57: #{siamese_forward.5} parent=0
    _
  %s9 = ssub.s32 1, %s7
  %s10 = scalar_select 0, %s9, %s7
  loop: start=0, step=1, limit=4
  $region2: #{siamese_forward.5} parent=0 // loop_pre_header
    _
  $region3: #{siamese_forward.5} parent=0 // loop_header
    %s12 = sphi 0, %s16
    %p13 = scmp.ge.s32.totalorder %s12, 4
    %s22 = sphi 0, %s24
    %s25 = sphi 0, %s22
    %s26 = sphi 0, %s25
    %s42 = sphi 0, %s26
    %s46 = sphi 0, %s46
    %s48 = sphi 0, %s46
    %s49 = sphi 0, %s48
    %s63 = sphi 0, %s49
    %s67 = sphi 0, %s67
    %s69 = sphi 0, %s67
    %s70 = sphi 0, %s69
    %s84 = sphi 0, %s70
    %s88 = sphi 0, %s88
    %s90 = sphi 0, %s88
    %s91 = sphi 0, %s90
    %s105 = sphi 0, %s91
    %s109 = sphi 0, %s109
    %s111 = sphi 0, %s109
    %s112 = sphi 0, %s111
    %s126 = sphi 0, %s112
    %s130 = sphi 0, %s130
    %s132 = sphi 0, %s130
    %s133 = sphi 0, %s132
    %s147 = sphi 0, %s133
    %s153 = sphi 0, %s155
    %s156 = sphi 0, %s153
    %s157 = sphi 0, %s156
    %s173 = sphi 0, %s157
  $region4: #{siamese_forward.5} parent=0 // loop_header_branch
    %15 = sbr.rel (%p13) target = $region8
  $region5: #{siamese_forward.5} parent=0 // loop_body
    %s17 = ssub.s32 %s12, 1
    %s18 = ssub.s32 %s12, 2
    %s19 = sadd.s32 %s12, 1
    %s20 = ssub.s32 %s12, %s19
    %p21 = scmp.eq.s32.totalorder %s20, 0
    %s23 = sadd.s32 %s22, 1
    %s24 = scalar_select %p21, %s22, %s23
    %p27 = pneg %p21
    %p28 = scmp.eq.s32.totalorder %s12, 1
    %p29 = por %p27, %p28
    %p30 = scmp.ne.s32.totalorder %s22, %s25
    %p31 = scmp.eq.s32.totalorder %s12, 0
    %p32 = por %p30, %p31
    %p33 = scmp.ne.s32.totalorder %s22, %s25
    %p34 = scmp.eq.s32.totalorder %s17, 1
    %p35 = por %p33, %p34
    %p36 = scmp.ne.s32.totalorder %s25, %s26
    %p37 = scmp.eq.s32.totalorder %s17, 0
    %p38 = por %p36, %p37
    %p39 = scmp.ne.s32.totalorder %s25, %s26
    %p40 = scmp.eq.s32.totalorder %s18, 1
    %p41 = por %p39, %p40
    %p43 = scmp.ne.s32.totalorder %s26, %s42
    %p44 = scmp.eq.s32.totalorder %s18, 0
    %p45 = por %p43, %p44
    %s47 = sadd.s32 %s46, 1
    %p50 = scmp.eq.s32.totalorder %s12, 1
    %p51 = scmp.ne.s32.totalorder %s46, %s48
    %p52 = scmp.eq.s32.totalorder %s12, 0
    %p53 = por %p51, %p52
    %p54 = scmp.ne.s32.totalorder %s46, %s48
    %p55 = scmp.eq.s32.totalorder %s17, 1
    %p56 = por %p54, %p55
    %p57 = scmp.ne.s32.totalorder %s48, %s49
    %p58 = scmp.eq.s32.totalorder %s17, 0
    %p59 = por %p57, %p58
    %p60 = scmp.ne.s32.totalorder %s48, %s49
    %p61 = scmp.eq.s32.totalorder %s18, 1
    %p62 = por %p60, %p61
    %p64 = scmp.ne.s32.totalorder %s49, %s63
    %p65 = scmp.eq.s32.totalorder %s18, 0
    %p66 = por %p64, %p65
    %s68 = sadd.s32 %s67, 1
    %p71 = scmp.eq.s32.totalorder %s12, 1
    %p72 = scmp.ne.s32.totalorder %s67, %s69
    %p73 = scmp.eq.s32.totalorder %s12, 0
    %p74 = por %p72, %p73
    %p75 = scmp.ne.s32.totalorder %s67, %s69
    %p76 = scmp.eq.s32.totalorder %s17, 1
    %p77 = por %p75, %p76
    %p78 = scmp.ne.s32.totalorder %s69, %s70
    %p79 = scmp.eq.s32.totalorder %s17, 0
    %p80 = por %p78, %p79
    %p81 = scmp.ne.s32.totalorder %s69, %s70
    %p82 = scmp.eq.s32.totalorder %s18, 1
    %p83 = por %p81, %p82
    %p85 = scmp.ne.s32.totalorder %s70, %s84
    %p86 = scmp.eq.s32.totalorder %s18, 0
    %p87 = por %p85, %p86
    %s89 = sadd.s32 %s88, 1
    %p92 = scmp.eq.s32.totalorder %s12, 1
    %p93 = scmp.ne.s32.totalorder %s88, %s90
    %p94 = scmp.eq.s32.totalorder %s12, 0
    %p95 = por %p93, %p94
    %p96 = scmp.ne.s32.totalorder %s88, %s90
    %p97 = scmp.eq.s32.totalorder %s17, 1
    %p98 = por %p96, %p97
    %p99 = scmp.ne.s32.totalorder %s90, %s91
    %p100 = scmp.eq.s32.totalorder %s17, 0
    %p101 = por %p99, %p100
    %p102 = scmp.ne.s32.totalorder %s90, %s91
    %p103 = scmp.eq.s32.totalorder %s18, 1
    %p104 = por %p102, %p103
    %p106 = scmp.ne.s32.totalorder %s91, %s105
    %p107 = scmp.eq.s32.totalorder %s18, 0
    %p108 = por %p106, %p107
    %s110 = sadd.s32 %s109, 1
    %p113 = scmp.eq.s32.totalorder %s12, 1
    %p114 = scmp.ne.s32.totalorder %s109, %s111
    %p115 = scmp.eq.s32.totalorder %s12, 0
    %p116 = por %p114, %p115
    %p117 = scmp.ne.s32.totalorder %s109, %s111
    %p118 = scmp.eq.s32.totalorder %s17, 1
    %p119 = por %p117, %p118
    %p120 = scmp.ne.s32.totalorder %s111, %s112
    %p121 = scmp.eq.s32.totalorder %s17, 0
    %p122 = por %p120, %p121
    %p123 = scmp.ne.s32.totalorder %s111, %s112
    %p124 = scmp.eq.s32.totalorder %s18, 1
    %p125 = por %p123, %p124
    %p127 = scmp.ne.s32.totalorder %s112, %s126
    %p128 = scmp.eq.s32.totalorder %s18, 0
    %p129 = por %p127, %p128
    %s131 = sadd.s32 %s130, 1
    %p134 = scmp.eq.s32.totalorder %s12, 1
    %p135 = scmp.ne.s32.totalorder %s130, %s132
    %p136 = scmp.eq.s32.totalorder %s12, 0
    %p137 = por %p135, %p136
    %p138 = scmp.ne.s32.totalorder %s130, %s132
    %p139 = scmp.eq.s32.totalorder %s17, 1
    %p140 = por %p138, %p139
    %p141 = scmp.ne.s32.totalorder %s132, %s133
    %p142 = scmp.eq.s32.totalorder %s17, 0
    %p143 = por %p141, %p142
    %p144 = scmp.ne.s32.totalorder %s132, %s133
    %p145 = scmp.eq.s32.totalorder %s18, 1
    %p146 = por %p144, %p145
    %p148 = scmp.ne.s32.totalorder %s133, %s147
    %p149 = scmp.eq.s32.totalorder %s18, 0
    %p150 = por %p148, %p149
    %s151 = ssub.s32 %s12, %s19
    %p152 = scmp.eq.s32.totalorder %s151, 0
    %s154 = sadd.s32 %s153, 1
    %s155 = scalar_select %p152, %s153, %s154
    %p158 = pneg %p152
    %p159 = scmp.eq.s32.totalorder %s12, 1
    %p160 = por %p158, %p159
    %p161 = scmp.ne.s32.totalorder %s153, %s156
    %p162 = scmp.eq.s32.totalorder %s12, 0
    %p163 = por %p161, %p162
    %p164 = scmp.ne.s32.totalorder %s153, %s156
    %p165 = scmp.eq.s32.totalorder %s17, 1
    %p166 = por %p164, %p165
    %p167 = scmp.ne.s32.totalorder %s156, %s157
    %p168 = scmp.eq.s32.totalorder %s17, 0
    %p169 = por %p167, %p168
    %p170 = scmp.ne.s32.totalorder %s156, %s157
    %p171 = scmp.eq.s32.totalorder %s18, 1
    %p172 = por %p170, %p171
    %p174 = scmp.ne.s32.totalorder %s157, %s173
    %p175 = scmp.eq.s32.totalorder %s18, 0
    %p176 = por %p174, %p175
    %p177 = scmp.le.s32.totalorder 1, %s12
    %p178 = scmp.lt.s32.totalorder %s12, 3
    %p179 = pnand %p177, %p178
    %p180 = pneg %p179
    // Predicated region
    $region9: #{siamese_forward.5} parent=5 // pred_check
      _
    $region10: #{siamese_forward.5} parent=5 // pred_check_branch
      %182 = sbr.rel (%p179) target = $region12
    $region11: #{siamese_forward.5} parent=5 // pred_region
      %s183 = ssub.s32 %s12, 1
      // Predicated region
      $region13: #{siamese_forward.5} parent=11 // pred_check
        %p184 = pneg %p59
      $region14: #{siamese_forward.5} parent=11 // pred_check_branch
        %186 = sbr.rel (%p184) target = $region16
      $region15: #{siamese_forward.5} parent=11 // pred_region
        _
      $region16: #{siamese_forward.5} parent=11 // pred_fallthru
        _
      // Predicated region
      $region17: #{siamese_forward.5} parent=11 // pred_check
        %p187 = pneg %p80
      $region18: #{siamese_forward.5} parent=11 // pred_check_branch
        %189 = sbr.rel (%p187) target = $region20
      $region19: #{siamese_forward.5} parent=11 // pred_region
        _
      $region20: #{siamese_forward.5} parent=11 // pred_fallthru
        _
      // Predicated region
      $region21: #{siamese_forward.5} parent=11 // pred_check
        %p190 = pneg %p101
      $region22: #{siamese_forward.5} parent=11 // pred_check_branch
        %192 = sbr.rel (%p190) target = $region24
      $region23: #{siamese_forward.5} parent=11 // pred_region
        _
      $region24: #{siamese_forward.5} parent=11 // pred_fallthru
        _
      // Predicated region
      $region25: #{siamese_forward.5} parent=11 // pred_check
        %p193 = pneg %p122
      $region26: #{siamese_forward.5} parent=11 // pred_check_branch
        %195 = sbr.rel (%p193) target = $region28
      $region27: #{siamese_forward.5} parent=11 // pred_region
        _
      $region28: #{siamese_forward.5} parent=11 // pred_fallthru
        _
      // Predicated region
      $region29: #{siamese_forward.5} parent=11 // pred_check
        %p196 = pneg %p143
      $region30: #{siamese_forward.5} parent=11 // pred_check_branch
        %198 = sbr.rel (%p196) target = $region32
      $region31: #{siamese_forward.5} parent=11 // pred_region
        _
      $region32: #{siamese_forward.5} parent=11 // pred_fallthru
        _
    $region12: #{siamese_forward.5} parent=5 // pred_fallthru
      _
    %p199 = scmp.lt.s32.totalorder %s12, 2
    // Predicated region
    $region33: #{siamese_forward.5} parent=5 // pred_check
      %p200 = pneg %p199
    $region34: #{siamese_forward.5} parent=5 // pred_check_branch
      %202 = sbr.rel (%p200) target = $region36
    $region35: #{siamese_forward.5} parent=5 // pred_region
      // Predicated region
      $region37: #{siamese_forward.5} parent=35 // pred_check
        %p203 = pneg %p32
      $region38: #{siamese_forward.5} parent=35 // pred_check_branch
        %205 = sbr.rel (%p203) target = $region40
      $region39: #{siamese_forward.5} parent=35 // pred_region
        %p206 = scmp.lt.s32.totalorder %s12, 1
        %s207 = scalar_select %p206, %s12, 1
        %s208 = smul.addr %s207, 9
        %s209 = smul.addr %s208, 4
        %s210 = scalar_lea.vmem %s0, %s209
      $region40: #{siamese_forward.5} parent=35 // pred_fallthru
        _
    $region36: #{siamese_forward.5} parent=5 // pred_fallthru
      _
    %p211 = scmp.le.s32.totalorder 1, %s12
    %p212 = scmp.lt.s32.totalorder %s12, 3
    %p213 = pnand %p211, %p212
    %p214 = pneg %p213
    // Predicated region
    $region41: #{siamese_forward.5} parent=5 // pred_check
      _
    $region42: #{siamese_forward.5} parent=5 // pred_check_branch
      %216 = sbr.rel (%p213) target = $region44
    $region43: #{siamese_forward.5} parent=5 // pred_region
      %s217 = ssub.s32 %s12, 1
      %p218 = scmp.lt.s32.totalorder %s17, 1
      %s219 = scalar_select %p218, %s17, 1
      %s220 = smul.addr %s219, 9
      %s221 = smul.addr %s220, 4
      %s222 = scalar_lea.vmem %s0, %s221
      %p223 = pneg %p38
      %p224 = pneg %p35
      %p225 = pneg %p59
      %p226 = pneg %p56
      %p227 = pneg %p80
      %p228 = pneg %p77
      %p229 = pneg %p101
      %p230 = pneg %p98
      %p231 = pneg %p122
      %p232 = pneg %p119
      %p233 = pneg %p143
      %p234 = pneg %p140
      %p235 = pneg %p169
      %p236 = pneg %p166
      %p237 = scmp.lt.s32.totalorder %s17, 1
      %s238 = scalar_select %p237, %s17, 1
      %s239 = smul.addr %s238, 6
      %s240 = smul.addr %s239, 8
      %s241 = scalar_lea.vmem %s6, %s240
      %p242 = scmp.lt.s32.totalorder %s17, 1
      %s243 = scalar_select %p242, %s17, 1
      %s244 = smul.addr %s243, 9
      %s245 = smul.addr %s244, 4
      %s246 = scalar_lea.vmem %s0, %s245
      %p247 = scmp.lt.s32.totalorder %s17, 1
      %s248 = scalar_select %p247, %s17, 1
      %s249 = smul.addr %s248, 6
      %s250 = smul.addr %s249, 8
      %s251 = scalar_lea.vmem %s6, %s250
      %v252 = vld [vmem:[%s246] sm:$0xff]
      %v253 = vld [vmem:[%s246 + $0x8] sm:$0xff]
      %v254 = vld [vmem:[%s246 + $0x10] sm:$0xff]
      %v258 = vcombine.high %v252, %v252
      %v259 = vcombine.high %v253, %v253
      %v260 = vcombine.high %v254, %v254
      %264 = vst [vmem:[#allocation2] sm:$0xf] %v252
      %265 = vst [vmem:[#allocation2 + $0x8] sm:$0xf] %v258
      %266 = vst [vmem:[#allocation2 + $0x10] sm:$0xf] %v253
      %267 = vst [vmem:[#allocation2 + $0x18] sm:$0xf] %v259
      %268 = vst [vmem:[#allocation2 + $0x20] sm:$0xf] %v254
      %269 = vst [vmem:[#allocation2 + $0x28] sm:$0xf] %v260
      %v270 = vld [vmem:[%s246] sm:$0xff]
      %v271 = vld [vmem:[%s246 + $0x8] sm:$0xff]
      %v272 = vld [vmem:[%s246 + $0x10] sm:$0xff]
      %v273 = vld [vmem:[%s246 + $0x18] sm:$0xf]
      %v278 = vcombine.low %v270, %v270
      %v279 = vcombine.low %v271, %v271
      %v280 = vcombine.low %v272, %v272
      %v281 = vcombine.low %v273, %v273
      %282 = vrot.lane.b32.xlu0 %v278, 127
      %v283 = vpop.permute.xlu0 %282
      %284 = vrot.lane.b32.xlu0 %v270, 127
      %v285 = vpop.permute.xlu0 %284
      %286 = vrot.lane.b32.xlu0 %v279, 127
      %v287 = vpop.permute.xlu0 %286
      %288 = vrot.lane.b32.xlu0 %v271, 127
      %v289 = vpop.permute.xlu0 %288
      %290 = vrot.lane.b32.xlu0 %v280, 127
      %v291 = vpop.permute.xlu0 %290
      %292 = vrot.lane.b32.xlu0 %v272, 127
      %v293 = vpop.permute.xlu0 %292
      %294 = vrot.lane.b32.xlu0 %v281, 127
      %v295 = vpop.permute.xlu0 %294
      %vm296 = vcmask 1039360
      %v297 = vsel %vm296, %v283, %v285
      %v298 = vsel %vm296, %v285, %v287
      %v299 = vsel %vm296, %v287, %v289
      %v300 = vsel %vm296, %v289, %v291
      %v301 = vsel %vm296, %v291, %v293
      %v302 = vsel %vm296, %v293, %v295
      %309 = vst [vmem:[#allocation2] sm:$0xf0] %v297
      %310 = vst [vmem:[#allocation2 + $0x8] sm:$0xf0] %v298
      %311 = vst [vmem:[#allocation2 + $0x10] sm:$0xf0] %v299
      %312 = vst [vmem:[#allocation2 + $0x18] sm:$0xf0] %v300
      %313 = vst [vmem:[#allocation2 + $0x20] sm:$0xf0] %v301
      %314 = vst [vmem:[#allocation2 + $0x28] sm:$0xf0] %v302
      %v315 = vld [vmem:[%s246] sm:$0xff]
      %v316 = vld [vmem:[%s246 + $0x8] sm:$0xff]
      %v317 = vld [vmem:[%s246 + $0x10] sm:$0xff]
      %v318 = vld [vmem:[%s246 + $0x18] sm:$0xf]
      %v323 = vcombine.high %v315, %v315
      %v324 = vcombine.high %v316, %v316
      %v325 = vcombine.high %v317, %v317
      %326 = vrot.lane.b32.xlu0 %v315, 126
      %v327 = vpop.permute.xlu0 %326
      %328 = vrot.lane.b32.xlu0 %v323, 126
      %v329 = vpop.permute.xlu0 %328
      %330 = vrot.lane.b32.xlu0 %v316, 126
      %v331 = vpop.permute.xlu0 %330
      %332 = vrot.lane.b32.xlu0 %v324, 126
      %v333 = vpop.permute.xlu0 %332
      %334 = vrot.lane.b32.xlu0 %v317, 126
      %v335 = vpop.permute.xlu0 %334
      %336 = vrot.lane.b32.xlu0 %v325, 126
      %v337 = vpop.permute.xlu0 %336
      %338 = vrot.lane.b32.xlu0 %v318, 126
      %v339 = vpop.permute.xlu0 %338
      %vm340 = vcmask 1031168
      %v341 = vsel %vm340, %v327, %v329
      %v342 = vsel %vm340, %v329, %v331
      %v343 = vsel %vm340, %v331, %v333
      %v344 = vsel %vm340, %v333, %v335
      %v345 = vsel %vm340, %v335, %v337
      %v346 = vsel %vm340, %v337, %v339
      %353 = vst [vmem:[#allocation2 + $0x30] sm:$0xf] %v341
      %354 = vst [vmem:[#allocation2 + $0x38] sm:$0xf] %v342
      %355 = vst [vmem:[#allocation2 + $0x40] sm:$0xf] %v343
      %356 = vst [vmem:[#allocation2 + $0x48] sm:$0xf] %v344
      %357 = vst [vmem:[#allocation2 + $0x50] sm:$0xf] %v345
      %358 = vst [vmem:[#allocation2 + $0x58] sm:$0xf] %v346
      %v359 = vld [vmem:[%s246] sm:$0xff]
      %v360 = vld [vmem:[%s246 + $0x8] sm:$0xff]
      %v361 = vld [vmem:[%s246 + $0x10] sm:$0xff]
      %v362 = vld [vmem:[%s246 + $0x18] sm:$0xf]
      %v367 = vcombine.low %v359, %v359
      %v368 = vcombine.low %v360, %v360
      %v369 = vcombine.low %v361, %v361
      %v370 = vcombine.low %v362, %v362
      %371 = vrot.lane.b32.xlu0 %v367, 110
      %v372 = vpop.permute.xlu0 %371
      %373 = vrot.lane.b32.xlu0 %v359, 110
      %v374 = vpop.permute.xlu0 %373
      %375 = vrot.lane.b32.xlu0 %v368, 110
      %v376 = vpop.permute.xlu0 %375
      %377 = vrot.lane.b32.xlu0 %v360, 110
      %v378 = vpop.permute.xlu0 %377
      %379 = vrot.lane.b32.xlu0 %v369, 110
      %v380 = vpop.permute.xlu0 %379
      %381 = vrot.lane.b32.xlu0 %v361, 110
      %v382 = vpop.permute.xlu0 %381
      %383 = vrot.lane.b32.xlu0 %v370, 110
      %v384 = vpop.permute.xlu0 %383
      %vm385 = vcmask 900096
      %v386 = vsel %vm385, %v372, %v374
      %v387 = vsel %vm385, %v374, %v376
      %v388 = vsel %vm385, %v376, %v378
      %v389 = vsel %vm385, %v378, %v380
      %v390 = vsel %vm385, %v380, %v382
      %v391 = vsel %vm385, %v382, %v384
      %398 = vst [vmem:[#allocation2 + $0x30] sm:$0xf0] %v386
      %399 = vst [vmem:[#allocation2 + $0x38] sm:$0xf0] %v387
      %400 = vst [vmem:[#allocation2 + $0x40] sm:$0xf0] %v388
      %401 = vst [vmem:[#allocation2 + $0x48] sm:$0xf0] %v389
      %402 = vst [vmem:[#allocation2 + $0x50] sm:$0xf0] %v390
      %403 = vst [vmem:[#allocation2 + $0x58] sm:$0xf0] %v391
      %v404 = vld [vmem:[%s246] sm:$0xff]
      %v405 = vld [vmem:[%s246 + $0x8] sm:$0xff]
      %v406 = vld [vmem:[%s246 + $0x10] sm:$0xff]
      %v407 = vld [vmem:[%s246 + $0x18] sm:$0xf]
      %v412 = vcombine.high %v404, %v404
      %v413 = vcombine.high %v405, %v405
      %v414 = vcombine.high %v406, %v406
      %415 = vrot.lane.b32.xlu0 %v404, 109
      %v416 = vpop.permute.xlu0 %415
      %417 = vrot.lane.b32.xlu0 %v412, 109
      %v418 = vpop.permute.xlu0 %417
      %419 = vrot.lane.b32.xlu0 %v405, 109
      %v420 = vpop.permute.xlu0 %419
      %421 = vrot.lane.b32.xlu0 %v413, 109
      %v422 = vpop.permute.xlu0 %421
      %423 = vrot.lane.b32.xlu0 %v406, 109
      %v424 = vpop.permute.xlu0 %423
      %425 = vrot.lane.b32.xlu0 %v414, 109
      %v426 = vpop.permute.xlu0 %425
      %427 = vrot.lane.b32.xlu0 %v407, 109
      %v428 = vpop.permute.xlu0 %427
      %vm429 = vcmask 891904
      %v430 = vsel %vm429, %v416, %v418
      %v431 = vsel %vm429, %v418, %v420
      %v432 = vsel %vm429, %v420, %v422
      %v433 = vsel %vm429, %v422, %v424
      %v434 = vsel %vm429, %v424, %v426
      %v435 = vsel %vm429, %v426, %v428
      %442 = vst [vmem:[#allocation2 + $0x60] sm:$0xf] %v430
      %443 = vst [vmem:[#allocation2 + $0x68] sm:$0xf] %v431
      %444 = vst [vmem:[#allocation2 + $0x70] sm:$0xf] %v432
      %445 = vst [vmem:[#allocation2 + $0x78] sm:$0xf] %v433
      %446 = vst [vmem:[#allocation2 + $0x80] sm:$0xf] %v434
      %447 = vst [vmem:[#allocation2 + $0x88] sm:$0xf] %v435
      %v448 = vld [vmem:[%s246] sm:$0xff]
      %v449 = vld [vmem:[%s246 + $0x8] sm:$0xff]
      %v450 = vld [vmem:[%s246 + $0x10] sm:$0xff]
      %v451 = vld [vmem:[%s246 + $0x18] sm:$0xf]
      %v456 = vcombine.low %v448, %v448
      %v457 = vcombine.low %v449, %v449
      %v458 = vcombine.low %v450, %v450
      %v459 = vcombine.low %v451, %v451
      %460 = vrot.lane.b32.xlu0 %v456, 108
      %v461 = vpop.permute.xlu0 %460
      %462 = vrot.lane.b32.xlu0 %v448, 108
      %v463 = vpop.permute.xlu0 %462
      %464 = vrot.lane.b32.xlu0 %v457, 108
      %v465 = vpop.permute.xlu0 %464
      %466 = vrot.lane.b32.xlu0 %v449, 108
      %v467 = vpop.permute.xlu0 %466
      %468 = vrot.lane.b32.xlu0 %v458, 108
      %v469 = vpop.permute.xlu0 %468
      %470 = vrot.lane.b32.xlu0 %v450, 108
      %v471 = vpop.permute.xlu0 %470
      %472 = vrot.lane.b32.xlu0 %v459, 108
      %v473 = vpop.permute.xlu0 %472
      %vm474 = vcmask 883712
      %v475 = vsel %vm474, %v461, %v463
      %v476 = vsel %vm474, %v463, %v465
      %v477 = vsel %vm474, %v465, %v467
      %v478 = vsel %vm474, %v467, %v469
      %v479 = vsel %vm474, %v469, %v471
      %v480 = vsel %vm474, %v471, %v473
      %487 = vst [vmem:[#allocation2 + $0x60] sm:$0xf0] %v475
      %488 = vst [vmem:[#allocation2 + $0x68] sm:$0xf0] %v476
      %489 = vst [vmem:[#allocation2 + $0x70] sm:$0xf0] %v477
      %490 = vst [vmem:[#allocation2 + $0x78] sm:$0xf0] %v478
      %491 = vst [vmem:[#allocation2 + $0x80] sm:$0xf0] %v479
      %492 = vst [vmem:[#allocation2 + $0x88] sm:$0xf0] %v480
      %v493 = vld [vmem:[%s246] sm:$0xff]
      %v494 = vld [vmem:[%s246 + $0x8] sm:$0xff]
      %v495 = vld [vmem:[%s246 + $0x10] sm:$0xff]
      %v496 = vld [vmem:[%s246 + $0x18] sm:$0xf]
      %v501 = vcombine.high %v493, %v493
      %v502 = vcombine.high %v494, %v494
      %v503 = vcombine.high %v495, %v495
      %504 = vrot.lane.b32.xlu0 %v493, 92
      %v505 = vpop.permute.xlu0 %504
      %506 = vrot.lane.b32.xlu0 %v501, 92
      %v507 = vpop.permute.xlu0 %506
      %508 = vrot.lane.b32.xlu0 %v494, 92
      %v509 = vpop.permute.xlu0 %508
      %510 = vrot.lane.b32.xlu0 %v502, 92
      %v511 = vpop.permute.xlu0 %510
      %512 = vrot.lane.b32.xlu0 %v495, 92
      %v513 = vpop.permute.xlu0 %512
      %514 = vrot.lane.b32.xlu0 %v503, 92
      %v515 = vpop.permute.xlu0 %514
      %516 = vrot.lane.b32.xlu0 %v496, 92
      %v517 = vpop.permute.xlu0 %516
      %vm518 = vcmask 752640
      %v519 = vsel %vm518, %v505, %v507
      %v520 = vsel %vm518, %v507, %v509
      %v521 = vsel %vm518, %v509, %v511
      %v522 = vsel %vm518, %v511, %v513
      %v523 = vsel %vm518, %v513, %v515
      %v524 = vsel %vm518, %v515, %v517
      %531 = vst [vmem:[#allocation2 + $0x90] sm:$0xf] %v519
      %532 = vst [vmem:[#allocation2 + $0x98] sm:$0xf] %v520
      %533 = vst [vmem:[#allocation2 + $0xa0] sm:$0xf] %v521
      %534 = vst [vmem:[#allocation2 + $0xa8] sm:$0xf] %v522
      %535 = vst [vmem:[#allocation2 + $0xb0] sm:$0xf] %v523
      %536 = vst [vmem:[#allocation2 + $0xb8] sm:$0xf] %v524
      %v537 = vld [vmem:[%s246] sm:$0xff]
      %v538 = vld [vmem:[%s246 + $0x8] sm:$0xff]
      %v539 = vld [vmem:[%s246 + $0x10] sm:$0xff]
      %v540 = vld [vmem:[%s246 + $0x18] sm:$0xf]
      %v545 = vcombine.low %v537, %v537
      %v546 = vcombine.low %v538, %v538
      %v547 = vcombine.low %v539, %v539
      %v548 = vcombine.low %v540, %v540
      %549 = vrot.lane.b32.xlu0 %v545, 91
      %v550 = vpop.permute.xlu0 %549
      %551 = vrot.lane.b32.xlu0 %v537, 91
      %v552 = vpop.permute.xlu0 %551
      %553 = vrot.lane.b32.xlu0 %v546, 91
      %v554 = vpop.permute.xlu0 %553
      %555 = vrot.lane.b32.xlu0 %v538, 91
      %v556 = vpop.permute.xlu0 %555
      %557 = vrot.lane.b32.xlu0 %v547, 91
      %v558 = vpop.permute.xlu0 %557
      %559 = vrot.lane.b32.xlu0 %v539, 91
      %v560 = vpop.permute.xlu0 %559
      %561 = vrot.lane.b32.xlu0 %v548, 91
      %v562 = vpop.permute.xlu0 %561
      %vm563 = vcmask 744448
      %v564 = vsel %vm563, %v550, %v552
      %v565 = vsel %vm563, %v552, %v554
      %v566 = vsel %vm563, %v554, %v556
      %v567 = vsel %vm563, %v556, %v558
      %v568 = vsel %vm563, %v558, %v560
      %v569 = vsel %vm563, %v560, %v562
      %576 = vst [vmem:[#allocation2 + $0x90] sm:$0xf0] %v564
      %577 = vst [vmem:[#allocation2 + $0x98] sm:$0xf0] %v565
      %578 = vst [vmem:[#allocation2 + $0xa0] sm:$0xf0] %v566
      %579 = vst [vmem:[#allocation2 + $0xa8] sm:$0xf0] %v567
      %580 = vst [vmem:[#allocation2 + $0xb0] sm:$0xf0] %v568
      %581 = vst [vmem:[#allocation2 + $0xb8] sm:$0xf0] %v569
      %v582 = vld [vmem:[%s246] sm:$0xff]
      %v583 = vld [vmem:[%s246 + $0x8] sm:$0xff]
      %v584 = vld [vmem:[%s246 + $0x10] sm:$0xff]
      %v585 = vld [vmem:[%s246 + $0x18] sm:$0xf]
      %v590 = vcombine.high %v582, %v582
      %v591 = vcombine.high %v583, %v583
      %v592 = vcombine.high %v584, %v584
      %593 = vrot.lane.b32.xlu0 %v582, 90
      %v594 = vpop.permute.xlu0 %593
      %595 = vrot.lane.b32.xlu0 %v590, 90
      %v596 = vpop.permute.xlu0 %595
      %597 = vrot.lane.b32.xlu0 %v583, 90
      %v598 = vpop.permute.xlu0 %597
      %599 = vrot.lane.b32.xlu0 %v591, 90
      %v600 = vpop.permute.xlu0 %599
      %601 = vrot.lane.b32.xlu0 %v584, 90
      %v602 = vpop.permute.xlu0 %601
      %603 = vrot.lane.b32.xlu0 %v592, 90
      %v604 = vpop.permute.xlu0 %603
      %605 = vrot.lane.b32.xlu0 %v585, 90
      %v606 = vpop.permute.xlu0 %605
      %vm607 = vcmask 736256
      %v608 = vsel %vm607, %v594, %v596
      %v609 = vsel %vm607, %v596, %v598
      %v610 = vsel %vm607, %v598, %v600
      %v611 = vsel %vm607, %v600, %v602
      %v612 = vsel %vm607, %v602, %v604
      %v613 = vsel %vm607, %v604, %v606
      %620 = vst [vmem:[#allocation2 + $0xc0] sm:$0xf] %v608
      %621 = vst [vmem:[#allocation2 + $0xc8] sm:$0xf] %v609
      %622 = vst [vmem:[#allocation2 + $0xd0] sm:$0xf] %v610
      %623 = vst [vmem:[#allocation2 + $0xd8] sm:$0xf] %v611
      %624 = vst [vmem:[#allocation2 + $0xe0] sm:$0xf] %v612
      %625 = vst [vmem:[#allocation2 + $0xe8] sm:$0xf] %v613
      %626 = vst [vmem:[#allocation2 + $0xc0] sm:$0xf0] 0.0
      %627 = vst [vmem:[#allocation2 + $0xc8] sm:$0xf0] 0.0
      %628 = vst [vmem:[#allocation2 + $0xd0] sm:$0xf0] 0.0
      %629 = vst [vmem:[#allocation2 + $0xd8] sm:$0xf0] 0.0
      %630 = vst [vmem:[#allocation2 + $0xe0] sm:$0xf0] 0.0
      %631 = vst [vmem:[#allocation2 + $0xe8] sm:$0xf0] 0.0
      %v632 = vld [vmem:[%s1] sm:$0xff]
      %v633 = vld [vmem:[#allocation2] sm:$0xff]
      %v634 = vld [vmem:[#allocation2 + $0x8] sm:$0xff]
      %v635 = vld [vmem:[#allocation2 + $0x10] sm:$0xff]
      %v636 = vld [vmem:[#allocation2 + $0x18] sm:$0xff]
      %v637 = vld [vmem:[#allocation2 + $0x20] sm:$0xff]
      %v638 = vld [vmem:[#allocation2 + $0x28] sm:$0xff]
      %v639 = vld [vmem:[#allocation2 + $0x30] sm:$0xff]
      %v640 = vld [vmem:[#allocation2 + $0x38] sm:$0xff]
      %v641 = vld [vmem:[#allocation2 + $0x40] sm:$0xff]
      %v642 = vld [vmem:[#allocation2 + $0x48] sm:$0xff]
      %v643 = vld [vmem:[#allocation2 + $0x50] sm:$0xff]
      %v644 = vld [vmem:[#allocation2 + $0x58] sm:$0xff]
      %v645 = vld [vmem:[#allocation2 + $0x60] sm:$0xff]
      %v646 = vld [vmem:[#allocation2 + $0x68] sm:$0xff]
      %v647 = vld [vmem:[#allocation2 + $0x70] sm:$0xff]
      %v648 = vld [vmem:[#allocation2 + $0x78] sm:$0xff]
      %v649 = vld [vmem:[#allocation2 + $0x80] sm:$0xff]
      %v650 = vld [vmem:[#allocation2 + $0x88] sm:$0xff]
      %v651 = vld [vmem:[#allocation2 + $0x90] sm:$0xff]
      %v652 = vld [vmem:[#allocation2 + $0x98] sm:$0xff]
      %v653 = vld [vmem:[#allocation2 + $0xa0] sm:$0xff]
      %v654 = vld [vmem:[#allocation2 + $0xa8] sm:$0xff]
      %v655 = vld [vmem:[#allocation2 + $0xb0] sm:$0xff]
      %v656 = vld [vmem:[#allocation2 + $0xb8] sm:$0xff]
      %v657 = vld [vmem:[#allocation2 + $0xc0] sm:$0xff]
      %v658 = vld [vmem:[#allocation2 + $0xc8] sm:$0xff]
      %v659 = vld [vmem:[#allocation2 + $0xd0] sm:$0xff]
      %v660 = vld [vmem:[#allocation2 + $0xd8] sm:$0xff]
      %v661 = vld [vmem:[#allocation2 + $0xe0] sm:$0xff]
      %v662 = vld [vmem:[#allocation2 + $0xe8] sm:$0xff]
      %v663 = vld [vmem:[%s2] sm:$0xff]
      %665 = vset.pattern.permute.xlu0 0
      %666 = vperm.xlu0 %665, %v663
      %v667 = vpop.permute.xlu0 %666
      %vm669 = vcmask 326656
      %v671 = vsel %vm669, %v632, 0
      %673 = vmatprep.subr.mxu0 %v634
      %674 = vmatpush1.msra.mxu0 %v633
      %675 = vmatprep.subr.mxu0 %v640
      %676 = vmatpush1.msra.mxu0 %v639
      %677 = vmatprep.subr.mxu0 %v646
      %678 = vmatpush1.msra.mxu0 %v645
      %679 = vmatprep.subr.mxu0 %v652
      %680 = vmatpush1.msra.mxu0 %v651
      %681 = vmatprep.subr.mxu0 %v658
      %682 = vmatpush1.msra.mxu0 %v657
      %683 = vmatprep.subr.mxu0 0.0
      %684 = vmatpush1.msra.mxu0 0.0
      %685 = vmatprep.subr.mxu0 0.0
      %686 = vmatpush1.msra.mxu0 0.0
      %687 = vmatprep.subr.mxu0 0.0
      %688 = vmatpush1.msra.mxu0 0.0
      %689 = vmatprep.subr.mxu0 0.0
      %690 = vmatpush1.msra.mxu0 0.0
      %691 = vmatprep.subr.mxu0 0.0
      %692 = vmatpush1.msra.mxu0 0.0
      %693 = vmatprep.subr.mxu0 0.0
      %694 = vmatpush1.msra.mxu0 0.0
      %695 = vmatprep.subr.mxu0 0.0
      %696 = vmatpush1.msra.mxu0 0.0
      %697 = vmatprep.subr.mxu0 0.0
      %698 = vmatpush1.msra.mxu0 0.0
      %699 = vmatprep.subr.mxu0 0.0
      %700 = vmatpush1.msra.mxu0 0.0
      %701 = vmatprep.subr.mxu0 0.0
      %702 = vmatpush1.msra.mxu0 0.0
      %703 = vmatprep.subr.mxu0 0.0
      %704 = vmatpush1.msra.mxu0 0.0
      %705 = vmatprep.subr.mxu0 0.0
      %706 = vmatpush1.msra.mxu0 0.0
      %707 = vmatprep.subr.mxu0 0.0
      %708 = vmatpush1.msra.mxu0 0.0
      %709 = vmatprep.subr.mxu0 0.0
      %710 = vmatpush1.msra.mxu0 0.0
      %711 = vmatprep.subr.mxu0 0.0
      %712 = vmatpush1.msra.mxu0 0.0
      %713 = vmatprep.subr.mxu0 0.0
      %714 = vmatpush1.msra.mxu0 0.0
      %715 = vmatprep.subr.mxu0 0.0
      %716 = vmatpush1.msra.mxu0 0.0
      %717 = vmatprep.subr.mxu0 0.0
      %718 = vmatpush1.msra.mxu0 0.0
      %719 = vmatprep.subr.mxu0 0.0
      %720 = vmatpush1.msra.mxu0 0.0
      %721 = vmatprep.subr.mxu0 0.0
      %722 = vmatpush1.msra.mxu0 0.0
      %723 = vmatprep.subr.mxu0 0.0
      %724 = vmatpush1.msra.mxu0 0.0
      %725 = vmatprep.subr.mxu0 0.0
      %726 = vmatpush1.msra.mxu0 0.0
      %727 = vmatprep.subr.mxu0 0.0
      %728 = vmatpush1.msra.mxu0 0.0
      %729 = vmatprep.subr.mxu0 0.0
      %730 = vmatpush1.msra.mxu0 0.0
      %731 = vmatprep.subr.mxu0 0.0
      %732 = vmatpush1.msra.mxu0 0.0
      %733 = vmatprep.subr.mxu0 0.0
      %734 = vmatpush1.msra.mxu0 0.0
      %735 = vmatprep.subr.mxu0 0.0
      %736 = vmatpush1.msra.mxu0 0.0
      %737 = vmatprep.mubr.f32.mxu0 0.0
      %738 = vmatmul.mubr.f32.gmra.mrb[0].mxu0 %v671
      %v739 = vpop.f32.mrb[0].mxu0
      %v740 = vadd.f32 %v667, %v739
      %v741 = vpop.f32.mrb[0].mxu0
      %v742 = vadd.f32 %v667, %v741
      %743 = vdwg.mxu0
      %744 = vmatprep.subr.mxu0 %v636
      %745 = vmatpush1.msra.mxu0 %v635
      %746 = vmatprep.subr.mxu0 %v642
      %747 = vmatpush1.msra.mxu0 %v641
      %748 = vmatprep.subr.mxu0 %v648
      %749 = vmatpush1.msra.mxu0 %v647
      %750 = vmatprep.subr.mxu0 %v654
      %751 = vmatpush1.msra.mxu0 %v653
      %752 = vmatprep.subr.mxu0 %v660
      %753 = vmatpush1.msra.mxu0 %v659
      %754 = vmatprep.subr.mxu0 0.0
      %755 = vmatpush1.msra.mxu0 0.0
      %756 = vmatprep.subr.mxu0 0.0
      %757 = vmatpush1.msra.mxu0 0.0
      %758 = vmatprep.subr.mxu0 0.0
      %759 = vmatpush1.msra.mxu0 0.0
      %760 = vmatprep.subr.mxu0 0.0
      %761 = vmatpush1.msra.mxu0 0.0
      %762 = vmatprep.subr.mxu0 0.0
      %763 = vmatpush1.msra.mxu0 0.0
      %764 = vmatprep.subr.mxu0 0.0
      %765 = vmatpush1.msra.mxu0 0.0
      %766 = vmatprep.subr.mxu0 0.0
      %767 = vmatpush1.msra.mxu0 0.0
      %768 = vmatprep.subr.mxu0 0.0
      %769 = vmatpush1.msra.mxu0 0.0
      %770 = vmatprep.subr.mxu0 0.0
      %771 = vmatpush1.msra.mxu0 0.0
      %772 = vmatprep.subr.mxu0 0.0
      %773 = vmatpush1.msra.mxu0 0.0
      %774 = vmatprep.subr.mxu0 0.0
      %775 = vmatpush1.msra.mxu0 0.0
      %776 = vmatprep.subr.mxu0 0.0
      %777 = vmatpush1.msra.mxu0 0.0
      %778 = vmatprep.subr.mxu0 0.0
      %779 = vmatpush1.msra.mxu0 0.0
      %780 = vmatprep.subr.mxu0 0.0
      %781 = vmatpush1.msra.mxu0 0.0
      %782 = vmatprep.subr.mxu0 0.0
      %783 = vmatpush1.msra.mxu0 0.0
      %784 = vmatprep.subr.mxu0 0.0
      %785 = vmatpush1.msra.mxu0 0.0
      %786 = vmatprep.subr.mxu0 0.0
      %787 = vmatpush1.msra.mxu0 0.0
      %788 = vmatprep.subr.mxu0 0.0
      %789 = vmatpush1.msra.mxu0 0.0
      %790 = vmatprep.subr.mxu0 0.0
      %791 = vmatpush1.msra.mxu0 0.0
      %792 = vmatprep.subr.mxu0 0.0
      %793 = vmatpush1.msra.mxu0 0.0
      %794 = vmatprep.subr.mxu0 0.0
      %795 = vmatpush1.msra.mxu0 0.0
      %796 = vmatprep.subr.mxu0 0.0
      %797 = vmatpush1.msra.mxu0 0.0
      %798 = vmatprep.subr.mxu0 0.0
      %799 = vmatpush1.msra.mxu0 0.0
      %800 = vmatprep.subr.mxu0 0.0
      %801 = vmatpush1.msra.mxu0 0.0
      %802 = vmatprep.subr.mxu0 0.0
      %803 = vmatpush1.msra.mxu0 0.0
      %804 = vmatprep.subr.mxu0 0.0
      %805 = vmatpush1.msra.mxu0 0.0
      %806 = vmatprep.subr.mxu0 0.0
      %807 = vmatpush1.msra.mxu0 0.0
      %808 = vmatprep.mubr.f32.mxu0 0.0
      %809 = vmatmul.mubr.f32.gmra.mrb[0].mxu0 %v671
      %v810 = vpop.f32.mrb[0].mxu0
      %v811 = vadd.f32 %v667, %v810
      %v812 = vpop.f32.mrb[0].mxu0
      %v813 = vadd.f32 %v667, %v812
      %814 = vdwg.mxu0
      %815 = vmatprep.subr.mxu0 %v638
      %816 = vmatpush1.msra.mxu0 %v637
      %817 = vmatprep.subr.mxu0 %v644
      %818 = vmatpush1.msra.mxu0 %v643
      %819 = vmatprep.subr.mxu0 %v650
      %820 = vmatpush1.msra.mxu0 %v649
      %821 = vmatprep.subr.mxu0 %v656
      %822 = vmatpush1.msra.mxu0 %v655
      %823 = vmatprep.subr.mxu0 %v662
      %824 = vmatpush1.msra.mxu0 %v661
      %825 = vmatprep.subr.mxu0 0.0
      %826 = vmatpush1.msra.mxu0 0.0
      %827 = vmatprep.subr.mxu0 0.0
      %828 = vmatpush1.msra.mxu0 0.0
      %829 = vmatprep.subr.mxu0 0.0
      %830 = vmatpush1.msra.mxu0 0.0
      %831 = vmatprep.subr.mxu0 0.0
      %832 = vmatpush1.msra.mxu0 0.0
      %833 = vmatprep.subr.mxu0 0.0
      %834 = vmatpush1.msra.mxu0 0.0
      %835 = vmatprep.subr.mxu0 0.0
      %836 = vmatpush1.msra.mxu0 0.0
      %837 = vmatprep.subr.mxu0 0.0
      %838 = vmatpush1.msra.mxu0 0.0
      %839 = vmatprep.subr.mxu0 0.0
      %840 = vmatpush1.msra.mxu0 0.0
      %841 = vmatprep.subr.mxu0 0.0
      %842 = vmatpush1.msra.mxu0 0.0
      %843 = vmatprep.subr.mxu0 0.0
      %844 = vmatpush1.msra.mxu0 0.0
      %845 = vmatprep.subr.mxu0 0.0
      %846 = vmatpush1.msra.mxu0 0.0
      %847 = vmatprep.subr.mxu0 0.0
      %848 = vmatpush1.msra.mxu0 0.0
      %849 = vmatprep.subr.mxu0 0.0
      %850 = vmatpush1.msra.mxu0 0.0
      %851 = vmatprep.subr.mxu0 0.0
      %852 = vmatpush1.msra.mxu0 0.0
      %853 = vmatprep.subr.mxu0 0.0
      %854 = vmatpush1.msra.mxu0 0.0
      %855 = vmatprep.subr.mxu0 0.0
      %856 = vmatpush1.msra.mxu0 0.0
      %857 = vmatprep.subr.mxu0 0.0
      %858 = vmatpush1.msra.mxu0 0.0
      %859 = vmatprep.subr.mxu0 0.0
      %860 = vmatpush1.msra.mxu0 0.0
      %861 = vmatprep.subr.mxu0 0.0
      %862 = vmatpush1.msra.mxu0 0.0
      %863 = vmatprep.subr.mxu0 0.0
      %864 = vmatpush1.msra.mxu0 0.0
      %865 = vmatprep.subr.mxu0 0.0
      %866 = vmatpush1.msra.mxu0 0.0
      %867 = vmatprep.subr.mxu0 0.0
      %868 = vmatpush1.msra.mxu0 0.0
      %869 = vmatprep.subr.mxu0 0.0
      %870 = vmatpush1.msra.mxu0 0.0
      %871 = vmatprep.subr.mxu0 0.0
      %872 = vmatpush1.msra.mxu0 0.0
      %873 = vmatprep.subr.mxu0 0.0
      %874 = vmatpush1.msra.mxu0 0.0
      %875 = vmatprep.subr.mxu0 0.0
      %876 = vmatpush1.msra.mxu0 0.0
      %877 = vmatprep.subr.mxu0 0.0
      %878 = vmatpush1.msra.mxu0 0.0
      %879 = vmatprep.mubr.f32.mxu0 0.0
      %880 = vmatmul.mubr.f32.gmra.mrb[0].mxu0 %v671
      %v881 = vpop.f32.mrb[0].mxu0
      %v882 = vadd.f32 %v667, %v881
      %v883 = vpop.f32.mrb[0].mxu0
      %v884 = vadd.f32 %v667, %v883
      %885 = vdwg.mxu0
      %v886 = vmax.f32 %v740, 0.0
      %v887 = vmax.f32 %v742, 0.0
      %v888 = vmax.f32 %v811, 0.0
      %v889 = vmax.f32 %v813, 0.0
      %v890 = vmax.f32 %v882, 0.0
      %v891 = vmax.f32 %v884, 0.0
      %v892 = vld [vmem:[%s5] sm:$0x3f]
      %v894 = vlaneseq
      %v895 = vshrl.u32 %v894, 7
      %v896 = vsub.s32 0, %v895
      %v897 = vrot.slane %v892, %v896
      %v898 = vlaneseq
      %v899 = vshrl.u32 %v898, 7
      %v900 = vsub.s32 1, %v899
      %v901 = vrot.slane %v892, %v900
      %v902 = vlaneseq
      %v903 = vshrl.u32 %v902, 7
      %v904 = vsub.s32 2, %v903
      %v905 = vrot.slane %v892, %v904
      %v906 = vlaneseq
      %v907 = vshrl.u32 %v906, 7
      %v908 = vsub.s32 3, %v907
      %v909 = vrot.slane %v892, %v908
      %v910 = vlaneseq
      %v911 = vshrl.u32 %v910, 7
      %v912 = vsub.s32 4, %v911
      %v913 = vrot.slane %v892, %v912
      %v914 = vlaneseq
      %v915 = vshrl.u32 %v914, 7
      %v916 = vsub.s32 5, %v915
      %v917 = vrot.slane %v892, %v916
      %v924 = vmul.f32 %v886, %v897
      %v925 = vmul.f32 %v887, %v901
      %v926 = vmul.f32 %v888, %v905
      %v927 = vmul.f32 %v889, %v909
      %v928 = vmul.f32 %v890, %v913
      %v929 = vmul.f32 %v891, %v917
      %v930 = vadd.f32 %v924, %v925
      %v931 = vadd.f32 %v930, %v926
      %v932 = vadd.f32 %v931, %v927
      %v933 = vadd.f32 %v932, %v928
      %v934 = vadd.f32 %v933, %v929
      %935 = vadd.xlane.f32.xlu0 %v934
      %v936 = vpop.xlane.xlu0 %935
      %v937 = vmul.f32 %v936, 0.001953125
      %v938 = vsub.f32 %v886, %v937
      %v939 = vsub.f32 %v887, %v937
      %v940 = vsub.f32 %v888, %v937
      %v941 = vsub.f32 %v889, %v937
      %v942 = vsub.f32 %v890, %v937
      %v943 = vsub.f32 %v891, %v937
      %v944 = vmul.f32 %v938, %v897
      %v945 = vmul.f32 %v939, %v901
      %v946 = vmul.f32 %v940, %v905
      %v947 = vmul.f32 %v941, %v909
      %v948 = vmul.f32 %v942, %v913
      %v949 = vmul.f32 %v943, %v917
      %v950 = vmul.f32 %v944, %v944
      %v951 = vmul.f32 %v945, %v945
      %v952 = vmul.f32 %v946, %v946
      %v953 = vmul.f32 %v947, %v947
      %v954 = vmul.f32 %v948, %v948
      %v955 = vmul.f32 %v949, %v949
      %v956 = vadd.f32 %v950, %v951
      %v957 = vadd.f32 %v956, %v952
      %v958 = vadd.f32 %v957, %v953
      %v959 = vadd.f32 %v958, %v954
      %v960 = vadd.f32 %v959, %v955
      %961 = vadd.xlane.f32.xlu0 %v960
      %v962 = vpop.xlane.xlu0 %961
      %v963 = vmul.f32 %v962, 0.001953125
      %v964 = vld [vmem:[%s3] sm:$0xff]
      %v965 = vadd.f32 %v963, 1e-05
      %v966 = vrsqrt.pop %v965
      %v967 = vmul.f32 %v964, %v966
      %969 = vset.pattern.permute.xlu0 0
      %970 = vperm.xlu0 %969, %v967
      %v971 = vpop.permute.xlu0 %970
      %v973 = vmul.f32 %v938, %v971
      %v974 = vmul.f32 %v939, %v971
      %v975 = vmul.f32 %v940, %v971
      %v976 = vmul.f32 %v941, %v971
      %v977 = vmul.f32 %v942, %v971
      %v978 = vmul.f32 %v943, %v971
      %v979 = vld [vmem:[%s4] sm:$0xff]
      %981 = vset.pattern.permute.xlu0 0
      %982 = vperm.xlu0 %981, %v979
      %v983 = vpop.permute.xlu0 %982
      %v985 = vadd.f32 %v973, %v983
      %v986 = vadd.f32 %v974, %v983
      %v987 = vadd.f32 %v975, %v983
      %v988 = vadd.f32 %v976, %v983
      %v989 = vadd.f32 %v977, %v983
      %v990 = vadd.f32 %v978, %v983
      %991 = vst [vmem:[%s251] sm:$0xff] %v985
      %992 = vst [vmem:[%s251 + $0x8] sm:$0xff] %v986
      %993 = vst [vmem:[%s251 + $0x10] sm:$0xff] %v987
      %994 = vst [vmem:[%s251 + $0x18] sm:$0xff] %v988
      %995 = vst [vmem:[%s251 + $0x20] sm:$0xff] %v989
      %996 = vst [vmem:[%s251 + $0x28] sm:$0xff] %v990
      %p997 = scmp.lt.s32.totalorder %s17, 1
      %s998 = scalar_select %p997, %s17, 1
      %s999 = smul.addr %s998, 6
      %s1000 = smul.addr %s999, 8
      %s1001 = scalar_lea.vmem %s6, %s1000
      // Predicated region
      $region45: #{siamese_forward.5} parent=43 // pred_check
        %p1002 = pneg %p166
      $region46: #{siamese_forward.5} parent=43 // pred_check_branch
        %1004 = sbr.rel (%p1002) target = $region48
      $region47: #{siamese_forward.5} parent=43 // pred_region
        _
      $region48: #{siamese_forward.5} parent=43 // pred_fallthru
        _
    $region44: #{siamese_forward.5} parent=5 // pred_fallthru
      _
    %p1005 = scmp.le.s32.totalorder 2, %s12
    // Predicated region
    $region49: #{siamese_forward.5} parent=5 // pred_check
      %p1006 = pneg %p1005
    $region50: #{siamese_forward.5} parent=5 // pred_check_branch
      %1008 = sbr.rel (%p1006) target = $region52
    $region51: #{siamese_forward.5} parent=5 // pred_region
      %s1009 = ssub.s32 %s12, 2
      // Predicated region
      $region53: #{siamese_forward.5} parent=51 // pred_check
        %p1010 = pneg %p172
      $region54: #{siamese_forward.5} parent=51 // pred_check_branch
        %1012 = sbr.rel (%p1010) target = $region56
      $region55: #{siamese_forward.5} parent=51 // pred_region
        %p1013 = scmp.lt.s32.totalorder %s18, 1
        %s1014 = scalar_select %p1013, %s18, 1
        %s1015 = smul.addr %s1014, 6
        %s1016 = smul.addr %s1015, 8
        %s1017 = scalar_lea.vmem %s6, %s1016
      $region56: #{siamese_forward.5} parent=51 // pred_fallthru
        _
    $region52: #{siamese_forward.5} parent=5 // pred_fallthru
      _
  $region6: #{siamese_forward.5} parent=0 // loop_footer
    %s16 = sadd.s32 1, %s12
  $region7: #{siamese_forward.5} parent=0 // loop_footer_branch
    %11 = sbr.rel target = $region3
  $region8: #{siamese_forward.5} parent=0 // loop_exit
    _

// kernel: siamese_forward.6
$region0: #{siamese_forward.6}
  #allocation0 [shape = 'u32[]', space=smem, size = 0x4, offset = 0x4, fixed_abs, tag = 'smem constant byte address 0x4 - core index']
  #allocation1 [shape = 'u32[144,128]{1,0:T(1,128)}', space=vmem, size = 0x12000, scoped, tag = 'internal scratch']
  #allocation2 [shape = 'f32[72,768]{1,0:T(8,128)}', space=vmem, size = 0x36000, scoped, tag = 'scratch operand']
  %s0 = inlined_call_operand.vmem [shape: f32[2,8,1152], index: 0, kind: input, shape index: {}]
  %s1 = inlined_call_operand.vmem [shape: f32[8,72], index: 1, kind: input, shape index: {}]
  %s2 = inlined_call_operand.vmem [shape: f32[8,1], index: 2, kind: input, shape index: {}]
  %s3 = inlined_call_operand.vmem [shape: f32[8,1], index: 3, kind: input, shape index: {}]
  %s4 = inlined_call_operand.vmem [shape: f32[8,1], index: 4, kind: input, shape index: {}]
  %s5 = inlined_call_operand.vmem [shape: f32[1,768], index: 5, kind: input, shape index: {}]
  %s6 = inlined_call_operand.vmem [shape: f32[2,8,768], index: 6, kind: output, shape index: {}]
  %s7 = sld [smem:[#allocation0]]
  $region57: #{siamese_forward.6} parent=0
    _
  %s9 = ssub.s32 1, %s7
  %s10 = scalar_select 0, %s9, %s7
  loop: start=0, step=1, limit=4
  $region2: #{siamese_forward.6} parent=0 // loop_pre_header
    _
  $region3: #{siamese_forward.6} parent=0 // loop_header
    %s12 = sphi 0, %s16
    %p13 = scmp.ge.s32.totalorder %s12, 4
    %s22 = sphi 0, %s24
    %s25 = sphi 0, %s22
    %s26 = sphi 0, %s25
    %s42 = sphi 0, %s26
    %s46 = sphi 0, %s46
    %s48 = sphi 0, %s46
    %s49 = sphi 0, %s48
    %s63 = sphi 0, %s49
    %s67 = sphi 0, %s67
    %s69 = sphi 0, %s67
    %s70 = sphi 0, %s69
    %s84 = sphi 0, %s70
    %s88 = sphi 0, %s88
    %s90 = sphi 0, %s88
    %s91 = sphi 0, %s90
    %s105 = sphi 0, %s91
    %s109 = sphi 0, %s109
    %s111 = sphi 0, %s109
    %s112 = sphi 0, %s111
    %s126 = sphi 0, %s112
    %s130 = sphi 0, %s130
    %s132 = sphi 0, %s130
    %s133 = sphi 0, %s132
    %s147 = sphi 0, %s133
    %s153 = sphi 0, %s155
    %s156 = sphi 0, %s153
    %s157 = sphi 0, %s156
    %s173 = sphi 0, %s157
  $region4: #{siamese_forward.6} parent=0 // loop_header_branch
    %15 = sbr.rel (%p13) target = $region8
  $region5: #{siamese_forward.6} parent=0 // loop_body
    %s17 = ssub.s32 %s12, 1
    %s18 = ssub.s32 %s12, 2
    %s19 = sadd.s32 %s12, 1
    %s20 = ssub.s32 %s12, %s19
    %p21 = scmp.eq.s32.totalorder %s20, 0
    %s23 = sadd.s32 %s22, 1
    %s24 = scalar_select %p21, %s22, %s23
    %p27 = pneg %p21
    %p28 = scmp.eq.s32.totalorder %s12, 1
    %p29 = por %p27, %p28
    %p30 = scmp.ne.s32.totalorder %s22, %s25
    %p31 = scmp.eq.s32.totalorder %s12, 0
    %p32 = por %p30, %p31
    %p33 = scmp.ne.s32.totalorder %s22, %s25
    %p34 = scmp.eq.s32.totalorder %s17, 1
    %p35 = por %p33, %p34
    %p36 = scmp.ne.s32.totalorder %s25, %s26
    %p37 = scmp.eq.s32.totalorder %s17, 0
    %p38 = por %p36, %p37
    %p39 = scmp.ne.s32.totalorder %s25, %s26
    %p40 = scmp.eq.s32.totalorder %s18, 1
    %p41 = por %p39, %p40
    %p43 = scmp.ne.s32.totalorder %s26, %s42
    %p44 = scmp.eq.s32.totalorder %s18, 0
    %p45 = por %p43, %p44
    %s47 = sadd.s32 %s46, 1
    %p50 = scmp.eq.s32.totalorder %s12, 1
    %p51 = scmp.ne.s32.totalorder %s46, %s48
    %p52 = scmp.eq.s32.totalorder %s12, 0
    %p53 = por %p51, %p52
    %p54 = scmp.ne.s32.totalorder %s46, %s48
    %p55 = scmp.eq.s32.totalorder %s17, 1
    %p56 = por %p54, %p55
    %p57 = scmp.ne.s32.totalorder %s48, %s49
    %p58 = scmp.eq.s32.totalorder %s17, 0
    %p59 = por %p57, %p58
    %p60 = scmp.ne.s32.totalorder %s48, %s49
    %p61 = scmp.eq.s32.totalorder %s18, 1
    %p62 = por %p60, %p61
    %p64 = scmp.ne.s32.totalorder %s49, %s63
    %p65 = scmp.eq.s32.totalorder %s18, 0
    %p66 = por %p64, %p65
    %s68 = sadd.s32 %s67, 1
    %p71 = scmp.eq.s32.totalorder %s12, 1
    %p72 = scmp.ne.s32.totalorder %s67, %s69
    %p73 = scmp.eq.s32.totalorder %s12, 0
    %p74 = por %p72, %p73
    %p75 = scmp.ne.s32.totalorder %s67, %s69
    %p76 = scmp.eq.s32.totalorder %s17, 1
    %p77 = por %p75, %p76
    %p78 = scmp.ne.s32.totalorder %s69, %s70
    %p79 = scmp.eq.s32.totalorder %s17, 0
    %p80 = por %p78, %p79
    %p81 = scmp.ne.s32.totalorder %s69, %s70
    %p82 = scmp.eq.s32.totalorder %s18, 1
    %p83 = por %p81, %p82
    %p85 = scmp.ne.s32.totalorder %s70, %s84
    %p86 = scmp.eq.s32.totalorder %s18, 0
    %p87 = por %p85, %p86
    %s89 = sadd.s32 %s88, 1
    %p92 = scmp.eq.s32.totalorder %s12, 1
    %p93 = scmp.ne.s32.totalorder %s88, %s90
    %p94 = scmp.eq.s32.totalorder %s12, 0
    %p95 = por %p93, %p94
    %p96 = scmp.ne.s32.totalorder %s88, %s90
    %p97 = scmp.eq.s32.totalorder %s17, 1
    %p98 = por %p96, %p97
    %p99 = scmp.ne.s32.totalorder %s90, %s91
    %p100 = scmp.eq.s32.totalorder %s17, 0
    %p101 = por %p99, %p100
    %p102 = scmp.ne.s32.totalorder %s90, %s91
    %p103 = scmp.eq.s32.totalorder %s18, 1
    %p104 = por %p102, %p103
    %p106 = scmp.ne.s32.totalorder %s91, %s105
    %p107 = scmp.eq.s32.totalorder %s18, 0
    %p108 = por %p106, %p107
    %s110 = sadd.s32 %s109, 1
    %p113 = scmp.eq.s32.totalorder %s12, 1
    %p114 = scmp.ne.s32.totalorder %s109, %s111
    %p115 = scmp.eq.s32.totalorder %s12, 0
    %p116 = por %p114, %p115
    %p117 = scmp.ne.s32.totalorder %s109, %s111
    %p118 = scmp.eq.s32.totalorder %s17, 1
    %p119 = por %p117, %p118
    %p120 = scmp.ne.s32.totalorder %s111, %s112
    %p121 = scmp.eq.s32.totalorder %s17, 0
    %p122 = por %p120, %p121
    %p123 = scmp.ne.s32.totalorder %s111, %s112
    %p124 = scmp.eq.s32.totalorder %s18, 1
    %p125 = por %p123, %p124
    %p127 = scmp.ne.s32.totalorder %s112, %s126
    %p128 = scmp.eq.s32.totalorder %s18, 0
    %p129 = por %p127, %p128
    %s131 = sadd.s32 %s130, 1
    %p134 = scmp.eq.s32.totalorder %s12, 1
    %p135 = scmp.ne.s32.totalorder %s130, %s132
    %p136 = scmp.eq.s32.totalorder %s12, 0
    %p137 = por %p135, %p136
    %p138 = scmp.ne.s32.totalorder %s130, %s132
    %p139 = scmp.eq.s32.totalorder %s17, 1
    %p140 = por %p138, %p139
    %p141 = scmp.ne.s32.totalorder %s132, %s133
    %p142 = scmp.eq.s32.totalorder %s17, 0
    %p143 = por %p141, %p142
    %p144 = scmp.ne.s32.totalorder %s132, %s133
    %p145 = scmp.eq.s32.totalorder %s18, 1
    %p146 = por %p144, %p145
    %p148 = scmp.ne.s32.totalorder %s133, %s147
    %p149 = scmp.eq.s32.totalorder %s18, 0
    %p150 = por %p148, %p149
    %s151 = ssub.s32 %s12, %s19
    %p152 = scmp.eq.s32.totalorder %s151, 0
    %s154 = sadd.s32 %s153, 1
    %s155 = scalar_select %p152, %s153, %s154
    %p158 = pneg %p152
    %p159 = scmp.eq.s32.totalorder %s12, 1
    %p160 = por %p158, %p159
    %p161 = scmp.ne.s32.totalorder %s153, %s156
    %p162 = scmp.eq.s32.totalorder %s12, 0
    %p163 = por %p161, %p162
    %p164 = scmp.ne.s32.totalorder %s153, %s156
    %p165 = scmp.eq.s32.totalorder %s17, 1
    %p166 = por %p164, %p165
    %p167 = scmp.ne.s32.totalorder %s156, %s157
    %p168 = scmp.eq.s32.totalorder %s17, 0
    %p169 = por %p167, %p168
    %p170 = scmp.ne.s32.totalorder %s156, %s157
    %p171 = scmp.eq.s32.totalorder %s18, 1
    %p172 = por %p170, %p171
    %p174 = scmp.ne.s32.totalorder %s157, %s173
    %p175 = scmp.eq.s32.totalorder %s18, 0
    %p176 = por %p174, %p175
    %p177 = scmp.le.s32.totalorder 1, %s12
    %p178 = scmp.lt.s32.totalorder %s12, 3
    %p179 = pnand %p177, %p178
    %p180 = pneg %p179
    // Predicated region
    $region9: #{siamese_forward.6} parent=5 // pred_check
      _
    $region10: #{siamese_forward.6} parent=5 // pred_check_branch
      %182 = sbr.rel (%p179) target = $region12
    $region11: #{siamese_forward.6} parent=5 // pred_region
      %s183 = ssub.s32 %s12, 1
      // Predicated region
      $region13: #{siamese_forward.6} parent=11 // pred_check
        %p184 = pneg %p59
      $region14: #{siamese_forward.6} parent=11 // pred_check_branch
        %186 = sbr.rel (%p184) target = $region16
      $region15: #{siamese_forward.6} parent=11 // pred_region
        _
      $region16: #{siamese_forward.6} parent=11 // pred_fallthru
        _
      // Predicated region
      $region17: #{siamese_forward.6} parent=11 // pred_check
        %p187 = pneg %p80
      $region18: #{siamese_forward.6} parent=11 // pred_check_branch
        %189 = sbr.rel (%p187) target = $region20
      $region19: #{siamese_forward.6} parent=11 // pred_region
        _
      $region20: #{siamese_forward.6} parent=11 // pred_fallthru
        _
      // Predicated region
      $region21: #{siamese_forward.6} parent=11 // pred_check
        %p190 = pneg %p101
      $region22: #{siamese_forward.6} parent=11 // pred_check_branch
        %192 = sbr.rel (%p190) target = $region24
      $region23: #{siamese_forward.6} parent=11 // pred_region
        _
      $region24: #{siamese_forward.6} parent=11 // pred_fallthru
        _
      // Predicated region
      $region25: #{siamese_forward.6} parent=11 // pred_check
        %p193 = pneg %p122
      $region26: #{siamese_forward.6} parent=11 // pred_check_branch
        %195 = sbr.rel (%p193) target = $region28
      $region27: #{siamese_forward.6} parent=11 // pred_region
        _
      $region28: #{siamese_forward.6} parent=11 // pred_fallthru
        _
      // Predicated region
      $region29: #{siamese_forward.6} parent=11 // pred_check
        %p196 = pneg %p143
      $region30: #{siamese_forward.6} parent=11 // pred_check_branch
        %198 = sbr.rel (%p196) target = $region32
      $region31: #{siamese_forward.6} parent=11 // pred_region
        _
      $region32: #{siamese_forward.6} parent=11 // pred_fallthru
        _
    $region12: #{siamese_forward.6} parent=5 // pred_fallthru
      _
    %p199 = scmp.lt.s32.totalorder %s12, 2
    // Predicated region
    $region33: #{siamese_forward.6} parent=5 // pred_check
      %p200 = pneg %p199
    $region34: #{siamese_forward.6} parent=5 // pred_check_branch
      %202 = sbr.rel (%p200) target = $region36
    $region35: #{siamese_forward.6} parent=5 // pred_region
      // Predicated region
      $region37: #{siamese_forward.6} parent=35 // pred_check
        %p203 = pneg %p32
      $region38: #{siamese_forward.6} parent=35 // pred_check_branch
        %205 = sbr.rel (%p203) target = $region40
      $region39: #{siamese_forward.6} parent=35 // pred_region
        %p206 = scmp.lt.s32.totalorder %s12, 1
        %s207 = scalar_select %p206, %s12, 1
        %s208 = smul.addr %s207, 9
        %s209 = smul.addr %s208, 8
        %s210 = scalar_lea.vmem %s0, %s209
      $region40: #{siamese_forward.6} parent=35 // pred_fallthru
        _
    $region36: #{siamese_forward.6} parent=5 // pred_fallthru
      _
    %p211 = scmp.le.s32.totalorder 1, %s12
    %p212 = scmp.lt.s32.totalorder %s12, 3
    %p213 = pnand %p211, %p212
    %p214 = pneg %p213
    // Predicated region
    $region41: #{siamese_forward.6} parent=5 // pred_check
      _
    $region42: #{siamese_forward.6} parent=5 // pred_check_branch
      %216 = sbr.rel (%p213) target = $region44
    $region43: #{siamese_forward.6} parent=5 // pred_region
      %s217 = ssub.s32 %s12, 1
      %p218 = scmp.lt.s32.totalorder %s17, 1
      %s219 = scalar_select %p218, %s17, 1
      %s220 = smul.addr %s219, 9
      %s221 = smul.addr %s220, 8
      %s222 = scalar_lea.vmem %s0, %s221
      %p223 = pneg %p38
      %p224 = pneg %p35
      %p225 = pneg %p59
      %p226 = pneg %p56
      %p227 = pneg %p80
      %p228 = pneg %p77
      %p229 = pneg %p101
      %p230 = pneg %p98
      %p231 = pneg %p122
      %p232 = pneg %p119
      %p233 = pneg %p143
      %p234 = pneg %p140
      %p235 = pneg %p169
      %p236 = pneg %p166
      %p237 = scmp.lt.s32.totalorder %s17, 1
      %s238 = scalar_select %p237, %s17, 1
      %s239 = smul.addr %s238, 6
      %s240 = smul.addr %s239, 8
      %s241 = scalar_lea.vmem %s6, %s240
      %p242 = scmp.lt.s32.totalorder %s17, 1
      %s243 = scalar_select %p242, %s17, 1
      %s244 = smul.addr %s243, 9
      %s245 = smul.addr %s244, 8
      %s246 = scalar_lea.vmem %s0, %s245
      %p247 = scmp.lt.s32.totalorder %s17, 1
      %s248 = scalar_select %p247, %s17, 1
      %s249 = smul.addr %s248, 6
      %s250 = smul.addr %s249, 8
      %s251 = scalar_lea.vmem %s6, %s250
      %v252 = vld [vmem:[%s246] sm:$0xff]
      %v253 = vld [vmem:[%s246 + $0x8] sm:$0xff]
      %v254 = vld [vmem:[%s246 + $0x10] sm:$0xff]
      %v255 = vld [vmem:[%s246 + $0x18] sm:$0xff]
      %v256 = vld [vmem:[%s246 + $0x20] sm:$0xff]
      %v257 = vld [vmem:[%s246 + $0x28] sm:$0xff]
      %258 = vst [vmem:[#allocation2] sm:$0xff] %v252
      %259 = vst [vmem:[#allocation2 + $0x8] sm:$0xff] %v253
      %260 = vst [vmem:[#allocation2 + $0x10] sm:$0xff] %v254
      %261 = vst [vmem:[#allocation2 + $0x18] sm:$0xff] %v255
      %262 = vst [vmem:[#allocation2 + $0x20] sm:$0xff] %v256
      %263 = vst [vmem:[#allocation2 + $0x28] sm:$0xff] %v257
      %v264 = vld [vmem:[%s246] sm:$0xff]
      %v265 = vld [vmem:[%s246 + $0x8] sm:$0xff]
      %v266 = vld [vmem:[%s246 + $0x10] sm:$0xff]
      %v267 = vld [vmem:[%s246 + $0x18] sm:$0xff]
      %v268 = vld [vmem:[%s246 + $0x20] sm:$0xff]
      %v269 = vld [vmem:[%s246 + $0x28] sm:$0xff]
      %v270 = vld [vmem:[%s246 + $0x30] sm:$0xff]
      %278 = vrot.lane.b32.xlu0 %v264, 127
      %v279 = vpop.permute.xlu0 %278
      %280 = vrot.lane.b32.xlu0 %v265, 127
      %v281 = vpop.permute.xlu0 %280
      %282 = vrot.lane.b32.xlu0 %v266, 127
      %v283 = vpop.permute.xlu0 %282
      %284 = vrot.lane.b32.xlu0 %v267, 127
      %v285 = vpop.permute.xlu0 %284
      %286 = vrot.lane.b32.xlu0 %v268, 127
      %v287 = vpop.permute.xlu0 %286
      %288 = vrot.lane.b32.xlu0 %v269, 127
      %v289 = vpop.permute.xlu0 %288
      %290 = vrot.lane.b32.xlu0 %v270, 127
      %v291 = vpop.permute.xlu0 %290
      %vm292 = vcmask 1039360
      %v293 = vsel %vm292, %v279, %v281
      %v294 = vsel %vm292, %v281, %v283
      %v295 = vsel %vm292, %v283, %v285
      %v296 = vsel %vm292, %v285, %v287
      %v297 = vsel %vm292, %v287, %v289
      %v298 = vsel %vm292, %v289, %v291
      %305 = vst [vmem:[#allocation2 + $0x30] sm:$0xff] %v293
      %306 = vst [vmem:[#allocation2 + $0x38] sm:$0xff] %v294
      %307 = vst [vmem:[#allocation2 + $0x40] sm:$0xff] %v295
      %308 = vst [vmem:[#allocation2 + $0x48] sm:$0xff] %v296
      %309 = vst [vmem:[#allocation2 + $0x50] sm:$0xff] %v297
      %310 = vst [vmem:[#allocation2 + $0x58] sm:$0xff] %v298
      %v311 = vld [vmem:[%s246] sm:$0xff]
      %v312 = vld [vmem:[%s246 + $0x8] sm:$0xff]
      %v313 = vld [vmem:[%s246 + $0x10] sm:$0xff]
      %v314 = vld [vmem:[%s246 + $0x18] sm:$0xff]
      %v315 = vld [vmem:[%s246 + $0x20] sm:$0xff]
      %v316 = vld [vmem:[%s246 + $0x28] sm:$0xff]
      %v317 = vld [vmem:[%s246 + $0x30] sm:$0xff]
      %325 = vrot.lane.b32.xlu0 %v311, 126
      %v326 = vpop.permute.xlu0 %325
      %327 = vrot.lane.b32.xlu0 %v312, 126
      %v328 = vpop.permute.xlu0 %327
      %329 = vrot.lane.b32.xlu0 %v313, 126
      %v330 = vpop.permute.xlu0 %329
      %331 = vrot.lane.b32.xlu0 %v314, 126
      %v332 = vpop.permute.xlu0 %331
      %333 = vrot.lane.b32.xlu0 %v315, 126
      %v334 = vpop.permute.xlu0 %333
      %335 = vrot.lane.b32.xlu0 %v316, 126
      %v336 = vpop.permute.xlu0 %335
      %337 = vrot.lane.b32.xlu0 %v317, 126
      %v338 = vpop.permute.xlu0 %337
      %vm339 = vcmask 1031168
      %v340 = vsel %vm339, %v326, %v328
      %v341 = vsel %vm339, %v328, %v330
      %v342 = vsel %vm339, %v330, %v332
      %v343 = vsel %vm339, %v332, %v334
      %v344 = vsel %vm339, %v334, %v336
      %v345 = vsel %vm339, %v336, %v338
      %352 = vst [vmem:[#allocation2 + $0x60] sm:$0xff] %v340
      %353 = vst [vmem:[#allocation2 + $0x68] sm:$0xff] %v341
      %354 = vst [vmem:[#allocation2 + $0x70] sm:$0xff] %v342
      %355 = vst [vmem:[#allocation2 + $0x78] sm:$0xff] %v343
      %356 = vst [vmem:[#allocation2 + $0x80] sm:$0xff] %v344
      %357 = vst [vmem:[#allocation2 + $0x88] sm:$0xff] %v345
      %v358 = vld [vmem:[%s246] sm:$0xff]
      %v359 = vld [vmem:[%s246 + $0x8] sm:$0xff]
      %v360 = vld [vmem:[%s246 + $0x10] sm:$0xff]
      %v361 = vld [vmem:[%s246 + $0x18] sm:$0xff]
      %v362 = vld [vmem:[%s246 + $0x20] sm:$0xff]
      %v363 = vld [vmem:[%s246 + $0x28] sm:$0xff]
      %v364 = vld [vmem:[%s246 + $0x30] sm:$0xff]
      %372 = vrot.lane.b32.xlu0 %v358, 110
      %v373 = vpop.permute.xlu0 %372
      %374 = vrot.lane.b32.xlu0 %v359, 110
      %v375 = vpop.permute.xlu0 %374
      %376 = vrot.lane.b32.xlu0 %v360, 110
      %v377 = vpop.permute.xlu0 %376
      %378 = vrot.lane.b32.xlu0 %v361, 110
      %v379 = vpop.permute.xlu0 %378
      %380 = vrot.lane.b32.xlu0 %v362, 110
      %v381 = vpop.permute.xlu0 %380
      %382 = vrot.lane.b32.xlu0 %v363, 110
      %v383 = vpop.permute.xlu0 %382
      %384 = vrot.lane.b32.xlu0 %v364, 110
      %v385 = vpop.permute.xlu0 %384
      %vm386 = vcmask 900096
      %v387 = vsel %vm386, %v373, %v375
      %v388 = vsel %vm386, %v375, %v377
      %v389 = vsel %vm386, %v377, %v379
      %v390 = vsel %vm386, %v379, %v381
      %v391 = vsel %vm386, %v381, %v383
      %v392 = vsel %vm386, %v383, %v385
      %399 = vst [vmem:[#allocation2 + $0x90] sm:$0xff] %v387
      %400 = vst [vmem:[#allocation2 + $0x98] sm:$0xff] %v388
      %401 = vst [vmem:[#allocation2 + $0xa0] sm:$0xff] %v389
      %402 = vst [vmem:[#allocation2 + $0xa8] sm:$0xff] %v390
      %403 = vst [vmem:[#allocation2 + $0xb0] sm:$0xff] %v391
      %404 = vst [vmem:[#allocation2 + $0xb8] sm:$0xff] %v392
      %v405 = vld [vmem:[%s246] sm:$0xff]
      %v406 = vld [vmem:[%s246 + $0x8] sm:$0xff]
      %v407 = vld [vmem:[%s246 + $0x10] sm:$0xff]
      %v408 = vld [vmem:[%s246 + $0x18] sm:$0xff]
      %v409 = vld [vmem:[%s246 + $0x20] sm:$0xff]
      %v410 = vld [vmem:[%s246 + $0x28] sm:$0xff]
      %v411 = vld [vmem:[%s246 + $0x30] sm:$0xff]
      %419 = vrot.lane.b32.xlu0 %v405, 109
      %v420 = vpop.permute.xlu0 %419
      %421 = vrot.lane.b32.xlu0 %v406, 109
      %v422 = vpop.permute.xlu0 %421
      %423 = vrot.lane.b32.xlu0 %v407, 109
      %v424 = vpop.permute.xlu0 %423
      %425 = vrot.lane.b32.xlu0 %v408, 109
      %v426 = vpop.permute.xlu0 %425
      %427 = vrot.lane.b32.xlu0 %v409, 109
      %v428 = vpop.permute.xlu0 %427
      %429 = vrot.lane.b32.xlu0 %v410, 109
      %v430 = vpop.permute.xlu0 %429
      %431 = vrot.lane.b32.xlu0 %v411, 109
      %v432 = vpop.permute.xlu0 %431
      %vm433 = vcmask 891904
      %v434 = vsel %vm433, %v420, %v422
      %v435 = vsel %vm433, %v422, %v424
      %v436 = vsel %vm433, %v424, %v426
      %v437 = vsel %vm433, %v426, %v428
      %v438 = vsel %vm433, %v428, %v430
      %v439 = vsel %vm433, %v430, %v432
      %446 = vst [vmem:[#allocation2 + $0xc0] sm:$0xff] %v434
      %447 = vst [vmem:[#allocation2 + $0xc8] sm:$0xff] %v435
      %448 = vst [vmem:[#allocation2 + $0xd0] sm:$0xff] %v436
      %449 = vst [vmem:[#allocation2 + $0xd8] sm:$0xff] %v437
      %450 = vst [vmem:[#allocation2 + $0xe0] sm:$0xff] %v438
      %451 = vst [vmem:[#allocation2 + $0xe8] sm:$0xff] %v439
      %v452 = vld [vmem:[%s246] sm:$0xff]
      %v453 = vld [vmem:[%s246 + $0x8] sm:$0xff]
      %v454 = vld [vmem:[%s246 + $0x10] sm:$0xff]
      %v455 = vld [vmem:[%s246 + $0x18] sm:$0xff]
      %v456 = vld [vmem:[%s246 + $0x20] sm:$0xff]
      %v457 = vld [vmem:[%s246 + $0x28] sm:$0xff]
      %v458 = vld [vmem:[%s246 + $0x30] sm:$0xff]
      %466 = vrot.lane.b32.xlu0 %v452, 108
      %v467 = vpop.permute.xlu0 %466
      %468 = vrot.lane.b32.xlu0 %v453, 108
      %v469 = vpop.permute.xlu0 %468
      %470 = vrot.lane.b32.xlu0 %v454, 108
      %v471 = vpop.permute.xlu0 %470
      %472 = vrot.lane.b32.xlu0 %v455, 108
      %v473 = vpop.permute.xlu0 %472
      %474 = vrot.lane.b32.xlu0 %v456, 108
      %v475 = vpop.permute.xlu0 %474
      %476 = vrot.lane.b32.xlu0 %v457, 108
      %v477 = vpop.permute.xlu0 %476
      %478 = vrot.lane.b32.xlu0 %v458, 108
      %v479 = vpop.permute.xlu0 %478
      %vm480 = vcmask 883712
      %v481 = vsel %vm480, %v467, %v469
      %v482 = vsel %vm480, %v469, %v471
      %v483 = vsel %vm480, %v471, %v473
      %v484 = vsel %vm480, %v473, %v475
      %v485 = vsel %vm480, %v475, %v477
      %v486 = vsel %vm480, %v477, %v479
      %493 = vst [vmem:[#allocation2 + $0xf0] sm:$0xff] %v481
      %494 = vst [vmem:[#allocation2 + $0xf8] sm:$0xff] %v482
      %495 = vst [vmem:[#allocation2 + $0x100] sm:$0xff] %v483
      %496 = vst [vmem:[#allocation2 + $0x108] sm:$0xff] %v484
      %497 = vst [vmem:[#allocation2 + $0x110] sm:$0xff] %v485
      %498 = vst [vmem:[#allocation2 + $0x118] sm:$0xff] %v486
      %v499 = vld [vmem:[%s246] sm:$0xff]
      %v500 = vld [vmem:[%s246 + $0x8] sm:$0xff]
      %v501 = vld [vmem:[%s246 + $0x10] sm:$0xff]
      %v502 = vld [vmem:[%s246 + $0x18] sm:$0xff]
      %v503 = vld [vmem:[%s246 + $0x20] sm:$0xff]
      %v504 = vld [vmem:[%s246 + $0x28] sm:$0xff]
      %v505 = vld [vmem:[%s246 + $0x30] sm:$0xff]
      %513 = vrot.lane.b32.xlu0 %v499, 92
      %v514 = vpop.permute.xlu0 %513
      %515 = vrot.lane.b32.xlu0 %v500, 92
      %v516 = vpop.permute.xlu0 %515
      %517 = vrot.lane.b32.xlu0 %v501, 92
      %v518 = vpop.permute.xlu0 %517
      %519 = vrot.lane.b32.xlu0 %v502, 92
      %v520 = vpop.permute.xlu0 %519
      %521 = vrot.lane.b32.xlu0 %v503, 92
      %v522 = vpop.permute.xlu0 %521
      %523 = vrot.lane.b32.xlu0 %v504, 92
      %v524 = vpop.permute.xlu0 %523
      %525 = vrot.lane.b32.xlu0 %v505, 92
      %v526 = vpop.permute.xlu0 %525
      %vm527 = vcmask 752640
      %v528 = vsel %vm527, %v514, %v516
      %v529 = vsel %vm527, %v516, %v518
      %v530 = vsel %vm527, %v518, %v520
      %v531 = vsel %vm527, %v520, %v522
      %v532 = vsel %vm527, %v522, %v524
      %v533 = vsel %vm527, %v524, %v526
      %540 = vst [vmem:[#allocation2 + $0x120] sm:$0xff] %v528
      %541 = vst [vmem:[#allocation2 + $0x128] sm:$0xff] %v529
      %542 = vst [vmem:[#allocation2 + $0x130] sm:$0xff] %v530
      %543 = vst [vmem:[#allocation2 + $0x138] sm:$0xff] %v531
      %544 = vst [vmem:[#allocation2 + $0x140] sm:$0xff] %v532
      %545 = vst [vmem:[#allocation2 + $0x148] sm:$0xff] %v533
      %v546 = vld [vmem:[%s246] sm:$0xff]
      %v547 = vld [vmem:[%s246 + $0x8] sm:$0xff]
      %v548 = vld [vmem:[%s246 + $0x10] sm:$0xff]
      %v549 = vld [vmem:[%s246 + $0x18] sm:$0xff]
      %v550 = vld [vmem:[%s246 + $0x20] sm:$0xff]
      %v551 = vld [vmem:[%s246 + $0x28] sm:$0xff]
      %v552 = vld [vmem:[%s246 + $0x30] sm:$0xff]
      %560 = vrot.lane.b32.xlu0 %v546, 91
      %v561 = vpop.permute.xlu0 %560
      %562 = vrot.lane.b32.xlu0 %v547, 91
      %v563 = vpop.permute.xlu0 %562
      %564 = vrot.lane.b32.xlu0 %v548, 91
      %v565 = vpop.permute.xlu0 %564
      %566 = vrot.lane.b32.xlu0 %v549, 91
      %v567 = vpop.permute.xlu0 %566
      %568 = vrot.lane.b32.xlu0 %v550, 91
      %v569 = vpop.permute.xlu0 %568
      %570 = vrot.lane.b32.xlu0 %v551, 91
      %v571 = vpop.permute.xlu0 %570
      %572 = vrot.lane.b32.xlu0 %v552, 91
      %v573 = vpop.permute.xlu0 %572
      %vm574 = vcmask 744448
      %v575 = vsel %vm574, %v561, %v563
      %v576 = vsel %vm574, %v563, %v565
      %v577 = vsel %vm574, %v565, %v567
      %v578 = vsel %vm574, %v567, %v569
      %v579 = vsel %vm574, %v569, %v571
      %v580 = vsel %vm574, %v571, %v573
      %587 = vst [vmem:[#allocation2 + $0x150] sm:$0xff] %v575
      %588 = vst [vmem:[#allocation2 + $0x158] sm:$0xff] %v576
      %589 = vst [vmem:[#allocation2 + $0x160] sm:$0xff] %v577
      %590 = vst [vmem:[#allocation2 + $0x168] sm:$0xff] %v578
      %591 = vst [vmem:[#allocation2 + $0x170] sm:$0xff] %v579
      %592 = vst [vmem:[#allocation2 + $0x178] sm:$0xff] %v580
      %v593 = vld [vmem:[%s246] sm:$0xff]
      %v594 = vld [vmem:[%s246 + $0x8] sm:$0xff]
      %v595 = vld [vmem:[%s246 + $0x10] sm:$0xff]
      %v596 = vld [vmem:[%s246 + $0x18] sm:$0xff]
      %v597 = vld [vmem:[%s246 + $0x20] sm:$0xff]
      %v598 = vld [vmem:[%s246 + $0x28] sm:$0xff]
      %v599 = vld [vmem:[%s246 + $0x30] sm:$0xff]
      %607 = vrot.lane.b32.xlu0 %v593, 90
      %v608 = vpop.permute.xlu0 %607
      %609 = vrot.lane.b32.xlu0 %v594, 90
      %v610 = vpop.permute.xlu0 %609
      %611 = vrot.lane.b32.xlu0 %v595, 90
      %v612 = vpop.permute.xlu0 %611
      %613 = vrot.lane.b32.xlu0 %v596, 90
      %v614 = vpop.permute.xlu0 %613
      %615 = vrot.lane.b32.xlu0 %v597, 90
      %v616 = vpop.permute.xlu0 %615
      %617 = vrot.lane.b32.xlu0 %v598, 90
      %v618 = vpop.permute.xlu0 %617
      %619 = vrot.lane.b32.xlu0 %v599, 90
      %v620 = vpop.permute.xlu0 %619
      %vm621 = vcmask 736256
      %v622 = vsel %vm621, %v608, %v610
      %v623 = vsel %vm621, %v610, %v612
      %v624 = vsel %vm621, %v612, %v614
      %v625 = vsel %vm621, %v614, %v616
      %v626 = vsel %vm621, %v616, %v618
      %v627 = vsel %vm621, %v618, %v620
      %634 = vst [vmem:[#allocation2 + $0x180] sm:$0xff] %v622
      %635 = vst [vmem:[#allocation2 + $0x188] sm:$0xff] %v623
      %636 = vst [vmem:[#allocation2 + $0x190] sm:$0xff] %v624
      %637 = vst [vmem:[#allocation2 + $0x198] sm:$0xff] %v625
      %638 = vst [vmem:[#allocation2 + $0x1a0] sm:$0xff] %v626
      %639 = vst [vmem:[#allocation2 + $0x1a8] sm:$0xff] %v627
      %v640 = vld [vmem:[%s1] sm:$0xff]
      %v641 = vld [vmem:[#allocation2] sm:$0xff]
      %v642 = vld [vmem:[#allocation2 + $0x8] sm:$0xff]
      %v643 = vld [vmem:[#allocation2 + $0x10] sm:$0xff]
      %v644 = vld [vmem:[#allocation2 + $0x18] sm:$0xff]
      %v645 = vld [vmem:[#allocation2 + $0x20] sm:$0xff]
      %v646 = vld [vmem:[#allocation2 + $0x28] sm:$0xff]
      %v647 = vld [vmem:[#allocation2 + $0x30] sm:$0xff]
      %v648 = vld [vmem:[#allocation2 + $0x38] sm:$0xff]
      %v649 = vld [vmem:[#allocation2 + $0x40] sm:$0xff]
      %v650 = vld [vmem:[#allocation2 + $0x48] sm:$0xff]
      %v651 = vld [vmem:[#allocation2 + $0x50] sm:$0xff]
      %v652 = vld [vmem:[#allocation2 + $0x58] sm:$0xff]
      %v653 = vld [vmem:[#allocation2 + $0x60] sm:$0xff]
      %v654 = vld [vmem:[#allocation2 + $0x68] sm:$0xff]
      %v655 = vld [vmem:[#allocation2 + $0x70] sm:$0xff]
      %v656 = vld [vmem:[#allocation2 + $0x78] sm:$0xff]
      %v657 = vld [vmem:[#allocation2 + $0x80] sm:$0xff]
      %v658 = vld [vmem:[#allocation2 + $0x88] sm:$0xff]
      %v659 = vld [vmem:[#allocation2 + $0x90] sm:$0xff]
      %v660 = vld [vmem:[#allocation2 + $0x98] sm:$0xff]
      %v661 = vld [vmem:[#allocation2 + $0xa0] sm:$0xff]
      %v662 = vld [vmem:[#allocation2 + $0xa8] sm:$0xff]
      %v663 = vld [vmem:[#allocation2 + $0xb0] sm:$0xff]
      %v664 = vld [vmem:[#allocation2 + $0xb8] sm:$0xff]
      %v665 = vld [vmem:[#allocation2 + $0xc0] sm:$0xff]
      %v666 = vld [vmem:[#allocation2 + $0xc8] sm:$0xff]
      %v667 = vld [vmem:[#allocation2 + $0xd0] sm:$0xff]
      %v668 = vld [vmem:[#allocation2 + $0xd8] sm:$0xff]
      %v669 = vld [vmem:[#allocation2 + $0xe0] sm:$0xff]
      %v670 = vld [vmem:[#allocation2 + $0xe8] sm:$0xff]
      %v671 = vld [vmem:[#allocation2 + $0xf0] sm:$0xff]
      %v672 = vld [vmem:[#allocation2 + $0xf8] sm:$0xff]
      %v673 = vld [vmem:[#allocation2 + $0x100] sm:$0xff]
      %v674 = vld [vmem:[#allocation2 + $0x108] sm:$0xff]
      %v675 = vld [vmem:[#allocation2 + $0x110] sm:$0xff]
      %v676 = vld [vmem:[#allocation2 + $0x118] sm:$0xff]
      %v677 = vld [vmem:[#allocation2 + $0x120] sm:$0xff]
      %v678 = vld [vmem:[#allocation2 + $0x128] sm:$0xff]
      %v679 = vld [vmem:[#allocation2 + $0x130] sm:$0xff]
      %v680 = vld [vmem:[#allocation2 + $0x138] sm:$0xff]
      %v681 = vld [vmem:[#allocation2 + $0x140] sm:$0xff]
      %v682 = vld [vmem:[#allocation2 + $0x148] sm:$0xff]
      %v683 = vld [vmem:[#allocation2 + $0x150] sm:$0xff]
      %v684 = vld [vmem:[#allocation2 + $0x158] sm:$0xff]
      %v685 = vld [vmem:[#allocation2 + $0x160] sm:$0xff]
      %v686 = vld [vmem:[#allocation2 + $0x168] sm:$0xff]
      %v687 = vld [vmem:[#allocation2 + $0x170] sm:$0xff]
      %v688 = vld [vmem:[#allocation2 + $0x178] sm:$0xff]
      %v689 = vld [vmem:[#allocation2 + $0x180] sm:$0xff]
      %v690 = vld [vmem:[#allocation2 + $0x188] sm:$0xff]
      %v691 = vld [vmem:[#allocation2 + $0x190] sm:$0xff]
      %v692 = vld [vmem:[#allocation2 + $0x198] sm:$0xff]
      %v693 = vld [vmem:[#allocation2 + $0x1a0] sm:$0xff]
      %v694 = vld [vmem:[#allocation2 + $0x1a8] sm:$0xff]
      %v695 = vld [vmem:[%s2] sm:$0xff]
      %697 = vset.pattern.permute.xlu0 0
      %698 = vperm.xlu0 %697, %v695
      %v699 = vpop.permute.xlu0 %698
      %vm701 = vcmask 588800
      %v703 = vsel %vm701, %v640, 0
      %705 = vmatprep.subr.mxu0 %v642
      %706 = vmatpush1.msra.mxu0 %v641
      %707 = vmatprep.subr.mxu0 %v648
      %708 = vmatpush1.msra.mxu0 %v647
      %709 = vmatprep.subr.mxu0 %v654
      %710 = vmatpush1.msra.mxu0 %v653
      %711 = vmatprep.subr.mxu0 %v660
      %712 = vmatpush1.msra.mxu0 %v659
      %713 = vmatprep.subr.mxu0 %v666
      %714 = vmatpush1.msra.mxu0 %v665
      %715 = vmatprep.subr.mxu0 %v672
      %716 = vmatpush1.msra.mxu0 %v671
      %717 = vmatprep.subr.mxu0 %v678
      %718 = vmatpush1.msra.mxu0 %v677
      %719 = vmatprep.subr.mxu0 %v684
      %720 = vmatpush1.msra.mxu0 %v683
      %721 = vmatprep.subr.mxu0 %v690
      %722 = vmatpush1.msra.mxu0 %v689
      %723 = vmatprep.subr.mxu0 0.0
      %724 = vmatpush1.msra.mxu0 0.0
      %725 = vmatprep.subr.mxu0 0.0
      %726 = vmatpush1.msra.mxu0 0.0
      %727 = vmatprep.subr.mxu0 0.0
      %728 = vmatpush1.msra.mxu0 0.0
      %729 = vmatprep.subr.mxu0 0.0
      %730 = vmatpush1.msra.mxu0 0.0
      %731 = vmatprep.subr.mxu0 0.0
      %732 = vmatpush1.msra.mxu0 0.0
      %733 = vmatprep.subr.mxu0 0.0
      %734 = vmatpush1.msra.mxu0 0.0
      %735 = vmatprep.subr.mxu0 0.0
      %736 = vmatpush1.msra.mxu0 0.0
      %737 = vmatprep.subr.mxu0 0.0
      %738 = vmatpush1.msra.mxu0 0.0
      %739 = vmatprep.subr.mxu0 0.0
      %740 = vmatpush1.msra.mxu0 0.0
      %741 = vmatprep.subr.mxu0 0.0
      %742 = vmatpush1.msra.mxu0 0.0
      %743 = vmatprep.subr.mxu0 0.0
      %744 = vmatpush1.msra.mxu0 0.0
      %745 = vmatprep.subr.mxu0 0.0
      %746 = vmatpush1.msra.mxu0 0.0
      %747 = vmatprep.subr.mxu0 0.0
      %748 = vmatpush1.msra.mxu0 0.0
      %749 = vmatprep.subr.mxu0 0.0
      %750 = vmatpush1.msra.mxu0 0.0
      %751 = vmatprep.subr.mxu0 0.0
      %752 = vmatpush1.msra.mxu0 0.0
      %753 = vmatprep.subr.mxu0 0.0
      %754 = vmatpush1.msra.mxu0 0.0
      %755 = vmatprep.subr.mxu0 0.0
      %756 = vmatpush1.msra.mxu0 0.0
      %757 = vmatprep.subr.mxu0 0.0
      %758 = vmatpush1.msra.mxu0 0.0
      %759 = vmatprep.subr.mxu0 0.0
      %760 = vmatpush1.msra.mxu0 0.0
      %761 = vmatprep.subr.mxu0 0.0
      %762 = vmatpush1.msra.mxu0 0.0
      %763 = vmatprep.subr.mxu0 0.0
      %764 = vmatpush1.msra.mxu0 0.0
      %765 = vmatprep.subr.mxu0 0.0
      %766 = vmatpush1.msra.mxu0 0.0
      %767 = vmatprep.subr.mxu0 0.0
      %768 = vmatpush1.msra.mxu0 0.0
      %769 = vmatprep.mubr.f32.mxu0 0.0
      %770 = vmatmul.mubr.f32.gmra.mrb[0].mxu0 %v703
      %v771 = vpop.f32.mrb[0].mxu0
      %v772 = vadd.f32 %v699, %v771
      %v773 = vpop.f32.mrb[0].mxu0
      %v774 = vadd.f32 %v699, %v773
      %775 = vdwg.mxu0
      %776 = vmatprep.subr.mxu0 %v644
      %777 = vmatpush1.msra.mxu0 %v643
      %778 = vmatprep.subr.mxu0 %v650
      %779 = vmatpush1.msra.mxu0 %v649
      %780 = vmatprep.subr.mxu0 %v656
      %781 = vmatpush1.msra.mxu0 %v655
      %782 = vmatprep.subr.mxu0 %v662
      %783 = vmatpush1.msra.mxu0 %v661
      %784 = vmatprep.subr.mxu0 %v668
      %785 = vmatpush1.msra.mxu0 %v667
      %786 = vmatprep.subr.mxu0 %v674
      %787 = vmatpush1.msra.mxu0 %v673
      %788 = vmatprep.subr.mxu0 %v680
      %789 = vmatpush1.msra.mxu0 %v679
      %790 = vmatprep.subr.mxu0 %v686
      %791 = vmatpush1.msra.mxu0 %v685
      %792 = vmatprep.subr.mxu0 %v692
      %793 = vmatpush1.msra.mxu0 %v691
      %794 = vmatprep.subr.mxu0 0.0
      %795 = vmatpush1.msra.mxu0 0.0
      %796 = vmatprep.subr.mxu0 0.0
      %797 = vmatpush1.msra.mxu0 0.0
      %798 = vmatprep.subr.mxu0 0.0
      %799 = vmatpush1.msra.mxu0 0.0
      %800 = vmatprep.subr.mxu0 0.0
      %801 = vmatpush1.msra.mxu0 0.0
      %802 = vmatprep.subr.mxu0 0.0
      %803 = vmatpush1.msra.mxu0 0.0
      %804 = vmatprep.subr.mxu0 0.0
      %805 = vmatpush1.msra.mxu0 0.0
      %806 = vmatprep.subr.mxu0 0.0
      %807 = vmatpush1.msra.mxu0 0.0
      %808 = vmatprep.subr.mxu0 0.0
      %809 = vmatpush1.msra.mxu0 0.0
      %810 = vmatprep.subr.mxu0 0.0
      %811 = vmatpush1.msra.mxu0 0.0
      %812 = vmatprep.subr.mxu0 0.0
      %813 = vmatpush1.msra.mxu0 0.0
      %814 = vmatprep.subr.mxu0 0.0
      %815 = vmatpush1.msra.mxu0 0.0
      %816 = vmatprep.subr.mxu0 0.0
      %817 = vmatpush1.msra.mxu0 0.0
      %818 = vmatprep.subr.mxu0 0.0
      %819 = vmatpush1.msra.mxu0 0.0
      %820 = vmatprep.subr.mxu0 0.0
      %821 = vmatpush1.msra.mxu0 0.0
      %822 = vmatprep.subr.mxu0 0.0
      %823 = vmatpush1.msra.mxu0 0.0
      %824 = vmatprep.subr.mxu0 0.0
      %825 = vmatpush1.msra.mxu0 0.0
      %826 = vmatprep.subr.mxu0 0.0
      %827 = vmatpush1.msra.mxu0 0.0
      %828 = vmatprep.subr.mxu0 0.0
      %829 = vmatpush1.msra.mxu0 0.0
      %830 = vmatprep.subr.mxu0 0.0
      %831 = vmatpush1.msra.mxu0 0.0
      %832 = vmatprep.subr.mxu0 0.0
      %833 = vmatpush1.msra.mxu0 0.0
      %834 = vmatprep.subr.mxu0 0.0
      %835 = vmatpush1.msra.mxu0 0.0
      %836 = vmatprep.subr.mxu0 0.0
      %837 = vmatpush1.msra.mxu0 0.0
      %838 = vmatprep.subr.mxu0 0.0
      %839 = vmatpush1.msra.mxu0 0.0
      %840 = vmatprep.mubr.f32.mxu0 0.0
      %841 = vmatmul.mubr.f32.gmra.mrb[0].mxu0 %v703
      %v842 = vpop.f32.mrb[0].mxu0
      %v843 = vadd.f32 %v699, %v842
      %v844 = vpop.f32.mrb[0].mxu0
      %v845 = vadd.f32 %v699, %v844
      %846 = vdwg.mxu0
      %847 = vmatprep.subr.mxu0 %v646
      %848 = vmatpush1.msra.mxu0 %v645
      %849 = vmatprep.subr.mxu0 %v652
      %850 = vmatpush1.msra.mxu0 %v651
      %851 = vmatprep.subr.mxu0 %v658
      %852 = vmatpush1.msra.mxu0 %v657
      %853 = vmatprep.subr.mxu0 %v664
      %854 = vmatpush1.msra.mxu0 %v663
      %855 = vmatprep.subr.mxu0 %v670
      %856 = vmatpush1.msra.mxu0 %v669
      %857 = vmatprep.subr.mxu0 %v676
      %858 = vmatpush1.msra.mxu0 %v675
      %859 = vmatprep.subr.mxu0 %v682
      %860 = vmatpush1.msra.mxu0 %v681
      %861 = vmatprep.subr.mxu0 %v688
      %862 = vmatpush1.msra.mxu0 %v687
      %863 = vmatprep.subr.mxu0 %v694
      %864 = vmatpush1.msra.mxu0 %v693
      %865 = vmatprep.subr.mxu0 0.0
      %866 = vmatpush1.msra.mxu0 0.0
      %867 = vmatprep.subr.mxu0 0.0
      %868 = vmatpush1.msra.mxu0 0.0
      %869 = vmatprep.subr.mxu0 0.0
      %870 = vmatpush1.msra.mxu0 0.0
      %871 = vmatprep.subr.mxu0 0.0
      %872 = vmatpush1.msra.mxu0 0.0
      %873 = vmatprep.subr.mxu0 0.0
      %874 = vmatpush1.msra.mxu0 0.0
      %875 = vmatprep.subr.mxu0 0.0
      %876 = vmatpush1.msra.mxu0 0.0
      %877 = vmatprep.subr.mxu0 0.0
      %878 = vmatpush1.msra.mxu0 0.0
      %879 = vmatprep.subr.mxu0 0.0
      %880 = vmatpush1.msra.mxu0 0.0
      %881 = vmatprep.subr.mxu0 0.0
      %882 = vmatpush1.msra.mxu0 0.0
      %883 = vmatprep.subr.mxu0 0.0
      %884 = vmatpush1.msra.mxu0 0.0
      %885 = vmatprep.subr.mxu0 0.0
      %886 = vmatpush1.msra.mxu0 0.0
      %887 = vmatprep.subr.mxu0 0.0
      %888 = vmatpush1.msra.mxu0 0.0
      %889 = vmatprep.subr.mxu0 0.0
      %890 = vmatpush1.msra.mxu0 0.0
      %891 = vmatprep.subr.mxu0 0.0
      %892 = vmatpush1.msra.mxu0 0.0
      %893 = vmatprep.subr.mxu0 0.0
      %894 = vmatpush1.msra.mxu0 0.0
      %895 = vmatprep.subr.mxu0 0.0
      %896 = vmatpush1.msra.mxu0 0.0
      %897 = vmatprep.subr.mxu0 0.0
      %898 = vmatpush1.msra.mxu0 0.0
      %899 = vmatprep.subr.mxu0 0.0
      %900 = vmatpush1.msra.mxu0 0.0
      %901 = vmatprep.subr.mxu0 0.0
      %902 = vmatpush1.msra.mxu0 0.0
      %903 = vmatprep.subr.mxu0 0.0
      %904 = vmatpush1.msra.mxu0 0.0
      %905 = vmatprep.subr.mxu0 0.0
      %906 = vmatpush1.msra.mxu0 0.0
      %907 = vmatprep.subr.mxu0 0.0
      %908 = vmatpush1.msra.mxu0 0.0
      %909 = vmatprep.subr.mxu0 0.0
      %910 = vmatpush1.msra.mxu0 0.0
      %911 = vmatprep.mubr.f32.mxu0 0.0
      %912 = vmatmul.mubr.f32.gmra.mrb[0].mxu0 %v703
      %v913 = vpop.f32.mrb[0].mxu0
      %v914 = vadd.f32 %v699, %v913
      %v915 = vpop.f32.mrb[0].mxu0
      %v916 = vadd.f32 %v699, %v915
      %917 = vdwg.mxu0
      %v918 = vmax.f32 %v772, 0.0
      %v919 = vmax.f32 %v774, 0.0
      %v920 = vmax.f32 %v843, 0.0
      %v921 = vmax.f32 %v845, 0.0
      %v922 = vmax.f32 %v914, 0.0
      %v923 = vmax.f32 %v916, 0.0
      %v924 = vld [vmem:[%s5] sm:$0x3f]
      %v926 = vlaneseq
      %v927 = vshrl.u32 %v926, 7
      %v928 = vsub.s32 0, %v927
      %v929 = vrot.slane %v924, %v928
      %v930 = vlaneseq
      %v931 = vshrl.u32 %v930, 7
      %v932 = vsub.s32 1, %v931
      %v933 = vrot.slane %v924, %v932
      %v934 = vlaneseq
      %v935 = vshrl.u32 %v934, 7
      %v936 = vsub.s32 2, %v935
      %v937 = vrot.slane %v924, %v936
      %v938 = vlaneseq
      %v939 = vshrl.u32 %v938, 7
      %v940 = vsub.s32 3, %v939
      %v941 = vrot.slane %v924, %v940
      %v942 = vlaneseq
      %v943 = vshrl.u32 %v942, 7
      %v944 = vsub.s32 4, %v943
      %v945 = vrot.slane %v924, %v944
      %v946 = vlaneseq
      %v947 = vshrl.u32 %v946, 7
      %v948 = vsub.s32 5, %v947
      %v949 = vrot.slane %v924, %v948
      %v956 = vmul.f32 %v918, %v929
      %v957 = vmul.f32 %v919, %v933
      %v958 = vmul.f32 %v920, %v937
      %v959 = vmul.f32 %v921, %v941
      %v960 = vmul.f32 %v922, %v945
      %v961 = vmul.f32 %v923, %v949
      %v962 = vadd.f32 %v956, %v957
      %v963 = vadd.f32 %v962, %v958
      %v964 = vadd.f32 %v963, %v959
      %v965 = vadd.f32 %v964, %v960
      %v966 = vadd.f32 %v965, %v961
      %967 = vadd.xlane.f32.xlu0 %v966
      %v968 = vpop.xlane.xlu0 %967
      %v969 = vmul.f32 %v968, 0.001953125
      %v970 = vsub.f32 %v918, %v969
      %v971 = vsub.f32 %v919, %v969
      %v972 = vsub.f32 %v920, %v969
      %v973 = vsub.f32 %v921, %v969
      %v974 = vsub.f32 %v922, %v969
      %v975 = vsub.f32 %v923, %v969
      %v976 = vmul.f32 %v970, %v929
      %v977 = vmul.f32 %v971, %v933
      %v978 = vmul.f32 %v972, %v937
      %v979 = vmul.f32 %v973, %v941
      %v980 = vmul.f32 %v974, %v945
      %v981 = vmul.f32 %v975, %v949
      %v982 = vmul.f32 %v976, %v976
      %v983 = vmul.f32 %v977, %v977
      %v984 = vmul.f32 %v978, %v978
      %v985 = vmul.f32 %v979, %v979
      %v986 = vmul.f32 %v980, %v980
      %v987 = vmul.f32 %v981, %v981
      %v988 = vadd.f32 %v982, %v983
      %v989 = vadd.f32 %v988, %v984
      %v990 = vadd.f32 %v989, %v985
      %v991 = vadd.f32 %v990, %v986
      %v992 = vadd.f32 %v991, %v987
      %993 = vadd.xlane.f32.xlu0 %v992
      %v994 = vpop.xlane.xlu0 %993
      %v995 = vmul.f32 %v994, 0.001953125
      %v996 = vld [vmem:[%s3] sm:$0xff]
      %v997 = vadd.f32 %v995, 1e-05
      %v998 = vrsqrt.pop %v997
      %v999 = vmul.f32 %v996, %v998
      %1001 = vset.pattern.permute.xlu0 0
      %1002 = vperm.xlu0 %1001, %v999
      %v1003 = vpop.permute.xlu0 %1002
      %v1005 = vmul.f32 %v970, %v1003
      %v1006 = vmul.f32 %v971, %v1003
      %v1007 = vmul.f32 %v972, %v1003
      %v1008 = vmul.f32 %v973, %v1003
      %v1009 = vmul.f32 %v974, %v1003
      %v1010 = vmul.f32 %v975, %v1003
      %v1011 = vld [vmem:[%s4] sm:$0xff]
      %1013 = vset.pattern.permute.xlu0 0
      %1014 = vperm.xlu0 %1013, %v1011
      %v1015 = vpop.permute.xlu0 %1014
      %v1017 = vadd.f32 %v1005, %v1015
      %v1018 = vadd.f32 %v1006, %v1015
      %v1019 = vadd.f32 %v1007, %v1015
      %v1020 = vadd.f32 %v1008, %v1015
      %v1021 = vadd.f32 %v1009, %v1015
      %v1022 = vadd.f32 %v1010, %v1015
      %1023 = vst [vmem:[%s251] sm:$0xff] %v1017
      %1024 = vst [vmem:[%s251 + $0x8] sm:$0xff] %v1018
      %1025 = vst [vmem:[%s251 + $0x10] sm:$0xff] %v1019
      %1026 = vst [vmem:[%s251 + $0x18] sm:$0xff] %v1020
      %1027 = vst [vmem:[%s251 + $0x20] sm:$0xff] %v1021
      %1028 = vst [vmem:[%s251 + $0x28] sm:$0xff] %v1022
      %p1029 = scmp.lt.s32.totalorder %s17, 1
      %s1030 = scalar_select %p1029, %s17, 1
      %s1031 = smul.addr %s1030, 6
      %s1032 = smul.addr %s1031, 8
      %s1033 = scalar_lea.vmem %s6, %s1032
      // Predicated region
      $region45: #{siamese_forward.6} parent=43 // pred_check
        %p1034 = pneg %p166
      $region46: #{siamese_forward.6} parent=43 // pred_check_branch
        %1036 = sbr.rel (%p1034) target = $region48
      $region47: #{siamese_forward.6} parent=43 // pred_region
        _
      $region48: #{siamese_forward.6} parent=43 // pred_fallthru
        _
    $region44: #{siamese_forward.6} parent=5 // pred_fallthru
      _
    %p1037 = scmp.le.s32.totalorder 2, %s12
    // Predicated region
    $region49: #{siamese_forward.6} parent=5 // pred_check
      %p1038 = pneg %p1037
    $region50: #{siamese_forward.6} parent=5 // pred_check_branch
      %1040 = sbr.rel (%p1038) target = $region52
    $region51: #{siamese_forward.6} parent=5 // pred_region
      %s1041 = ssub.s32 %s12, 2
      // Predicated region
      $region53: #{siamese_forward.6} parent=51 // pred_check
        %p1042 = pneg %p172
      $region54: #{siamese_forward.6} parent=51 // pred_check_branch
        %1044 = sbr.rel (%p1042) target = $region56
      $region55: #{siamese_forward.6} parent=51 // pred_region
        %p1045 = scmp.lt.s32.totalorder %s18, 1
        %s1046 = scalar_select %p1045, %s18, 1
        %s1047 = smul.addr %s1046, 6
        %s1048 = smul.addr %s1047, 8
        %s1049 = scalar_lea.vmem %s6, %s1048
      $region56: #{siamese_forward.6} parent=51 // pred_fallthru
        _
    $region52: #{siamese_forward.6} parent=5 // pred_fallthru
      _
  $region6: #{siamese_forward.6} parent=0 // loop_footer
    %s16 = sadd.s32 1, %s12
  $region7: #{siamese_forward.6} parent=0 // loop_footer_branch
    %11 = sbr.rel target = $region3
  $region8: #{siamese_forward.6} parent=0 // loop_exit
    _

// kernel: siamese_forward.7
$region0: #{siamese_forward.7}
  #allocation0 [shape = 'u32[]', space=smem, size = 0x4, offset = 0x4, fixed_abs, tag = 'smem constant byte address 0x4 - core index']
  #allocation1 [shape = 'u32[144,128]{1,0:T(1,128)}', space=vmem, size = 0x12000, scoped, tag = 'internal scratch']
  #allocation2 [shape = 'f32[4,512]{1,0:T(4,128)}', space=vmem, size = 0x2000, scoped, tag = 'scratch operand']
  %s0 = inlined_call_operand.vmem [shape: f32[4,2048], index: 0, kind: input, shape index: {}]
  %s1 = inlined_call_operand.vmem [shape: bf16[2048,512], index: 1, kind: input, shape index: {}]
  %s2 = inlined_call_operand.vmem [shape: f32[1,512], index: 2, kind: input, shape index: {}]
  %s3 = inlined_call_operand.vmem [shape: bf16[512,512], index: 3, kind: input, shape index: {}]
  %s4 = inlined_call_operand.vmem [shape: f32[1,512], index: 4, kind: input, shape index: {}]
  %s5 = inlined_call_operand.vmem [shape: f32[512,128], index: 5, kind: input, shape index: {}]
  %s6 = inlined_call_operand.vmem [shape: f32[1,128], index: 6, kind: input, shape index: {}]
  %s7 = inlined_call_operand.vmem [shape: f32[4,128], index: 7, kind: output, shape index: {}]
  %s8 = sld [smem:[#allocation0]]
  $region46: #{siamese_forward.7} parent=0
    _
  %s10 = ssub.s32 1, %s8
  %s11 = scalar_select 0, %s10, %s8
  // Predicated region
  $region2: #{siamese_forward.7} parent=0 // pred_check
    _
  $region3: #{siamese_forward.7} parent=0 // pred_check_branch
    %13 = sbr.rel (0) target = $region5
  $region4: #{siamese_forward.7} parent=0 // pred_region
    _
  $region5: #{siamese_forward.7} parent=0 // pred_fallthru
    _
  // Predicated region
  $region6: #{siamese_forward.7} parent=0 // pred_check
    _
  $region7: #{siamese_forward.7} parent=0 // pred_check_branch
    %15 = sbr.rel (0) target = $region9
  $region8: #{siamese_forward.7} parent=0 // pred_region
    _
  $region9: #{siamese_forward.7} parent=0 // pred_fallthru
    _
  // Predicated region
  $region10: #{siamese_forward.7} parent=0 // pred_check
    _
  $region11: #{siamese_forward.7} parent=0 // pred_check_branch
    %17 = sbr.rel (0) target = $region13
  $region12: #{siamese_forward.7} parent=0 // pred_region
    _
  $region13: #{siamese_forward.7} parent=0 // pred_fallthru
    _
  // Predicated region
  $region14: #{siamese_forward.7} parent=0 // pred_check
    _
  $region15: #{siamese_forward.7} parent=0 // pred_check_branch
    %19 = sbr.rel (0) target = $region17
  $region16: #{siamese_forward.7} parent=0 // pred_region
    _
  $region17: #{siamese_forward.7} parent=0 // pred_fallthru
    _
  // Predicated region
  $region18: #{siamese_forward.7} parent=0 // pred_check
    _
  $region19: #{siamese_forward.7} parent=0 // pred_check_branch
    %21 = sbr.rel (0) target = $region21
  $region20: #{siamese_forward.7} parent=0 // pred_region
    _
  $region21: #{siamese_forward.7} parent=0 // pred_fallthru
    _
  // Predicated region
  $region22: #{siamese_forward.7} parent=0 // pred_check
    _
  $region23: #{siamese_forward.7} parent=0 // pred_check_branch
    %23 = sbr.rel (0) target = $region25
  $region24: #{siamese_forward.7} parent=0 // pred_region
    _
  $region25: #{siamese_forward.7} parent=0 // pred_fallthru
    _
  // Predicated region
  $region26: #{siamese_forward.7} parent=0 // pred_check
    _
  $region27: #{siamese_forward.7} parent=0 // pred_check_branch
    %25 = sbr.rel (0) target = $region29
  $region28: #{siamese_forward.7} parent=0 // pred_region
    _
  $region29: #{siamese_forward.7} parent=0 // pred_fallthru
    _
  %p26 = scmp.eq.s32.totalorder 0, 0
  // Predicated region
  $region30: #{siamese_forward.7} parent=0 // pred_check
    %p27 = pneg %p26
  $region31: #{siamese_forward.7} parent=0 // pred_check_branch
    %29 = sbr.rel (%p27) target = $region33
  $region32: #{siamese_forward.7} parent=0 // pred_region
    %30 = vst [vmem:[#allocation2] sm:$0xff] 0.0
    %31 = vst [vmem:[#allocation2 + $0x8] sm:$0xff] 0.0
  $region33: #{siamese_forward.7} parent=0 // pred_fallthru
    _
  %v32 = vld [vmem:[#allocation2] sm:$0xff]
  %v33 = vld [vmem:[#allocation2 + $0x8] sm:$0xff]
  %v34 = vld [vmem:[%s0] sm:$0xff]
  %v35 = vld [vmem:[%s0 + $0x8] sm:$0xff]
  %v36 = vld [vmem:[%s0 + $0x10] sm:$0xff]
  %v37 = vld [vmem:[%s0 + $0x18] sm:$0xff]
  %v38 = vld [vmem:[%s0 + $0x20] sm:$0xff]
  %v39 = vld [vmem:[%s0 + $0x28] sm:$0xff]
  %v40 = vld [vmem:[%s0 + $0x30] sm:$0xff]
  %v41 = vld [vmem:[%s0 + $0x38] sm:$0xff]
  %v42 = vld [vmem:[%s1] sm:$0xff]
  %v43 = vld [vmem:[%s1 + $0x8] sm:$0xff]
  %v44 = vld [vmem:[%s1 + $0x10] sm:$0xff]
  %v45 = vld [vmem:[%s1 + $0x18] sm:$0xff]
  %v46 = vld [vmem:[%s1 + $0x20] sm:$0xff]
  %v47 = vld [vmem:[%s1 + $0x28] sm:$0xff]
  %v48 = vld [vmem:[%s1 + $0x30] sm:$0xff]
  %v49 = vld [vmem:[%s1 + $0x38] sm:$0xff]
  %v50 = vld [vmem:[%s1 + $0x40] sm:$0xff]
  %v51 = vld [vmem:[%s1 + $0x48] sm:$0xff]
  %v52 = vld [vmem:[%s1 + $0x50] sm:$0xff]
  %v53 = vld [vmem:[%s1 + $0x58] sm:$0xff]
  %v54 = vld [vmem:[%s1 + $0x60] sm:$0xff]
  %v55 = vld [vmem:[%s1 + $0x68] sm:$0xff]
  %v56 = vld [vmem:[%s1 + $0x70] sm:$0xff]
  %v57 = vld [vmem:[%s1 + $0x78] sm:$0xff]
  %v58 = vld [vmem:[%s1 + $0x80] sm:$0xff]
  %v59 = vld [vmem:[%s1 + $0x88] sm:$0xff]
  %v60 = vld [vmem:[%s1 + $0x90] sm:$0xff]
  %v61 = vld [vmem:[%s1 + $0x98] sm:$0xff]
  %v62 = vld [vmem:[%s1 + $0xa0] sm:$0xff]
  %v63 = vld [vmem:[%s1 + $0xa8] sm:$0xff]
  %v64 = vld [vmem:[%s1 + $0xb0] sm:$0xff]
  %v65 = vld [vmem:[%s1 + $0xb8] sm:$0xff]
  %v66 = vld [vmem:[%s1 + $0xc0] sm:$0xff]
  %v67 = vld [vmem:[%s1 + $0xc8] sm:$0xff]
  %v68 = vld [vmem:[%s1 + $0xd0] sm:$0xff]
  %v69 = vld [vmem:[%s1 + $0xd8] sm:$0xff]
  %v70 = vld [vmem:[%s1 + $0xe0] sm:$0xff]
  %v71 = vld [vmem:[%s1 + $0xe8] sm:$0xff]
  %v72 = vld [vmem:[%s1 + $0xf0] sm:$0xff]
  %v73 = vld [vmem:[%s1 + $0xf8] sm:$0xff]
  %v74 = vld [vmem:[%s1 + $0x100] sm:$0xff]
  %v75 = vld [vmem:[%s1 + $0x108] sm:$0xff]
  %v76 = vld [vmem:[%s1 + $0x110] sm:$0xff]
  %v77 = vld [vmem:[%s1 + $0x118] sm:$0xff]
  %v78 = vld [vmem:[%s1 + $0x120] sm:$0xff]
  %v79 = vld [vmem:[%s1 + $0x128] sm:$0xff]
  %v80 = vld [vmem:[%s1 + $0x130] sm:$0xff]
  %v81 = vld [vmem:[%s1 + $0x138] sm:$0xff]
  %v82 = vld [vmem:[%s1 + $0x140] sm:$0xff]
  %v83 = vld [vmem:[%s1 + $0x148] sm:$0xff]
  %v84 = vld [vmem:[%s1 + $0x150] sm:$0xff]
  %v85 = vld [vmem:[%s1 + $0x158] sm:$0xff]
  %v86 = vld [vmem:[%s1 + $0x160] sm:$0xff]
  %v87 = vld [vmem:[%s1 + $0x168] sm:$0xff]
  %v88 = vld [vmem:[%s1 + $0x170] sm:$0xff]
  %v89 = vld [vmem:[%s1 + $0x178] sm:$0xff]
  %v90 = vld [vmem:[%s1 + $0x180] sm:$0xff]
  %v91 = vld [vmem:[%s1 + $0x188] sm:$0xff]
  %v92 = vld [vmem:[%s1 + $0x190] sm:$0xff]
  %v93 = vld [vmem:[%s1 + $0x198] sm:$0xff]
  %v94 = vld [vmem:[%s1 + $0x1a0] sm:$0xff]
  %v95 = vld [vmem:[%s1 + $0x1a8] sm:$0xff]
  %v96 = vld [vmem:[%s1 + $0x1b0] sm:$0xff]
  %v97 = vld [vmem:[%s1 + $0x1b8] sm:$0xff]
  %v98 = vld [vmem:[%s1 + $0x1c0] sm:$0xff]
  %v99 = vld [vmem:[%s1 + $0x1c8] sm:$0xff]
  %v100 = vld [vmem:[%s1 + $0x1d0] sm:$0xff]
  %v101 = vld [vmem:[%s1 + $0x1d8] sm:$0xff]
  %v102 = vld [vmem:[%s1 + $0x1e0] sm:$0xff]
  %v103 = vld [vmem:[%s1 + $0x1e8] sm:$0xff]
  %v104 = vld [vmem:[%s1 + $0x1f0] sm:$0xff]
  %v105 = vld [vmem:[%s1 + $0x1f8] sm:$0xff]
  %v106 = vld [vmem:[%s1 + $0x200] sm:$0xff]
  %v107 = vld [vmem:[%s1 + $0x208] sm:$0xff]
  %v108 = vld [vmem:[%s1 + $0x210] sm:$0xff]
  %v109 = vld [vmem:[%s1 + $0x218] sm:$0xff]
  %v110 = vld [vmem:[%s1 + $0x220] sm:$0xff]
  %v111 = vld [vmem:[%s1 + $0x228] sm:$0xff]
  %v112 = vld [vmem:[%s1 + $0x230] sm:$0xff]
  %v113 = vld [vmem:[%s1 + $0x238] sm:$0xff]
  %v114 = vld [vmem:[%s1 + $0x240] sm:$0xff]
  %v115 = vld [vmem:[%s1 + $0x248] sm:$0xff]
  %v116 = vld [vmem:[%s1 + $0x250] sm:$0xff]
  %v117 = vld [vmem:[%s1 + $0x258] sm:$0xff]
  %v118 = vld [vmem:[%s1 + $0x260] sm:$0xff]
  %v119 = vld [vmem:[%s1 + $0x268] sm:$0xff]
  %v120 = vld [vmem:[%s1 + $0x270] sm:$0xff]
  %v121 = vld [vmem:[%s1 + $0x278] sm:$0xff]
  %v122 = vld [vmem:[%s1 + $0x280] sm:$0xff]
  %v123 = vld [vmem:[%s1 + $0x288] sm:$0xff]
  %v124 = vld [vmem:[%s1 + $0x290] sm:$0xff]
  %v125 = vld [vmem:[%s1 + $0x298] sm:$0xff]
  %v126 = vld [vmem:[%s1 + $0x2a0] sm:$0xff]
  %v127 = vld [vmem:[%s1 + $0x2a8] sm:$0xff]
  %v128 = vld [vmem:[%s1 + $0x2b0] sm:$0xff]
  %v129 = vld [vmem:[%s1 + $0x2b8] sm:$0xff]
  %v130 = vld [vmem:[%s1 + $0x2c0] sm:$0xff]
  %v131 = vld [vmem:[%s1 + $0x2c8] sm:$0xff]
  %v132 = vld [vmem:[%s1 + $0x2d0] sm:$0xff]
  %v133 = vld [vmem:[%s1 + $0x2d8] sm:$0xff]
  %v134 = vld [vmem:[%s1 + $0x2e0] sm:$0xff]
  %v135 = vld [vmem:[%s1 + $0x2e8] sm:$0xff]
  %v136 = vld [vmem:[%s1 + $0x2f0] sm:$0xff]
  %v137 = vld [vmem:[%s1 + $0x2f8] sm:$0xff]
  %v138 = vld [vmem:[%s1 + $0x300] sm:$0xff]
  %v139 = vld [vmem:[%s1 + $0x308] sm:$0xff]
  %v140 = vld [vmem:[%s1 + $0x310] sm:$0xff]
  %v141 = vld [vmem:[%s1 + $0x318] sm:$0xff]
  %v142 = vld [vmem:[%s1 + $0x320] sm:$0xff]
  %v143 = vld [vmem:[%s1 + $0x328] sm:$0xff]
  %v144 = vld [vmem:[%s1 + $0x330] sm:$0xff]
  %v145 = vld [vmem:[%s1 + $0x338] sm:$0xff]
  %v146 = vld [vmem:[%s1 + $0x340] sm:$0xff]
  %v147 = vld [vmem:[%s1 + $0x348] sm:$0xff]
  %v148 = vld [vmem:[%s1 + $0x350] sm:$0xff]
  %v149 = vld [vmem:[%s1 + $0x358] sm:$0xff]
  %v150 = vld [vmem:[%s1 + $0x360] sm:$0xff]
  %v151 = vld [vmem:[%s1 + $0x368] sm:$0xff]
  %v152 = vld [vmem:[%s1 + $0x370] sm:$0xff]
  %v153 = vld [vmem:[%s1 + $0x378] sm:$0xff]
  %v154 = vld [vmem:[%s1 + $0x380] sm:$0xff]
  %v155 = vld [vmem:[%s1 + $0x388] sm:$0xff]
  %v156 = vld [vmem:[%s1 + $0x390] sm:$0xff]
  %v157 = vld [vmem:[%s1 + $0x398] sm:$0xff]
  %v158 = vld [vmem:[%s1 + $0x3a0] sm:$0xff]
  %v159 = vld [vmem:[%s1 + $0x3a8] sm:$0xff]
  %v160 = vld [vmem:[%s1 + $0x3b0] sm:$0xff]
  %v161 = vld [vmem:[%s1 + $0x3b8] sm:$0xff]
  %v162 = vld [vmem:[%s1 + $0x3c0] sm:$0xff]
  %v163 = vld [vmem:[%s1 + $0x3c8] sm:$0xff]
  %v164 = vld [vmem:[%s1 + $0x3d0] sm:$0xff]
  %v165 = vld [vmem:[%s1 + $0x3d8] sm:$0xff]
  %v166 = vld [vmem:[%s1 + $0x3e0] sm:$0xff]
  %v167 = vld [vmem:[%s1 + $0x3e8] sm:$0xff]
  %v168 = vld [vmem:[%s1 + $0x3f0] sm:$0xff]
  %v169 = vld [vmem:[%s1 + $0x3f8] sm:$0xff]
  %v170 = vld [vmem:[%s1 + $0x400] sm:$0xff]
  %v171 = vld [vmem:[%s1 + $0x408] sm:$0xff]
  %v172 = vld [vmem:[%s1 + $0x410] sm:$0xff]
  %v173 = vld [vmem:[%s1 + $0x418] sm:$0xff]
  %v174 = vld [vmem:[%s1 + $0x420] sm:$0xff]
  %v175 = vld [vmem:[%s1 + $0x428] sm:$0xff]
  %v176 = vld [vmem:[%s1 + $0x430] sm:$0xff]
  %v177 = vld [vmem:[%s1 + $0x438] sm:$0xff]
  %v178 = vld [vmem:[%s1 + $0x440] sm:$0xff]
  %v179 = vld [vmem:[%s1 + $0x448] sm:$0xff]
  %v180 = vld [vmem:[%s1 + $0x450] sm:$0xff]
  %v181 = vld [vmem:[%s1 + $0x458] sm:$0xff]
  %v182 = vld [vmem:[%s1 + $0x460] sm:$0xff]
  %v183 = vld [vmem:[%s1 + $0x468] sm:$0xff]
  %v184 = vld [vmem:[%s1 + $0x470] sm:$0xff]
  %v185 = vld [vmem:[%s1 + $0x478] sm:$0xff]
  %v186 = vld [vmem:[%s1 + $0x480] sm:$0xff]
  %v187 = vld [vmem:[%s1 + $0x488] sm:$0xff]
  %v188 = vld [vmem:[%s1 + $0x490] sm:$0xff]
  %v189 = vld [vmem:[%s1 + $0x498] sm:$0xff]
  %v190 = vld [vmem:[%s1 + $0x4a0] sm:$0xff]
  %v191 = vld [vmem:[%s1 + $0x4a8] sm:$0xff]
  %v192 = vld [vmem:[%s1 + $0x4b0] sm:$0xff]
  %v193 = vld [vmem:[%s1 + $0x4b8] sm:$0xff]
  %v194 = vld [vmem:[%s1 + $0x4c0] sm:$0xff]
  %v195 = vld [vmem:[%s1 + $0x4c8] sm:$0xff]
  %v196 = vld [vmem:[%s1 + $0x4d0] sm:$0xff]
  %v197 = vld [vmem:[%s1 + $0x4d8] sm:$0xff]
  %v198 = vld [vmem:[%s1 + $0x4e0] sm:$0xff]
  %v199 = vld [vmem:[%s1 + $0x4e8] sm:$0xff]
  %v200 = vld [vmem:[%s1 + $0x4f0] sm:$0xff]
  %v201 = vld [vmem:[%s1 + $0x4f8] sm:$0xff]
  %v202 = vld [vmem:[%s1 + $0x500] sm:$0xff]
  %v203 = vld [vmem:[%s1 + $0x508] sm:$0xff]
  %v204 = vld [vmem:[%s1 + $0x510] sm:$0xff]
  %v205 = vld [vmem:[%s1 + $0x518] sm:$0xff]
  %v206 = vld [vmem:[%s1 + $0x520] sm:$0xff]
  %v207 = vld [vmem:[%s1 + $0x528] sm:$0xff]
  %v208 = vld [vmem:[%s1 + $0x530] sm:$0xff]
  %v209 = vld [vmem:[%s1 + $0x538] sm:$0xff]
  %v210 = vld [vmem:[%s1 + $0x540] sm:$0xff]
  %v211 = vld [vmem:[%s1 + $0x548] sm:$0xff]
  %v212 = vld [vmem:[%s1 + $0x550] sm:$0xff]
  %v213 = vld [vmem:[%s1 + $0x558] sm:$0xff]
  %v214 = vld [vmem:[%s1 + $0x560] sm:$0xff]
  %v215 = vld [vmem:[%s1 + $0x568] sm:$0xff]
  %v216 = vld [vmem:[%s1 + $0x570] sm:$0xff]
  %v217 = vld [vmem:[%s1 + $0x578] sm:$0xff]
  %v218 = vld [vmem:[%s1 + $0x580] sm:$0xff]
  %v219 = vld [vmem:[%s1 + $0x588] sm:$0xff]
  %v220 = vld [vmem:[%s1 + $0x590] sm:$0xff]
  %v221 = vld [vmem:[%s1 + $0x598] sm:$0xff]
  %v222 = vld [vmem:[%s1 + $0x5a0] sm:$0xff]
  %v223 = vld [vmem:[%s1 + $0x5a8] sm:$0xff]
  %v224 = vld [vmem:[%s1 + $0x5b0] sm:$0xff]
  %v225 = vld [vmem:[%s1 + $0x5b8] sm:$0xff]
  %v226 = vld [vmem:[%s1 + $0x5c0] sm:$0xff]
  %v227 = vld [vmem:[%s1 + $0x5c8] sm:$0xff]
  %v228 = vld [vmem:[%s1 + $0x5d0] sm:$0xff]
  %v229 = vld [vmem:[%s1 + $0x5d8] sm:$0xff]
  %v230 = vld [vmem:[%s1 + $0x5e0] sm:$0xff]
  %v231 = vld [vmem:[%s1 + $0x5e8] sm:$0xff]
  %v232 = vld [vmem:[%s1 + $0x5f0] sm:$0xff]
  %v233 = vld [vmem:[%s1 + $0x5f8] sm:$0xff]
  %v234 = vld [vmem:[%s1 + $0x600] sm:$0xff]
  %v235 = vld [vmem:[%s1 + $0x608] sm:$0xff]
  %v236 = vld [vmem:[%s1 + $0x610] sm:$0xff]
  %v237 = vld [vmem:[%s1 + $0x618] sm:$0xff]
  %v238 = vld [vmem:[%s1 + $0x620] sm:$0xff]
  %v239 = vld [vmem:[%s1 + $0x628] sm:$0xff]
  %v240 = vld [vmem:[%s1 + $0x630] sm:$0xff]
  %v241 = vld [vmem:[%s1 + $0x638] sm:$0xff]
  %v242 = vld [vmem:[%s1 + $0x640] sm:$0xff]
  %v243 = vld [vmem:[%s1 + $0x648] sm:$0xff]
  %v244 = vld [vmem:[%s1 + $0x650] sm:$0xff]
  %v245 = vld [vmem:[%s1 + $0x658] sm:$0xff]
  %v246 = vld [vmem:[%s1 + $0x660] sm:$0xff]
  %v247 = vld [vmem:[%s1 + $0x668] sm:$0xff]
  %v248 = vld [vmem:[%s1 + $0x670] sm:$0xff]
  %v249 = vld [vmem:[%s1 + $0x678] sm:$0xff]
  %v250 = vld [vmem:[%s1 + $0x680] sm:$0xff]
  %v251 = vld [vmem:[%s1 + $0x688] sm:$0xff]
  %v252 = vld [vmem:[%s1 + $0x690] sm:$0xff]
  %v253 = vld [vmem:[%s1 + $0x698] sm:$0xff]
  %v254 = vld [vmem:[%s1 + $0x6a0] sm:$0xff]
  %v255 = vld [vmem:[%s1 + $0x6a8] sm:$0xff]
  %v256 = vld [vmem:[%s1 + $0x6b0] sm:$0xff]
  %v257 = vld [vmem:[%s1 + $0x6b8] sm:$0xff]
  %v258 = vld [vmem:[%s1 + $0x6c0] sm:$0xff]
  %v259 = vld [vmem:[%s1 + $0x6c8] sm:$0xff]
  %v260 = vld [vmem:[%s1 + $0x6d0] sm:$0xff]
  %v261 = vld [vmem:[%s1 + $0x6d8] sm:$0xff]
  %v262 = vld [vmem:[%s1 + $0x6e0] sm:$0xff]
  %v263 = vld [vmem:[%s1 + $0x6e8] sm:$0xff]
  %v264 = vld [vmem:[%s1 + $0x6f0] sm:$0xff]
  %v265 = vld [vmem:[%s1 + $0x6f8] sm:$0xff]
  %v266 = vld [vmem:[%s1 + $0x700] sm:$0xff]
  %v267 = vld [vmem:[%s1 + $0x708] sm:$0xff]
  %v268 = vld [vmem:[%s1 + $0x710] sm:$0xff]
  %v269 = vld [vmem:[%s1 + $0x718] sm:$0xff]
  %v270 = vld [vmem:[%s1 + $0x720] sm:$0xff]
  %v271 = vld [vmem:[%s1 + $0x728] sm:$0xff]
  %v272 = vld [vmem:[%s1 + $0x730] sm:$0xff]
  %v273 = vld [vmem:[%s1 + $0x738] sm:$0xff]
  %v274 = vld [vmem:[%s1 + $0x740] sm:$0xff]
  %v275 = vld [vmem:[%s1 + $0x748] sm:$0xff]
  %v276 = vld [vmem:[%s1 + $0x750] sm:$0xff]
  %v277 = vld [vmem:[%s1 + $0x758] sm:$0xff]
  %v278 = vld [vmem:[%s1 + $0x760] sm:$0xff]
  %v279 = vld [vmem:[%s1 + $0x768] sm:$0xff]
  %v280 = vld [vmem:[%s1 + $0x770] sm:$0xff]
  %v281 = vld [vmem:[%s1 + $0x778] sm:$0xff]
  %v282 = vld [vmem:[%s1 + $0x780] sm:$0xff]
  %v283 = vld [vmem:[%s1 + $0x788] sm:$0xff]
  %v284 = vld [vmem:[%s1 + $0x790] sm:$0xff]
  %v285 = vld [vmem:[%s1 + $0x798] sm:$0xff]
  %v286 = vld [vmem:[%s1 + $0x7a0] sm:$0xff]
  %v287 = vld [vmem:[%s1 + $0x7a8] sm:$0xff]
  %v288 = vld [vmem:[%s1 + $0x7b0] sm:$0xff]
  %v289 = vld [vmem:[%s1 + $0x7b8] sm:$0xff]
  %v290 = vld [vmem:[%s1 + $0x7c0] sm:$0xff]
  %v291 = vld [vmem:[%s1 + $0x7c8] sm:$0xff]
  %v292 = vld [vmem:[%s1 + $0x7d0] sm:$0xff]
  %v293 = vld [vmem:[%s1 + $0x7d8] sm:$0xff]
  %v294 = vld [vmem:[%s1 + $0x7e0] sm:$0xff]
  %v295 = vld [vmem:[%s1 + $0x7e8] sm:$0xff]
  %v296 = vld [vmem:[%s1 + $0x7f0] sm:$0xff]
  %v297 = vld [vmem:[%s1 + $0x7f8] sm:$0xff]
  %v298 = vld [vmem:[%s1 + $0x800] sm:$0xff]
  %v299 = vld [vmem:[%s1 + $0x808] sm:$0xff]
  %v300 = vld [vmem:[%s1 + $0x810] sm:$0xff]
  %v301 = vld [vmem:[%s1 + $0x818] sm:$0xff]
  %v302 = vld [vmem:[%s1 + $0x820] sm:$0xff]
  %v303 = vld [vmem:[%s1 + $0x828] sm:$0xff]
  %v304 = vld [vmem:[%s1 + $0x830] sm:$0xff]
  %v305 = vld [vmem:[%s1 + $0x838] sm:$0xff]
  %v306 = vld [vmem:[%s1 + $0x840] sm:$0xff]
  %v307 = vld [vmem:[%s1 + $0x848] sm:$0xff]
  %v308 = vld [vmem:[%s1 + $0x850] sm:$0xff]
  %v309 = vld [vmem:[%s1 + $0x858] sm:$0xff]
  %v310 = vld [vmem:[%s1 + $0x860] sm:$0xff]
  %v311 = vld [vmem:[%s1 + $0x868] sm:$0xff]
  %v312 = vld [vmem:[%s1 + $0x870] sm:$0xff]
  %v313 = vld [vmem:[%s1 + $0x878] sm:$0xff]
  %v314 = vld [vmem:[%s1 + $0x880] sm:$0xff]
  %v315 = vld [vmem:[%s1 + $0x888] sm:$0xff]
  %v316 = vld [vmem:[%s1 + $0x890] sm:$0xff]
  %v317 = vld [vmem:[%s1 + $0x898] sm:$0xff]
  %v318 = vld [vmem:[%s1 + $0x8a0] sm:$0xff]
  %v319 = vld [vmem:[%s1 + $0x8a8] sm:$0xff]
  %v320 = vld [vmem:[%s1 + $0x8b0] sm:$0xff]
  %v321 = vld [vmem:[%s1 + $0x8b8] sm:$0xff]
  %v322 = vld [vmem:[%s1 + $0x8c0] sm:$0xff]
  %v323 = vld [vmem:[%s1 + $0x8c8] sm:$0xff]
  %v324 = vld [vmem:[%s1 + $0x8d0] sm:$0xff]
  %v325 = vld [vmem:[%s1 + $0x8d8] sm:$0xff]
  %v326 = vld [vmem:[%s1 + $0x8e0] sm:$0xff]
  %v327 = vld [vmem:[%s1 + $0x8e8] sm:$0xff]
  %v328 = vld [vmem:[%s1 + $0x8f0] sm:$0xff]
  %v329 = vld [vmem:[%s1 + $0x8f8] sm:$0xff]
  %v330 = vld [vmem:[%s1 + $0x900] sm:$0xff]
  %v331 = vld [vmem:[%s1 + $0x908] sm:$0xff]
  %v332 = vld [vmem:[%s1 + $0x910] sm:$0xff]
  %v333 = vld [vmem:[%s1 + $0x918] sm:$0xff]
  %v334 = vld [vmem:[%s1 + $0x920] sm:$0xff]
  %v335 = vld [vmem:[%s1 + $0x928] sm:$0xff]
  %v336 = vld [vmem:[%s1 + $0x930] sm:$0xff]
  %v337 = vld [vmem:[%s1 + $0x938] sm:$0xff]
  %v338 = vld [vmem:[%s1 + $0x940] sm:$0xff]
  %v339 = vld [vmem:[%s1 + $0x948] sm:$0xff]
  %v340 = vld [vmem:[%s1 + $0x950] sm:$0xff]
  %v341 = vld [vmem:[%s1 + $0x958] sm:$0xff]
  %v342 = vld [vmem:[%s1 + $0x960] sm:$0xff]
  %v343 = vld [vmem:[%s1 + $0x968] sm:$0xff]
  %v344 = vld [vmem:[%s1 + $0x970] sm:$0xff]
  %v345 = vld [vmem:[%s1 + $0x978] sm:$0xff]
  %v346 = vld [vmem:[%s1 + $0x980] sm:$0xff]
  %v347 = vld [vmem:[%s1 + $0x988] sm:$0xff]
  %v348 = vld [vmem:[%s1 + $0x990] sm:$0xff]
  %v349 = vld [vmem:[%s1 + $0x998] sm:$0xff]
  %v350 = vld [vmem:[%s1 + $0x9a0] sm:$0xff]
  %v351 = vld [vmem:[%s1 + $0x9a8] sm:$0xff]
  %v352 = vld [vmem:[%s1 + $0x9b0] sm:$0xff]
  %v353 = vld [vmem:[%s1 + $0x9b8] sm:$0xff]
  %v354 = vld [vmem:[%s1 + $0x9c0] sm:$0xff]
  %v355 = vld [vmem:[%s1 + $0x9c8] sm:$0xff]
  %v356 = vld [vmem:[%s1 + $0x9d0] sm:$0xff]
  %v357 = vld [vmem:[%s1 + $0x9d8] sm:$0xff]
  %v358 = vld [vmem:[%s1 + $0x9e0] sm:$0xff]
  %v359 = vld [vmem:[%s1 + $0x9e8] sm:$0xff]
  %v360 = vld [vmem:[%s1 + $0x9f0] sm:$0xff]
  %v361 = vld [vmem:[%s1 + $0x9f8] sm:$0xff]
  %v362 = vld [vmem:[%s1 + $0xa00] sm:$0xff]
  %v363 = vld [vmem:[%s1 + $0xa08] sm:$0xff]
  %v364 = vld [vmem:[%s1 + $0xa10] sm:$0xff]
  %v365 = vld [vmem:[%s1 + $0xa18] sm:$0xff]
  %v366 = vld [vmem:[%s1 + $0xa20] sm:$0xff]
  %v367 = vld [vmem:[%s1 + $0xa28] sm:$0xff]
  %v368 = vld [vmem:[%s1 + $0xa30] sm:$0xff]
  %v369 = vld [vmem:[%s1 + $0xa38] sm:$0xff]
  %v370 = vld [vmem:[%s1 + $0xa40] sm:$0xff]
  %v371 = vld [vmem:[%s1 + $0xa48] sm:$0xff]
  %v372 = vld [vmem:[%s1 + $0xa50] sm:$0xff]
  %v373 = vld [vmem:[%s1 + $0xa58] sm:$0xff]
  %v374 = vld [vmem:[%s1 + $0xa60] sm:$0xff]
  %v375 = vld [vmem:[%s1 + $0xa68] sm:$0xff]
  %v376 = vld [vmem:[%s1 + $0xa70] sm:$0xff]
  %v377 = vld [vmem:[%s1 + $0xa78] sm:$0xff]
  %v378 = vld [vmem:[%s1 + $0xa80] sm:$0xff]
  %v379 = vld [vmem:[%s1 + $0xa88] sm:$0xff]
  %v380 = vld [vmem:[%s1 + $0xa90] sm:$0xff]
  %v381 = vld [vmem:[%s1 + $0xa98] sm:$0xff]
  %v382 = vld [vmem:[%s1 + $0xaa0] sm:$0xff]
  %v383 = vld [vmem:[%s1 + $0xaa8] sm:$0xff]
  %v384 = vld [vmem:[%s1 + $0xab0] sm:$0xff]
  %v385 = vld [vmem:[%s1 + $0xab8] sm:$0xff]
  %v386 = vld [vmem:[%s1 + $0xac0] sm:$0xff]
  %v387 = vld [vmem:[%s1 + $0xac8] sm:$0xff]
  %v388 = vld [vmem:[%s1 + $0xad0] sm:$0xff]
  %v389 = vld [vmem:[%s1 + $0xad8] sm:$0xff]
  %v390 = vld [vmem:[%s1 + $0xae0] sm:$0xff]
  %v391 = vld [vmem:[%s1 + $0xae8] sm:$0xff]
  %v392 = vld [vmem:[%s1 + $0xaf0] sm:$0xff]
  %v393 = vld [vmem:[%s1 + $0xaf8] sm:$0xff]
  %v394 = vld [vmem:[%s1 + $0xb00] sm:$0xff]
  %v395 = vld [vmem:[%s1 + $0xb08] sm:$0xff]
  %v396 = vld [vmem:[%s1 + $0xb10] sm:$0xff]
  %v397 = vld [vmem:[%s1 + $0xb18] sm:$0xff]
  %v398 = vld [vmem:[%s1 + $0xb20] sm:$0xff]
  %v399 = vld [vmem:[%s1 + $0xb28] sm:$0xff]
  %v400 = vld [vmem:[%s1 + $0xb30] sm:$0xff]
  %v401 = vld [vmem:[%s1 + $0xb38] sm:$0xff]
  %v402 = vld [vmem:[%s1 + $0xb40] sm:$0xff]
  %v403 = vld [vmem:[%s1 + $0xb48] sm:$0xff]
  %v404 = vld [vmem:[%s1 + $0xb50] sm:$0xff]
  %v405 = vld [vmem:[%s1 + $0xb58] sm:$0xff]
  %v406 = vld [vmem:[%s1 + $0xb60] sm:$0xff]
  %v407 = vld [vmem:[%s1 + $0xb68] sm:$0xff]
  %v408 = vld [vmem:[%s1 + $0xb70] sm:$0xff]
  %v409 = vld [vmem:[%s1 + $0xb78] sm:$0xff]
  %v410 = vld [vmem:[%s1 + $0xb80] sm:$0xff]
  %v411 = vld [vmem:[%s1 + $0xb88] sm:$0xff]
  %v412 = vld [vmem:[%s1 + $0xb90] sm:$0xff]
  %v413 = vld [vmem:[%s1 + $0xb98] sm:$0xff]
  %v414 = vld [vmem:[%s1 + $0xba0] sm:$0xff]
  %v415 = vld [vmem:[%s1 + $0xba8] sm:$0xff]
  %v416 = vld [vmem:[%s1 + $0xbb0] sm:$0xff]
  %v417 = vld [vmem:[%s1 + $0xbb8] sm:$0xff]
  %v418 = vld [vmem:[%s1 + $0xbc0] sm:$0xff]
  %v419 = vld [vmem:[%s1 + $0xbc8] sm:$0xff]
  %v420 = vld [vmem:[%s1 + $0xbd0] sm:$0xff]
  %v421 = vld [vmem:[%s1 + $0xbd8] sm:$0xff]
  %v422 = vld [vmem:[%s1 + $0xbe0] sm:$0xff]
  %v423 = vld [vmem:[%s1 + $0xbe8] sm:$0xff]
  %v424 = vld [vmem:[%s1 + $0xbf0] sm:$0xff]
  %v425 = vld [vmem:[%s1 + $0xbf8] sm:$0xff]
  %v426 = vld [vmem:[%s1 + $0xc00] sm:$0xff]
  %v427 = vld [vmem:[%s1 + $0xc08] sm:$0xff]
  %v428 = vld [vmem:[%s1 + $0xc10] sm:$0xff]
  %v429 = vld [vmem:[%s1 + $0xc18] sm:$0xff]
  %v430 = vld [vmem:[%s1 + $0xc20] sm:$0xff]
  %v431 = vld [vmem:[%s1 + $0xc28] sm:$0xff]
  %v432 = vld [vmem:[%s1 + $0xc30] sm:$0xff]
  %v433 = vld [vmem:[%s1 + $0xc38] sm:$0xff]
  %v434 = vld [vmem:[%s1 + $0xc40] sm:$0xff]
  %v435 = vld [vmem:[%s1 + $0xc48] sm:$0xff]
  %v436 = vld [vmem:[%s1 + $0xc50] sm:$0xff]
  %v437 = vld [vmem:[%s1 + $0xc58] sm:$0xff]
  %v438 = vld [vmem:[%s1 + $0xc60] sm:$0xff]
  %v439 = vld [vmem:[%s1 + $0xc68] sm:$0xff]
  %v440 = vld [vmem:[%s1 + $0xc70] sm:$0xff]
  %v441 = vld [vmem:[%s1 + $0xc78] sm:$0xff]
  %v442 = vld [vmem:[%s1 + $0xc80] sm:$0xff]
  %v443 = vld [vmem:[%s1 + $0xc88] sm:$0xff]
  %v444 = vld [vmem:[%s1 + $0xc90] sm:$0xff]
  %v445 = vld [vmem:[%s1 + $0xc98] sm:$0xff]
  %v446 = vld [vmem:[%s1 + $0xca0] sm:$0xff]
  %v447 = vld [vmem:[%s1 + $0xca8] sm:$0xff]
  %v448 = vld [vmem:[%s1 + $0xcb0] sm:$0xff]
  %v449 = vld [vmem:[%s1 + $0xcb8] sm:$0xff]
  %v450 = vld [vmem:[%s1 + $0xcc0] sm:$0xff]
  %v451 = vld [vmem:[%s1 + $0xcc8] sm:$0xff]
  %v452 = vld [vmem:[%s1 + $0xcd0] sm:$0xff]
  %v453 = vld [vmem:[%s1 + $0xcd8] sm:$0xff]
  %v454 = vld [vmem:[%s1 + $0xce0] sm:$0xff]
  %v455 = vld [vmem:[%s1 + $0xce8] sm:$0xff]
  %v456 = vld [vmem:[%s1 + $0xcf0] sm:$0xff]
  %v457 = vld [vmem:[%s1 + $0xcf8] sm:$0xff]
  %v458 = vld [vmem:[%s1 + $0xd00] sm:$0xff]
  %v459 = vld [vmem:[%s1 + $0xd08] sm:$0xff]
  %v460 = vld [vmem:[%s1 + $0xd10] sm:$0xff]
  %v461 = vld [vmem:[%s1 + $0xd18] sm:$0xff]
  %v462 = vld [vmem:[%s1 + $0xd20] sm:$0xff]
  %v463 = vld [vmem:[%s1 + $0xd28] sm:$0xff]
  %v464 = vld [vmem:[%s1 + $0xd30] sm:$0xff]
  %v465 = vld [vmem:[%s1 + $0xd38] sm:$0xff]
  %v466 = vld [vmem:[%s1 + $0xd40] sm:$0xff]
  %v467 = vld [vmem:[%s1 + $0xd48] sm:$0xff]
  %v468 = vld [vmem:[%s1 + $0xd50] sm:$0xff]
  %v469 = vld [vmem:[%s1 + $0xd58] sm:$0xff]
  %v470 = vld [vmem:[%s1 + $0xd60] sm:$0xff]
  %v471 = vld [vmem:[%s1 + $0xd68] sm:$0xff]
  %v472 = vld [vmem:[%s1 + $0xd70] sm:$0xff]
  %v473 = vld [vmem:[%s1 + $0xd78] sm:$0xff]
  %v474 = vld [vmem:[%s1 + $0xd80] sm:$0xff]
  %v475 = vld [vmem:[%s1 + $0xd88] sm:$0xff]
  %v476 = vld [vmem:[%s1 + $0xd90] sm:$0xff]
  %v477 = vld [vmem:[%s1 + $0xd98] sm:$0xff]
  %v478 = vld [vmem:[%s1 + $0xda0] sm:$0xff]
  %v479 = vld [vmem:[%s1 + $0xda8] sm:$0xff]
  %v480 = vld [vmem:[%s1 + $0xdb0] sm:$0xff]
  %v481 = vld [vmem:[%s1 + $0xdb8] sm:$0xff]
  %v482 = vld [vmem:[%s1 + $0xdc0] sm:$0xff]
  %v483 = vld [vmem:[%s1 + $0xdc8] sm:$0xff]
  %v484 = vld [vmem:[%s1 + $0xdd0] sm:$0xff]
  %v485 = vld [vmem:[%s1 + $0xdd8] sm:$0xff]
  %v486 = vld [vmem:[%s1 + $0xde0] sm:$0xff]
  %v487 = vld [vmem:[%s1 + $0xde8] sm:$0xff]
  %v488 = vld [vmem:[%s1 + $0xdf0] sm:$0xff]
  %v489 = vld [vmem:[%s1 + $0xdf8] sm:$0xff]
  %v490 = vld [vmem:[%s1 + $0xe00] sm:$0xff]
  %v491 = vld [vmem:[%s1 + $0xe08] sm:$0xff]
  %v492 = vld [vmem:[%s1 + $0xe10] sm:$0xff]
  %v493 = vld [vmem:[%s1 + $0xe18] sm:$0xff]
  %v494 = vld [vmem:[%s1 + $0xe20] sm:$0xff]
  %v495 = vld [vmem:[%s1 + $0xe28] sm:$0xff]
  %v496 = vld [vmem:[%s1 + $0xe30] sm:$0xff]
  %v497 = vld [vmem:[%s1 + $0xe38] sm:$0xff]
  %v498 = vld [vmem:[%s1 + $0xe40] sm:$0xff]
  %v499 = vld [vmem:[%s1 + $0xe48] sm:$0xff]
  %v500 = vld [vmem:[%s1 + $0xe50] sm:$0xff]
  %v501 = vld [vmem:[%s1 + $0xe58] sm:$0xff]
  %v502 = vld [vmem:[%s1 + $0xe60] sm:$0xff]
  %v503 = vld [vmem:[%s1 + $0xe68] sm:$0xff]
  %v504 = vld [vmem:[%s1 + $0xe70] sm:$0xff]
  %v505 = vld [vmem:[%s1 + $0xe78] sm:$0xff]
  %v506 = vld [vmem:[%s1 + $0xe80] sm:$0xff]
  %v507 = vld [vmem:[%s1 + $0xe88] sm:$0xff]
  %v508 = vld [vmem:[%s1 + $0xe90] sm:$0xff]
  %v509 = vld [vmem:[%s1 + $0xe98] sm:$0xff]
  %v510 = vld [vmem:[%s1 + $0xea0] sm:$0xff]
  %v511 = vld [vmem:[%s1 + $0xea8] sm:$0xff]
  %v512 = vld [vmem:[%s1 + $0xeb0] sm:$0xff]
  %v513 = vld [vmem:[%s1 + $0xeb8] sm:$0xff]
  %v514 = vld [vmem:[%s1 + $0xec0] sm:$0xff]
  %v515 = vld [vmem:[%s1 + $0xec8] sm:$0xff]
  %v516 = vld [vmem:[%s1 + $0xed0] sm:$0xff]
  %v517 = vld [vmem:[%s1 + $0xed8] sm:$0xff]
  %v518 = vld [vmem:[%s1 + $0xee0] sm:$0xff]
  %v519 = vld [vmem:[%s1 + $0xee8] sm:$0xff]
  %v520 = vld [vmem:[%s1 + $0xef0] sm:$0xff]
  %v521 = vld [vmem:[%s1 + $0xef8] sm:$0xff]
  %v522 = vld [vmem:[%s1 + $0xf00] sm:$0xff]
  %v523 = vld [vmem:[%s1 + $0xf08] sm:$0xff]
  %v524 = vld [vmem:[%s1 + $0xf10] sm:$0xff]
  %v525 = vld [vmem:[%s1 + $0xf18] sm:$0xff]
  %v526 = vld [vmem:[%s1 + $0xf20] sm:$0xff]
  %v527 = vld [vmem:[%s1 + $0xf28] sm:$0xff]
  %v528 = vld [vmem:[%s1 + $0xf30] sm:$0xff]
  %v529 = vld [vmem:[%s1 + $0xf38] sm:$0xff]
  %v530 = vld [vmem:[%s1 + $0xf40] sm:$0xff]
  %v531 = vld [vmem:[%s1 + $0xf48] sm:$0xff]
  %v532 = vld [vmem:[%s1 + $0xf50] sm:$0xff]
  %v533 = vld [vmem:[%s1 + $0xf58] sm:$0xff]
  %v534 = vld [vmem:[%s1 + $0xf60] sm:$0xff]
  %v535 = vld [vmem:[%s1 + $0xf68] sm:$0xff]
  %v536 = vld [vmem:[%s1 + $0xf70] sm:$0xff]
  %v537 = vld [vmem:[%s1 + $0xf78] sm:$0xff]
  %v538 = vld [vmem:[%s1 + $0xf80] sm:$0xff]
  %v539 = vld [vmem:[%s1 + $0xf88] sm:$0xff]
  %v540 = vld [vmem:[%s1 + $0xf90] sm:$0xff]
  %v541 = vld [vmem:[%s1 + $0xf98] sm:$0xff]
  %v542 = vld [vmem:[%s1 + $0xfa0] sm:$0xff]
  %v543 = vld [vmem:[%s1 + $0xfa8] sm:$0xff]
  %v544 = vld [vmem:[%s1 + $0xfb0] sm:$0xff]
  %v545 = vld [vmem:[%s1 + $0xfb8] sm:$0xff]
  %v546 = vld [vmem:[%s1 + $0xfc0] sm:$0xff]
  %v547 = vld [vmem:[%s1 + $0xfc8] sm:$0xff]
  %v548 = vld [vmem:[%s1 + $0xfd0] sm:$0xff]
  %v549 = vld [vmem:[%s1 + $0xfd8] sm:$0xff]
  %v550 = vld [vmem:[%s1 + $0xfe0] sm:$0xff]
  %v551 = vld [vmem:[%s1 + $0xfe8] sm:$0xff]
  %v552 = vld [vmem:[%s1 + $0xff0] sm:$0xff]
  %v553 = vld [vmem:[%s1 + $0xff8] sm:$0xff]
  %v554 = vunpack.c.l.bf16 %v42
  %v555 = vunpack.c.h.bf16 %v42
  %v556 = vunpack.c.l.bf16 %v43
  %v557 = vunpack.c.h.bf16 %v43
  %v558 = vunpack.c.l.bf16 %v44
  %v559 = vunpack.c.h.bf16 %v44
  %v560 = vunpack.c.l.bf16 %v45
  %v561 = vunpack.c.h.bf16 %v45
  %v562 = vunpack.c.l.bf16 %v46
  %v563 = vunpack.c.h.bf16 %v46
  %v564 = vunpack.c.l.bf16 %v47
  %v565 = vunpack.c.h.bf16 %v47
  %v566 = vunpack.c.l.bf16 %v48
  %v567 = vunpack.c.h.bf16 %v48
  %v568 = vunpack.c.l.bf16 %v49
  %v569 = vunpack.c.h.bf16 %v49
  %v570 = vunpack.c.l.bf16 %v50
  %v571 = vunpack.c.h.bf16 %v50
  %v572 = vunpack.c.l.bf16 %v51
  %v573 = vunpack.c.h.bf16 %v51
  %v574 = vunpack.c.l.bf16 %v52
  %v575 = vunpack.c.h.bf16 %v52
  %v576 = vunpack.c.l.bf16 %v53
  %v577 = vunpack.c.h.bf16 %v53
  %v578 = vunpack.c.l.bf16 %v54
  %v579 = vunpack.c.h.bf16 %v54
  %v580 = vunpack.c.l.bf16 %v55
  %v581 = vunpack.c.h.bf16 %v55
  %v582 = vunpack.c.l.bf16 %v56
  %v583 = vunpack.c.h.bf16 %v56
  %v584 = vunpack.c.l.bf16 %v57
  %v585 = vunpack.c.h.bf16 %v57
  %v586 = vunpack.c.l.bf16 %v58
  %v587 = vunpack.c.h.bf16 %v58
  %v588 = vunpack.c.l.bf16 %v59
  %v589 = vunpack.c.h.bf16 %v59
  %v590 = vunpack.c.l.bf16 %v60
  %v591 = vunpack.c.h.bf16 %v60
  %v592 = vunpack.c.l.bf16 %v61
  %v593 = vunpack.c.h.bf16 %v61
  %v594 = vunpack.c.l.bf16 %v62
  %v595 = vunpack.c.h.bf16 %v62
  %v596 = vunpack.c.l.bf16 %v63
  %v597 = vunpack.c.h.bf16 %v63
  %v598 = vunpack.c.l.bf16 %v64
  %v599 = vunpack.c.h.bf16 %v64
  %v600 = vunpack.c.l.bf16 %v65
  %v601 = vunpack.c.h.bf16 %v65
  %v602 = vunpack.c.l.bf16 %v66
  %v603 = vunpack.c.h.bf16 %v66
  %v604 = vunpack.c.l.bf16 %v67
  %v605 = vunpack.c.h.bf16 %v67
  %v606 = vunpack.c.l.bf16 %v68
  %v607 = vunpack.c.h.bf16 %v68
  %v608 = vunpack.c.l.bf16 %v69
  %v609 = vunpack.c.h.bf16 %v69
  %v610 = vunpack.c.l.bf16 %v70
  %v611 = vunpack.c.h.bf16 %v70
  %v612 = vunpack.c.l.bf16 %v71
  %v613 = vunpack.c.h.bf16 %v71
  %v614 = vunpack.c.l.bf16 %v72
  %v615 = vunpack.c.h.bf16 %v72
  %v616 = vunpack.c.l.bf16 %v73
  %v617 = vunpack.c.h.bf16 %v73
  %v618 = vunpack.c.l.bf16 %v74
  %v619 = vunpack.c.h.bf16 %v74
  %v620 = vunpack.c.l.bf16 %v75
  %v621 = vunpack.c.h.bf16 %v75
  %v622 = vunpack.c.l.bf16 %v76
  %v623 = vunpack.c.h.bf16 %v76
  %v624 = vunpack.c.l.bf16 %v77
  %v625 = vunpack.c.h.bf16 %v77
  %v626 = vunpack.c.l.bf16 %v78
  %v627 = vunpack.c.h.bf16 %v78
  %v628 = vunpack.c.l.bf16 %v79
  %v629 = vunpack.c.h.bf16 %v79
  %v630 = vunpack.c.l.bf16 %v80
  %v631 = vunpack.c.h.bf16 %v80
  %v632 = vunpack.c.l.bf16 %v81
  %v633 = vunpack.c.h.bf16 %v81
  %v634 = vunpack.c.l.bf16 %v82
  %v635 = vunpack.c.h.bf16 %v82
  %v636 = vunpack.c.l.bf16 %v83
  %v637 = vunpack.c.h.bf16 %v83
  %v638 = vunpack.c.l.bf16 %v84
  %v639 = vunpack.c.h.bf16 %v84
  %v640 = vunpack.c.l.bf16 %v85
  %v641 = vunpack.c.h.bf16 %v85
  %v642 = vunpack.c.l.bf16 %v86
  %v643 = vunpack.c.h.bf16 %v86
  %v644 = vunpack.c.l.bf16 %v87
  %v645 = vunpack.c.h.bf16 %v87
  %v646 = vunpack.c.l.bf16 %v88
  %v647 = vunpack.c.h.bf16 %v88
  %v648 = vunpack.c.l.bf16 %v89
  %v649 = vunpack.c.h.bf16 %v89
  %v650 = vunpack.c.l.bf16 %v90
  %v651 = vunpack.c.h.bf16 %v90
  %v652 = vunpack.c.l.bf16 %v91
  %v653 = vunpack.c.h.bf16 %v91
  %v654 = vunpack.c.l.bf16 %v92
  %v655 = vunpack.c.h.bf16 %v92
  %v656 = vunpack.c.l.bf16 %v93
  %v657 = vunpack.c.h.bf16 %v93
  %v658 = vunpack.c.l.bf16 %v94
  %v659 = vunpack.c.h.bf16 %v94
  %v660 = vunpack.c.l.bf16 %v95
  %v661 = vunpack.c.h.bf16 %v95
  %v662 = vunpack.c.l.bf16 %v96
  %v663 = vunpack.c.h.bf16 %v96
  %v664 = vunpack.c.l.bf16 %v97
  %v665 = vunpack.c.h.bf16 %v97
  %v666 = vunpack.c.l.bf16 %v98
  %v667 = vunpack.c.h.bf16 %v98
  %v668 = vunpack.c.l.bf16 %v99
  %v669 = vunpack.c.h.bf16 %v99
  %v670 = vunpack.c.l.bf16 %v100
  %v671 = vunpack.c.h.bf16 %v100
  %v672 = vunpack.c.l.bf16 %v101
  %v673 = vunpack.c.h.bf16 %v101
  %v674 = vunpack.c.l.bf16 %v102
  %v675 = vunpack.c.h.bf16 %v102
  %v676 = vunpack.c.l.bf16 %v103
  %v677 = vunpack.c.h.bf16 %v103
  %v678 = vunpack.c.l.bf16 %v104
  %v679 = vunpack.c.h.bf16 %v104
  %v680 = vunpack.c.l.bf16 %v105
  %v681 = vunpack.c.h.bf16 %v105
  %v682 = vunpack.c.l.bf16 %v106
  %v683 = vunpack.c.h.bf16 %v106
  %v684 = vunpack.c.l.bf16 %v107
  %v685 = vunpack.c.h.bf16 %v107
  %v686 = vunpack.c.l.bf16 %v108
  %v687 = vunpack.c.h.bf16 %v108
  %v688 = vunpack.c.l.bf16 %v109
  %v689 = vunpack.c.h.bf16 %v109
  %v690 = vunpack.c.l.bf16 %v110
  %v691 = vunpack.c.h.bf16 %v110
  %v692 = vunpack.c.l.bf16 %v111
  %v693 = vunpack.c.h.bf16 %v111
  %v694 = vunpack.c.l.bf16 %v112
  %v695 = vunpack.c.h.bf16 %v112
  %v696 = vunpack.c.l.bf16 %v113
  %v697 = vunpack.c.h.bf16 %v113
  %v698 = vunpack.c.l.bf16 %v114
  %v699 = vunpack.c.h.bf16 %v114
  %v700 = vunpack.c.l.bf16 %v115
  %v701 = vunpack.c.h.bf16 %v115
  %v702 = vunpack.c.l.bf16 %v116
  %v703 = vunpack.c.h.bf16 %v116
  %v704 = vunpack.c.l.bf16 %v117
  %v705 = vunpack.c.h.bf16 %v117
  %v706 = vunpack.c.l.bf16 %v118
  %v707 = vunpack.c.h.bf16 %v118
  %v708 = vunpack.c.l.bf16 %v119
  %v709 = vunpack.c.h.bf16 %v119
  %v710 = vunpack.c.l.bf16 %v120
  %v711 = vunpack.c.h.bf16 %v120
  %v712 = vunpack.c.l.bf16 %v121
  %v713 = vunpack.c.h.bf16 %v121
  %v714 = vunpack.c.l.bf16 %v122
  %v715 = vunpack.c.h.bf16 %v122
  %v716 = vunpack.c.l.bf16 %v123
  %v717 = vunpack.c.h.bf16 %v123
  %v718 = vunpack.c.l.bf16 %v124
  %v719 = vunpack.c.h.bf16 %v124
  %v720 = vunpack.c.l.bf16 %v125
  %v721 = vunpack.c.h.bf16 %v125
  %v722 = vunpack.c.l.bf16 %v126
  %v723 = vunpack.c.h.bf16 %v126
  %v724 = vunpack.c.l.bf16 %v127
  %v725 = vunpack.c.h.bf16 %v127
  %v726 = vunpack.c.l.bf16 %v128
  %v727 = vunpack.c.h.bf16 %v128
  %v728 = vunpack.c.l.bf16 %v129
  %v729 = vunpack.c.h.bf16 %v129
  %v730 = vunpack.c.l.bf16 %v130
  %v731 = vunpack.c.h.bf16 %v130
  %v732 = vunpack.c.l.bf16 %v131
  %v733 = vunpack.c.h.bf16 %v131
  %v734 = vunpack.c.l.bf16 %v132
  %v735 = vunpack.c.h.bf16 %v132
  %v736 = vunpack.c.l.bf16 %v133
  %v737 = vunpack.c.h.bf16 %v133
  %v738 = vunpack.c.l.bf16 %v134
  %v739 = vunpack.c.h.bf16 %v134
  %v740 = vunpack.c.l.bf16 %v135
  %v741 = vunpack.c.h.bf16 %v135
  %v742 = vunpack.c.l.bf16 %v136
  %v743 = vunpack.c.h.bf16 %v136
  %v744 = vunpack.c.l.bf16 %v137
  %v745 = vunpack.c.h.bf16 %v137
  %v746 = vunpack.c.l.bf16 %v138
  %v747 = vunpack.c.h.bf16 %v138
  %v748 = vunpack.c.l.bf16 %v139
  %v749 = vunpack.c.h.bf16 %v139
  %v750 = vunpack.c.l.bf16 %v140
  %v751 = vunpack.c.h.bf16 %v140
  %v752 = vunpack.c.l.bf16 %v141
  %v753 = vunpack.c.h.bf16 %v141
  %v754 = vunpack.c.l.bf16 %v142
  %v755 = vunpack.c.h.bf16 %v142
  %v756 = vunpack.c.l.bf16 %v143
  %v757 = vunpack.c.h.bf16 %v143
  %v758 = vunpack.c.l.bf16 %v144
  %v759 = vunpack.c.h.bf16 %v144
  %v760 = vunpack.c.l.bf16 %v145
  %v761 = vunpack.c.h.bf16 %v145
  %v762 = vunpack.c.l.bf16 %v146
  %v763 = vunpack.c.h.bf16 %v146
  %v764 = vunpack.c.l.bf16 %v147
  %v765 = vunpack.c.h.bf16 %v147
  %v766 = vunpack.c.l.bf16 %v148
  %v767 = vunpack.c.h.bf16 %v148
  %v768 = vunpack.c.l.bf16 %v149
  %v769 = vunpack.c.h.bf16 %v149
  %v770 = vunpack.c.l.bf16 %v150
  %v771 = vunpack.c.h.bf16 %v150
  %v772 = vunpack.c.l.bf16 %v151
  %v773 = vunpack.c.h.bf16 %v151
  %v774 = vunpack.c.l.bf16 %v152
  %v775 = vunpack.c.h.bf16 %v152
  %v776 = vunpack.c.l.bf16 %v153
  %v777 = vunpack.c.h.bf16 %v153
  %v778 = vunpack.c.l.bf16 %v154
  %v779 = vunpack.c.h.bf16 %v154
  %v780 = vunpack.c.l.bf16 %v155
  %v781 = vunpack.c.h.bf16 %v155
  %v782 = vunpack.c.l.bf16 %v156
  %v783 = vunpack.c.h.bf16 %v156
  %v784 = vunpack.c.l.bf16 %v157
  %v785 = vunpack.c.h.bf16 %v157
  %v786 = vunpack.c.l.bf16 %v158
  %v787 = vunpack.c.h.bf16 %v158
  %v788 = vunpack.c.l.bf16 %v159
  %v789 = vunpack.c.h.bf16 %v159
  %v790 = vunpack.c.l.bf16 %v160
  %v791 = vunpack.c.h.bf16 %v160
  %v792 = vunpack.c.l.bf16 %v161
  %v793 = vunpack.c.h.bf16 %v161
  %v794 = vunpack.c.l.bf16 %v162
  %v795 = vunpack.c.h.bf16 %v162
  %v796 = vunpack.c.l.bf16 %v163
  %v797 = vunpack.c.h.bf16 %v163
  %v798 = vunpack.c.l.bf16 %v164
  %v799 = vunpack.c.h.bf16 %v164
  %v800 = vunpack.c.l.bf16 %v165
  %v801 = vunpack.c.h.bf16 %v165
  %v802 = vunpack.c.l.bf16 %v166
  %v803 = vunpack.c.h.bf16 %v166
  %v804 = vunpack.c.l.bf16 %v167
  %v805 = vunpack.c.h.bf16 %v167
  %v806 = vunpack.c.l.bf16 %v168
  %v807 = vunpack.c.h.bf16 %v168
  %v808 = vunpack.c.l.bf16 %v169
  %v809 = vunpack.c.h.bf16 %v169
  %v810 = vunpack.c.l.bf16 %v170
  %v811 = vunpack.c.h.bf16 %v170
  %v812 = vunpack.c.l.bf16 %v171
  %v813 = vunpack.c.h.bf16 %v171
  %v814 = vunpack.c.l.bf16 %v172
  %v815 = vunpack.c.h.bf16 %v172
  %v816 = vunpack.c.l.bf16 %v173
  %v817 = vunpack.c.h.bf16 %v173
  %v818 = vunpack.c.l.bf16 %v174
  %v819 = vunpack.c.h.bf16 %v174
  %v820 = vunpack.c.l.bf16 %v175
  %v821 = vunpack.c.h.bf16 %v175
  %v822 = vunpack.c.l.bf16 %v176
  %v823 = vunpack.c.h.bf16 %v176
  %v824 = vunpack.c.l.bf16 %v177
  %v825 = vunpack.c.h.bf16 %v177
  %v826 = vunpack.c.l.bf16 %v178
  %v827 = vunpack.c.h.bf16 %v178
  %v828 = vunpack.c.l.bf16 %v179
  %v829 = vunpack.c.h.bf16 %v179
  %v830 = vunpack.c.l.bf16 %v180
  %v831 = vunpack.c.h.bf16 %v180
  %v832 = vunpack.c.l.bf16 %v181
  %v833 = vunpack.c.h.bf16 %v181
  %v834 = vunpack.c.l.bf16 %v182
  %v835 = vunpack.c.h.bf16 %v182
  %v836 = vunpack.c.l.bf16 %v183
  %v837 = vunpack.c.h.bf16 %v183
  %v838 = vunpack.c.l.bf16 %v184
  %v839 = vunpack.c.h.bf16 %v184
  %v840 = vunpack.c.l.bf16 %v185
  %v841 = vunpack.c.h.bf16 %v185
  %v842 = vunpack.c.l.bf16 %v186
  %v843 = vunpack.c.h.bf16 %v186
  %v844 = vunpack.c.l.bf16 %v187
  %v845 = vunpack.c.h.bf16 %v187
  %v846 = vunpack.c.l.bf16 %v188
  %v847 = vunpack.c.h.bf16 %v188
  %v848 = vunpack.c.l.bf16 %v189
  %v849 = vunpack.c.h.bf16 %v189
  %v850 = vunpack.c.l.bf16 %v190
  %v851 = vunpack.c.h.bf16 %v190
  %v852 = vunpack.c.l.bf16 %v191
  %v853 = vunpack.c.h.bf16 %v191
  %v854 = vunpack.c.l.bf16 %v192
  %v855 = vunpack.c.h.bf16 %v192
  %v856 = vunpack.c.l.bf16 %v193
  %v857 = vunpack.c.h.bf16 %v193
  %v858 = vunpack.c.l.bf16 %v194
  %v859 = vunpack.c.h.bf16 %v194
  %v860 = vunpack.c.l.bf16 %v195
  %v861 = vunpack.c.h.bf16 %v195
  %v862 = vunpack.c.l.bf16 %v196
  %v863 = vunpack.c.h.bf16 %v196
  %v864 = vunpack.c.l.bf16 %v197
  %v865 = vunpack.c.h.bf16 %v197
  %v866 = vunpack.c.l.bf16 %v198
  %v867 = vunpack.c.h.bf16 %v198
  %v868 = vunpack.c.l.bf16 %v199
  %v869 = vunpack.c.h.bf16 %v199
  %v870 = vunpack.c.l.bf16 %v200
  %v871 = vunpack.c.h.bf16 %v200
  %v872 = vunpack.c.l.bf16 %v201
  %v873 = vunpack.c.h.bf16 %v201
  %v874 = vunpack.c.l.bf16 %v202
  %v875 = vunpack.c.h.bf16 %v202
  %v876 = vunpack.c.l.bf16 %v203
  %v877 = vunpack.c.h.bf16 %v203
  %v878 = vunpack.c.l.bf16 %v204
  %v879 = vunpack.c.h.bf16 %v204
  %v880 = vunpack.c.l.bf16 %v205
  %v881 = vunpack.c.h.bf16 %v205
  %v882 = vunpack.c.l.bf16 %v206
  %v883 = vunpack.c.h.bf16 %v206
  %v884 = vunpack.c.l.bf16 %v207
  %v885 = vunpack.c.h.bf16 %v207
  %v886 = vunpack.c.l.bf16 %v208
  %v887 = vunpack.c.h.bf16 %v208
  %v888 = vunpack.c.l.bf16 %v209
  %v889 = vunpack.c.h.bf16 %v209
  %v890 = vunpack.c.l.bf16 %v210
  %v891 = vunpack.c.h.bf16 %v210
  %v892 = vunpack.c.l.bf16 %v211
  %v893 = vunpack.c.h.bf16 %v211
  %v894 = vunpack.c.l.bf16 %v212
  %v895 = vunpack.c.h.bf16 %v212
  %v896 = vunpack.c.l.bf16 %v213
  %v897 = vunpack.c.h.bf16 %v213
  %v898 = vunpack.c.l.bf16 %v214
  %v899 = vunpack.c.h.bf16 %v214
  %v900 = vunpack.c.l.bf16 %v215
  %v901 = vunpack.c.h.bf16 %v215
  %v902 = vunpack.c.l.bf16 %v216
  %v903 = vunpack.c.h.bf16 %v216
  %v904 = vunpack.c.l.bf16 %v217
  %v905 = vunpack.c.h.bf16 %v217
  %v906 = vunpack.c.l.bf16 %v218
  %v907 = vunpack.c.h.bf16 %v218
  %v908 = vunpack.c.l.bf16 %v219
  %v909 = vunpack.c.h.bf16 %v219
  %v910 = vunpack.c.l.bf16 %v220
  %v911 = vunpack.c.h.bf16 %v220
  %v912 = vunpack.c.l.bf16 %v221
  %v913 = vunpack.c.h.bf16 %v221
  %v914 = vunpack.c.l.bf16 %v222
  %v915 = vunpack.c.h.bf16 %v222
  %v916 = vunpack.c.l.bf16 %v223
  %v917 = vunpack.c.h.bf16 %v223
  %v918 = vunpack.c.l.bf16 %v224
  %v919 = vunpack.c.h.bf16 %v224
  %v920 = vunpack.c.l.bf16 %v225
  %v921 = vunpack.c.h.bf16 %v225
  %v922 = vunpack.c.l.bf16 %v226
  %v923 = vunpack.c.h.bf16 %v226
  %v924 = vunpack.c.l.bf16 %v227
  %v925 = vunpack.c.h.bf16 %v227
  %v926 = vunpack.c.l.bf16 %v228
  %v927 = vunpack.c.h.bf16 %v228
  %v928 = vunpack.c.l.bf16 %v229
  %v929 = vunpack.c.h.bf16 %v229
  %v930 = vunpack.c.l.bf16 %v230
  %v931 = vunpack.c.h.bf16 %v230
  %v932 = vunpack.c.l.bf16 %v231
  %v933 = vunpack.c.h.bf16 %v231
  %v934 = vunpack.c.l.bf16 %v232
  %v935 = vunpack.c.h.bf16 %v232
  %v936 = vunpack.c.l.bf16 %v233
  %v937 = vunpack.c.h.bf16 %v233
  %v938 = vunpack.c.l.bf16 %v234
  %v939 = vunpack.c.h.bf16 %v234
  %v940 = vunpack.c.l.bf16 %v235
  %v941 = vunpack.c.h.bf16 %v235
  %v942 = vunpack.c.l.bf16 %v236
  %v943 = vunpack.c.h.bf16 %v236
  %v944 = vunpack.c.l.bf16 %v237
  %v945 = vunpack.c.h.bf16 %v237
  %v946 = vunpack.c.l.bf16 %v238
  %v947 = vunpack.c.h.bf16 %v238
  %v948 = vunpack.c.l.bf16 %v239
  %v949 = vunpack.c.h.bf16 %v239
  %v950 = vunpack.c.l.bf16 %v240
  %v951 = vunpack.c.h.bf16 %v240
  %v952 = vunpack.c.l.bf16 %v241
  %v953 = vunpack.c.h.bf16 %v241
  %v954 = vunpack.c.l.bf16 %v242
  %v955 = vunpack.c.h.bf16 %v242
  %v956 = vunpack.c.l.bf16 %v243
  %v957 = vunpack.c.h.bf16 %v243
  %v958 = vunpack.c.l.bf16 %v244
  %v959 = vunpack.c.h.bf16 %v244
  %v960 = vunpack.c.l.bf16 %v245
  %v961 = vunpack.c.h.bf16 %v245
  %v962 = vunpack.c.l.bf16 %v246
  %v963 = vunpack.c.h.bf16 %v246
  %v964 = vunpack.c.l.bf16 %v247
  %v965 = vunpack.c.h.bf16 %v247
  %v966 = vunpack.c.l.bf16 %v248
  %v967 = vunpack.c.h.bf16 %v248
  %v968 = vunpack.c.l.bf16 %v249
  %v969 = vunpack.c.h.bf16 %v249
  %v970 = vunpack.c.l.bf16 %v250
  %v971 = vunpack.c.h.bf16 %v250
  %v972 = vunpack.c.l.bf16 %v251
  %v973 = vunpack.c.h.bf16 %v251
  %v974 = vunpack.c.l.bf16 %v252
  %v975 = vunpack.c.h.bf16 %v252
  %v976 = vunpack.c.l.bf16 %v253
  %v977 = vunpack.c.h.bf16 %v253
  %v978 = vunpack.c.l.bf16 %v254
  %v979 = vunpack.c.h.bf16 %v254
  %v980 = vunpack.c.l.bf16 %v255
  %v981 = vunpack.c.h.bf16 %v255
  %v982 = vunpack.c.l.bf16 %v256
  %v983 = vunpack.c.h.bf16 %v256
  %v984 = vunpack.c.l.bf16 %v257
  %v985 = vunpack.c.h.bf16 %v257
  %v986 = vunpack.c.l.bf16 %v258
  %v987 = vunpack.c.h.bf16 %v258
  %v988 = vunpack.c.l.bf16 %v259
  %v989 = vunpack.c.h.bf16 %v259
  %v990 = vunpack.c.l.bf16 %v260
  %v991 = vunpack.c.h.bf16 %v260
  %v992 = vunpack.c.l.bf16 %v261
  %v993 = vunpack.c.h.bf16 %v261
  %v994 = vunpack.c.l.bf16 %v262
  %v995 = vunpack.c.h.bf16 %v262
  %v996 = vunpack.c.l.bf16 %v263
  %v997 = vunpack.c.h.bf16 %v263
  %v998 = vunpack.c.l.bf16 %v264
  %v999 = vunpack.c.h.bf16 %v264
  %v1000 = vunpack.c.l.bf16 %v265
  %v1001 = vunpack.c.h.bf16 %v265
  %v1002 = vunpack.c.l.bf16 %v266
  %v1003 = vunpack.c.h.bf16 %v266
  %v1004 = vunpack.c.l.bf16 %v267
  %v1005 = vunpack.c.h.bf16 %v267
  %v1006 = vunpack.c.l.bf16 %v268
  %v1007 = vunpack.c.h.bf16 %v268
  %v1008 = vunpack.c.l.bf16 %v269
  %v1009 = vunpack.c.h.bf16 %v269
  %v1010 = vunpack.c.l.bf16 %v270
  %v1011 = vunpack.c.h.bf16 %v270
  %v1012 = vunpack.c.l.bf16 %v271
  %v1013 = vunpack.c.h.bf16 %v271
  %v1014 = vunpack.c.l.bf16 %v272
  %v1015 = vunpack.c.h.bf16 %v272
  %v1016 = vunpack.c.l.bf16 %v273
  %v1017 = vunpack.c.h.bf16 %v273
  %v1018 = vunpack.c.l.bf16 %v274
  %v1019 = vunpack.c.h.bf16 %v274
  %v1020 = vunpack.c.l.bf16 %v275
  %v1021 = vunpack.c.h.bf16 %v275
  %v1022 = vunpack.c.l.bf16 %v276
  %v1023 = vunpack.c.h.bf16 %v276
  %v1024 = vunpack.c.l.bf16 %v277
  %v1025 = vunpack.c.h.bf16 %v277
  %v1026 = vunpack.c.l.bf16 %v278
  %v1027 = vunpack.c.h.bf16 %v278
  %v1028 = vunpack.c.l.bf16 %v279
  %v1029 = vunpack.c.h.bf16 %v279
  %v1030 = vunpack.c.l.bf16 %v280
  %v1031 = vunpack.c.h.bf16 %v280
  %v1032 = vunpack.c.l.bf16 %v281
  %v1033 = vunpack.c.h.bf16 %v281
  %v1034 = vunpack.c.l.bf16 %v282
  %v1035 = vunpack.c.h.bf16 %v282
  %v1036 = vunpack.c.l.bf16 %v283
  %v1037 = vunpack.c.h.bf16 %v283
  %v1038 = vunpack.c.l.bf16 %v284
  %v1039 = vunpack.c.h.bf16 %v284
  %v1040 = vunpack.c.l.bf16 %v285
  %v1041 = vunpack.c.h.bf16 %v285
  %v1042 = vunpack.c.l.bf16 %v286
  %v1043 = vunpack.c.h.bf16 %v286
  %v1044 = vunpack.c.l.bf16 %v287
  %v1045 = vunpack.c.h.bf16 %v287
  %v1046 = vunpack.c.l.bf16 %v288
  %v1047 = vunpack.c.h.bf16 %v288
  %v1048 = vunpack.c.l.bf16 %v289
  %v1049 = vunpack.c.h.bf16 %v289
  %v1050 = vunpack.c.l.bf16 %v290
  %v1051 = vunpack.c.h.bf16 %v290
  %v1052 = vunpack.c.l.bf16 %v291
  %v1053 = vunpack.c.h.bf16 %v291
  %v1054 = vunpack.c.l.bf16 %v292
  %v1055 = vunpack.c.h.bf16 %v292
  %v1056 = vunpack.c.l.bf16 %v293
  %v1057 = vunpack.c.h.bf16 %v293
  %v1058 = vunpack.c.l.bf16 %v294
  %v1059 = vunpack.c.h.bf16 %v294
  %v1060 = vunpack.c.l.bf16 %v295
  %v1061 = vunpack.c.h.bf16 %v295
  %v1062 = vunpack.c.l.bf16 %v296
  %v1063 = vunpack.c.h.bf16 %v296
  %v1064 = vunpack.c.l.bf16 %v297
  %v1065 = vunpack.c.h.bf16 %v297
  %v1066 = vunpack.c.l.bf16 %v298
  %v1067 = vunpack.c.h.bf16 %v298
  %v1068 = vunpack.c.l.bf16 %v299
  %v1069 = vunpack.c.h.bf16 %v299
  %v1070 = vunpack.c.l.bf16 %v300
  %v1071 = vunpack.c.h.bf16 %v300
  %v1072 = vunpack.c.l.bf16 %v301
  %v1073 = vunpack.c.h.bf16 %v301
  %v1074 = vunpack.c.l.bf16 %v302
  %v1075 = vunpack.c.h.bf16 %v302
  %v1076 = vunpack.c.l.bf16 %v303
  %v1077 = vunpack.c.h.bf16 %v303
  %v1078 = vunpack.c.l.bf16 %v304
  %v1079 = vunpack.c.h.bf16 %v304
  %v1080 = vunpack.c.l.bf16 %v305
  %v1081 = vunpack.c.h.bf16 %v305
  %v1082 = vunpack.c.l.bf16 %v306
  %v1083 = vunpack.c.h.bf16 %v306
  %v1084 = vunpack.c.l.bf16 %v307
  %v1085 = vunpack.c.h.bf16 %v307
  %v1086 = vunpack.c.l.bf16 %v308
  %v1087 = vunpack.c.h.bf16 %v308
  %v1088 = vunpack.c.l.bf16 %v309
  %v1089 = vunpack.c.h.bf16 %v309
  %v1090 = vunpack.c.l.bf16 %v310
  %v1091 = vunpack.c.h.bf16 %v310
  %v1092 = vunpack.c.l.bf16 %v311
  %v1093 = vunpack.c.h.bf16 %v311
  %v1094 = vunpack.c.l.bf16 %v312
  %v1095 = vunpack.c.h.bf16 %v312
  %v1096 = vunpack.c.l.bf16 %v313
  %v1097 = vunpack.c.h.bf16 %v313
  %v1098 = vunpack.c.l.bf16 %v314
  %v1099 = vunpack.c.h.bf16 %v314
  %v1100 = vunpack.c.l.bf16 %v315
  %v1101 = vunpack.c.h.bf16 %v315
  %v1102 = vunpack.c.l.bf16 %v316
  %v1103 = vunpack.c.h.bf16 %v316
  %v1104 = vunpack.c.l.bf16 %v317
  %v1105 = vunpack.c.h.bf16 %v317
  %v1106 = vunpack.c.l.bf16 %v318
  %v1107 = vunpack.c.h.bf16 %v318
  %v1108 = vunpack.c.l.bf16 %v319
  %v1109 = vunpack.c.h.bf16 %v319
  %v1110 = vunpack.c.l.bf16 %v320
  %v1111 = vunpack.c.h.bf16 %v320
  %v1112 = vunpack.c.l.bf16 %v321
  %v1113 = vunpack.c.h.bf16 %v321
  %v1114 = vunpack.c.l.bf16 %v322
  %v1115 = vunpack.c.h.bf16 %v322
  %v1116 = vunpack.c.l.bf16 %v323
  %v1117 = vunpack.c.h.bf16 %v323
  %v1118 = vunpack.c.l.bf16 %v324
  %v1119 = vunpack.c.h.bf16 %v324
  %v1120 = vunpack.c.l.bf16 %v325
  %v1121 = vunpack.c.h.bf16 %v325
  %v1122 = vunpack.c.l.bf16 %v326
  %v1123 = vunpack.c.h.bf16 %v326
  %v1124 = vunpack.c.l.bf16 %v327
  %v1125 = vunpack.c.h.bf16 %v327
  %v1126 = vunpack.c.l.bf16 %v328
  %v1127 = vunpack.c.h.bf16 %v328
  %v1128 = vunpack.c.l.bf16 %v329
  %v1129 = vunpack.c.h.bf16 %v329
  %v1130 = vunpack.c.l.bf16 %v330
  %v1131 = vunpack.c.h.bf16 %v330
  %v1132 = vunpack.c.l.bf16 %v331
  %v1133 = vunpack.c.h.bf16 %v331
  %v1134 = vunpack.c.l.bf16 %v332
  %v1135 = vunpack.c.h.bf16 %v332
  %v1136 = vunpack.c.l.bf16 %v333
  %v1137 = vunpack.c.h.bf16 %v333
  %v1138 = vunpack.c.l.bf16 %v334
  %v1139 = vunpack.c.h.bf16 %v334
  %v1140 = vunpack.c.l.bf16 %v335
  %v1141 = vunpack.c.h.bf16 %v335
  %v1142 = vunpack.c.l.bf16 %v336
  %v1143 = vunpack.c.h.bf16 %v336
  %v1144 = vunpack.c.l.bf16 %v337
  %v1145 = vunpack.c.h.bf16 %v337
  %v1146 = vunpack.c.l.bf16 %v338
  %v1147 = vunpack.c.h.bf16 %v338
  %v1148 = vunpack.c.l.bf16 %v339
  %v1149 = vunpack.c.h.bf16 %v339
  %v1150 = vunpack.c.l.bf16 %v340
  %v1151 = vunpack.c.h.bf16 %v340
  %v1152 = vunpack.c.l.bf16 %v341
  %v1153 = vunpack.c.h.bf16 %v341
  %v1154 = vunpack.c.l.bf16 %v342
  %v1155 = vunpack.c.h.bf16 %v342
  %v1156 = vunpack.c.l.bf16 %v343
  %v1157 = vunpack.c.h.bf16 %v343
  %v1158 = vunpack.c.l.bf16 %v344
  %v1159 = vunpack.c.h.bf16 %v344
  %v1160 = vunpack.c.l.bf16 %v345
  %v1161 = vunpack.c.h.bf16 %v345
  %v1162 = vunpack.c.l.bf16 %v346
  %v1163 = vunpack.c.h.bf16 %v346
  %v1164 = vunpack.c.l.bf16 %v347
  %v1165 = vunpack.c.h.bf16 %v347
  %v1166 = vunpack.c.l.bf16 %v348
  %v1167 = vunpack.c.h.bf16 %v348
  %v1168 = vunpack.c.l.bf16 %v349
  %v1169 = vunpack.c.h.bf16 %v349
  %v1170 = vunpack.c.l.bf16 %v350
  %v1171 = vunpack.c.h.bf16 %v350
  %v1172 = vunpack.c.l.bf16 %v351
  %v1173 = vunpack.c.h.bf16 %v351
  %v1174 = vunpack.c.l.bf16 %v352
  %v1175 = vunpack.c.h.bf16 %v352
  %v1176 = vunpack.c.l.bf16 %v353
  %v1177 = vunpack.c.h.bf16 %v353
  %v1178 = vunpack.c.l.bf16 %v354
  %v1179 = vunpack.c.h.bf16 %v354
  %v1180 = vunpack.c.l.bf16 %v355
  %v1181 = vunpack.c.h.bf16 %v355
  %v1182 = vunpack.c.l.bf16 %v356
  %v1183 = vunpack.c.h.bf16 %v356
  %v1184 = vunpack.c.l.bf16 %v357
  %v1185 = vunpack.c.h.bf16 %v357
  %v1186 = vunpack.c.l.bf16 %v358
  %v1187 = vunpack.c.h.bf16 %v358
  %v1188 = vunpack.c.l.bf16 %v359
  %v1189 = vunpack.c.h.bf16 %v359
  %v1190 = vunpack.c.l.bf16 %v360
  %v1191 = vunpack.c.h.bf16 %v360
  %v1192 = vunpack.c.l.bf16 %v361
  %v1193 = vunpack.c.h.bf16 %v361
  %v1194 = vunpack.c.l.bf16 %v362
  %v1195 = vunpack.c.h.bf16 %v362
  %v1196 = vunpack.c.l.bf16 %v363
  %v1197 = vunpack.c.h.bf16 %v363
  %v1198 = vunpack.c.l.bf16 %v364
  %v1199 = vunpack.c.h.bf16 %v364
  %v1200 = vunpack.c.l.bf16 %v365
  %v1201 = vunpack.c.h.bf16 %v365
  %v1202 = vunpack.c.l.bf16 %v366
  %v1203 = vunpack.c.h.bf16 %v366
  %v1204 = vunpack.c.l.bf16 %v367
  %v1205 = vunpack.c.h.bf16 %v367
  %v1206 = vunpack.c.l.bf16 %v368
  %v1207 = vunpack.c.h.bf16 %v368
  %v1208 = vunpack.c.l.bf16 %v369
  %v1209 = vunpack.c.h.bf16 %v369
  %v1210 = vunpack.c.l.bf16 %v370
  %v1211 = vunpack.c.h.bf16 %v370
  %v1212 = vunpack.c.l.bf16 %v371
  %v1213 = vunpack.c.h.bf16 %v371
  %v1214 = vunpack.c.l.bf16 %v372
  %v1215 = vunpack.c.h.bf16 %v372
  %v1216 = vunpack.c.l.bf16 %v373
  %v1217 = vunpack.c.h.bf16 %v373
  %v1218 = vunpack.c.l.bf16 %v374
  %v1219 = vunpack.c.h.bf16 %v374
  %v1220 = vunpack.c.l.bf16 %v375
  %v1221 = vunpack.c.h.bf16 %v375
  %v1222 = vunpack.c.l.bf16 %v376
  %v1223 = vunpack.c.h.bf16 %v376
  %v1224 = vunpack.c.l.bf16 %v377
  %v1225 = vunpack.c.h.bf16 %v377
  %v1226 = vunpack.c.l.bf16 %v378
  %v1227 = vunpack.c.h.bf16 %v378
  %v1228 = vunpack.c.l.bf16 %v379
  %v1229 = vunpack.c.h.bf16 %v379
  %v1230 = vunpack.c.l.bf16 %v380
  %v1231 = vunpack.c.h.bf16 %v380
  %v1232 = vunpack.c.l.bf16 %v381
  %v1233 = vunpack.c.h.bf16 %v381
  %v1234 = vunpack.c.l.bf16 %v382
  %v1235 = vunpack.c.h.bf16 %v382
  %v1236 = vunpack.c.l.bf16 %v383
  %v1237 = vunpack.c.h.bf16 %v383
  %v1238 = vunpack.c.l.bf16 %v384
  %v1239 = vunpack.c.h.bf16 %v384
  %v1240 = vunpack.c.l.bf16 %v385
  %v1241 = vunpack.c.h.bf16 %v385
  %v1242 = vunpack.c.l.bf16 %v386
  %v1243 = vunpack.c.h.bf16 %v386
  %v1244 = vunpack.c.l.bf16 %v387
  %v1245 = vunpack.c.h.bf16 %v387
  %v1246 = vunpack.c.l.bf16 %v388
  %v1247 = vunpack.c.h.bf16 %v388
  %v1248 = vunpack.c.l.bf16 %v389
  %v1249 = vunpack.c.h.bf16 %v389
  %v1250 = vunpack.c.l.bf16 %v390
  %v1251 = vunpack.c.h.bf16 %v390
  %v1252 = vunpack.c.l.bf16 %v391
  %v1253 = vunpack.c.h.bf16 %v391
  %v1254 = vunpack.c.l.bf16 %v392
  %v1255 = vunpack.c.h.bf16 %v392
  %v1256 = vunpack.c.l.bf16 %v393
  %v1257 = vunpack.c.h.bf16 %v393
  %v1258 = vunpack.c.l.bf16 %v394
  %v1259 = vunpack.c.h.bf16 %v394
  %v1260 = vunpack.c.l.bf16 %v395
  %v1261 = vunpack.c.h.bf16 %v395
  %v1262 = vunpack.c.l.bf16 %v396
  %v1263 = vunpack.c.h.bf16 %v396
  %v1264 = vunpack.c.l.bf16 %v397
  %v1265 = vunpack.c.h.bf16 %v397
  %v1266 = vunpack.c.l.bf16 %v398
  %v1267 = vunpack.c.h.bf16 %v398
  %v1268 = vunpack.c.l.bf16 %v399
  %v1269 = vunpack.c.h.bf16 %v399
  %v1270 = vunpack.c.l.bf16 %v400
  %v1271 = vunpack.c.h.bf16 %v400
  %v1272 = vunpack.c.l.bf16 %v401
  %v1273 = vunpack.c.h.bf16 %v401
  %v1274 = vunpack.c.l.bf16 %v402
  %v1275 = vunpack.c.h.bf16 %v402
  %v1276 = vunpack.c.l.bf16 %v403
  %v1277 = vunpack.c.h.bf16 %v403
  %v1278 = vunpack.c.l.bf16 %v404
  %v1279 = vunpack.c.h.bf16 %v404
  %v1280 = vunpack.c.l.bf16 %v405
  %v1281 = vunpack.c.h.bf16 %v405
  %v1282 = vunpack.c.l.bf16 %v406
  %v1283 = vunpack.c.h.bf16 %v406
  %v1284 = vunpack.c.l.bf16 %v407
  %v1285 = vunpack.c.h.bf16 %v407
  %v1286 = vunpack.c.l.bf16 %v408
  %v1287 = vunpack.c.h.bf16 %v408
  %v1288 = vunpack.c.l.bf16 %v409
  %v1289 = vunpack.c.h.bf16 %v409
  %v1290 = vunpack.c.l.bf16 %v410
  %v1291 = vunpack.c.h.bf16 %v410
  %v1292 = vunpack.c.l.bf16 %v411
  %v1293 = vunpack.c.h.bf16 %v411
  %v1294 = vunpack.c.l.bf16 %v412
  %v1295 = vunpack.c.h.bf16 %v412
  %v1296 = vunpack.c.l.bf16 %v413
  %v1297 = vunpack.c.h.bf16 %v413
  %v1298 = vunpack.c.l.bf16 %v414
  %v1299 = vunpack.c.h.bf16 %v414
  %v1300 = vunpack.c.l.bf16 %v415
  %v1301 = vunpack.c.h.bf16 %v415
  %v1302 = vunpack.c.l.bf16 %v416
  %v1303 = vunpack.c.h.bf16 %v416
  %v1304 = vunpack.c.l.bf16 %v417
  %v1305 = vunpack.c.h.bf16 %v417
  %v1306 = vunpack.c.l.bf16 %v418
  %v1307 = vunpack.c.h.bf16 %v418
  %v1308 = vunpack.c.l.bf16 %v419
  %v1309 = vunpack.c.h.bf16 %v419
  %v1310 = vunpack.c.l.bf16 %v420
  %v1311 = vunpack.c.h.bf16 %v420
  %v1312 = vunpack.c.l.bf16 %v421
  %v1313 = vunpack.c.h.bf16 %v421
  %v1314 = vunpack.c.l.bf16 %v422
  %v1315 = vunpack.c.h.bf16 %v422
  %v1316 = vunpack.c.l.bf16 %v423
  %v1317 = vunpack.c.h.bf16 %v423
  %v1318 = vunpack.c.l.bf16 %v424
  %v1319 = vunpack.c.h.bf16 %v424
  %v1320 = vunpack.c.l.bf16 %v425
  %v1321 = vunpack.c.h.bf16 %v425
  %v1322 = vunpack.c.l.bf16 %v426
  %v1323 = vunpack.c.h.bf16 %v426
  %v1324 = vunpack.c.l.bf16 %v427
  %v1325 = vunpack.c.h.bf16 %v427
  %v1326 = vunpack.c.l.bf16 %v428
  %v1327 = vunpack.c.h.bf16 %v428
  %v1328 = vunpack.c.l.bf16 %v429
  %v1329 = vunpack.c.h.bf16 %v429
  %v1330 = vunpack.c.l.bf16 %v430
  %v1331 = vunpack.c.h.bf16 %v430
  %v1332 = vunpack.c.l.bf16 %v431
  %v1333 = vunpack.c.h.bf16 %v431
  %v1334 = vunpack.c.l.bf16 %v432
  %v1335 = vunpack.c.h.bf16 %v432
  %v1336 = vunpack.c.l.bf16 %v433
  %v1337 = vunpack.c.h.bf16 %v433
  %v1338 = vunpack.c.l.bf16 %v434
  %v1339 = vunpack.c.h.bf16 %v434
  %v1340 = vunpack.c.l.bf16 %v435
  %v1341 = vunpack.c.h.bf16 %v435
  %v1342 = vunpack.c.l.bf16 %v436
  %v1343 = vunpack.c.h.bf16 %v436
  %v1344 = vunpack.c.l.bf16 %v437
  %v1345 = vunpack.c.h.bf16 %v437
  %v1346 = vunpack.c.l.bf16 %v438
  %v1347 = vunpack.c.h.bf16 %v438
  %v1348 = vunpack.c.l.bf16 %v439
  %v1349 = vunpack.c.h.bf16 %v439
  %v1350 = vunpack.c.l.bf16 %v440
  %v1351 = vunpack.c.h.bf16 %v440
  %v1352 = vunpack.c.l.bf16 %v441
  %v1353 = vunpack.c.h.bf16 %v441
  %v1354 = vunpack.c.l.bf16 %v442
  %v1355 = vunpack.c.h.bf16 %v442
  %v1356 = vunpack.c.l.bf16 %v443
  %v1357 = vunpack.c.h.bf16 %v443
  %v1358 = vunpack.c.l.bf16 %v444
  %v1359 = vunpack.c.h.bf16 %v444
  %v1360 = vunpack.c.l.bf16 %v445
  %v1361 = vunpack.c.h.bf16 %v445
  %v1362 = vunpack.c.l.bf16 %v446
  %v1363 = vunpack.c.h.bf16 %v446
  %v1364 = vunpack.c.l.bf16 %v447
  %v1365 = vunpack.c.h.bf16 %v447
  %v1366 = vunpack.c.l.bf16 %v448
  %v1367 = vunpack.c.h.bf16 %v448
  %v1368 = vunpack.c.l.bf16 %v449
  %v1369 = vunpack.c.h.bf16 %v449
  %v1370 = vunpack.c.l.bf16 %v450
  %v1371 = vunpack.c.h.bf16 %v450
  %v1372 = vunpack.c.l.bf16 %v451
  %v1373 = vunpack.c.h.bf16 %v451
  %v1374 = vunpack.c.l.bf16 %v452
  %v1375 = vunpack.c.h.bf16 %v452
  %v1376 = vunpack.c.l.bf16 %v453
  %v1377 = vunpack.c.h.bf16 %v453
  %v1378 = vunpack.c.l.bf16 %v454
  %v1379 = vunpack.c.h.bf16 %v454
  %v1380 = vunpack.c.l.bf16 %v455
  %v1381 = vunpack.c.h.bf16 %v455
  %v1382 = vunpack.c.l.bf16 %v456
  %v1383 = vunpack.c.h.bf16 %v456
  %v1384 = vunpack.c.l.bf16 %v457
  %v1385 = vunpack.c.h.bf16 %v457
  %v1386 = vunpack.c.l.bf16 %v458
  %v1387 = vunpack.c.h.bf16 %v458
  %v1388 = vunpack.c.l.bf16 %v459
  %v1389 = vunpack.c.h.bf16 %v459
  %v1390 = vunpack.c.l.bf16 %v460
  %v1391 = vunpack.c.h.bf16 %v460
  %v1392 = vunpack.c.l.bf16 %v461
  %v1393 = vunpack.c.h.bf16 %v461
  %v1394 = vunpack.c.l.bf16 %v462
  %v1395 = vunpack.c.h.bf16 %v462
  %v1396 = vunpack.c.l.bf16 %v463
  %v1397 = vunpack.c.h.bf16 %v463
  %v1398 = vunpack.c.l.bf16 %v464
  %v1399 = vunpack.c.h.bf16 %v464
  %v1400 = vunpack.c.l.bf16 %v465
  %v1401 = vunpack.c.h.bf16 %v465
  %v1402 = vunpack.c.l.bf16 %v466
  %v1403 = vunpack.c.h.bf16 %v466
  %v1404 = vunpack.c.l.bf16 %v467
  %v1405 = vunpack.c.h.bf16 %v467
  %v1406 = vunpack.c.l.bf16 %v468
  %v1407 = vunpack.c.h.bf16 %v468
  %v1408 = vunpack.c.l.bf16 %v469
  %v1409 = vunpack.c.h.bf16 %v469
  %v1410 = vunpack.c.l.bf16 %v470
  %v1411 = vunpack.c.h.bf16 %v470
  %v1412 = vunpack.c.l.bf16 %v471
  %v1413 = vunpack.c.h.bf16 %v471
  %v1414 = vunpack.c.l.bf16 %v472
  %v1415 = vunpack.c.h.bf16 %v472
  %v1416 = vunpack.c.l.bf16 %v473
  %v1417 = vunpack.c.h.bf16 %v473
  %v1418 = vunpack.c.l.bf16 %v474
  %v1419 = vunpack.c.h.bf16 %v474
  %v1420 = vunpack.c.l.bf16 %v475
  %v1421 = vunpack.c.h.bf16 %v475
  %v1422 = vunpack.c.l.bf16 %v476
  %v1423 = vunpack.c.h.bf16 %v476
  %v1424 = vunpack.c.l.bf16 %v477
  %v1425 = vunpack.c.h.bf16 %v477
  %v1426 = vunpack.c.l.bf16 %v478
  %v1427 = vunpack.c.h.bf16 %v478
  %v1428 = vunpack.c.l.bf16 %v479
  %v1429 = vunpack.c.h.bf16 %v479
  %v1430 = vunpack.c.l.bf16 %v480
  %v1431 = vunpack.c.h.bf16 %v480
  %v1432 = vunpack.c.l.bf16 %v481
  %v1433 = vunpack.c.h.bf16 %v481
  %v1434 = vunpack.c.l.bf16 %v482
  %v1435 = vunpack.c.h.bf16 %v482
  %v1436 = vunpack.c.l.bf16 %v483
  %v1437 = vunpack.c.h.bf16 %v483
  %v1438 = vunpack.c.l.bf16 %v484
  %v1439 = vunpack.c.h.bf16 %v484
  %v1440 = vunpack.c.l.bf16 %v485
  %v1441 = vunpack.c.h.bf16 %v485
  %v1442 = vunpack.c.l.bf16 %v486
  %v1443 = vunpack.c.h.bf16 %v486
  %v1444 = vunpack.c.l.bf16 %v487
  %v1445 = vunpack.c.h.bf16 %v487
  %v1446 = vunpack.c.l.bf16 %v488
  %v1447 = vunpack.c.h.bf16 %v488
  %v1448 = vunpack.c.l.bf16 %v489
  %v1449 = vunpack.c.h.bf16 %v489
  %v1450 = vunpack.c.l.bf16 %v490
  %v1451 = vunpack.c.h.bf16 %v490
  %v1452 = vunpack.c.l.bf16 %v491
  %v1453 = vunpack.c.h.bf16 %v491
  %v1454 = vunpack.c.l.bf16 %v492
  %v1455 = vunpack.c.h.bf16 %v492
  %v1456 = vunpack.c.l.bf16 %v493
  %v1457 = vunpack.c.h.bf16 %v493
  %v1458 = vunpack.c.l.bf16 %v494
  %v1459 = vunpack.c.h.bf16 %v494
  %v1460 = vunpack.c.l.bf16 %v495
  %v1461 = vunpack.c.h.bf16 %v495
  %v1462 = vunpack.c.l.bf16 %v496
  %v1463 = vunpack.c.h.bf16 %v496
  %v1464 = vunpack.c.l.bf16 %v497
  %v1465 = vunpack.c.h.bf16 %v497
  %v1466 = vunpack.c.l.bf16 %v498
  %v1467 = vunpack.c.h.bf16 %v498
  %v1468 = vunpack.c.l.bf16 %v499
  %v1469 = vunpack.c.h.bf16 %v499
  %v1470 = vunpack.c.l.bf16 %v500
  %v1471 = vunpack.c.h.bf16 %v500
  %v1472 = vunpack.c.l.bf16 %v501
  %v1473 = vunpack.c.h.bf16 %v501
  %v1474 = vunpack.c.l.bf16 %v502
  %v1475 = vunpack.c.h.bf16 %v502
  %v1476 = vunpack.c.l.bf16 %v503
  %v1477 = vunpack.c.h.bf16 %v503
  %v1478 = vunpack.c.l.bf16 %v504
  %v1479 = vunpack.c.h.bf16 %v504
  %v1480 = vunpack.c.l.bf16 %v505
  %v1481 = vunpack.c.h.bf16 %v505
  %v1482 = vunpack.c.l.bf16 %v506
  %v1483 = vunpack.c.h.bf16 %v506
  %v1484 = vunpack.c.l.bf16 %v507
  %v1485 = vunpack.c.h.bf16 %v507
  %v1486 = vunpack.c.l.bf16 %v508
  %v1487 = vunpack.c.h.bf16 %v508
  %v1488 = vunpack.c.l.bf16 %v509
  %v1489 = vunpack.c.h.bf16 %v509
  %v1490 = vunpack.c.l.bf16 %v510
  %v1491 = vunpack.c.h.bf16 %v510
  %v1492 = vunpack.c.l.bf16 %v511
  %v1493 = vunpack.c.h.bf16 %v511
  %v1494 = vunpack.c.l.bf16 %v512
  %v1495 = vunpack.c.h.bf16 %v512
  %v1496 = vunpack.c.l.bf16 %v513
  %v1497 = vunpack.c.h.bf16 %v513
  %v1498 = vunpack.c.l.bf16 %v514
  %v1499 = vunpack.c.h.bf16 %v514
  %v1500 = vunpack.c.l.bf16 %v515
  %v1501 = vunpack.c.h.bf16 %v515
  %v1502 = vunpack.c.l.bf16 %v516
  %v1503 = vunpack.c.h.bf16 %v516
  %v1504 = vunpack.c.l.bf16 %v517
  %v1505 = vunpack.c.h.bf16 %v517
  %v1506 = vunpack.c.l.bf16 %v518
  %v1507 = vunpack.c.h.bf16 %v518
  %v1508 = vunpack.c.l.bf16 %v519
  %v1509 = vunpack.c.h.bf16 %v519
  %v1510 = vunpack.c.l.bf16 %v520
  %v1511 = vunpack.c.h.bf16 %v520
  %v1512 = vunpack.c.l.bf16 %v521
  %v1513 = vunpack.c.h.bf16 %v521
  %v1514 = vunpack.c.l.bf16 %v522
  %v1515 = vunpack.c.h.bf16 %v522
  %v1516 = vunpack.c.l.bf16 %v523
  %v1517 = vunpack.c.h.bf16 %v523
  %v1518 = vunpack.c.l.bf16 %v524
  %v1519 = vunpack.c.h.bf16 %v524
  %v1520 = vunpack.c.l.bf16 %v525
  %v1521 = vunpack.c.h.bf16 %v525
  %v1522 = vunpack.c.l.bf16 %v526
  %v1523 = vunpack.c.h.bf16 %v526
  %v1524 = vunpack.c.l.bf16 %v527
  %v1525 = vunpack.c.h.bf16 %v527
  %v1526 = vunpack.c.l.bf16 %v528
  %v1527 = vunpack.c.h.bf16 %v528
  %v1528 = vunpack.c.l.bf16 %v529
  %v1529 = vunpack.c.h.bf16 %v529
  %v1530 = vunpack.c.l.bf16 %v530
  %v1531 = vunpack.c.h.bf16 %v530
  %v1532 = vunpack.c.l.bf16 %v531
  %v1533 = vunpack.c.h.bf16 %v531
  %v1534 = vunpack.c.l.bf16 %v532
  %v1535 = vunpack.c.h.bf16 %v532
  %v1536 = vunpack.c.l.bf16 %v533
  %v1537 = vunpack.c.h.bf16 %v533
  %v1538 = vunpack.c.l.bf16 %v534
  %v1539 = vunpack.c.h.bf16 %v534
  %v1540 = vunpack.c.l.bf16 %v535
  %v1541 = vunpack.c.h.bf16 %v535
  %v1542 = vunpack.c.l.bf16 %v536
  %v1543 = vunpack.c.h.bf16 %v536
  %v1544 = vunpack.c.l.bf16 %v537
  %v1545 = vunpack.c.h.bf16 %v537
  %v1546 = vunpack.c.l.bf16 %v538
  %v1547 = vunpack.c.h.bf16 %v538
  %v1548 = vunpack.c.l.bf16 %v539
  %v1549 = vunpack.c.h.bf16 %v539
  %v1550 = vunpack.c.l.bf16 %v540
  %v1551 = vunpack.c.h.bf16 %v540
  %v1552 = vunpack.c.l.bf16 %v541
  %v1553 = vunpack.c.h.bf16 %v541
  %v1554 = vunpack.c.l.bf16 %v542
  %v1555 = vunpack.c.h.bf16 %v542
  %v1556 = vunpack.c.l.bf16 %v543
  %v1557 = vunpack.c.h.bf16 %v543
  %v1558 = vunpack.c.l.bf16 %v544
  %v1559 = vunpack.c.h.bf16 %v544
  %v1560 = vunpack.c.l.bf16 %v545
  %v1561 = vunpack.c.h.bf16 %v545
  %v1562 = vunpack.c.l.bf16 %v546
  %v1563 = vunpack.c.h.bf16 %v546
  %v1564 = vunpack.c.l.bf16 %v547
  %v1565 = vunpack.c.h.bf16 %v547
  %v1566 = vunpack.c.l.bf16 %v548
  %v1567 = vunpack.c.h.bf16 %v548
  %v1568 = vunpack.c.l.bf16 %v549
  %v1569 = vunpack.c.h.bf16 %v549
  %v1570 = vunpack.c.l.bf16 %v550
  %v1571 = vunpack.c.h.bf16 %v550
  %v1572 = vunpack.c.l.bf16 %v551
  %v1573 = vunpack.c.h.bf16 %v551
  %v1574 = vunpack.c.l.bf16 %v552
  %v1575 = vunpack.c.h.bf16 %v552
  %v1576 = vunpack.c.l.bf16 %v553
  %v1577 = vunpack.c.h.bf16 %v553
  %v1586 = vcombine.high %v34, %v34
  %v1587 = vcombine.high %v35, %v35
  %v1588 = vcombine.high %v36, %v36
  %v1589 = vcombine.high %v37, %v37
  %v1590 = vcombine.high %v38, %v38
  %v1591 = vcombine.high %v39, %v39
  %v1592 = vcombine.high %v40, %v40
  %v1593 = vcombine.high %v41, %v41
  %1602 = vmatprep.subr.mxu0 %v555
  %1603 = vmatpush1.msra.mxu0 %v554
  %1604 = vmatprep.subr.mxu0 %v559
  %1605 = vmatpush1.msra.mxu0 %v558
  %1606 = vmatprep.subr.mxu0 %v563
  %1607 = vmatpush1.msra.mxu0 %v562
  %1608 = vmatprep.subr.mxu0 %v567
  %1609 = vmatpush1.msra.mxu0 %v566
  %1610 = vmatprep.subr.mxu0 %v571
  %1611 = vmatpush1.msra.mxu0 %v570
  %1612 = vmatprep.subr.mxu0 %v575
  %1613 = vmatpush1.msra.mxu0 %v574
  %1614 = vmatprep.subr.mxu0 %v579
  %1615 = vmatpush1.msra.mxu0 %v578
  %1616 = vmatprep.subr.mxu0 %v583
  %1617 = vmatpush1.msra.mxu0 %v582
  %1618 = vmatprep.subr.mxu0 %v587
  %1619 = vmatpush1.msra.mxu0 %v586
  %1620 = vmatprep.subr.mxu0 %v591
  %1621 = vmatpush1.msra.mxu0 %v590
  %1622 = vmatprep.subr.mxu0 %v595
  %1623 = vmatpush1.msra.mxu0 %v594
  %1624 = vmatprep.subr.mxu0 %v599
  %1625 = vmatpush1.msra.mxu0 %v598
  %1626 = vmatprep.subr.mxu0 %v603
  %1627 = vmatpush1.msra.mxu0 %v602
  %1628 = vmatprep.subr.mxu0 %v607
  %1629 = vmatpush1.msra.mxu0 %v606
  %1630 = vmatprep.subr.mxu0 %v611
  %1631 = vmatpush1.msra.mxu0 %v610
  %1632 = vmatprep.subr.mxu0 %v615
  %1633 = vmatpush1.msra.mxu0 %v614
  %1634 = vmatprep.subr.mxu0 %v619
  %1635 = vmatpush1.msra.mxu0 %v618
  %1636 = vmatprep.subr.mxu0 %v623
  %1637 = vmatpush1.msra.mxu0 %v622
  %1638 = vmatprep.subr.mxu0 %v627
  %1639 = vmatpush1.msra.mxu0 %v626
  %1640 = vmatprep.subr.mxu0 %v631
  %1641 = vmatpush1.msra.mxu0 %v630
  %1642 = vmatprep.subr.mxu0 %v635
  %1643 = vmatpush1.msra.mxu0 %v634
  %1644 = vmatprep.subr.mxu0 %v639
  %1645 = vmatpush1.msra.mxu0 %v638
  %1646 = vmatprep.subr.mxu0 %v643
  %1647 = vmatpush1.msra.mxu0 %v642
  %1648 = vmatprep.subr.mxu0 %v647
  %1649 = vmatpush1.msra.mxu0 %v646
  %1650 = vmatprep.subr.mxu0 %v651
  %1651 = vmatpush1.msra.mxu0 %v650
  %1652 = vmatprep.subr.mxu0 %v655
  %1653 = vmatpush1.msra.mxu0 %v654
  %1654 = vmatprep.subr.mxu0 %v659
  %1655 = vmatpush1.msra.mxu0 %v658
  %1656 = vmatprep.subr.mxu0 %v663
  %1657 = vmatpush1.msra.mxu0 %v662
  %1658 = vmatprep.subr.mxu0 %v667
  %1659 = vmatpush1.msra.mxu0 %v666
  %1660 = vmatprep.subr.mxu0 %v671
  %1661 = vmatpush1.msra.mxu0 %v670
  %1662 = vmatprep.subr.mxu0 %v675
  %1663 = vmatpush1.msra.mxu0 %v674
  %1664 = vmatprep.subr.mxu0 %v679
  %1665 = vmatpush1.msra.mxu0 %v678
  %1666 = vmatprep.mubr.f32.mxu0 %v1586
  %1667 = vmatmul.mubr.f32.gmra.mrb[0].mxu0 %v34
  %v1668 = vpop.f32.mrb[0].mxu0
  %v1669 = vadd.f32 0.0, %v1668
  %v1670 = vpop.f32.mrb[0].mxu0
  %v1671 = vadd.f32 0.0, %v1670
  %1672 = vdwg.mxu0
  %1673 = vmatprep.subr.mxu0 %v683
  %1674 = vmatpush1.msra.mxu0 %v682
  %1675 = vmatprep.subr.mxu0 %v687
  %1676 = vmatpush1.msra.mxu0 %v686
  %1677 = vmatprep.subr.mxu0 %v691
  %1678 = vmatpush1.msra.mxu0 %v690
  %1679 = vmatprep.subr.mxu0 %v695
  %1680 = vmatpush1.msra.mxu0 %v694
  %1681 = vmatprep.subr.mxu0 %v699
  %1682 = vmatpush1.msra.mxu0 %v698
  %1683 = vmatprep.subr.mxu0 %v703
  %1684 = vmatpush1.msra.mxu0 %v702
  %1685 = vmatprep.subr.mxu0 %v707
  %1686 = vmatpush1.msra.mxu0 %v706
  %1687 = vmatprep.subr.mxu0 %v711
  %1688 = vmatpush1.msra.mxu0 %v710
  %1689 = vmatprep.subr.mxu0 %v715
  %1690 = vmatpush1.msra.mxu0 %v714
  %1691 = vmatprep.subr.mxu0 %v719
  %1692 = vmatpush1.msra.mxu0 %v718
  %1693 = vmatprep.subr.mxu0 %v723
  %1694 = vmatpush1.msra.mxu0 %v722
  %1695 = vmatprep.subr.mxu0 %v727
  %1696 = vmatpush1.msra.mxu0 %v726
  %1697 = vmatprep.subr.mxu0 %v731
  %1698 = vmatpush1.msra.mxu0 %v730
  %1699 = vmatprep.subr.mxu0 %v735
  %1700 = vmatpush1.msra.mxu0 %v734
  %1701 = vmatprep.subr.mxu0 %v739
  %1702 = vmatpush1.msra.mxu0 %v738
  %1703 = vmatprep.subr.mxu0 %v743
  %1704 = vmatpush1.msra.mxu0 %v742
  %1705 = vmatprep.subr.mxu0 %v747
  %1706 = vmatpush1.msra.mxu0 %v746
  %1707 = vmatprep.subr.mxu0 %v751
  %1708 = vmatpush1.msra.mxu0 %v750
  %1709 = vmatprep.subr.mxu0 %v755
  %1710 = vmatpush1.msra.mxu0 %v754
  %1711 = vmatprep.subr.mxu0 %v759
  %1712 = vmatpush1.msra.mxu0 %v758
  %1713 = vmatprep.subr.mxu0 %v763
  %1714 = vmatpush1.msra.mxu0 %v762
  %1715 = vmatprep.subr.mxu0 %v767
  %1716 = vmatpush1.msra.mxu0 %v766
  %1717 = vmatprep.subr.mxu0 %v771
  %1718 = vmatpush1.msra.mxu0 %v770
  %1719 = vmatprep.subr.mxu0 %v775
  %1720 = vmatpush1.msra.mxu0 %v774
  %1721 = vmatprep.subr.mxu0 %v779
  %1722 = vmatpush1.msra.mxu0 %v778
  %1723 = vmatprep.subr.mxu0 %v783
  %1724 = vmatpush1.msra.mxu0 %v782
  %1725 = vmatprep.subr.mxu0 %v787
  %1726 = vmatpush1.msra.mxu0 %v786
  %1727 = vmatprep.subr.mxu0 %v791
  %1728 = vmatpush1.msra.mxu0 %v790
  %1729 = vmatprep.subr.mxu0 %v795
  %1730 = vmatpush1.msra.mxu0 %v794
  %1731 = vmatprep.subr.mxu0 %v799
  %1732 = vmatpush1.msra.mxu0 %v798
  %1733 = vmatprep.subr.mxu0 %v803
  %1734 = vmatpush1.msra.mxu0 %v802
  %1735 = vmatprep.subr.mxu0 %v807
  %1736 = vmatpush1.msra.mxu0 %v806
  %1737 = vmatprep.mubr.f32.mxu0 %v1587
  %1738 = vmatmul.mubr.f32.gmra.mrb[0].mxu0 %v35
  %v1739 = vpop.f32.mrb[0].mxu0
  %v1740 = vadd.f32 %v1669, %v1739
  %v1741 = vpop.f32.mrb[0].mxu0
  %v1742 = vadd.f32 %v1671, %v1741
  %1743 = vdwg.mxu0
  %1744 = vmatprep.subr.mxu0 %v811
  %1745 = vmatpush1.msra.mxu0 %v810
  %1746 = vmatprep.subr.mxu0 %v815
  %1747 = vmatpush1.msra.mxu0 %v814
  %1748 = vmatprep.subr.mxu0 %v819
  %1749 = vmatpush1.msra.mxu0 %v818
  %1750 = vmatprep.subr.mxu0 %v823
  %1751 = vmatpush1.msra.mxu0 %v822
  %1752 = vmatprep.subr.mxu0 %v827
  %1753 = vmatpush1.msra.mxu0 %v826
  %1754 = vmatprep.subr.mxu0 %v831
  %1755 = vmatpush1.msra.mxu0 %v830
  %1756 = vmatprep.subr.mxu0 %v835
  %1757 = vmatpush1.msra.mxu0 %v834
  %1758 = vmatprep.subr.mxu0 %v839
  %1759 = vmatpush1.msra.mxu0 %v838
  %1760 = vmatprep.subr.mxu0 %v843
  %1761 = vmatpush1.msra.mxu0 %v842
  %1762 = vmatprep.subr.mxu0 %v847
  %1763 = vmatpush1.msra.mxu0 %v846
  %1764 = vmatprep.subr.mxu0 %v851
  %1765 = vmatpush1.msra.mxu0 %v850
  %1766 = vmatprep.subr.mxu0 %v855
  %1767 = vmatpush1.msra.mxu0 %v854
  %1768 = vmatprep.subr.mxu0 %v859
  %1769 = vmatpush1.msra.mxu0 %v858
  %1770 = vmatprep.subr.mxu0 %v863
  %1771 = vmatpush1.msra.mxu0 %v862
  %1772 = vmatprep.subr.mxu0 %v867
  %1773 = vmatpush1.msra.mxu0 %v866
  %1774 = vmatprep.subr.mxu0 %v871
  %1775 = vmatpush1.msra.mxu0 %v870
  %1776 = vmatprep.subr.mxu0 %v875
  %1777 = vmatpush1.msra.mxu0 %v874
  %1778 = vmatprep.subr.mxu0 %v879
  %1779 = vmatpush1.msra.mxu0 %v878
  %1780 = vmatprep.subr.mxu0 %v883
  %1781 = vmatpush1.msra.mxu0 %v882
  %1782 = vmatprep.subr.mxu0 %v887
  %1783 = vmatpush1.msra.mxu0 %v886
  %1784 = vmatprep.subr.mxu0 %v891
  %1785 = vmatpush1.msra.mxu0 %v890
  %1786 = vmatprep.subr.mxu0 %v895
  %1787 = vmatpush1.msra.mxu0 %v894
  %1788 = vmatprep.subr.mxu0 %v899
  %1789 = vmatpush1.msra.mxu0 %v898
  %1790 = vmatprep.subr.mxu0 %v903
  %1791 = vmatpush1.msra.mxu0 %v902
  %1792 = vmatprep.subr.mxu0 %v907
  %1793 = vmatpush1.msra.mxu0 %v906
  %1794 = vmatprep.subr.mxu0 %v911
  %1795 = vmatpush1.msra.mxu0 %v910
  %1796 = vmatprep.subr.mxu0 %v915
  %1797 = vmatpush1.msra.mxu0 %v914
  %1798 = vmatprep.subr.mxu0 %v919
  %1799 = vmatpush1.msra.mxu0 %v918
  %1800 = vmatprep.subr.mxu0 %v923
  %1801 = vmatpush1.msra.mxu0 %v922
  %1802 = vmatprep.subr.mxu0 %v927
  %1803 = vmatpush1.msra.mxu0 %v926
  %1804 = vmatprep.subr.mxu0 %v931
  %1805 = vmatpush1.msra.mxu0 %v930
  %1806 = vmatprep.subr.mxu0 %v935
  %1807 = vmatpush1.msra.mxu0 %v934
  %1808 = vmatprep.mubr.f32.mxu0 %v1588
  %1809 = vmatmul.mubr.f32.gmra.mrb[0].mxu0 %v36
  %v1810 = vpop.f32.mrb[0].mxu0
  %v1811 = vadd.f32 %v1740, %v1810
  %v1812 = vpop.f32.mrb[0].mxu0
  %v1813 = vadd.f32 %v1742, %v1812
  %1814 = vdwg.mxu0
  %1815 = vmatprep.subr.mxu0 %v939
  %1816 = vmatpush1.msra.mxu0 %v938
  %1817 = vmatprep.subr.mxu0 %v943
  %1818 = vmatpush1.msra.mxu0 %v942
  %1819 = vmatprep.subr.mxu0 %v947
  %1820 = vmatpush1.msra.mxu0 %v946
  %1821 = vmatprep.subr.mxu0 %v951
  %1822 = vmatpush1.msra.mxu0 %v950
  %1823 = vmatprep.subr.mxu0 %v955
  %1824 = vmatpush1.msra.mxu0 %v954
  %1825 = vmatprep.subr.mxu0 %v959
  %1826 = vmatpush1.msra.mxu0 %v958
  %1827 = vmatprep.subr.mxu0 %v963
  %1828 = vmatpush1.msra.mxu0 %v962
  %1829 = vmatprep.subr.mxu0 %v967
  %1830 = vmatpush1.msra.mxu0 %v966
  %1831 = vmatprep.subr.mxu0 %v971
  %1832 = vmatpush1.msra.mxu0 %v970
  %1833 = vmatprep.subr.mxu0 %v975
  %1834 = vmatpush1.msra.mxu0 %v974
  %1835 = vmatprep.subr.mxu0 %v979
  %1836 = vmatpush1.msra.mxu0 %v978
  %1837 = vmatprep.subr.mxu0 %v983
  %1838 = vmatpush1.msra.mxu0 %v982
  %1839 = vmatprep.subr.mxu0 %v987
  %1840 = vmatpush1.msra.mxu0 %v986
  %1841 = vmatprep.subr.mxu0 %v991
  %1842 = vmatpush1.msra.mxu0 %v990
  %1843 = vmatprep.subr.mxu0 %v995
  %1844 = vmatpush1.msra.mxu0 %v994
  %1845 = vmatprep.subr.mxu0 %v999
  %1846 = vmatpush1.msra.mxu0 %v998
  %1847 = vmatprep.subr.mxu0 %v1003
  %1848 = vmatpush1.msra.mxu0 %v1002
  %1849 = vmatprep.subr.mxu0 %v1007
  %1850 = vmatpush1.msra.mxu0 %v1006
  %1851 = vmatprep.subr.mxu0 %v1011
  %1852 = vmatpush1.msra.mxu0 %v1010
  %1853 = vmatprep.subr.mxu0 %v1015
  %1854 = vmatpush1.msra.mxu0 %v1014
  %1855 = vmatprep.subr.mxu0 %v1019
  %1856 = vmatpush1.msra.mxu0 %v1018
  %1857 = vmatprep.subr.mxu0 %v1023
  %1858 = vmatpush1.msra.mxu0 %v1022
  %1859 = vmatprep.subr.mxu0 %v1027
  %1860 = vmatpush1.msra.mxu0 %v1026
  %1861 = vmatprep.subr.mxu0 %v1031
  %1862 = vmatpush1.msra.mxu0 %v1030
  %1863 = vmatprep.subr.mxu0 %v1035
  %1864 = vmatpush1.msra.mxu0 %v1034
  %1865 = vmatprep.subr.mxu0 %v1039
  %1866 = vmatpush1.msra.mxu0 %v1038
  %1867 = vmatprep.subr.mxu0 %v1043
  %1868 = vmatpush1.msra.mxu0 %v1042
  %1869 = vmatprep.subr.mxu0 %v1047
  %1870 = vmatpush1.msra.mxu0 %v1046
  %1871 = vmatprep.subr.mxu0 %v1051
  %1872 = vmatpush1.msra.mxu0 %v1050
  %1873 = vmatprep.subr.mxu0 %v1055
  %1874 = vmatpush1.msra.mxu0 %v1054
  %1875 = vmatprep.subr.mxu0 %v1059
  %1876 = vmatpush1.msra.mxu0 %v1058
  %1877 = vmatprep.subr.mxu0 %v1063
  %1878 = vmatpush1.msra.mxu0 %v1062
  %1879 = vmatprep.mubr.f32.mxu0 %v1589
  %1880 = vmatmul.mubr.f32.gmra.mrb[0].mxu0 %v37
  %v1881 = vpop.f32.mrb[0].mxu0
  %v1882 = vadd.f32 %v1811, %v1881
  %v1883 = vpop.f32.mrb[0].mxu0
  %v1884 = vadd.f32 %v1813, %v1883
  %1885 = vdwg.mxu0
  %1886 = vmatprep.subr.mxu0 %v1067
  %1887 = vmatpush1.msra.mxu0 %v1066
  %1888 = vmatprep.subr.mxu0 %v1071
  %1889 = vmatpush1.msra.mxu0 %v1070
  %1890 = vmatprep.subr.mxu0 %v1075
  %1891 = vmatpush1.msra.mxu0 %v1074
  %1892 = vmatprep.subr.mxu0 %v1079
  %1893 = vmatpush1.msra.mxu0 %v1078
  %1894 = vmatprep.subr.mxu0 %v1083
  %1895 = vmatpush1.msra.mxu0 %v1082
  %1896 = vmatprep.subr.mxu0 %v1087
  %1897 = vmatpush1.msra.mxu0 %v1086
  %1898 = vmatprep.subr.mxu0 %v1091
  %1899 = vmatpush1.msra.mxu0 %v1090
  %1900 = vmatprep.subr.mxu0 %v1095
  %1901 = vmatpush1.msra.mxu0 %v1094
  %1902 = vmatprep.subr.mxu0 %v1099
  %1903 = vmatpush1.msra.mxu0 %v1098
  %1904 = vmatprep.subr.mxu0 %v1103
  %1905 = vmatpush1.msra.mxu0 %v1102
  %1906 = vmatprep.subr.mxu0 %v1107
  %1907 = vmatpush1.msra.mxu0 %v1106
  %1908 = vmatprep.subr.mxu0 %v1111
  %1909 = vmatpush1.msra.mxu0 %v1110
  %1910 = vmatprep.subr.mxu0 %v1115
  %1911 = vmatpush1.msra.mxu0 %v1114
  %1912 = vmatprep.subr.mxu0 %v1119
  %1913 = vmatpush1.msra.mxu0 %v1118
  %1914 = vmatprep.subr.mxu0 %v1123
  %1915 = vmatpush1.msra.mxu0 %v1122
  %1916 = vmatprep.subr.mxu0 %v1127
  %1917 = vmatpush1.msra.mxu0 %v1126
  %1918 = vmatprep.subr.mxu0 %v1131
  %1919 = vmatpush1.msra.mxu0 %v1130
  %1920 = vmatprep.subr.mxu0 %v1135
  %1921 = vmatpush1.msra.mxu0 %v1134
  %1922 = vmatprep.subr.mxu0 %v1139
  %1923 = vmatpush1.msra.mxu0 %v1138
  %1924 = vmatprep.subr.mxu0 %v1143
  %1925 = vmatpush1.msra.mxu0 %v1142
  %1926 = vmatprep.subr.mxu0 %v1147
  %1927 = vmatpush1.msra.mxu0 %v1146
  %1928 = vmatprep.subr.mxu0 %v1151
  %1929 = vmatpush1.msra.mxu0 %v1150
  %1930 = vmatprep.subr.mxu0 %v1155
  %1931 = vmatpush1.msra.mxu0 %v1154
  %1932 = vmatprep.subr.mxu0 %v1159
  %1933 = vmatpush1.msra.mxu0 %v1158
  %1934 = vmatprep.subr.mxu0 %v1163
  %1935 = vmatpush1.msra.mxu0 %v1162
  %1936 = vmatprep.subr.mxu0 %v1167
  %1937 = vmatpush1.msra.mxu0 %v1166
  %1938 = vmatprep.subr.mxu0 %v1171
  %1939 = vmatpush1.msra.mxu0 %v1170
  %1940 = vmatprep.subr.mxu0 %v1175
  %1941 = vmatpush1.msra.mxu0 %v1174
  %1942 = vmatprep.subr.mxu0 %v1179
  %1943 = vmatpush1.msra.mxu0 %v1178
  %1944 = vmatprep.subr.mxu0 %v1183
  %1945 = vmatpush1.msra.mxu0 %v1182
  %1946 = vmatprep.subr.mxu0 %v1187
  %1947 = vmatpush1.msra.mxu0 %v1186
  %1948 = vmatprep.subr.mxu0 %v1191
  %1949 = vmatpush1.msra.mxu0 %v1190
  %1950 = vmatprep.mubr.f32.mxu0 %v1590
  %1951 = vmatmul.mubr.f32.gmra.mrb[0].mxu0 %v38
  %v1952 = vpop.f32.mrb[0].mxu0
  %v1953 = vadd.f32 %v1882, %v1952
  %v1954 = vpop.f32.mrb[0].mxu0
  %v1955 = vadd.f32 %v1884, %v1954
  %1956 = vdwg.mxu0
  %1957 = vmatprep.subr.mxu0 %v1195
  %1958 = vmatpush1.msra.mxu0 %v1194
  %1959 = vmatprep.subr.mxu0 %v1199
  %1960 = vmatpush1.msra.mxu0 %v1198
  %1961 = vmatprep.subr.mxu0 %v1203
  %1962 = vmatpush1.msra.mxu0 %v1202
  %1963 = vmatprep.subr.mxu0 %v1207
  %1964 = vmatpush1.msra.mxu0 %v1206
  %1965 = vmatprep.subr.mxu0 %v1211
  %1966 = vmatpush1.msra.mxu0 %v1210
  %1967 = vmatprep.subr.mxu0 %v1215
  %1968 = vmatpush1.msra.mxu0 %v1214
  %1969 = vmatprep.subr.mxu0 %v1219
  %1970 = vmatpush1.msra.mxu0 %v1218
  %1971 = vmatprep.subr.mxu0 %v1223
  %1972 = vmatpush1.msra.mxu0 %v1222
  %1973 = vmatprep.subr.mxu0 %v1227
  %1974 = vmatpush1.msra.mxu0 %v1226
  %1975 = vmatprep.subr.mxu0 %v1231
  %1976 = vmatpush1.msra.mxu0 %v1230
  %1977 = vmatprep.subr.mxu0 %v1235
  %1978 = vmatpush1.msra.mxu0 %v1234
  %1979 = vmatprep.subr.mxu0 %v1239
  %1980 = vmatpush1.msra.mxu0 %v1238
  %1981 = vmatprep.subr.mxu0 %v1243
  %1982 = vmatpush1.msra.mxu0 %v1242
  %1983 = vmatprep.subr.mxu0 %v1247
  %1984 = vmatpush1.msra.mxu0 %v1246
  %1985 = vmatprep.subr.mxu0 %v1251
  %1986 = vmatpush1.msra.mxu0 %v1250
  %1987 = vmatprep.subr.mxu0 %v1255
  %1988 = vmatpush1.msra.mxu0 %v1254
  %1989 = vmatprep.subr.mxu0 %v1259
  %1990 = vmatpush1.msra.mxu0 %v1258
  %1991 = vmatprep.subr.mxu0 %v1263
  %1992 = vmatpush1.msra.mxu0 %v1262
  %1993 = vmatprep.subr.mxu0 %v1267
  %1994 = vmatpush1.msra.mxu0 %v1266
  %1995 = vmatprep.subr.mxu0 %v1271
  %1996 = vmatpush1.msra.mxu0 %v1270
  %1997 = vmatprep.subr.mxu0 %v1275
  %1998 = vmatpush1.msra.mxu0 %v1274
  %1999 = vmatprep.subr.mxu0 %v1279
  %2000 = vmatpush1.msra.mxu0 %v1278
  %2001 = vmatprep.subr.mxu0 %v1283
  %2002 = vmatpush1.msra.mxu0 %v1282
  %2003 = vmatprep.subr.mxu0 %v1287
  %2004 = vmatpush1.msra.mxu0 %v1286
  %2005 = vmatprep.subr.mxu0 %v1291
  %2006 = vmatpush1.msra.mxu0 %v1290
  %2007 = vmatprep.subr.mxu0 %v1295
  %2008 = vmatpush1.msra.mxu0 %v1294
  %2009 = vmatprep.subr.mxu0 %v1299
  %2010 = vmatpush1.msra.mxu0 %v1298
  %2011 = vmatprep.subr.mxu0 %v1303
  %2012 = vmatpush1.msra.mxu0 %v1302
  %2013 = vmatprep.subr.mxu0 %v1307
  %2014 = vmatpush1.msra.mxu0 %v1306
  %2015 = vmatprep.subr.mxu0 %v1311
  %2016 = vmatpush1.msra.mxu0 %v1310
  %2017 = vmatprep.subr.mxu0 %v1315
  %2018 = vmatpush1.msra.mxu0 %v1314
  %2019 = vmatprep.subr.mxu0 %v1319
  %2020 = vmatpush1.msra.mxu0 %v1318
  %2021 = vmatprep.mubr.f32.mxu0 %v1591
  %2022 = vmatmul.mubr.f32.gmra.mrb[0].mxu0 %v39
  %v2023 = vpop.f32.mrb[0].mxu0
  %v2024 = vadd.f32 %v1953, %v2023
  %v2025 = vpop.f32.mrb[0].mxu0
  %v2026 = vadd.f32 %v1955, %v2025
  %2027 = vdwg.mxu0
  %2028 = vmatprep.subr.mxu0 %v1323
  %2029 = vmatpush1.msra.mxu0 %v1322
  %2030 = vmatprep.subr.mxu0 %v1327
  %2031 = vmatpush1.msra.mxu0 %v1326
  %2032 = vmatprep.subr.mxu0 %v1331
  %2033 = vmatpush1.msra.mxu0 %v1330
  %2034 = vmatprep.subr.mxu0 %v1335
  %2035 = vmatpush1.msra.mxu0 %v1334
  %2036 = vmatprep.subr.mxu0 %v1339
  %2037 = vmatpush1.msra.mxu0 %v1338
  %2038 = vmatprep.subr.mxu0 %v1343
  %2039 = vmatpush1.msra.mxu0 %v1342
  %2040 = vmatprep.subr.mxu0 %v1347
  %2041 = vmatpush1.msra.mxu0 %v1346
  %2042 = vmatprep.subr.mxu0 %v1351
  %2043 = vmatpush1.msra.mxu0 %v1350
  %2044 = vmatprep.subr.mxu0 %v1355
  %2045 = vmatpush1.msra.mxu0 %v1354
  %2046 = vmatprep.subr.mxu0 %v1359
  %2047 = vmatpush1.msra.mxu0 %v1358
  %2048 = vmatprep.subr.mxu0 %v1363
  %2049 = vmatpush1.msra.mxu0 %v1362
  %2050 = vmatprep.subr.mxu0 %v1367
  %2051 = vmatpush1.msra.mxu0 %v1366
  %2052 = vmatprep.subr.mxu0 %v1371
  %2053 = vmatpush1.msra.mxu0 %v1370
  %2054 = vmatprep.subr.mxu0 %v1375
  %2055 = vmatpush1.msra.mxu0 %v1374
  %2056 = vmatprep.subr.mxu0 %v1379
  %2057 = vmatpush1.msra.mxu0 %v1378
  %2058 = vmatprep.subr.mxu0 %v1383
  %2059 = vmatpush1.msra.mxu0 %v1382
  %2060 = vmatprep.subr.mxu0 %v1387
  %2061 = vmatpush1.msra.mxu0 %v1386
  %2062 = vmatprep.subr.mxu0 %v1391
  %2063 = vmatpush1.msra.mxu0 %v1390
  %2064 = vmatprep.subr.mxu0 %v1395
  %2065 = vmatpush1.msra.mxu0 %v1394
  %2066 = vmatprep.subr.mxu0 %v1399
  %2067 = vmatpush1.msra.mxu0 %v1398
  %2068 = vmatprep.subr.mxu0 %v1403
  %2069 = vmatpush1.msra.mxu0 %v1402
  %2070 = vmatprep.subr.mxu0 %v1407
  %2071 = vmatpush1.msra.mxu0 %v1406
  %2072 = vmatprep.subr.mxu0 %v1411
  %2073 = vmatpush1.msra.mxu0 %v1410
  %2074 = vmatprep.subr.mxu0 %v1415
  %2075 = vmatpush1.msra.mxu0 %v1414
  %2076 = vmatprep.subr.mxu0 %v1419
  %2077 = vmatpush1.msra.mxu0 %v1418
  %2078 = vmatprep.subr.mxu0 %v1423
  %2079 = vmatpush1.msra.mxu0 %v1422
  %2080 = vmatprep.subr.mxu0 %v1427
  %2081 = vmatpush1.msra.mxu0 %v1426
  %2082 = vmatprep.subr.mxu0 %v1431
  %2083 = vmatpush1.msra.mxu0 %v1430
  %2084 = vmatprep.subr.mxu0 %v1435
  %2085 = vmatpush1.msra.mxu0 %v1434
  %2086 = vmatprep.subr.mxu0 %v1439
  %2087 = vmatpush1.msra.mxu0 %v1438
  %2088 = vmatprep.subr.mxu0 %v1443
  %2089 = vmatpush1.msra.mxu0 %v1442
  %2090 = vmatprep.subr.mxu0 %v1447
  %2091 = vmatpush1.msra.mxu0 %v1446
  %2092 = vmatprep.mubr.f32.mxu0 %v1592
  %2093 = vmatmul.mubr.f32.gmra.mrb[0].mxu0 %v40
  %v2094 = vpop.f32.mrb[0].mxu0
  %v2095 = vadd.f32 %v2024, %v2094
  %v2096 = vpop.f32.mrb[0].mxu0
  %v2097 = vadd.f32 %v2026, %v2096
  %2098 = vdwg.mxu0
  %2099 = vmatprep.subr.mxu0 %v1451
  %2100 = vmatpush1.msra.mxu0 %v1450
  %2101 = vmatprep.subr.mxu0 %v1455
  %2102 = vmatpush1.msra.mxu0 %v1454
  %2103 = vmatprep.subr.mxu0 %v1459
  %2104 = vmatpush1.msra.mxu0 %v1458
  %2105 = vmatprep.subr.mxu0 %v1463
  %2106 = vmatpush1.msra.mxu0 %v1462
  %2107 = vmatprep.subr.mxu0 %v1467
  %2108 = vmatpush1.msra.mxu0 %v1466
  %2109 = vmatprep.subr.mxu0 %v1471
  %2110 = vmatpush1.msra.mxu0 %v1470
  %2111 = vmatprep.subr.mxu0 %v1475
  %2112 = vmatpush1.msra.mxu0 %v1474
  %2113 = vmatprep.subr.mxu0 %v1479
  %2114 = vmatpush1.msra.mxu0 %v1478
  %2115 = vmatprep.subr.mxu0 %v1483
  %2116 = vmatpush1.msra.mxu0 %v1482
  %2117 = vmatprep.subr.mxu0 %v1487
  %2118 = vmatpush1.msra.mxu0 %v1486
  %2119 = vmatprep.subr.mxu0 %v1491
  %2120 = vmatpush1.msra.mxu0 %v1490
  %2121 = vmatprep.subr.mxu0 %v1495
  %2122 = vmatpush1.msra.mxu0 %v1494
  %2123 = vmatprep.subr.mxu0 %v1499
  %2124 = vmatpush1.msra.mxu0 %v1498
  %2125 = vmatprep.subr.mxu0 %v1503
  %2126 = vmatpush1.msra.mxu0 %v1502
  %2127 = vmatprep.subr.mxu0 %v1507
  %2128 = vmatpush1.msra.mxu0 %v1506
  %2129 = vmatprep.subr.mxu0 %v1511
  %2130 = vmatpush1.msra.mxu0 %v1510
  %2131 = vmatprep.subr.mxu0 %v1515
  %2132 = vmatpush1.msra.mxu0 %v1514
  %2133 = vmatprep.subr.mxu0 %v1519
  %2134 = vmatpush1.msra.mxu0 %v1518
  %2135 = vmatprep.subr.mxu0 %v1523
  %2136 = vmatpush1.msra.mxu0 %v1522
  %2137 = vmatprep.subr.mxu0 %v1527
  %2138 = vmatpush1.msra.mxu0 %v1526
  %2139 = vmatprep.subr.mxu0 %v1531
  %2140 = vmatpush1.msra.mxu0 %v1530
  %2141 = vmatprep.subr.mxu0 %v1535
  %2142 = vmatpush1.msra.mxu0 %v1534
  %2143 = vmatprep.subr.mxu0 %v1539
  %2144 = vmatpush1.msra.mxu0 %v1538
  %2145 = vmatprep.subr.mxu0 %v1543
  %2146 = vmatpush1.msra.mxu0 %v1542
  %2147 = vmatprep.subr.mxu0 %v1547
  %2148 = vmatpush1.msra.mxu0 %v1546
  %2149 = vmatprep.subr.mxu0 %v1551
  %2150 = vmatpush1.msra.mxu0 %v1550
  %2151 = vmatprep.subr.mxu0 %v1555
  %2152 = vmatpush1.msra.mxu0 %v1554
  %2153 = vmatprep.subr.mxu0 %v1559
  %2154 = vmatpush1.msra.mxu0 %v1558
  %2155 = vmatprep.subr.mxu0 %v1563
  %2156 = vmatpush1.msra.mxu0 %v1562
  %2157 = vmatprep.subr.mxu0 %v1567
  %2158 = vmatpush1.msra.mxu0 %v1566
  %2159 = vmatprep.subr.mxu0 %v1571
  %2160 = vmatpush1.msra.mxu0 %v1570
  %2161 = vmatprep.subr.mxu0 %v1575
  %2162 = vmatpush1.msra.mxu0 %v1574
  %2163 = vmatprep.mubr.f32.mxu0 %v1593
  %2164 = vmatmul.mubr.f32.gmra.mrb[0].mxu0 %v41
  %v2165 = vpop.f32.mrb[0].mxu0
  %v2166 = vadd.f32 %v2095, %v2165
  %v2167 = vpop.f32.mrb[0].mxu0
  %v2168 = vadd.f32 %v2097, %v2167
  %2169 = vdwg.mxu0
  %2170 = vmatprep.subr.mxu0 %v557
  %2171 = vmatpush1.msra.mxu0 %v556
  %2172 = vmatprep.subr.mxu0 %v561
  %2173 = vmatpush1.msra.mxu0 %v560
  %2174 = vmatprep.subr.mxu0 %v565
  %2175 = vmatpush1.msra.mxu0 %v564
  %2176 = vmatprep.subr.mxu0 %v569
  %2177 = vmatpush1.msra.mxu0 %v568
  %2178 = vmatprep.subr.mxu0 %v573
  %2179 = vmatpush1.msra.mxu0 %v572
  %2180 = vmatprep.subr.mxu0 %v577
  %2181 = vmatpush1.msra.mxu0 %v576
  %2182 = vmatprep.subr.mxu0 %v581
  %2183 = vmatpush1.msra.mxu0 %v580
  %2184 = vmatprep.subr.mxu0 %v585
  %2185 = vmatpush1.msra.mxu0 %v584
  %2186 = vmatprep.subr.mxu0 %v589
  %2187 = vmatpush1.msra.mxu0 %v588
  %2188 = vmatprep.subr.mxu0 %v593
  %2189 = vmatpush1.msra.mxu0 %v592
  %2190 = vmatprep.subr.mxu0 %v597
  %2191 = vmatpush1.msra.mxu0 %v596
  %2192 = vmatprep.subr.mxu0 %v601
  %2193 = vmatpush1.msra.mxu0 %v600
  %2194 = vmatprep.subr.mxu0 %v605
  %2195 = vmatpush1.msra.mxu0 %v604
  %2196 = vmatprep.subr.mxu0 %v609
  %2197 = vmatpush1.msra.mxu0 %v608
  %2198 = vmatprep.subr.mxu0 %v613
  %2199 = vmatpush1.msra.mxu0 %v612
  %2200 = vmatprep.subr.mxu0 %v617
  %2201 = vmatpush1.msra.mxu0 %v616
  %2202 = vmatprep.subr.mxu0 %v621
  %2203 = vmatpush1.msra.mxu0 %v620
  %2204 = vmatprep.subr.mxu0 %v625
  %2205 = vmatpush1.msra.mxu0 %v624
  %2206 = vmatprep.subr.mxu0 %v629
  %2207 = vmatpush1.msra.mxu0 %v628
  %2208 = vmatprep.subr.mxu0 %v633
  %2209 = vmatpush1.msra.mxu0 %v632
  %2210 = vmatprep.subr.mxu0 %v637
  %2211 = vmatpush1.msra.mxu0 %v636
  %2212 = vmatprep.subr.mxu0 %v641
  %2213 = vmatpush1.msra.mxu0 %v640
  %2214 = vmatprep.subr.mxu0 %v645
  %2215 = vmatpush1.msra.mxu0 %v644
  %2216 = vmatprep.subr.mxu0 %v649
  %2217 = vmatpush1.msra.mxu0 %v648
  %2218 = vmatprep.subr.mxu0 %v653
  %2219 = vmatpush1.msra.mxu0 %v652
  %2220 = vmatprep.subr.mxu0 %v657
  %2221 = vmatpush1.msra.mxu0 %v656
  %2222 = vmatprep.subr.mxu0 %v661
  %2223 = vmatpush1.msra.mxu0 %v660
  %2224 = vmatprep.subr.mxu0 %v665
  %2225 = vmatpush1.msra.mxu0 %v664
  %2226 = vmatprep.subr.mxu0 %v669
  %2227 = vmatpush1.msra.mxu0 %v668
  %2228 = vmatprep.subr.mxu0 %v673
  %2229 = vmatpush1.msra.mxu0 %v672
  %2230 = vmatprep.subr.mxu0 %v677
  %2231 = vmatpush1.msra.mxu0 %v676
  %2232 = vmatprep.subr.mxu0 %v681
  %2233 = vmatpush1.msra.mxu0 %v680
  %2234 = vmatprep.mubr.f32.mxu0 %v1586
  %2235 = vmatmul.mubr.f32.gmra.mrb[0].mxu0 %v34
  %v2236 = vpop.f32.mrb[0].mxu0
  %v2237 = vadd.f32 0.0, %v2236
  %v2238 = vpop.f32.mrb[0].mxu0
  %v2239 = vadd.f32 0.0, %v2238
  %2240 = vdwg.mxu0
  %2241 = vmatprep.subr.mxu0 %v685
  %2242 = vmatpush1.msra.mxu0 %v684
  %2243 = vmatprep.subr.mxu0 %v689
  %2244 = vmatpush1.msra.mxu0 %v688
  %2245 = vmatprep.subr.mxu0 %v693
  %2246 = vmatpush1.msra.mxu0 %v692
  %2247 = vmatprep.subr.mxu0 %v697
  %2248 = vmatpush1.msra.mxu0 %v696
  %2249 = vmatprep.subr.mxu0 %v701
  %2250 = vmatpush1.msra.mxu0 %v700
  %2251 = vmatprep.subr.mxu0 %v705
  %2252 = vmatpush1.msra.mxu0 %v704
  %2253 = vmatprep.subr.mxu0 %v709
  %2254 = vmatpush1.msra.mxu0 %v708
  %2255 = vmatprep.subr.mxu0 %v713
  %2256 = vmatpush1.msra.mxu0 %v712
  %2257 = vmatprep.subr.mxu0 %v717
  %2258 = vmatpush1.msra.mxu0 %v716
  %2259 = vmatprep.subr.mxu0 %v721
  %2260 = vmatpush1.msra.mxu0 %v720
  %2261 = vmatprep.subr.mxu0 %v725
  %2262 = vmatpush1.msra.mxu0 %v724
  %2263 = vmatprep.subr.mxu0 %v729
  %2264 = vmatpush1.msra.mxu0 %v728
  %2265 = vmatprep.subr.mxu0 %v733
  %2266 = vmatpush1.msra.mxu0 %v732
  %2267 = vmatprep.subr.mxu0 %v737
  %2268 = vmatpush1.msra.mxu0 %v736
  %2269 = vmatprep.subr.mxu0 %v741
  %2270 = vmatpush1.msra.mxu0 %v740
  %2271 = vmatprep.subr.mxu0 %v745
  %2272 = vmatpush1.msra.mxu0 %v744
  %2273 = vmatprep.subr.mxu0 %v749
  %2274 = vmatpush1.msra.mxu0 %v748
  %2275 = vmatprep.subr.mxu0 %v753
  %2276 = vmatpush1.msra.mxu0 %v752
  %2277 = vmatprep.subr.mxu0 %v757
  %2278 = vmatpush1.msra.mxu0 %v756
  %2279 = vmatprep.subr.mxu0 %v761
  %2280 = vmatpush1.msra.mxu0 %v760
  %2281 = vmatprep.subr.mxu0 %v765
  %2282 = vmatpush1.msra.mxu0 %v764
  %2283 = vmatprep.subr.mxu0 %v769
  %2284 = vmatpush1.msra.mxu0 %v768
  %2285 = vmatprep.subr.mxu0 %v773
  %2286 = vmatpush1.msra.mxu0 %v772
  %2287 = vmatprep.subr.mxu0 %v777
  %2288 = vmatpush1.msra.mxu0 %v776
  %2289 = vmatprep.subr.mxu0 %v781
  %2290 = vmatpush1.msra.mxu0 %v780
  %2291 = vmatprep.subr.mxu0 %v785
  %2292 = vmatpush1.msra.mxu0 %v784
  %2293 = vmatprep.subr.mxu0 %v789
  %2294 = vmatpush1.msra.mxu0 %v788
  %2295 = vmatprep.subr.mxu0 %v793
  %2296 = vmatpush1.msra.mxu0 %v792
  %2297 = vmatprep.subr.mxu0 %v797
  %2298 = vmatpush1.msra.mxu0 %v796
  %2299 = vmatprep.subr.mxu0 %v801
  %2300 = vmatpush1.msra.mxu0 %v800
  %2301 = vmatprep.subr.mxu0 %v805
  %2302 = vmatpush1.msra.mxu0 %v804
  %2303 = vmatprep.subr.mxu0 %v809
  %2304 = vmatpush1.msra.mxu0 %v808
  %2305 = vmatprep.mubr.f32.mxu0 %v1587
  %2306 = vmatmul.mubr.f32.gmra.mrb[0].mxu0 %v35
  %v2307 = vpop.f32.mrb[0].mxu0
  %v2308 = vadd.f32 %v2237, %v2307
  %v2309 = vpop.f32.mrb[0].mxu0
  %v2310 = vadd.f32 %v2239, %v2309
  %2311 = vdwg.mxu0
  %2312 = vmatprep.subr.mxu0 %v813
  %2313 = vmatpush1.msra.mxu0 %v812
  %2314 = vmatprep.subr.mxu0 %v817
  %2315 = vmatpush1.msra.mxu0 %v816
  %2316 = vmatprep.subr.mxu0 %v821
  %2317 = vmatpush1.msra.mxu0 %v820
  %2318 = vmatprep.subr.mxu0 %v825
  %2319 = vmatpush1.msra.mxu0 %v824
  %2320 = vmatprep.subr.mxu0 %v829
  %2321 = vmatpush1.msra.mxu0 %v828
  %2322 = vmatprep.subr.mxu0 %v833
  %2323 = vmatpush1.msra.mxu0 %v832
  %2324 = vmatprep.subr.mxu0 %v837
  %2325 = vmatpush1.msra.mxu0 %v836
  %2326 = vmatprep.subr.mxu0 %v841
  %2327 = vmatpush1.msra.mxu0 %v840
  %2328 = vmatprep.subr.mxu0 %v845
  %2329 = vmatpush1.msra.mxu0 %v844
  %2330 = vmatprep.subr.mxu0 %v849
  %2331 = vmatpush1.msra.mxu0 %v848
  %2332 = vmatprep.subr.mxu0 %v853
  %2333 = vmatpush1.msra.mxu0 %v852
  %2334 = vmatprep.subr.mxu0 %v857
  %2335 = vmatpush1.msra.mxu0 %v856
  %2336 = vmatprep.subr.mxu0 %v861
  %2337 = vmatpush1.msra.mxu0 %v860
  %2338 = vmatprep.subr.mxu0 %v865
  %2339 = vmatpush1.msra.mxu0 %v864
  %2340 = vmatprep.subr.mxu0 %v869
  %2341 = vmatpush1.msra.mxu0 %v868
  %2342 = vmatprep.subr.mxu0 %v873
  %2343 = vmatpush1.msra.mxu0 %v872
  %2344 = vmatprep.subr.mxu0 %v877
  %2345 = vmatpush1.msra.mxu0 %v876
  %2346 = vmatprep.subr.mxu0 %v881
  %2347 = vmatpush1.msra.mxu0 %v880
  %2348 = vmatprep.subr.mxu0 %v885
  %2349 = vmatpush1.msra.mxu0 %v884
  %2350 = vmatprep.subr.mxu0 %v889
  %2351 = vmatpush1.msra.mxu0 %v888
  %2352 = vmatprep.subr.mxu0 %v893
  %2353 = vmatpush1.msra.mxu0 %v892
  %2354 = vmatprep.subr.mxu0 %v897
  %2355 = vmatpush1.msra.mxu0 %v896
  %2356 = vmatprep.subr.mxu0 %v901
  %2357 = vmatpush1.msra.mxu0 %v900
  %2358 = vmatprep.subr.mxu0 %v905
  %2359 = vmatpush1.msra.mxu0 %v904
  %2360 = vmatprep.subr.mxu0 %v909
  %2361 = vmatpush1.msra.mxu0 %v908
  %2362 = vmatprep.subr.mxu0 %v913
  %2363 = vmatpush1.msra.mxu0 %v912
  %2364 = vmatprep.subr.mxu0 %v917
  %2365 = vmatpush1.msra.mxu0 %v916
  %2366 = vmatprep.subr.mxu0 %v921
  %2367 = vmatpush1.msra.mxu0 %v920
  %2368 = vmatprep.subr.mxu0 %v925
  %2369 = vmatpush1.msra.mxu0 %v924
  %2370 = vmatprep.subr.mxu0 %v929
  %2371 = vmatpush1.msra.mxu0 %v928
  %2372 = vmatprep.subr.mxu0 %v933
  %2373 = vmatpush1.msra.mxu0 %v932
  %2374 = vmatprep.subr.mxu0 %v937
  %2375 = vmatpush1.msra.mxu0 %v936
  %2376 = vmatprep.mubr.f32.mxu0 %v1588
  %2377 = vmatmul.mubr.f32.gmra.mrb[0].mxu0 %v36
  %v2378 = vpop.f32.mrb[0].mxu0
  %v2379 = vadd.f32 %v2308, %v2378
  %v2380 = vpop.f32.mrb[0].mxu0
  %v2381 = vadd.f32 %v2310, %v2380
  %2382 = vdwg.mxu0
  %2383 = vmatprep.subr.mxu0 %v941
  %2384 = vmatpush1.msra.mxu0 %v940
  %2385 = vmatprep.subr.mxu0 %v945
  %2386 = vmatpush1.msra.mxu0 %v944
  %2387 = vmatprep.subr.mxu0 %v949
  %2388 = vmatpush1.msra.mxu0 %v948
  %2389 = vmatprep.subr.mxu0 %v953
  %2390 = vmatpush1.msra.mxu0 %v952
  %2391 = vmatprep.subr.mxu0 %v957
  %2392 = vmatpush1.msra.mxu0 %v956
  %2393 = vmatprep.subr.mxu0 %v961
  %2394 = vmatpush1.msra.mxu0 %v960
  %2395 = vmatprep.subr.mxu0 %v965
  %2396 = vmatpush1.msra.mxu0 %v964
  %2397 = vmatprep.subr.mxu0 %v969
  %2398 = vmatpush1.msra.mxu0 %v968
  %2399 = vmatprep.subr.mxu0 %v973
  %2400 = vmatpush1.msra.mxu0 %v972
  %2401 = vmatprep.subr.mxu0 %v977
  %2402 = vmatpush1.msra.mxu0 %v976
  %2403 = vmatprep.subr.mxu0 %v981
  %2404 = vmatpush1.msra.mxu0 %v980
  %2405 = vmatprep.subr.mxu0 %v985
  %2406 = vmatpush1.msra.mxu0 %v984
  %2407 = vmatprep.subr.mxu0 %v989
  %2408 = vmatpush1.msra.mxu0 %v988
  %2409 = vmatprep.subr.mxu0 %v993
  %2410 = vmatpush1.msra.mxu0 %v992
  %2411 = vmatprep.subr.mxu0 %v997
  %2412 = vmatpush1.msra.mxu0 %v996
  %2413 = vmatprep.subr.mxu0 %v1001
  %2414 = vmatpush1.msra.mxu0 %v1000
  %2415 = vmatprep.subr.mxu0 %v1005
  %2416 = vmatpush1.msra.mxu0 %v1004
  %2417 = vmatprep.subr.mxu0 %v1009
  %2418 = vmatpush1.msra.mxu0 %v1008
  %2419 = vmatprep.subr.mxu0 %v1013
  %2420 = vmatpush1.msra.mxu0 %v1012
  %2421 = vmatprep.subr.mxu0 %v1017
  %2422 = vmatpush1.msra.mxu0 %v1016
  %2423 = vmatprep.subr.mxu0 %v1021
  %2424 = vmatpush1.msra.mxu0 %v1020
  %2425 = vmatprep.subr.mxu0 %v1025
  %2426 = vmatpush1.msra.mxu0 %v1024
  %2427 = vmatprep.subr.mxu0 %v1029
  %2428 = vmatpush1.msra.mxu0 %v1028
  %2429 = vmatprep.subr.mxu0 %v1033
  %2430 = vmatpush1.msra.mxu0 %v1032
  %2431 = vmatprep.subr.mxu0 %v1037
  %2432 = vmatpush1.msra.mxu0 %v1036
  %2433 = vmatprep.subr.mxu0 %v1041
  %2434 = vmatpush1.msra.mxu0 %v1040
  %2435 = vmatprep.subr.mxu0 %v1045
  %2436 = vmatpush1.msra.mxu0 %v1044
  %2437 = vmatprep.subr.mxu0 %v1049
  %2438 = vmatpush1.msra.mxu0 %v1048
  %2439 = vmatprep.subr.mxu0 %v1053
  %2440 = vmatpush1.msra.mxu0 %v1052
  %2441 = vmatprep.subr.mxu0 %v1057
  %2442 = vmatpush1.msra.mxu0 %v1056
  %2443 = vmatprep.subr.mxu0 %v1061
  %2444 = vmatpush1.msra.mxu0 %v1060
  %2445 = vmatprep.subr.mxu0 %v1065
  %2446 = vmatpush1.msra.mxu0 %v1064
  %2447 = vmatprep.mubr.f32.mxu0 %v1589
  %2448 = vmatmul.mubr.f32.gmra.mrb[0].mxu0 %v37
  %v2449 = vpop.f32.mrb[0].mxu0
  %v2450 = vadd.f32 %v2379, %v2449
  %v2451 = vpop.f32.mrb[0].mxu0
  %v2452 = vadd.f32 %v2381, %v2451
  %2453 = vdwg.mxu0
  %2454 = vmatprep.subr.mxu0 %v1069
  %2455 = vmatpush1.msra.mxu0 %v1068
  %2456 = vmatprep.subr.mxu0 %v1073
  %2457 = vmatpush1.msra.mxu0 %v1072
  %2458 = vmatprep.subr.mxu0 %v1077
  %2459 = vmatpush1.msra.mxu0 %v1076
  %2460 = vmatprep.subr.mxu0 %v1081
  %2461 = vmatpush1.msra.mxu0 %v1080
  %2462 = vmatprep.subr.mxu0 %v1085
  %2463 = vmatpush1.msra.mxu0 %v1084
  %2464 = vmatprep.subr.mxu0 %v1089
  %2465 = vmatpush1.msra.mxu0 %v1088
  %2466 = vmatprep.subr.mxu0 %v1093
  %2467 = vmatpush1.msra.mxu0 %v1092
  %2468 = vmatprep.subr.mxu0 %v1097
  %2469 = vmatpush1.msra.mxu0 %v1096
  %2470 = vmatprep.subr.mxu0 %v1101
  %2471 = vmatpush1.msra.mxu0 %v1100
  %2472 = vmatprep.subr.mxu0 %v1105
  %2473 = vmatpush1.msra.mxu0 %v1104
  %2474 = vmatprep.subr.mxu0 %v1109
  %2475 = vmatpush1.msra.mxu0 %v1108
  %2476 = vmatprep.subr.mxu0 %v1113
  %2477 = vmatpush1.msra.mxu0 %v1112
  %2478 = vmatprep.subr.mxu0 %v1117
  %2479 = vmatpush1.msra.mxu0 %v1116
  %2480 = vmatprep.subr.mxu0 %v1121
  %2481 = vmatpush1.msra.mxu0 %v1120
  %2482 = vmatprep.subr.mxu0 %v1125
  %2483 = vmatpush1.msra.mxu0 %v1124
  %2484 = vmatprep.subr.mxu0 %v1129
  %2485 = vmatpush1.msra.mxu0 %v1128
  %2486 = vmatprep.subr.mxu0 %v1133
  %2487 = vmatpush1.msra.mxu0 %v1132
  %2488 = vmatprep.subr.mxu0 %v1137
  %2489 = vmatpush1.msra.mxu0 %v1136
  %2490 = vmatprep.subr.mxu0 %v1141
  %2491 = vmatpush1.msra.mxu0 %v1140
  %2492 = vmatprep.subr.mxu0 %v1145
  %2493 = vmatpush1.msra.mxu0 %v1144
  %2494 = vmatprep.subr.mxu0 %v1149
  %2495 = vmatpush1.msra.mxu0 %v1148
  %2496 = vmatprep.subr.mxu0 %v1153
  %2497 = vmatpush1.msra.mxu0 %v1152
  %2498 = vmatprep.subr.mxu0 %v1157
  %2499 = vmatpush1.msra.mxu0 %v1156
  %2500 = vmatprep.subr.mxu0 %v1161
  %2501 = vmatpush1.msra.mxu0 %v1160
  %2502 = vmatprep.subr.mxu0 %v1165
  %2503 = vmatpush1.msra.mxu0 %v1164
  %2504 = vmatprep.subr.mxu0 %v1169
  %2505 = vmatpush1.msra.mxu0 %v1168
  %2506 = vmatprep.subr.mxu0 %v1173
  %2507 = vmatpush1.msra.mxu0 %v1172
  %2508 = vmatprep.subr.mxu0 %v1177
  %2509 = vmatpush1.msra.mxu0 %v1176
  %2510 = vmatprep.subr.mxu0 %v1181
  %2511 = vmatpush1.msra.mxu0 %v1180
  %2512 = vmatprep.subr.mxu0 %v1185
  %2513 = vmatpush1.msra.mxu0 %v1184
  %2514 = vmatprep.subr.mxu0 %v1189
  %2515 = vmatpush1.msra.mxu0 %v1188
  %2516 = vmatprep.subr.mxu0 %v1193
  %2517 = vmatpush1.msra.mxu0 %v1192
  %2518 = vmatprep.mubr.f32.mxu0 %v1590
  %2519 = vmatmul.mubr.f32.gmra.mrb[0].mxu0 %v38
  %v2520 = vpop.f32.mrb[0].mxu0
  %v2521 = vadd.f32 %v2450, %v2520
  %v2522 = vpop.f32.mrb[0].mxu0
  %v2523 = vadd.f32 %v2452, %v2522
  %2524 = vdwg.mxu0
  %2525 = vmatprep.subr.mxu0 %v1197
  %2526 = vmatpush1.msra.mxu0 %v1196
  %2527 = vmatprep.subr.mxu0 %v1201
  %2528 = vmatpush1.msra.mxu0 %v1200
  %2529 = vmatprep.subr.mxu0 %v1205
  %2530 = vmatpush1.msra.mxu0 %v1204
  %2531 = vmatprep.subr.mxu0 %v1209
  %2532 = vmatpush1.msra.mxu0 %v1208
  %2533 = vmatprep.subr.mxu0 %v1213
  %2534 = vmatpush1.msra.mxu0 %v1212
  %2535 = vmatprep.subr.mxu0 %v1217
  %2536 = vmatpush1.msra.mxu0 %v1216
  %2537 = vmatprep.subr.mxu0 %v1221
  %2538 = vmatpush1.msra.mxu0 %v1220
  %2539 = vmatprep.subr.mxu0 %v1225
  %2540 = vmatpush1.msra.mxu0 %v1224
  %2541 = vmatprep.subr.mxu0 %v1229
  %2542 = vmatpush1.msra.mxu0 %v1228
  %2543 = vmatprep.subr.mxu0 %v1233
  %2544 = vmatpush1.msra.mxu0 %v1232
  %2545 = vmatprep.subr.mxu0 %v1237
  %2546 = vmatpush1.msra.mxu0 %v1236
  %2547 = vmatprep.subr.mxu0 %v1241
  %2548 = vmatpush1.msra.mxu0 %v1240
  %2549 = vmatprep.subr.mxu0 %v1245
  %2550 = vmatpush1.msra.mxu0 %v1244
  %2551 = vmatprep.subr.mxu0 %v1249
  %2552 = vmatpush1.msra.mxu0 %v1248
  %2553 = vmatprep.subr.mxu0 %v1253
  %2554 = vmatpush1.msra.mxu0 %v1252
  %2555 = vmatprep.subr.mxu0 %v1257
  %2556 = vmatpush1.msra.mxu0 %v1256
  %2557 = vmatprep.subr.mxu0 %v1261
  %2558 = vmatpush1.msra.mxu0 %v1260
  %2559 = vmatprep.subr.mxu0 %v1265
  %2560 = vmatpush1.msra.mxu0 %v1264
  %2561 = vmatprep.subr.mxu0 %v1269
  %2562 = vmatpush1.msra.mxu0 %v1268
  %2563 = vmatprep.subr.mxu0 %v1273
  %2564 = vmatpush1.msra.mxu0 %v1272
  %2565 = vmatprep.subr.mxu0 %v1277
  %2566 = vmatpush1.msra.mxu0 %v1276
  %2567 = vmatprep.subr.mxu0 %v1281
  %2568 = vmatpush1.msra.mxu0 %v1280
  %2569 = vmatprep.subr.mxu0 %v1285
  %2570 = vmatpush1.msra.mxu0 %v1284
  %2571 = vmatprep.subr.mxu0 %v1289
  %2572 = vmatpush1.msra.mxu0 %v1288
  %2573 = vmatprep.subr.mxu0 %v1293
  %2574 = vmatpush1.msra.mxu0 %v1292
  %2575 = vmatprep.subr.mxu0 %v1297
  %2576 = vmatpush1.msra.mxu0 %v1296
  %2577 = vmatprep.subr.mxu0 %v1301
  %2578 = vmatpush1.msra.mxu0 %v1300
  %2579 = vmatprep.subr.mxu0 %v1305
  %2580 = vmatpush1.msra.mxu0 %v1304
  %2581 = vmatprep.subr.mxu0 %v1309
  %2582 = vmatpush1.msra.mxu0 %v1308
  %2583 = vmatprep.subr.mxu0 %v1313
  %2584 = vmatpush1.msra.mxu0 %v1312
  %2585 = vmatprep.subr.mxu0 %v1317
  %2586 = vmatpush1.msra.mxu0 %v1316
  %2587 = vmatprep.subr.mxu0 %v1321
  %2588 = vmatpush1.msra.mxu0 %v1320
  %2589 = vmatprep.mubr.f32.mxu0 %v1591
  %2590 = vmatmul.mubr.f32.gmra.mrb[0].mxu0 %v39
  %v2591 = vpop.f32.mrb[0].mxu0
  %v2592 = vadd.f32 %v2521, %v2591
  %v2593 = vpop.f32.mrb[0].mxu0
  %v2594 = vadd.f32 %v2523, %v2593
  %2595 = vdwg.mxu0
  %2596 = vmatprep.subr.mxu0 %v1325
  %2597 = vmatpush1.msra.mxu0 %v1324
  %2598 = vmatprep.subr.mxu0 %v1329
  %2599 = vmatpush1.msra.mxu0 %v1328
  %2600 = vmatprep.subr.mxu0 %v1333
  %2601 = vmatpush1.msra.mxu0 %v1332
  %2602 = vmatprep.subr.mxu0 %v1337
  %2603 = vmatpush1.msra.mxu0 %v1336
  %2604 = vmatprep.subr.mxu0 %v1341
  %2605 = vmatpush1.msra.mxu0 %v1340
  %2606 = vmatprep.subr.mxu0 %v1345
  %2607 = vmatpush1.msra.mxu0 %v1344
  %2608 = vmatprep.subr.mxu0 %v1349
  %2609 = vmatpush1.msra.mxu0 %v1348
  %2610 = vmatprep.subr.mxu0 %v1353
  %2611 = vmatpush1.msra.mxu0 %v1352
  %2612 = vmatprep.subr.mxu0 %v1357
  %2613 = vmatpush1.msra.mxu0 %v1356
  %2614 = vmatprep.subr.mxu0 %v1361
  %2615 = vmatpush1.msra.mxu0 %v1360
  %2616 = vmatprep.subr.mxu0 %v1365
  %2617 = vmatpush1.msra.mxu0 %v1364
  %2618 = vmatprep.subr.mxu0 %v1369
  %2619 = vmatpush1.msra.mxu0 %v1368
  %2620 = vmatprep.subr.mxu0 %v1373
  %2621 = vmatpush1.msra.mxu0 %v1372
  %2622 = vmatprep.subr.mxu0 %v1377
  %2623 = vmatpush1.msra.mxu0 %v1376
  %2624 = vmatprep.subr.mxu0 %v1381
  %2625 = vmatpush1.msra.mxu0 %v1380
  %2626 = vmatprep.subr.mxu0 %v1385
  %2627 = vmatpush1.msra.mxu0 %v1384
  %2628 = vmatprep.subr.mxu0 %v1389
  %2629 = vmatpush1.msra.mxu0 %v1388
  %2630 = vmatprep.subr.mxu0 %v1393
  %2631 = vmatpush1.msra.mxu0 %v1392
  %2632 = vmatprep.subr.mxu0 %v1397
  %2633 = vmatpush1.msra.mxu0 %v1396
  %2634 = vmatprep.subr.mxu0 %v1401
  %2635 = vmatpush1.msra.mxu0 %v1400
  %2636 = vmatprep.subr.mxu0 %v1405
  %2637 = vmatpush1.msra.mxu0 %v1404
  %2638 = vmatprep.subr.mxu0 %v1409
  %2639 = vmatpush1.msra.mxu0 %v1408
  %2640 = vmatprep.subr.mxu0 %v1413
  %2641 = vmatpush1.msra.mxu0 %v1412
  %2642 = vmatprep.subr.mxu0 %v1417
  %2643 = vmatpush1.msra.mxu0 %v1416
  %2644 = vmatprep.subr.mxu0 %v1421
  %2645 = vmatpush1.msra.mxu0 %v1420
  %2646 = vmatprep.subr.mxu0 %v1425
  %2647 = vmatpush1.msra.mxu0 %v1424
  %2648 = vmatprep.subr.mxu0 %v1429
  %2649 = vmatpush1.msra.mxu0 %v1428
  %2650 = vmatprep.subr.mxu0 %v1433
  %2651 = vmatpush1.msra.mxu0 %v1432
  %2652 = vmatprep.subr.mxu0 %v1437
  %2653 = vmatpush1.msra.mxu0 %v1436
  %2654 = vmatprep.subr.mxu0 %v1441
  %2655 = vmatpush1.msra.mxu0 %v1440
  %2656 = vmatprep.subr.mxu0 %v1445
  %2657 = vmatpush1.msra.mxu0 %v1444
  %2658 = vmatprep.subr.mxu0 %v1449
  %2659 = vmatpush1.msra.mxu0 %v1448
  %2660 = vmatprep.mubr.f32.mxu0 %v1592
  %2661 = vmatmul.mubr.f32.gmra.mrb[0].mxu0 %v40
  %v2662 = vpop.f32.mrb[0].mxu0
  %v2663 = vadd.f32 %v2592, %v2662
  %v2664 = vpop.f32.mrb[0].mxu0
  %v2665 = vadd.f32 %v2594, %v2664
  %2666 = vdwg.mxu0
  %2667 = vmatprep.subr.mxu0 %v1453
  %2668 = vmatpush1.msra.mxu0 %v1452
  %2669 = vmatprep.subr.mxu0 %v1457
  %2670 = vmatpush1.msra.mxu0 %v1456
  %2671 = vmatprep.subr.mxu0 %v1461
  %2672 = vmatpush1.msra.mxu0 %v1460
  %2673 = vmatprep.subr.mxu0 %v1465
  %2674 = vmatpush1.msra.mxu0 %v1464
  %2675 = vmatprep.subr.mxu0 %v1469
  %2676 = vmatpush1.msra.mxu0 %v1468
  %2677 = vmatprep.subr.mxu0 %v1473
  %2678 = vmatpush1.msra.mxu0 %v1472
  %2679 = vmatprep.subr.mxu0 %v1477
  %2680 = vmatpush1.msra.mxu0 %v1476
  %2681 = vmatprep.subr.mxu0 %v1481
  %2682 = vmatpush1.msra.mxu0 %v1480
  %2683 = vmatprep.subr.mxu0 %v1485
  %2684 = vmatpush1.msra.mxu0 %v1484
  %2685 = vmatprep.subr.mxu0 %v1489
  %2686 = vmatpush1.msra.mxu0 %v1488
  %2687 = vmatprep.subr.mxu0 %v1493
  %2688 = vmatpush1.msra.mxu0 %v1492
  %2689 = vmatprep.subr.mxu0 %v1497
  %2690 = vmatpush1.msra.mxu0 %v1496
  %2691 = vmatprep.subr.mxu0 %v1501
  %2692 = vmatpush1.msra.mxu0 %v1500
  %2693 = vmatprep.subr.mxu0 %v1505
  %2694 = vmatpush1.msra.mxu0 %v1504
  %2695 = vmatprep.subr.mxu0 %v1509
  %2696 = vmatpush1.msra.mxu0 %v1508
  %2697 = vmatprep.subr.mxu0 %v1513
  %2698 = vmatpush1.msra.mxu0 %v1512
  %2699 = vmatprep.subr.mxu0 %v1517
  %2700 = vmatpush1.msra.mxu0 %v1516
  %2701 = vmatprep.subr.mxu0 %v1521
  %2702 = vmatpush1.msra.mxu0 %v1520
  %2703 = vmatprep.subr.mxu0 %v1525
  %2704 = vmatpush1.msra.mxu0 %v1524
  %2705 = vmatprep.subr.mxu0 %v1529
  %2706 = vmatpush1.msra.mxu0 %v1528
  %2707 = vmatprep.subr.mxu0 %v1533
  %2708 = vmatpush1.msra.mxu0 %v1532
  %2709 = vmatprep.subr.mxu0 %v1537
  %2710 = vmatpush1.msra.mxu0 %v1536
  %2711 = vmatprep.subr.mxu0 %v1541
  %2712 = vmatpush1.msra.mxu0 %v1540
  %2713 = vmatprep.subr.mxu0 %v1545
  %2714 = vmatpush1.msra.mxu0 %v1544
  %2715 = vmatprep.subr.mxu0 %v1549
  %2716 = vmatpush1.msra.mxu0 %v1548
  %2717 = vmatprep.subr.mxu0 %v1553
  %2718 = vmatpush1.msra.mxu0 %v1552
  %2719 = vmatprep.subr.mxu0 %v1557
  %2720 = vmatpush1.msra.mxu0 %v1556
  %2721 = vmatprep.subr.mxu0 %v1561
  %2722 = vmatpush1.msra.mxu0 %v1560
  %2723 = vmatprep.subr.mxu0 %v1565
  %2724 = vmatpush1.msra.mxu0 %v1564
  %2725 = vmatprep.subr.mxu0 %v1569
  %2726 = vmatpush1.msra.mxu0 %v1568
  %2727 = vmatprep.subr.mxu0 %v1573
  %2728 = vmatpush1.msra.mxu0 %v1572
  %2729 = vmatprep.subr.mxu0 %v1577
  %2730 = vmatpush1.msra.mxu0 %v1576
  %2731 = vmatprep.mubr.f32.mxu0 %v1593
  %2732 = vmatmul.mubr.f32.gmra.mrb[0].mxu0 %v41
  %v2733 = vpop.f32.mrb[0].mxu0
  %v2734 = vadd.f32 %v2663, %v2733
  %v2735 = vpop.f32.mrb[0].mxu0
  %v2736 = vadd.f32 %v2665, %v2735
  %2737 = vdwg.mxu0
  %v2742 = vcombine.low %v2166, %v2168
  %v2743 = vcombine.low %v2734, %v2736
  %v2746 = vadd.f32 %v32, %v2742
  %v2747 = vadd.f32 %v33, %v2743
  %2748 = vst [vmem:[#allocation2] sm:$0xff] %v2746
  %2749 = vst [vmem:[#allocation2 + $0x8] sm:$0xff] %v2747
  // Predicated region
  $region34: #{siamese_forward.7} parent=0 // pred_check
    %p2750 = pneg %p26
  $region35: #{siamese_forward.7} parent=0 // pred_check_branch
    %2752 = sbr.rel (%p2750) target = $region37
  $region36: #{siamese_forward.7} parent=0 // pred_region
    %v2753 = vld [vmem:[#allocation2] sm:$0xff]
    %v2754 = vld [vmem:[#allocation2 + $0x8] sm:$0xff]
    %v2755 = vld [vmem:[%s2] sm:$0xf]
    %v2757 = vlaneseq
    %v2758 = vshrl.u32 %v2757, 7
    %v2759 = vsub.s32 0, %v2758
    %v2760 = vrot.slane %v2755, %v2759
    %v2761 = vlaneseq
    %v2762 = vshrl.u32 %v2761, 7
    %v2763 = vsub.s32 1, %v2762
    %v2764 = vrot.slane %v2755, %v2763
    %v2765 = vlaneseq
    %v2766 = vshrl.u32 %v2765, 7
    %v2767 = vsub.s32 2, %v2766
    %v2768 = vrot.slane %v2755, %v2767
    %v2769 = vlaneseq
    %v2770 = vshrl.u32 %v2769, 7
    %v2771 = vsub.s32 3, %v2770
    %v2772 = vrot.slane %v2755, %v2771
    %v2773 = vcombine.low %v2760, %v2764
    %v2774 = vcombine.low %v2768, %v2772
    %v2777 = vadd.f32 %v2753, %v2773
    %v2778 = vadd.f32 %v2754, %v2774
    %v2779 = vmax.f32 %v2777, 0.0
    %v2780 = vmax.f32 %v2778, 0.0
    %v2781 = vld [vmem:[%s3] sm:$0xff]
    %v2782 = vld [vmem:[%s3 + $0x8] sm:$0xff]
    %v2783 = vld [vmem:[%s3 + $0x10] sm:$0xff]
    %v2784 = vld [vmem:[%s3 + $0x18] sm:$0xff]
    %v2785 = vld [vmem:[%s3 + $0x20] sm:$0xff]
    %v2786 = vld [vmem:[%s3 + $0x28] sm:$0xff]
    %v2787 = vld [vmem:[%s3 + $0x30] sm:$0xff]
    %v2788 = vld [vmem:[%s3 + $0x38] sm:$0xff]
    %v2789 = vld [vmem:[%s3 + $0x40] sm:$0xff]
    %v2790 = vld [vmem:[%s3 + $0x48] sm:$0xff]
    %v2791 = vld [vmem:[%s3 + $0x50] sm:$0xff]
    %v2792 = vld [vmem:[%s3 + $0x58] sm:$0xff]
    %v2793 = vld [vmem:[%s3 + $0x60] sm:$0xff]
    %v2794 = vld [vmem:[%s3 + $0x68] sm:$0xff]
    %v2795 = vld [vmem:[%s3 + $0x70] sm:$0xff]
    %v2796 = vld [vmem:[%s3 + $0x78] sm:$0xff]
    %v2797 = vld [vmem:[%s3 + $0x80] sm:$0xff]
    %v2798 = vld [vmem:[%s3 + $0x88] sm:$0xff]
    %v2799 = vld [vmem:[%s3 + $0x90] sm:$0xff]
    %v2800 = vld [vmem:[%s3 + $0x98] sm:$0xff]
    %v2801 = vld [vmem:[%s3 + $0xa0] sm:$0xff]
    %v2802 = vld [vmem:[%s3 + $0xa8] sm:$0xff]
    %v2803 = vld [vmem:[%s3 + $0xb0] sm:$0xff]
    %v2804 = vld [vmem:[%s3 + $0xb8] sm:$0xff]
    %v2805 = vld [vmem:[%s3 + $0xc0] sm:$0xff]
    %v2806 = vld [vmem:[%s3 + $0xc8] sm:$0xff]
    %v2807 = vld [vmem:[%s3 + $0xd0] sm:$0xff]
    %v2808 = vld [vmem:[%s3 + $0xd8] sm:$0xff]
    %v2809 = vld [vmem:[%s3 + $0xe0] sm:$0xff]
    %v2810 = vld [vmem:[%s3 + $0xe8] sm:$0xff]
    %v2811 = vld [vmem:[%s3 + $0xf0] sm:$0xff]
    %v2812 = vld [vmem:[%s3 + $0xf8] sm:$0xff]
    %v2813 = vld [vmem:[%s3 + $0x100] sm:$0xff]
    %v2814 = vld [vmem:[%s3 + $0x108] sm:$0xff]
    %v2815 = vld [vmem:[%s3 + $0x110] sm:$0xff]
    %v2816 = vld [vmem:[%s3 + $0x118] sm:$0xff]
    %v2817 = vld [vmem:[%s3 + $0x120] sm:$0xff]
    %v2818 = vld [vmem:[%s3 + $0x128] sm:$0xff]
    %v2819 = vld [vmem:[%s3 + $0x130] sm:$0xff]
    %v2820 = vld [vmem:[%s3 + $0x138] sm:$0xff]
    %v2821 = vld [vmem:[%s3 + $0x140] sm:$0xff]
    %v2822 = vld [vmem:[%s3 + $0x148] sm:$0xff]
    %v2823 = vld [vmem:[%s3 + $0x150] sm:$0xff]
    %v2824 = vld [vmem:[%s3 + $0x158] sm:$0xff]
    %v2825 = vld [vmem:[%s3 + $0x160] sm:$0xff]
    %v2826 = vld [vmem:[%s3 + $0x168] sm:$0xff]
    %v2827 = vld [vmem:[%s3 + $0x170] sm:$0xff]
    %v2828 = vld [vmem:[%s3 + $0x178] sm:$0xff]
    %v2829 = vld [vmem:[%s3 + $0x180] sm:$0xff]
    %v2830 = vld [vmem:[%s3 + $0x188] sm:$0xff]
    %v2831 = vld [vmem:[%s3 + $0x190] sm:$0xff]
    %v2832 = vld [vmem:[%s3 + $0x198] sm:$0xff]
    %v2833 = vld [vmem:[%s3 + $0x1a0] sm:$0xff]
    %v2834 = vld [vmem:[%s3 + $0x1a8] sm:$0xff]
    %v2835 = vld [vmem:[%s3 + $0x1b0] sm:$0xff]
    %v2836 = vld [vmem:[%s3 + $0x1b8] sm:$0xff]
    %v2837 = vld [vmem:[%s3 + $0x1c0] sm:$0xff]
    %v2838 = vld [vmem:[%s3 + $0x1c8] sm:$0xff]
    %v2839 = vld [vmem:[%s3 + $0x1d0] sm:$0xff]
    %v2840 = vld [vmem:[%s3 + $0x1d8] sm:$0xff]
    %v2841 = vld [vmem:[%s3 + $0x1e0] sm:$0xff]
    %v2842 = vld [vmem:[%s3 + $0x1e8] sm:$0xff]
    %v2843 = vld [vmem:[%s3 + $0x1f0] sm:$0xff]
    %v2844 = vld [vmem:[%s3 + $0x1f8] sm:$0xff]
    %v2845 = vld [vmem:[%s3 + $0x200] sm:$0xff]
    %v2846 = vld [vmem:[%s3 + $0x208] sm:$0xff]
    %v2847 = vld [vmem:[%s3 + $0x210] sm:$0xff]
    %v2848 = vld [vmem:[%s3 + $0x218] sm:$0xff]
    %v2849 = vld [vmem:[%s3 + $0x220] sm:$0xff]
    %v2850 = vld [vmem:[%s3 + $0x228] sm:$0xff]
    %v2851 = vld [vmem:[%s3 + $0x230] sm:$0xff]
    %v2852 = vld [vmem:[%s3 + $0x238] sm:$0xff]
    %v2853 = vld [vmem:[%s3 + $0x240] sm:$0xff]
    %v2854 = vld [vmem:[%s3 + $0x248] sm:$0xff]
    %v2855 = vld [vmem:[%s3 + $0x250] sm:$0xff]
    %v2856 = vld [vmem:[%s3 + $0x258] sm:$0xff]
    %v2857 = vld [vmem:[%s3 + $0x260] sm:$0xff]
    %v2858 = vld [vmem:[%s3 + $0x268] sm:$0xff]
    %v2859 = vld [vmem:[%s3 + $0x270] sm:$0xff]
    %v2860 = vld [vmem:[%s3 + $0x278] sm:$0xff]
    %v2861 = vld [vmem:[%s3 + $0x280] sm:$0xff]
    %v2862 = vld [vmem:[%s3 + $0x288] sm:$0xff]
    %v2863 = vld [vmem:[%s3 + $0x290] sm:$0xff]
    %v2864 = vld [vmem:[%s3 + $0x298] sm:$0xff]
    %v2865 = vld [vmem:[%s3 + $0x2a0] sm:$0xff]
    %v2866 = vld [vmem:[%s3 + $0x2a8] sm:$0xff]
    %v2867 = vld [vmem:[%s3 + $0x2b0] sm:$0xff]
    %v2868 = vld [vmem:[%s3 + $0x2b8] sm:$0xff]
    %v2869 = vld [vmem:[%s3 + $0x2c0] sm:$0xff]
    %v2870 = vld [vmem:[%s3 + $0x2c8] sm:$0xff]
    %v2871 = vld [vmem:[%s3 + $0x2d0] sm:$0xff]
    %v2872 = vld [vmem:[%s3 + $0x2d8] sm:$0xff]
    %v2873 = vld [vmem:[%s3 + $0x2e0] sm:$0xff]
    %v2874 = vld [vmem:[%s3 + $0x2e8] sm:$0xff]
    %v2875 = vld [vmem:[%s3 + $0x2f0] sm:$0xff]
    %v2876 = vld [vmem:[%s3 + $0x2f8] sm:$0xff]
    %v2877 = vld [vmem:[%s3 + $0x300] sm:$0xff]
    %v2878 = vld [vmem:[%s3 + $0x308] sm:$0xff]
    %v2879 = vld [vmem:[%s3 + $0x310] sm:$0xff]
    %v2880 = vld [vmem:[%s3 + $0x318] sm:$0xff]
    %v2881 = vld [vmem:[%s3 + $0x320] sm:$0xff]
    %v2882 = vld [vmem:[%s3 + $0x328] sm:$0xff]
    %v2883 = vld [vmem:[%s3 + $0x330] sm:$0xff]
    %v2884 = vld [vmem:[%s3 + $0x338] sm:$0xff]
    %v2885 = vld [vmem:[%s3 + $0x340] sm:$0xff]
    %v2886 = vld [vmem:[%s3 + $0x348] sm:$0xff]
    %v2887 = vld [vmem:[%s3 + $0x350] sm:$0xff]
    %v2888 = vld [vmem:[%s3 + $0x358] sm:$0xff]
    %v2889 = vld [vmem:[%s3 + $0x360] sm:$0xff]
    %v2890 = vld [vmem:[%s3 + $0x368] sm:$0xff]
    %v2891 = vld [vmem:[%s3 + $0x370] sm:$0xff]
    %v2892 = vld [vmem:[%s3 + $0x378] sm:$0xff]
    %v2893 = vld [vmem:[%s3 + $0x380] sm:$0xff]
    %v2894 = vld [vmem:[%s3 + $0x388] sm:$0xff]
    %v2895 = vld [vmem:[%s3 + $0x390] sm:$0xff]
    %v2896 = vld [vmem:[%s3 + $0x398] sm:$0xff]
    %v2897 = vld [vmem:[%s3 + $0x3a0] sm:$0xff]
    %v2898 = vld [vmem:[%s3 + $0x3a8] sm:$0xff]
    %v2899 = vld [vmem:[%s3 + $0x3b0] sm:$0xff]
    %v2900 = vld [vmem:[%s3 + $0x3b8] sm:$0xff]
    %v2901 = vld [vmem:[%s3 + $0x3c0] sm:$0xff]
    %v2902 = vld [vmem:[%s3 + $0x3c8] sm:$0xff]
    %v2903 = vld [vmem:[%s3 + $0x3d0] sm:$0xff]
    %v2904 = vld [vmem:[%s3 + $0x3d8] sm:$0xff]
    %v2905 = vld [vmem:[%s3 + $0x3e0] sm:$0xff]
    %v2906 = vld [vmem:[%s3 + $0x3e8] sm:$0xff]
    %v2907 = vld [vmem:[%s3 + $0x3f0] sm:$0xff]
    %v2908 = vld [vmem:[%s3 + $0x3f8] sm:$0xff]
    %v2909 = vunpack.c.l.bf16 %v2781
    %v2910 = vunpack.c.h.bf16 %v2781
    %v2911 = vunpack.c.l.bf16 %v2782
    %v2912 = vunpack.c.h.bf16 %v2782
    %v2913 = vunpack.c.l.bf16 %v2783
    %v2914 = vunpack.c.h.bf16 %v2783
    %v2915 = vunpack.c.l.bf16 %v2784
    %v2916 = vunpack.c.h.bf16 %v2784
    %v2917 = vunpack.c.l.bf16 %v2785
    %v2918 = vunpack.c.h.bf16 %v2785
    %v2919 = vunpack.c.l.bf16 %v2786
    %v2920 = vunpack.c.h.bf16 %v2786
    %v2921 = vunpack.c.l.bf16 %v2787
    %v2922 = vunpack.c.h.bf16 %v2787
    %v2923 = vunpack.c.l.bf16 %v2788
    %v2924 = vunpack.c.h.bf16 %v2788
    %v2925 = vunpack.c.l.bf16 %v2789
    %v2926 = vunpack.c.h.bf16 %v2789
    %v2927 = vunpack.c.l.bf16 %v2790
    %v2928 = vunpack.c.h.bf16 %v2790
    %v2929 = vunpack.c.l.bf16 %v2791
    %v2930 = vunpack.c.h.bf16 %v2791
    %v2931 = vunpack.c.l.bf16 %v2792
    %v2932 = vunpack.c.h.bf16 %v2792
    %v2933 = vunpack.c.l.bf16 %v2793
    %v2934 = vunpack.c.h.bf16 %v2793
    %v2935 = vunpack.c.l.bf16 %v2794
    %v2936 = vunpack.c.h.bf16 %v2794
    %v2937 = vunpack.c.l.bf16 %v2795
    %v2938 = vunpack.c.h.bf16 %v2795
    %v2939 = vunpack.c.l.bf16 %v2796
    %v2940 = vunpack.c.h.bf16 %v2796
    %v2941 = vunpack.c.l.bf16 %v2797
    %v2942 = vunpack.c.h.bf16 %v2797
    %v2943 = vunpack.c.l.bf16 %v2798
    %v2944 = vunpack.c.h.bf16 %v2798
    %v2945 = vunpack.c.l.bf16 %v2799
    %v2946 = vunpack.c.h.bf16 %v2799
    %v2947 = vunpack.c.l.bf16 %v2800
    %v2948 = vunpack.c.h.bf16 %v2800
    %v2949 = vunpack.c.l.bf16 %v2801
    %v2950 = vunpack.c.h.bf16 %v2801
    %v2951 = vunpack.c.l.bf16 %v2802
    %v2952 = vunpack.c.h.bf16 %v2802
    %v2953 = vunpack.c.l.bf16 %v2803
    %v2954 = vunpack.c.h.bf16 %v2803
    %v2955 = vunpack.c.l.bf16 %v2804
    %v2956 = vunpack.c.h.bf16 %v2804
    %v2957 = vunpack.c.l.bf16 %v2805
    %v2958 = vunpack.c.h.bf16 %v2805
    %v2959 = vunpack.c.l.bf16 %v2806
    %v2960 = vunpack.c.h.bf16 %v2806
    %v2961 = vunpack.c.l.bf16 %v2807
    %v2962 = vunpack.c.h.bf16 %v2807
    %v2963 = vunpack.c.l.bf16 %v2808
    %v2964 = vunpack.c.h.bf16 %v2808
    %v2965 = vunpack.c.l.bf16 %v2809
    %v2966 = vunpack.c.h.bf16 %v2809
    %v2967 = vunpack.c.l.bf16 %v2810
    %v2968 = vunpack.c.h.bf16 %v2810
    %v2969 = vunpack.c.l.bf16 %v2811
    %v2970 = vunpack.c.h.bf16 %v2811
    %v2971 = vunpack.c.l.bf16 %v2812
    %v2972 = vunpack.c.h.bf16 %v2812
    %v2973 = vunpack.c.l.bf16 %v2813
    %v2974 = vunpack.c.h.bf16 %v2813
    %v2975 = vunpack.c.l.bf16 %v2814
    %v2976 = vunpack.c.h.bf16 %v2814
    %v2977 = vunpack.c.l.bf16 %v2815
    %v2978 = vunpack.c.h.bf16 %v2815
    %v2979 = vunpack.c.l.bf16 %v2816
    %v2980 = vunpack.c.h.bf16 %v2816
    %v2981 = vunpack.c.l.bf16 %v2817
    %v2982 = vunpack.c.h.bf16 %v2817
    %v2983 = vunpack.c.l.bf16 %v2818
    %v2984 = vunpack.c.h.bf16 %v2818
    %v2985 = vunpack.c.l.bf16 %v2819
    %v2986 = vunpack.c.h.bf16 %v2819
    %v2987 = vunpack.c.l.bf16 %v2820
    %v2988 = vunpack.c.h.bf16 %v2820
    %v2989 = vunpack.c.l.bf16 %v2821
    %v2990 = vunpack.c.h.bf16 %v2821
    %v2991 = vunpack.c.l.bf16 %v2822
    %v2992 = vunpack.c.h.bf16 %v2822
    %v2993 = vunpack.c.l.bf16 %v2823
    %v2994 = vunpack.c.h.bf16 %v2823
    %v2995 = vunpack.c.l.bf16 %v2824
    %v2996 = vunpack.c.h.bf16 %v2824
    %v2997 = vunpack.c.l.bf16 %v2825
    %v2998 = vunpack.c.h.bf16 %v2825
    %v2999 = vunpack.c.l.bf16 %v2826
    %v3000 = vunpack.c.h.bf16 %v2826
    %v3001 = vunpack.c.l.bf16 %v2827
    %v3002 = vunpack.c.h.bf16 %v2827
    %v3003 = vunpack.c.l.bf16 %v2828
    %v3004 = vunpack.c.h.bf16 %v2828
    %v3005 = vunpack.c.l.bf16 %v2829
    %v3006 = vunpack.c.h.bf16 %v2829
    %v3007 = vunpack.c.l.bf16 %v2830
    %v3008 = vunpack.c.h.bf16 %v2830
    %v3009 = vunpack.c.l.bf16 %v2831
    %v3010 = vunpack.c.h.bf16 %v2831
    %v3011 = vunpack.c.l.bf16 %v2832
    %v3012 = vunpack.c.h.bf16 %v2832
    %v3013 = vunpack.c.l.bf16 %v2833
    %v3014 = vunpack.c.h.bf16 %v2833
    %v3015 = vunpack.c.l.bf16 %v2834
    %v3016 = vunpack.c.h.bf16 %v2834
    %v3017 = vunpack.c.l.bf16 %v2835
    %v3018 = vunpack.c.h.bf16 %v2835
    %v3019 = vunpack.c.l.bf16 %v2836
    %v3020 = vunpack.c.h.bf16 %v2836
    %v3021 = vunpack.c.l.bf16 %v2837
    %v3022 = vunpack.c.h.bf16 %v2837
    %v3023 = vunpack.c.l.bf16 %v2838
    %v3024 = vunpack.c.h.bf16 %v2838
    %v3025 = vunpack.c.l.bf16 %v2839
    %v3026 = vunpack.c.h.bf16 %v2839
    %v3027 = vunpack.c.l.bf16 %v2840
    %v3028 = vunpack.c.h.bf16 %v2840
    %v3029 = vunpack.c.l.bf16 %v2841
    %v3030 = vunpack.c.h.bf16 %v2841
    %v3031 = vunpack.c.l.bf16 %v2842
    %v3032 = vunpack.c.h.bf16 %v2842
    %v3033 = vunpack.c.l.bf16 %v2843
    %v3034 = vunpack.c.h.bf16 %v2843
    %v3035 = vunpack.c.l.bf16 %v2844
    %v3036 = vunpack.c.h.bf16 %v2844
    %v3037 = vunpack.c.l.bf16 %v2845
    %v3038 = vunpack.c.h.bf16 %v2845
    %v3039 = vunpack.c.l.bf16 %v2846
    %v3040 = vunpack.c.h.bf16 %v2846
    %v3041 = vunpack.c.l.bf16 %v2847
    %v3042 = vunpack.c.h.bf16 %v2847
    %v3043 = vunpack.c.l.bf16 %v2848
    %v3044 = vunpack.c.h.bf16 %v2848
    %v3045 = vunpack.c.l.bf16 %v2849
    %v3046 = vunpack.c.h.bf16 %v2849
    %v3047 = vunpack.c.l.bf16 %v2850
    %v3048 = vunpack.c.h.bf16 %v2850
    %v3049 = vunpack.c.l.bf16 %v2851
    %v3050 = vunpack.c.h.bf16 %v2851
    %v3051 = vunpack.c.l.bf16 %v2852
    %v3052 = vunpack.c.h.bf16 %v2852
    %v3053 = vunpack.c.l.bf16 %v2853
    %v3054 = vunpack.c.h.bf16 %v2853
    %v3055 = vunpack.c.l.bf16 %v2854
    %v3056 = vunpack.c.h.bf16 %v2854
    %v3057 = vunpack.c.l.bf16 %v2855
    %v3058 = vunpack.c.h.bf16 %v2855
    %v3059 = vunpack.c.l.bf16 %v2856
    %v3060 = vunpack.c.h.bf16 %v2856
    %v3061 = vunpack.c.l.bf16 %v2857
    %v3062 = vunpack.c.h.bf16 %v2857
    %v3063 = vunpack.c.l.bf16 %v2858
    %v3064 = vunpack.c.h.bf16 %v2858
    %v3065 = vunpack.c.l.bf16 %v2859
    %v3066 = vunpack.c.h.bf16 %v2859
    %v3067 = vunpack.c.l.bf16 %v2860
    %v3068 = vunpack.c.h.bf16 %v2860
    %v3069 = vunpack.c.l.bf16 %v2861
    %v3070 = vunpack.c.h.bf16 %v2861
    %v3071 = vunpack.c.l.bf16 %v2862
    %v3072 = vunpack.c.h.bf16 %v2862
    %v3073 = vunpack.c.l.bf16 %v2863
    %v3074 = vunpack.c.h.bf16 %v2863
    %v3075 = vunpack.c.l.bf16 %v2864
    %v3076 = vunpack.c.h.bf16 %v2864
    %v3077 = vunpack.c.l.bf16 %v2865
    %v3078 = vunpack.c.h.bf16 %v2865
    %v3079 = vunpack.c.l.bf16 %v2866
    %v3080 = vunpack.c.h.bf16 %v2866
    %v3081 = vunpack.c.l.bf16 %v2867
    %v3082 = vunpack.c.h.bf16 %v2867
    %v3083 = vunpack.c.l.bf16 %v2868
    %v3084 = vunpack.c.h.bf16 %v2868
    %v3085 = vunpack.c.l.bf16 %v2869
    %v3086 = vunpack.c.h.bf16 %v2869
    %v3087 = vunpack.c.l.bf16 %v2870
    %v3088 = vunpack.c.h.bf16 %v2870
    %v3089 = vunpack.c.l.bf16 %v2871
    %v3090 = vunpack.c.h.bf16 %v2871
    %v3091 = vunpack.c.l.bf16 %v2872
    %v3092 = vunpack.c.h.bf16 %v2872
    %v3093 = vunpack.c.l.bf16 %v2873
    %v3094 = vunpack.c.h.bf16 %v2873
    %v3095 = vunpack.c.l.bf16 %v2874
    %v3096 = vunpack.c.h.bf16 %v2874
    %v3097 = vunpack.c.l.bf16 %v2875
    %v3098 = vunpack.c.h.bf16 %v2875
    %v3099 = vunpack.c.l.bf16 %v2876
    %v3100 = vunpack.c.h.bf16 %v2876
    %v3101 = vunpack.c.l.bf16 %v2877
    %v3102 = vunpack.c.h.bf16 %v2877
    %v3103 = vunpack.c.l.bf16 %v2878
    %v3104 = vunpack.c.h.bf16 %v2878
    %v3105 = vunpack.c.l.bf16 %v2879
    %v3106 = vunpack.c.h.bf16 %v2879
    %v3107 = vunpack.c.l.bf16 %v2880
    %v3108 = vunpack.c.h.bf16 %v2880
    %v3109 = vunpack.c.l.bf16 %v2881
    %v3110 = vunpack.c.h.bf16 %v2881
    %v3111 = vunpack.c.l.bf16 %v2882
    %v3112 = vunpack.c.h.bf16 %v2882
    %v3113 = vunpack.c.l.bf16 %v2883
    %v3114 = vunpack.c.h.bf16 %v2883
    %v3115 = vunpack.c.l.bf16 %v2884
    %v3116 = vunpack.c.h.bf16 %v2884
    %v3117 = vunpack.c.l.bf16 %v2885
    %v3118 = vunpack.c.h.bf16 %v2885
    %v3119 = vunpack.c.l.bf16 %v2886
    %v3120 = vunpack.c.h.bf16 %v2886
    %v3121 = vunpack.c.l.bf16 %v2887
    %v3122 = vunpack.c.h.bf16 %v2887
    %v3123 = vunpack.c.l.bf16 %v2888
    %v3124 = vunpack.c.h.bf16 %v2888
    %v3125 = vunpack.c.l.bf16 %v2889
    %v3126 = vunpack.c.h.bf16 %v2889
    %v3127 = vunpack.c.l.bf16 %v2890
    %v3128 = vunpack.c.h.bf16 %v2890
    %v3129 = vunpack.c.l.bf16 %v2891
    %v3130 = vunpack.c.h.bf16 %v2891
    %v3131 = vunpack.c.l.bf16 %v2892
    %v3132 = vunpack.c.h.bf16 %v2892
    %v3133 = vunpack.c.l.bf16 %v2893
    %v3134 = vunpack.c.h.bf16 %v2893
    %v3135 = vunpack.c.l.bf16 %v2894
    %v3136 = vunpack.c.h.bf16 %v2894
    %v3137 = vunpack.c.l.bf16 %v2895
    %v3138 = vunpack.c.h.bf16 %v2895
    %v3139 = vunpack.c.l.bf16 %v2896
    %v3140 = vunpack.c.h.bf16 %v2896
    %v3141 = vunpack.c.l.bf16 %v2897
    %v3142 = vunpack.c.h.bf16 %v2897
    %v3143 = vunpack.c.l.bf16 %v2898
    %v3144 = vunpack.c.h.bf16 %v2898
    %v3145 = vunpack.c.l.bf16 %v2899
    %v3146 = vunpack.c.h.bf16 %v2899
    %v3147 = vunpack.c.l.bf16 %v2900
    %v3148 = vunpack.c.h.bf16 %v2900
    %v3149 = vunpack.c.l.bf16 %v2901
    %v3150 = vunpack.c.h.bf16 %v2901
    %v3151 = vunpack.c.l.bf16 %v2902
    %v3152 = vunpack.c.h.bf16 %v2902
    %v3153 = vunpack.c.l.bf16 %v2903
    %v3154 = vunpack.c.h.bf16 %v2903
    %v3155 = vunpack.c.l.bf16 %v2904
    %v3156 = vunpack.c.h.bf16 %v2904
    %v3157 = vunpack.c.l.bf16 %v2905
    %v3158 = vunpack.c.h.bf16 %v2905
    %v3159 = vunpack.c.l.bf16 %v2906
    %v3160 = vunpack.c.h.bf16 %v2906
    %v3161 = vunpack.c.l.bf16 %v2907
    %v3162 = vunpack.c.h.bf16 %v2907
    %v3163 = vunpack.c.l.bf16 %v2908
    %v3164 = vunpack.c.h.bf16 %v2908
    %v3165 = vld [vmem:[%s4] sm:$0xf]
    %v3167 = vlaneseq
    %v3168 = vshrl.u32 %v3167, 7
    %v3169 = vsub.s32 0, %v3168
    %v3170 = vrot.slane %v3165, %v3169
    %v3171 = vlaneseq
    %v3172 = vshrl.u32 %v3171, 7
    %v3173 = vsub.s32 1, %v3172
    %v3174 = vrot.slane %v3165, %v3173
    %v3175 = vlaneseq
    %v3176 = vshrl.u32 %v3175, 7
    %v3177 = vsub.s32 2, %v3176
    %v3178 = vrot.slane %v3165, %v3177
    %v3179 = vlaneseq
    %v3180 = vshrl.u32 %v3179, 7
    %v3181 = vsub.s32 3, %v3180
    %v3182 = vrot.slane %v3165, %v3181
    %v3189 = vcombine.high %v2779, %v2779
    %v3190 = vcombine.high %v2780, %v2780
    %3193 = vmatprep.subr.mxu0 %v2910
    %3194 = vmatpush1.msra.mxu0 %v2909
    %3195 = vmatprep.subr.mxu0 %v2914
    %3196 = vmatpush1.msra.mxu0 %v2913
    %3197 = vmatprep.subr.mxu0 %v2918
    %3198 = vmatpush1.msra.mxu0 %v2917
    %3199 = vmatprep.subr.mxu0 %v2922
    %3200 = vmatpush1.msra.mxu0 %v2921
    %3201 = vmatprep.subr.mxu0 %v2926
    %3202 = vmatpush1.msra.mxu0 %v2925
    %3203 = vmatprep.subr.mxu0 %v2930
    %3204 = vmatpush1.msra.mxu0 %v2929
    %3205 = vmatprep.subr.mxu0 %v2934
    %3206 = vmatpush1.msra.mxu0 %v2933
    %3207 = vmatprep.subr.mxu0 %v2938
    %3208 = vmatpush1.msra.mxu0 %v2937
    %3209 = vmatprep.subr.mxu0 %v2942
    %3210 = vmatpush1.msra.mxu0 %v2941
    %3211 = vmatprep.subr.mxu0 %v2946
    %3212 = vmatpush1.msra.mxu0 %v2945
    %3213 = vmatprep.subr.mxu0 %v2950
    %3214 = vmatpush1.msra.mxu0 %v2949
    %3215 = vmatprep.subr.mxu0 %v2954
    %3216 = vmatpush1.msra.mxu0 %v2953
    %3217 = vmatprep.subr.mxu0 %v2958
    %3218 = vmatpush1.msra.mxu0 %v2957
    %3219 = vmatprep.subr.mxu0 %v2962
    %3220 = vmatpush1.msra.mxu0 %v2961
    %3221 = vmatprep.subr.mxu0 %v2966
    %3222 = vmatpush1.msra.mxu0 %v2965
    %3223 = vmatprep.subr.mxu0 %v2970
    %3224 = vmatpush1.msra.mxu0 %v2969
    %3225 = vmatprep.subr.mxu0 %v2974
    %3226 = vmatpush1.msra.mxu0 %v2973
    %3227 = vmatprep.subr.mxu0 %v2978
    %3228 = vmatpush1.msra.mxu0 %v2977
    %3229 = vmatprep.subr.mxu0 %v2982
    %3230 = vmatpush1.msra.mxu0 %v2981
    %3231 = vmatprep.subr.mxu0 %v2986
    %3232 = vmatpush1.msra.mxu0 %v2985
    %3233 = vmatprep.subr.mxu0 %v2990
    %3234 = vmatpush1.msra.mxu0 %v2989
    %3235 = vmatprep.subr.mxu0 %v2994
    %3236 = vmatpush1.msra.mxu0 %v2993
    %3237 = vmatprep.subr.mxu0 %v2998
    %3238 = vmatpush1.msra.mxu0 %v2997
    %3239 = vmatprep.subr.mxu0 %v3002
    %3240 = vmatpush1.msra.mxu0 %v3001
    %3241 = vmatprep.subr.mxu0 %v3006
    %3242 = vmatpush1.msra.mxu0 %v3005
    %3243 = vmatprep.subr.mxu0 %v3010
    %3244 = vmatpush1.msra.mxu0 %v3009
    %3245 = vmatprep.subr.mxu0 %v3014
    %3246 = vmatpush1.msra.mxu0 %v3013
    %3247 = vmatprep.subr.mxu0 %v3018
    %3248 = vmatpush1.msra.mxu0 %v3017
    %3249 = vmatprep.subr.mxu0 %v3022
    %3250 = vmatpush1.msra.mxu0 %v3021
    %3251 = vmatprep.subr.mxu0 %v3026
    %3252 = vmatpush1.msra.mxu0 %v3025
    %3253 = vmatprep.subr.mxu0 %v3030
    %3254 = vmatpush1.msra.mxu0 %v3029
    %3255 = vmatprep.subr.mxu0 %v3034
    %3256 = vmatpush1.msra.mxu0 %v3033
    %3257 = vmatprep.mubr.f32.mxu0 %v3189
    %3258 = vmatmul.mubr.f32.gmra.mrb[0].mxu0 %v2779
    %v3259 = vpop.f32.mrb[0].mxu0
    %v3260 = vadd.f32 %v3170, %v3259
    %v3261 = vpop.f32.mrb[0].mxu0
    %v3262 = vadd.f32 %v3174, %v3261
    %3263 = vdwg.mxu0
    %3264 = vmatprep.subr.mxu0 %v3038
    %3265 = vmatpush1.msra.mxu0 %v3037
    %3266 = vmatprep.subr.mxu0 %v3042
    %3267 = vmatpush1.msra.mxu0 %v3041
    %3268 = vmatprep.subr.mxu0 %v3046
    %3269 = vmatpush1.msra.mxu0 %v3045
    %3270 = vmatprep.subr.mxu0 %v3050
    %3271 = vmatpush1.msra.mxu0 %v3049
    %3272 = vmatprep.subr.mxu0 %v3054
    %3273 = vmatpush1.msra.mxu0 %v3053
    %3274 = vmatprep.subr.mxu0 %v3058
    %3275 = vmatpush1.msra.mxu0 %v3057
    %3276 = vmatprep.subr.mxu0 %v3062
    %3277 = vmatpush1.msra.mxu0 %v3061
    %3278 = vmatprep.subr.mxu0 %v3066
    %3279 = vmatpush1.msra.mxu0 %v3065
    %3280 = vmatprep.subr.mxu0 %v3070
    %3281 = vmatpush1.msra.mxu0 %v3069
    %3282 = vmatprep.subr.mxu0 %v3074
    %3283 = vmatpush1.msra.mxu0 %v3073
    %3284 = vmatprep.subr.mxu0 %v3078
    %3285 = vmatpush1.msra.mxu0 %v3077
    %3286 = vmatprep.subr.mxu0 %v3082
    %3287 = vmatpush1.msra.mxu0 %v3081
    %3288 = vmatprep.subr.mxu0 %v3086
    %3289 = vmatpush1.msra.mxu0 %v3085
    %3290 = vmatprep.subr.mxu0 %v3090
    %3291 = vmatpush1.msra.mxu0 %v3089
    %3292 = vmatprep.subr.mxu0 %v3094
    %3293 = vmatpush1.msra.mxu0 %v3093
    %3294 = vmatprep.subr.mxu0 %v3098
    %3295 = vmatpush1.msra.mxu0 %v3097
    %3296 = vmatprep.subr.mxu0 %v3102
    %3297 = vmatpush1.msra.mxu0 %v3101
    %3298 = vmatprep.subr.mxu0 %v3106
    %3299 = vmatpush1.msra.mxu0 %v3105
    %3300 = vmatprep.subr.mxu0 %v3110
    %3301 = vmatpush1.msra.mxu0 %v3109
    %3302 = vmatprep.subr.mxu0 %v3114
    %3303 = vmatpush1.msra.mxu0 %v3113
    %3304 = vmatprep.subr.mxu0 %v3118
    %3305 = vmatpush1.msra.mxu0 %v3117
    %3306 = vmatprep.subr.mxu0 %v3122
    %3307 = vmatpush1.msra.mxu0 %v3121
    %3308 = vmatprep.subr.mxu0 %v3126
    %3309 = vmatpush1.msra.mxu0 %v3125
    %3310 = vmatprep.subr.mxu0 %v3130
    %3311 = vmatpush1.msra.mxu0 %v3129
    %3312 = vmatprep.subr.mxu0 %v3134
    %3313 = vmatpush1.msra.mxu0 %v3133
    %3314 = vmatprep.subr.mxu0 %v3138
    %3315 = vmatpush1.msra.mxu0 %v3137
    %3316 = vmatprep.subr.mxu0 %v3142
    %3317 = vmatpush1.msra.mxu0 %v3141
    %3318 = vmatprep.subr.mxu0 %v3146
    %3319 = vmatpush1.msra.mxu0 %v3145
    %3320 = vmatprep.subr.mxu0 %v3150
    %3321 = vmatpush1.msra.mxu0 %v3149
    %3322 = vmatprep.subr.mxu0 %v3154
    %3323 = vmatpush1.msra.mxu0 %v3153
    %3324 = vmatprep.subr.mxu0 %v3158
    %3325 = vmatpush1.msra.mxu0 %v3157
    %3326 = vmatprep.subr.mxu0 %v3162
    %3327 = vmatpush1.msra.mxu0 %v3161
    %3328 = vmatprep.mubr.f32.mxu0 %v3190
    %3329 = vmatmul.mubr.f32.gmra.mrb[0].mxu0 %v2780
    %v3330 = vpop.f32.mrb[0].mxu0
    %v3331 = vadd.f32 %v3260, %v3330
    %v3332 = vpop.f32.mrb[0].mxu0
    %v3333 = vadd.f32 %v3262, %v3332
    %3334 = vdwg.mxu0
    %3335 = vmatprep.subr.mxu0 %v2912
    %3336 = vmatpush1.msra.mxu0 %v2911
    %3337 = vmatprep.subr.mxu0 %v2916
    %3338 = vmatpush1.msra.mxu0 %v2915
    %3339 = vmatprep.subr.mxu0 %v2920
    %3340 = vmatpush1.msra.mxu0 %v2919
    %3341 = vmatprep.subr.mxu0 %v2924
    %3342 = vmatpush1.msra.mxu0 %v2923
    %3343 = vmatprep.subr.mxu0 %v2928
    %3344 = vmatpush1.msra.mxu0 %v2927
    %3345 = vmatprep.subr.mxu0 %v2932
    %3346 = vmatpush1.msra.mxu0 %v2931
    %3347 = vmatprep.subr.mxu0 %v2936
    %3348 = vmatpush1.msra.mxu0 %v2935
    %3349 = vmatprep.subr.mxu0 %v2940
    %3350 = vmatpush1.msra.mxu0 %v2939
    %3351 = vmatprep.subr.mxu0 %v2944
    %3352 = vmatpush1.msra.mxu0 %v2943
    %3353 = vmatprep.subr.mxu0 %v2948
    %3354 = vmatpush1.msra.mxu0 %v2947
    %3355 = vmatprep.subr.mxu0 %v2952
    %3356 = vmatpush1.msra.mxu0 %v2951
    %3357 = vmatprep.subr.mxu0 %v2956
    %3358 = vmatpush1.msra.mxu0 %v2955
    %3359 = vmatprep.subr.mxu0 %v2960
    %3360 = vmatpush1.msra.mxu0 %v2959
    %3361 = vmatprep.subr.mxu0 %v2964
    %3362 = vmatpush1.msra.mxu0 %v2963
    %3363 = vmatprep.subr.mxu0 %v2968
    %3364 = vmatpush1.msra.mxu0 %v2967
    %3365 = vmatprep.subr.mxu0 %v2972
    %3366 = vmatpush1.msra.mxu0 %v2971
    %3367 = vmatprep.subr.mxu0 %v2976
    %3368 = vmatpush1.msra.mxu0 %v2975
    %3369 = vmatprep.subr.mxu0 %v2980
    %3370 = vmatpush1.msra.mxu0 %v2979
    %3371 = vmatprep.subr.mxu0 %v2984
    %3372 = vmatpush1.msra.mxu0 %v2983
    %3373 = vmatprep.subr.mxu0 %v2988
    %3374 = vmatpush1.msra.mxu0 %v2987
    %3375 = vmatprep.subr.mxu0 %v2992
    %3376 = vmatpush1.msra.mxu0 %v2991
    %3377 = vmatprep.subr.mxu0 %v2996
    %3378 = vmatpush1.msra.mxu0 %v2995
    %3379 = vmatprep.subr.mxu0 %v3000
    %3380 = vmatpush1.msra.mxu0 %v2999
    %3381 = vmatprep.subr.mxu0 %v3004
    %3382 = vmatpush1.msra.mxu0 %v3003
    %3383 = vmatprep.subr.mxu0 %v3008
    %3384 = vmatpush1.msra.mxu0 %v3007
    %3385 = vmatprep.subr.mxu0 %v3012
    %3386 = vmatpush1.msra.mxu0 %v3011
    %3387 = vmatprep.subr.mxu0 %v3016
    %3388 = vmatpush1.msra.mxu0 %v3015
    %3389 = vmatprep.subr.mxu0 %v3020
    %3390 = vmatpush1.msra.mxu0 %v3019
    %3391 = vmatprep.subr.mxu0 %v3024
    %3392 = vmatpush1.msra.mxu0 %v3023
    %3393 = vmatprep.subr.mxu0 %v3028
    %3394 = vmatpush1.msra.mxu0 %v3027
    %3395 = vmatprep.subr.mxu0 %v3032
    %3396 = vmatpush1.msra.mxu0 %v3031
    %3397 = vmatprep.subr.mxu0 %v3036
    %3398 = vmatpush1.msra.mxu0 %v3035
    %3399 = vmatprep.mubr.f32.mxu0 %v3189
    %3400 = vmatmul.mubr.f32.gmra.mrb[0].mxu0 %v2779
    %v3401 = vpop.f32.mrb[0].mxu0
    %v3402 = vadd.f32 %v3178, %v3401
    %v3403 = vpop.f32.mrb[0].mxu0
    %v3404 = vadd.f32 %v3182, %v3403
    %3405 = vdwg.mxu0
    %3406 = vmatprep.subr.mxu0 %v3040
    %3407 = vmatpush1.msra.mxu0 %v3039
    %3408 = vmatprep.subr.mxu0 %v3044
    %3409 = vmatpush1.msra.mxu0 %v3043
    %3410 = vmatprep.subr.mxu0 %v3048
    %3411 = vmatpush1.msra.mxu0 %v3047
    %3412 = vmatprep.subr.mxu0 %v3052
    %3413 = vmatpush1.msra.mxu0 %v3051
    %3414 = vmatprep.subr.mxu0 %v3056
    %3415 = vmatpush1.msra.mxu0 %v3055
    %3416 = vmatprep.subr.mxu0 %v3060
    %3417 = vmatpush1.msra.mxu0 %v3059
    %3418 = vmatprep.subr.mxu0 %v3064
    %3419 = vmatpush1.msra.mxu0 %v3063
    %3420 = vmatprep.subr.mxu0 %v3068
    %3421 = vmatpush1.msra.mxu0 %v3067
    %3422 = vmatprep.subr.mxu0 %v3072
    %3423 = vmatpush1.msra.mxu0 %v3071
    %3424 = vmatprep.subr.mxu0 %v3076
    %3425 = vmatpush1.msra.mxu0 %v3075
    %3426 = vmatprep.subr.mxu0 %v3080
    %3427 = vmatpush1.msra.mxu0 %v3079
    %3428 = vmatprep.subr.mxu0 %v3084
    %3429 = vmatpush1.msra.mxu0 %v3083
    %3430 = vmatprep.subr.mxu0 %v3088
    %3431 = vmatpush1.msra.mxu0 %v3087
    %3432 = vmatprep.subr.mxu0 %v3092
    %3433 = vmatpush1.msra.mxu0 %v3091
    %3434 = vmatprep.subr.mxu0 %v3096
    %3435 = vmatpush1.msra.mxu0 %v3095
    %3436 = vmatprep.subr.mxu0 %v3100
    %3437 = vmatpush1.msra.mxu0 %v3099
    %3438 = vmatprep.subr.mxu0 %v3104
    %3439 = vmatpush1.msra.mxu0 %v3103
    %3440 = vmatprep.subr.mxu0 %v3108
    %3441 = vmatpush1.msra.mxu0 %v3107
    %3442 = vmatprep.subr.mxu0 %v3112
    %3443 = vmatpush1.msra.mxu0 %v3111
    %3444 = vmatprep.subr.mxu0 %v3116
    %3445 = vmatpush1.msra.mxu0 %v3115
    %3446 = vmatprep.subr.mxu0 %v3120
    %3447 = vmatpush1.msra.mxu0 %v3119
    %3448 = vmatprep.subr.mxu0 %v3124
    %3449 = vmatpush1.msra.mxu0 %v3123
    %3450 = vmatprep.subr.mxu0 %v3128
    %3451 = vmatpush1.msra.mxu0 %v3127
    %3452 = vmatprep.subr.mxu0 %v3132
    %3453 = vmatpush1.msra.mxu0 %v3131
    %3454 = vmatprep.subr.mxu0 %v3136
    %3455 = vmatpush1.msra.mxu0 %v3135
    %3456 = vmatprep.subr.mxu0 %v3140
    %3457 = vmatpush1.msra.mxu0 %v3139
    %3458 = vmatprep.subr.mxu0 %v3144
    %3459 = vmatpush1.msra.mxu0 %v3143
    %3460 = vmatprep.subr.mxu0 %v3148
    %3461 = vmatpush1.msra.mxu0 %v3147
    %3462 = vmatprep.subr.mxu0 %v3152
    %3463 = vmatpush1.msra.mxu0 %v3151
    %3464 = vmatprep.subr.mxu0 %v3156
    %3465 = vmatpush1.msra.mxu0 %v3155
    %3466 = vmatprep.subr.mxu0 %v3160
    %3467 = vmatpush1.msra.mxu0 %v3159
    %3468 = vmatprep.subr.mxu0 %v3164
    %3469 = vmatpush1.msra.mxu0 %v3163
    %3470 = vmatprep.mubr.f32.mxu0 %v3190
    %3471 = vmatmul.mubr.f32.gmra.mrb[0].mxu0 %v2780
    %v3472 = vpop.f32.mrb[0].mxu0
    %v3473 = vadd.f32 %v3402, %v3472
    %v3474 = vpop.f32.mrb[0].mxu0
    %v3475 = vadd.f32 %v3404, %v3474
    %3476 = vdwg.mxu0
    %v3477 = vmax.f32 %v3331, 0.0
    %v3478 = vmax.f32 %v3333, 0.0
    %v3479 = vmax.f32 %v3473, 0.0
    %v3480 = vmax.f32 %v3475, 0.0
    %v3481 = vld [vmem:[%s5] sm:$0xff]
    %v3482 = vld [vmem:[%s5 + $0x8] sm:$0xff]
    %v3483 = vld [vmem:[%s5 + $0x10] sm:$0xff]
    %v3484 = vld [vmem:[%s5 + $0x18] sm:$0xff]
    %v3485 = vld [vmem:[%s5 + $0x20] sm:$0xff]
    %v3486 = vld [vmem:[%s5 + $0x28] sm:$0xff]
    %v3487 = vld [vmem:[%s5 + $0x30] sm:$0xff]
    %v3488 = vld [vmem:[%s5 + $0x38] sm:$0xff]
    %v3489 = vld [vmem:[%s5 + $0x40] sm:$0xff]
    %v3490 = vld [vmem:[%s5 + $0x48] sm:$0xff]
    %v3491 = vld [vmem:[%s5 + $0x50] sm:$0xff]
    %v3492 = vld [vmem:[%s5 + $0x58] sm:$0xff]
    %v3493 = vld [vmem:[%s5 + $0x60] sm:$0xff]
    %v3494 = vld [vmem:[%s5 + $0x68] sm:$0xff]
    %v3495 = vld [vmem:[%s5 + $0x70] sm:$0xff]
    %v3496 = vld [vmem:[%s5 + $0x78] sm:$0xff]
    %v3497 = vld [vmem:[%s5 + $0x80] sm:$0xff]
    %v3498 = vld [vmem:[%s5 + $0x88] sm:$0xff]
    %v3499 = vld [vmem:[%s5 + $0x90] sm:$0xff]
    %v3500 = vld [vmem:[%s5 + $0x98] sm:$0xff]
    %v3501 = vld [vmem:[%s5 + $0xa0] sm:$0xff]
    %v3502 = vld [vmem:[%s5 + $0xa8] sm:$0xff]
    %v3503 = vld [vmem:[%s5 + $0xb0] sm:$0xff]
    %v3504 = vld [vmem:[%s5 + $0xb8] sm:$0xff]
    %v3505 = vld [vmem:[%s5 + $0xc0] sm:$0xff]
    %v3506 = vld [vmem:[%s5 + $0xc8] sm:$0xff]
    %v3507 = vld [vmem:[%s5 + $0xd0] sm:$0xff]
    %v3508 = vld [vmem:[%s5 + $0xd8] sm:$0xff]
    %v3509 = vld [vmem:[%s5 + $0xe0] sm:$0xff]
    %v3510 = vld [vmem:[%s5 + $0xe8] sm:$0xff]
    %v3511 = vld [vmem:[%s5 + $0xf0] sm:$0xff]
    %v3512 = vld [vmem:[%s5 + $0xf8] sm:$0xff]
    %v3513 = vld [vmem:[%s5 + $0x100] sm:$0xff]
    %v3514 = vld [vmem:[%s5 + $0x108] sm:$0xff]
    %v3515 = vld [vmem:[%s5 + $0x110] sm:$0xff]
    %v3516 = vld [vmem:[%s5 + $0x118] sm:$0xff]
    %v3517 = vld [vmem:[%s5 + $0x120] sm:$0xff]
    %v3518 = vld [vmem:[%s5 + $0x128] sm:$0xff]
    %v3519 = vld [vmem:[%s5 + $0x130] sm:$0xff]
    %v3520 = vld [vmem:[%s5 + $0x138] sm:$0xff]
    %v3521 = vld [vmem:[%s5 + $0x140] sm:$0xff]
    %v3522 = vld [vmem:[%s5 + $0x148] sm:$0xff]
    %v3523 = vld [vmem:[%s5 + $0x150] sm:$0xff]
    %v3524 = vld [vmem:[%s5 + $0x158] sm:$0xff]
    %v3525 = vld [vmem:[%s5 + $0x160] sm:$0xff]
    %v3526 = vld [vmem:[%s5 + $0x168] sm:$0xff]
    %v3527 = vld [vmem:[%s5 + $0x170] sm:$0xff]
    %v3528 = vld [vmem:[%s5 + $0x178] sm:$0xff]
    %v3529 = vld [vmem:[%s5 + $0x180] sm:$0xff]
    %v3530 = vld [vmem:[%s5 + $0x188] sm:$0xff]
    %v3531 = vld [vmem:[%s5 + $0x190] sm:$0xff]
    %v3532 = vld [vmem:[%s5 + $0x198] sm:$0xff]
    %v3533 = vld [vmem:[%s5 + $0x1a0] sm:$0xff]
    %v3534 = vld [vmem:[%s5 + $0x1a8] sm:$0xff]
    %v3535 = vld [vmem:[%s5 + $0x1b0] sm:$0xff]
    %v3536 = vld [vmem:[%s5 + $0x1b8] sm:$0xff]
    %v3537 = vld [vmem:[%s5 + $0x1c0] sm:$0xff]
    %v3538 = vld [vmem:[%s5 + $0x1c8] sm:$0xff]
    %v3539 = vld [vmem:[%s5 + $0x1d0] sm:$0xff]
    %v3540 = vld [vmem:[%s5 + $0x1d8] sm:$0xff]
    %v3541 = vld [vmem:[%s5 + $0x1e0] sm:$0xff]
    %v3542 = vld [vmem:[%s5 + $0x1e8] sm:$0xff]
    %v3543 = vld [vmem:[%s5 + $0x1f0] sm:$0xff]
    %v3544 = vld [vmem:[%s5 + $0x1f8] sm:$0xff]
    %v3545 = vld [vmem:[%s6] sm:$0x1]
    %v3547 = vlaneseq
    %v3548 = vshrl.u32 %v3547, 7
    %v3549 = vsub.s32 0, %v3548
    %v3550 = vrot.slane %v3545, %v3549
    %3552 = vmatprep.subr.mxu0 0.0
    %3553 = vmatpush1.msra.mxu0 %v3481
    %3554 = vmatprep.subr.mxu0 0.0
    %3555 = vmatpush1.msra.mxu0 %v3482
    %3556 = vmatprep.subr.mxu0 0.0
    %3557 = vmatpush1.msra.mxu0 %v3483
    %3558 = vmatprep.subr.mxu0 0.0
    %3559 = vmatpush1.msra.mxu0 %v3484
    %3560 = vmatprep.subr.mxu0 0.0
    %3561 = vmatpush1.msra.mxu0 %v3485
    %3562 = vmatprep.subr.mxu0 0.0
    %3563 = vmatpush1.msra.mxu0 %v3486
    %3564 = vmatprep.subr.mxu0 0.0
    %3565 = vmatpush1.msra.mxu0 %v3487
    %3566 = vmatprep.subr.mxu0 0.0
    %3567 = vmatpush1.msra.mxu0 %v3488
    %3568 = vmatprep.subr.mxu0 0.0
    %3569 = vmatpush1.msra.mxu0 %v3489
    %3570 = vmatprep.subr.mxu0 0.0
    %3571 = vmatpush1.msra.mxu0 %v3490
    %3572 = vmatprep.subr.mxu0 0.0
    %3573 = vmatpush1.msra.mxu0 %v3491
    %3574 = vmatprep.subr.mxu0 0.0
    %3575 = vmatpush1.msra.mxu0 %v3492
    %3576 = vmatprep.subr.mxu0 0.0
    %3577 = vmatpush1.msra.mxu0 %v3493
    %3578 = vmatprep.subr.mxu0 0.0
    %3579 = vmatpush1.msra.mxu0 %v3494
    %3580 = vmatprep.subr.mxu0 0.0
    %3581 = vmatpush1.msra.mxu0 %v3495
    %3582 = vmatprep.subr.mxu0 0.0
    %3583 = vmatpush1.msra.mxu0 %v3496
    %3584 = vmatprep.subr.mxu0 0.0
    %3585 = vmatpush1.msra.mxu0 %v3497
    %3586 = vmatprep.subr.mxu0 0.0
    %3587 = vmatpush1.msra.mxu0 %v3498
    %3588 = vmatprep.subr.mxu0 0.0
    %3589 = vmatpush1.msra.mxu0 %v3499
    %3590 = vmatprep.subr.mxu0 0.0
    %3591 = vmatpush1.msra.mxu0 %v3500
    %3592 = vmatprep.subr.mxu0 0.0
    %3593 = vmatpush1.msra.mxu0 %v3501
    %3594 = vmatprep.subr.mxu0 0.0
    %3595 = vmatpush1.msra.mxu0 %v3502
    %3596 = vmatprep.subr.mxu0 0.0
    %3597 = vmatpush1.msra.mxu0 %v3503
    %3598 = vmatprep.subr.mxu0 0.0
    %3599 = vmatpush1.msra.mxu0 %v3504
    %3600 = vmatprep.subr.mxu0 0.0
    %3601 = vmatpush1.msra.mxu0 %v3505
    %3602 = vmatprep.subr.mxu0 0.0
    %3603 = vmatpush1.msra.mxu0 %v3506
    %3604 = vmatprep.subr.mxu0 0.0
    %3605 = vmatpush1.msra.mxu0 %v3507
    %3606 = vmatprep.subr.mxu0 0.0
    %3607 = vmatpush1.msra.mxu0 %v3508
    %3608 = vmatprep.subr.mxu0 0.0
    %3609 = vmatpush1.msra.mxu0 %v3509
    %3610 = vmatprep.subr.mxu0 0.0
    %3611 = vmatpush1.msra.mxu0 %v3510
    %3612 = vmatprep.subr.mxu0 0.0
    %3613 = vmatpush1.msra.mxu0 %v3511
    %3614 = vmatprep.subr.mxu0 0.0
    %3615 = vmatpush1.msra.mxu0 %v3512
    %3616 = vmatprep.mubr.f32.mxu0 %v3478
    %3617 = vmatmul.mubr.f32.gmra.mrb[0].mxu0 %v3477
    %v3618 = vpop.f32.mrb[0].mxu0
    %v3619 = vadd.f32 %v3550, %v3618
    %v3620 = vpop.f32.mrb[0].mxu0
    %3621 = vdwg.mxu0
    %3622 = vmatprep.subr.mxu0 0.0
    %3623 = vmatpush1.msra.mxu0 %v3513
    %3624 = vmatprep.subr.mxu0 0.0
    %3625 = vmatpush1.msra.mxu0 %v3514
    %3626 = vmatprep.subr.mxu0 0.0
    %3627 = vmatpush1.msra.mxu0 %v3515
    %3628 = vmatprep.subr.mxu0 0.0
    %3629 = vmatpush1.msra.mxu0 %v3516
    %3630 = vmatprep.subr.mxu0 0.0
    %3631 = vmatpush1.msra.mxu0 %v3517
    %3632 = vmatprep.subr.mxu0 0.0
    %3633 = vmatpush1.msra.mxu0 %v3518
    %3634 = vmatprep.subr.mxu0 0.0
    %3635 = vmatpush1.msra.mxu0 %v3519
    %3636 = vmatprep.subr.mxu0 0.0
    %3637 = vmatpush1.msra.mxu0 %v3520
    %3638 = vmatprep.subr.mxu0 0.0
    %3639 = vmatpush1.msra.mxu0 %v3521
    %3640 = vmatprep.subr.mxu0 0.0
    %3641 = vmatpush1.msra.mxu0 %v3522
    %3642 = vmatprep.subr.mxu0 0.0
    %3643 = vmatpush1.msra.mxu0 %v3523
    %3644 = vmatprep.subr.mxu0 0.0
    %3645 = vmatpush1.msra.mxu0 %v3524
    %3646 = vmatprep.subr.mxu0 0.0
    %3647 = vmatpush1.msra.mxu0 %v3525
    %3648 = vmatprep.subr.mxu0 0.0
    %3649 = vmatpush1.msra.mxu0 %v3526
    %3650 = vmatprep.subr.mxu0 0.0
    %3651 = vmatpush1.msra.mxu0 %v3527
    %3652 = vmatprep.subr.mxu0 0.0
    %3653 = vmatpush1.msra.mxu0 %v3528
    %3654 = vmatprep.subr.mxu0 0.0
    %3655 = vmatpush1.msra.mxu0 %v3529
    %3656 = vmatprep.subr.mxu0 0.0
    %3657 = vmatpush1.msra.mxu0 %v3530
    %3658 = vmatprep.subr.mxu0 0.0
    %3659 = vmatpush1.msra.mxu0 %v3531
    %3660 = vmatprep.subr.mxu0 0.0
    %3661 = vmatpush1.msra.mxu0 %v3532
    %3662 = vmatprep.subr.mxu0 0.0
    %3663 = vmatpush1.msra.mxu0 %v3533
    %3664 = vmatprep.subr.mxu0 0.0
    %3665 = vmatpush1.msra.mxu0 %v3534
    %3666 = vmatprep.subr.mxu0 0.0
    %3667 = vmatpush1.msra.mxu0 %v3535
    %3668 = vmatprep.subr.mxu0 0.0
    %3669 = vmatpush1.msra.mxu0 %v3536
    %3670 = vmatprep.subr.mxu0 0.0
    %3671 = vmatpush1.msra.mxu0 %v3537
    %3672 = vmatprep.subr.mxu0 0.0
    %3673 = vmatpush1.msra.mxu0 %v3538
    %3674 = vmatprep.subr.mxu0 0.0
    %3675 = vmatpush1.msra.mxu0 %v3539
    %3676 = vmatprep.subr.mxu0 0.0
    %3677 = vmatpush1.msra.mxu0 %v3540
    %3678 = vmatprep.subr.mxu0 0.0
    %3679 = vmatpush1.msra.mxu0 %v3541
    %3680 = vmatprep.subr.mxu0 0.0
    %3681 = vmatpush1.msra.mxu0 %v3542
    %3682 = vmatprep.subr.mxu0 0.0
    %3683 = vmatpush1.msra.mxu0 %v3543
    %3684 = vmatprep.subr.mxu0 0.0
    %3685 = vmatpush1.msra.mxu0 %v3544
    %3686 = vmatprep.mubr.f32.mxu0 %v3480
    %3687 = vmatmul.mubr.f32.gmra.mrb[0].mxu0 %v3479
    %v3688 = vpop.f32.mrb[0].mxu0
    %v3689 = vadd.f32 %v3619, %v3688
    %v3690 = vpop.f32.mrb[0].mxu0
    %3691 = vdwg.mxu0
    %3692 = vst [vmem:[%s7] sm:$0xf] %v3689
  $region37: #{siamese_forward.7} parent=0 // pred_fallthru
    _
  // Predicated region
  $region38: #{siamese_forward.7} parent=0 // pred_check
    _
  $region39: #{siamese_forward.7} parent=0 // pred_check_branch
    %3694 = sbr.rel (0) target = $region41
  $region40: #{siamese_forward.7} parent=0 // pred_region
    _
  $region41: #{siamese_forward.7} parent=0 // pred_fallthru
    _
  // Predicated region
  $region42: #{siamese_forward.7} parent=0 // pred_check
    _
  $region43: #{siamese_forward.7} parent=0 // pred_check_branch
    %3696 = sbr.rel (0) target = $region45
  $region44: #{siamese_forward.7} parent=0 // pred_region
    _
  $region45: #{siamese_forward.7} parent=0 // pred_fallthru
    _

</llo_original>
